<compile_context>
chip_gen: v6e
topology: v6e:2x2x1
jax: 0.10.0
libtpu: 0.0.40
codegen_flags: <defaults>
</compile_context>

<pallas_src>
import functools

import jax
import jax.numpy as jnp
from jax import lax
from jax.experimental import pallas as pl
from jax.experimental.pallas import tpu as pltpu


def _sorter_kernel(x_ref, w_ref, b_ref, val_ref, id_ref):
    """Conv1d(kernel_size=1) == matmul over the feature dim, plus argmax over regions."""
    x = x_ref[0]                                    # (F, N)
    w = w_ref[...]                                  # (R, F)
    # R is tiny (16) so the MXU is mostly idle here, but the sorter is negligible FLOPs.
    val = jnp.dot(w, x, preferred_element_type=jnp.float32) + b_ref[...]   # (R, N)
    val_ref[0] = val
    # argmax over the region axis, first occurrence (matches torch/jnp argmax semantics)
    nreg = val.shape[0]
    row_ids = lax.broadcasted_iota(jnp.int32, val.shape, 0)
    mx = jnp.max(val, axis=0, keepdims=True)
    ids = jnp.min(jnp.where(val == mx, row_ids, jnp.int32(nreg)), axis=0, keepdims=True)
    id_ref[0] = ids                                 # (1, N) int32


def _gather_pool_kernel(x_ref, idx_ref, cube_ref, cab_ref, *,
                        regions, num_cabin, n_chunk):
    """One grid step == one batch: gather all R regions (top-P each) with a single
    one-hot MXU matmul, then per-cabin max via a shift+max tree + exact compaction."""
    x = x_ref[0]                                    # (F, N) f32, one DMA per batch
    idx_row = idx_ref[0]                            # (1, R*P) int32, one DMA per batch
    n = x.shape[1]
    rp = idx_row.shape[1]                           # R*P
    p = rp // regions
    pc = p // num_cabin                             # points per cabin
    rc = regions * num_cabin

    # Gather x[:, idx] for all regions at once via a one-hot matmul (exact in f32:
    # 1*v passes v through, 0*v adds 0).  bf16 would double MXU rate on v6e/v7x but
    # breaks bit-exactness w.r.t. the f32 PyTorch reference, so f32 is kept.
    # The one-hot is built in chunks of n_chunk along N so its VMEM footprint is
    # bounded (n_chunk * R*P * 4 bytes); partial dots accumulate exactly because each
    # index falls in exactly one chunk and all other chunks contribute exact zeros.
    spc = None
    for ci in range(n // n_chunk):                  # static trace-time loop
        xs = x[:, ci * n_chunk:(ci + 1) * n_chunk]  # (F, n_chunk)
        iota = lax.broadcasted_iota(jnp.int32, (n_chunk, rp), 0) + ci * n_chunk
        onehot = (iota == idx_row).astype(jnp.float32)                  # (n_chunk, R*P)
        part = jnp.dot(xs, onehot, preferred_element_type=jnp.float32)  # (F, R*P)
        spc = part if spc is None else spc + part
    cube_ref[0] = spc                               # final-layout (B, F, R*P) slab

    # train2cabins: max over contiguous chunks of pc lanes.  Doubling shift+max tree
    # (log2(pc) steps).  A static jnp.roll lowers to two lane slices + a concat, so the
    # shift direction is unambiguous and portable; it replaces R*C tiny slice+reduce ops.
    t = spc
    cover = 1
    while cover < pc:                               # static trace-time loop
        step = min(cover, pc - cover)
        # jnp.roll(t, -step)[j] == t[j + step]  =>  after the loop t[j] = max(spc[j : j+pc])
        t = jnp.maximum(t, jnp.roll(t, -step, axis=-1))
        cover += step
    # Compact the chunk-start lanes {k*pc} into a dense (F, R*C) block with one exact
    # one-hot matmul.  Chunk k == (region k//C, cabin k%C), which is already the output
    # lane order because P == num_cabin * pc.
    j_ids = lax.broadcasted_iota(jnp.int32, (rp, rc), 0)
    k_ids = lax.broadcasted_iota(jnp.int32, (rp, rc), 1)
    sel = (j_ids == k_ids * pc).astype(jnp.float32)                     # (R*P, R*C)
    cab_ref[0] = jnp.dot(t, sel, preferred_element_type=jnp.float32)    # (F, R*C)


def softpool_forward(x, w, b, *, regions=16, num_cabin=8, sp_ratio=4,
                     gather_n_chunk=512):
    B, F, N = x.shape
    P = N // sp_ratio
    assert P % num_cabin == 0, "pnt_per_sort must be divisible by num_cabin (train2cabins)"
    # Best performance when P is a multiple of 128 and F a multiple of 8 (full vregs).

    # ---- Sorter (Conv1d k=1 + argmax) in Pallas -------------------------------------
    val_activa, id_activa = pl.pallas_call(
        _sorter_kernel,
        out_shape=(jax.ShapeDtypeStruct((B, regions, N), jnp.float32),
                   jax.ShapeDtypeStruct((B, 1, N), jnp.int32)),
        grid=(B,),
        in_specs=[pl.BlockSpec((1, F, N), lambda i: (i, 0, 0)),
                  pl.BlockSpec((regions, F), lambda i: (0, 0)),
                  pl.BlockSpec((regions, 1), lambda i: (0, 0))],
        out_specs=(pl.BlockSpec((1, regions, N), lambda i: (i, 0, 0)),
                   pl.BlockSpec((1, 1, N), lambda i: (i, 0, 0))),
        compiler_params=pltpu.CompilerParams(dimension_semantics=("parallel",)),
        cost_estimate=pl.CostEstimate(
            flops=2 * B * regions * F * N, transcendentals=0,
            bytes_accessed=4 * (B * F * N + regions * F + regions
                                + B * regions * N + B * N)),
    )(x, w, b)
    id_activa = id_activa[:, 0, :]                  # (B, N)
    # TODO(synk): torch.argmax/torch.sort return int64 indices; int32 is used here
    # (TPU-native integer width), fine for N < 2^31.

    # torch.sort(descending)[:, :P] == top-P indices; no Pallas sort primitive, so this
    # stays in XLA.  Tie-breaking of lax.top_k may differ from torch.sort on exact ties.
    # TODO(synk): at production N this XLA top_k dominates wall clock; lax.approx_max_k
    # is several-x faster on TPU if exact torch.sort tie ordering is not required.
    _, idx = lax.top_k(val_activa, P)               # (B, R, P)
    idx = idx.astype(jnp.int32)

    # Free reshape: one lane-dense (1, R*P) idx row per batch -> a single idx DMA per
    # grid step instead of R tiny ones.
    idx_flat = idx.reshape(B, 1, regions * P)

    # One-hot chunk size along N (bounds the (n_chunk, R*P) one-hot temp in VMEM).
    n_chunk = gather_n_chunk if (0 < gather_n_chunk < N and N % gather_n_chunk == 0) else N

    # ---- Gather + per-cabin max pooling in Pallas -----------------------------------
    kernel = functools.partial(_gather_pool_kernel, regions=regions,
                               num_cabin=num_cabin, n_chunk=n_chunk)
    gather_flops = (2 * B * F * N * regions * P
                    + 2 * B * F * regions * P * regions * num_cabin)
    gather_bytes = 4 * (B * F * N + B * regions * P + B * F * regions * P
                        + B * F * regions * num_cabin)
    cube_flat, cab_flat = pl.pallas_call(
        kernel,
        out_shape=(jax.ShapeDtypeStruct((B, F, regions * P), jnp.float32),
                   jax.ShapeDtypeStruct((B, F, regions * num_cabin), jnp.float32)),
        grid=(B,),
        in_specs=[
            pl.BlockSpec((1, F, N), lambda bi: (bi, 0, 0)),
            pl.BlockSpec((1, 1, regions * P), lambda bi: (bi, 0, 0)),
        ],
        out_specs=(
            # sp_cube slab in its final memory layout, one wide unmasked store per batch.
            pl.BlockSpec((1, F, regions * P), lambda bi: (bi, 0, 0)),
            # cabins: lane-dense (R*C = 128 lanes), written exactly once per batch.
            pl.BlockSpec((1, F, regions * num_cabin), lambda bi: (bi, 0, 0)),
        ),
        compiler_params=pltpu.CompilerParams(
            dimension_semantics=("parallel",),
            # 48 MiB covers the (n_chunk x R*P) one-hot temps and fits v7x's 64 MiB
            # physical VMEM; v5e/v6e (128 MiB) could go higher for larger n_chunk.
            vmem_limit_bytes=48 * 1024 * 1024),
        cost_estimate=pl.CostEstimate(flops=gather_flops, transcendentals=0,
                                      bytes_accessed=gather_bytes),
    )(x, idx_flat)
    # TODO(synk): for production-sized N and P (one-hot ~ N*R*P*4 bytes) also split the
    # grid into region groups G < regions and/or shrink n_chunk; on v7x (2 TensorCores)
    # a parallel region-group axis keeps both cores busy when B == 1.

    # Free reshapes (identical row-major layout) -- no transpose round trip through HBM.
    sp_cube = cube_flat.reshape(B, F, regions, P)                  # (B, F, R, P)
    cabins = cab_flat.reshape(B, F, regions, num_cabin)            # (B, F, R, C)

    # sp_idx: the top-P indices broadcast over (regions + 3) channels, stored as float32
    # (the PyTorch code writes int indices into a float zeros tensor).  This is
    # (regions+3)x redundant HBM writes; kept only to match the module's return contract.
    # TODO(synk): return idx (int32) and broadcast at the consumer to save HBM bandwidth.
    sp_idx = jnp.broadcast_to(idx.astype(jnp.float32)[:, None, :, :],
                              (B, regions + 3, regions, P))

    # Note: conv2d_1/2/3/5, sp_windows, sp_trains, sp_station in the reference forward
    # are dead code when scope == 'local' (never returned), so they are not computed.
    return sp_cube, sp_idx, cabins, id_activa


if __name__ == "__main__":
    B, F, N = 2, 8, 512           # N chosen so P = N // sp_ratio = 128 (lane-aligned)
    regions, num_cabin, sp_ratio = 16, 8, 4
    P = N // sp_ratio

    key = jax.random.PRNGKey(0)
    k1, k2, k3 = jax.random.split(key, 3)
    x = jax.random.normal(k1, (B, F, N), dtype=jnp.float32)
    # Sorter Conv1d(F -> regions, kernel_size=1): weight (regions, F), bias (regions, 1)
    w = 0.1 * jax.random.normal(k2, (regions, F), dtype=jnp.float32)
    bias = 0.1 * jax.random.normal(k3, (regions, 1), dtype=jnp.float32)

    fwd = jax.jit(functools.partial(softpool_forward, regions=regions,
                                    num_cabin=num_cabin, sp_ratio=sp_ratio))
    sp_cube, sp_idx, cabins, id_activa = fwd(x, w, bias)
    jax.block_until_ready((sp_cube, sp_idx, cabins, id_activa))

    # --- sanity / correctness checks ---------------------------------------------------
    assert sp_cube.shape == (B, F, regions, P) and sp_cube.dtype == jnp.float32
    assert sp_idx.shape == (B, regions + 3, regions, P) and sp_idx.dtype == jnp.float32
    assert cabins.shape == (B, F, regions, num_cabin) and cabins.dtype == jnp.float32
    assert id_activa.shape == (B, N) and id_activa.dtype == jnp.int32

    # sp_cube[b, f, r, p] must equal x[b, f, idx[b, r, p]] (exact gather via one-hot matmul)
    idx_used = sp_idx[:, 0].astype(jnp.int32)                       # (B, R, P)
    ref_cube = jax.vmap(lambda xb, ib: xb[:, ib])(x, idx_used)      # (B, F, R, P)
    assert bool(jnp.all(ref_cube == sp_cube))

    # cabins must equal a chunked max over sp_cube (train2cabins semantics)
    cab_check = sp_cube.reshape(B, F, regions, num_cabin, P // num_cabin).max(axis=-1)
    assert bool(jnp.all(cab_check == cabins))

    # sorter: id_activa must pick a max-scoring region of the k=1 conv
    ref_val = jnp.einsum("rf,bfn->brn", w, x) + bias[None]
    picked = jnp.take_along_axis(ref_val, id_activa[:, None, :], axis=1)[:, 0]
    assert bool(jnp.all(picked >= jnp.max(ref_val, axis=1) - 1e-4))
    assert bool(jnp.all((id_activa >= 0) & (id_activa < regions)))

    # sp_idx channels are identical broadcasts of integer indices in [0, N)
    assert bool(jnp.all(sp_idx == sp_idx[:, :1]))
    assert bool(jnp.all((sp_idx >= 0) & (sp_idx < N)))

    print("KERNEL_OK")
</pallas_src>

<mosaic_0001>
module attributes {stable_mosaic.version = 11 : i64} {
  func.func @_sorter_kernel(%arg0: i32, %arg1: memref<1x8x512xf32, #tpu.memory_space<vmem>>, %arg2: memref<16x8xf32, #tpu.memory_space<vmem>>, %arg3: memref<16x1xf32, #tpu.memory_space<vmem>>, %arg4: memref<1x16x512xf32, #tpu.memory_space<vmem>>, %arg5: memref<1x1x512xi32, #tpu.memory_space<vmem>>) attributes {dimension_semantics = [#tpu.dimension_semantics<parallel>], iteration_bounds = array<i64: 2>, scalar_prefetch = 0 : i64, scratch_operands = 0 : i64, tpu.core_type = #tpu.core_type<tc>, window_params = [{transform_indices = @transform_0, window_bounds = array<i64: 1, 8, 512>}, {pipeline_mode = #tpu.pipeline_mode<synchronous>, transform_indices = @transform_1, window_bounds = array<i64: 16, 8>}, {pipeline_mode = #tpu.pipeline_mode<synchronous>, transform_indices = @transform_2, window_bounds = array<i64: 16, 1>}, {transform_indices = @transform_3, window_bounds = array<i64: 1, 16, 512>}, {transform_indices = @transform_4, window_bounds = array<i64: 1, 1, 512>}]} {
    %c0 = arith.constant 0 : index
    %c0_0 = arith.constant 0 : index
    %c0_1 = arith.constant 0 : index
    %0 = vector.load %arg1[%c0, %c0_0, %c0_1] : memref<1x8x512xf32, #tpu.memory_space<vmem>>, vector<1x8x512xf32>
    %1 = vector.shape_cast %0 : vector<1x8x512xf32> to vector<8x512xf32>
    %c0_2 = arith.constant 0 : index
    %c0_3 = arith.constant 0 : index
    %2 = vector.load %arg2[%c0_2, %c0_3] : memref<16x8xf32, #tpu.memory_space<vmem>>, vector<16x8xf32>
    %cst = arith.constant dense<0.000000e+00> : vector<16x512xf32>
    %3 = tpu.matmul %2, %1, %cst {dimension_numbers = #tpu.dot_dimension_numbers<[1], [0], [0], [1], [0, 0, 1, 1], [], []>} : vector<16x8xf32>, vector<8x512xf32>, vector<16x512xf32> -> vector<16x512xf32>
    %c0_4 = arith.constant 0 : index
    %c0_5 = arith.constant 0 : index
    %4 = vector.load %arg3[%c0_4, %c0_5] : memref<16x1xf32, #tpu.memory_space<vmem>>, vector<16x1xf32>
    %5 = vector.broadcast %4 : vector<16x1xf32> to vector<16x512xf32>
    %6 = arith.addf %3, %5 : vector<16x512xf32>
    %c0_6 = arith.constant 0 : index
    %c0_7 = arith.constant 0 : index
    %c0_8 = arith.constant 0 : index
    %7 = vector.load %arg4[%c0_6, %c0_7, %c0_8] : memref<1x16x512xf32, #tpu.memory_space<vmem>>, vector<1x16x512xf32>
    %8 = vector.shape_cast %7 : vector<1x16x512xf32> to vector<16x512xf32>
    %9 = vector.shape_cast %6 : vector<16x512xf32> to vector<1x16x512xf32>
    tpu.vector_store %arg4[%c0_6, %c0_7, %c0_8], %9 {strides = array<i32>} : memref<1x16x512xf32, #tpu.memory_space<vmem>>, vector<1x16x512xf32>,
    %10 = tpu.iota {dimensions = array<i32: 0>} : vector<16x512xi32>
    %cst_9 = arith.constant dense<0xFF800000> : vector<512xf32>
    %11 = vector.multi_reduction <maximumf>, %6, %cst_9 [0] : vector<16x512xf32> to vector<512xf32>
    %12 = vector.shape_cast %11 : vector<512xf32> to vector<1x512xf32>
    %13 = vector.broadcast %12 : vector<1x512xf32> to vector<16x512xf32>
    %14 = arith.cmpf oeq, %6, %13 : vector<16x512xf32>
    %c16_i32 = arith.constant 16 : i32
    %15 = vector.broadcast %c16_i32 : i32 to vector<16x512xi32>
    %16 = arith.select %14, %10, %15 : vector<16x512xi1>, vector<16x512xi32>
    %cst_10 = arith.constant dense<2147483647> : vector<512xi32>
    %17 = vector.multi_reduction <minsi>, %16, %cst_10 [0] : vector<16x512xi32> to vector<512xi32>
    %18 = vector.shape_cast %17 : vector<512xi32> to vector<1x512xi32>
    %c0_11 = arith.constant 0 : index
    %c0_12 = arith.constant 0 : index
    %c0_13 = arith.constant 0 : index
    %19 = vector.load %arg5[%c0_11, %c0_12, %c0_13] : memref<1x1x512xi32, #tpu.memory_space<vmem>>, vector<1x1x512xi32>
    %20 = vector.shape_cast %19 : vector<1x1x512xi32> to vector<1x512xi32>
    %21 = vector.shape_cast %18 : vector<1x512xi32> to vector<1x1x512xi32>
    tpu.vector_store %arg5[%c0_11, %c0_12, %c0_13], %21 {strides = array<i32>} : memref<1x1x512xi32, #tpu.memory_space<vmem>>, vector<1x1x512xi32>,
    return
  }
  func.func @transform_0(%arg0: i32) -> (i32, i32, i32) {
    %c0_i32 = arith.constant 0 : i32
    %c0_i32_0 = arith.constant 0 : i32
    %c0_i32_1 = arith.constant 0 : i32
    return %arg0, %c0_i32, %c0_i32_0 : i32, i32, i32
  }
  func.func @transform_1(%arg0: i32) -> (i32, i32) {
    %c0_i32 = arith.constant 0 : i32
    %c0_i32_0 = arith.constant 0 : i32
    %c0_i32_1 = arith.constant 0 : i32
    return %c0_i32, %c0_i32_0 : i32, i32
  }
  func.func @transform_2(%arg0: i32) -> (i32, i32) {
    %c0_i32 = arith.constant 0 : i32
    %c0_i32_0 = arith.constant 0 : i32
    %c0_i32_1 = arith.constant 0 : i32
    return %c0_i32, %c0_i32_0 : i32, i32
  }
  func.func @transform_3(%arg0: i32) -> (i32, i32, i32) {
    %c0_i32 = arith.constant 0 : i32
    %c0_i32_0 = arith.constant 0 : i32
    %c0_i32_1 = arith.constant 0 : i32
    return %arg0, %c0_i32, %c0_i32_0 : i32, i32, i32
  }
  func.func @transform_4(%arg0: i32) -> (i32, i32, i32) {
    %c0_i32 = arith.constant 0 : i32
    %c0_i32_0 = arith.constant 0 : i32
    %c0_i32_1 = arith.constant 0 : i32
    return %arg0, %c0_i32, %c0_i32_0 : i32, i32, i32
  }
}

module attributes {stable_mosaic.version = 11 : i64} {
  func.func @_gather_pool_kernel(%arg0: i32, %arg1: memref<1x8x512xf32, #tpu.memory_space<vmem>>, %arg2: memref<1x1x2048xi32, #tpu.memory_space<vmem>>, %arg3: memref<1x8x2048xf32, #tpu.memory_space<vmem>>, %arg4: memref<1x8x128xf32, #tpu.memory_space<vmem>>) attributes {dimension_semantics = [#tpu.dimension_semantics<parallel>], iteration_bounds = array<i64: 2>, scalar_prefetch = 0 : i64, scratch_operands = 0 : i64, tpu.core_type = #tpu.core_type<tc>, window_params = [{transform_indices = @transform_0, window_bounds = array<i64: 1, 8, 512>}, {transform_indices = @transform_1, window_bounds = array<i64: 1, 1, 2048>}, {transform_indices = @transform_2, window_bounds = array<i64: 1, 8, 2048>}, {transform_indices = @transform_3, window_bounds = array<i64: 1, 8, 128>}]} {
    %c0 = arith.constant 0 : index
    %c0_0 = arith.constant 0 : index
    %c0_1 = arith.constant 0 : index
    %0 = vector.load %arg1[%c0, %c0_0, %c0_1] : memref<1x8x512xf32, #tpu.memory_space<vmem>>, vector<1x8x512xf32>
    %1 = vector.shape_cast %0 : vector<1x8x512xf32> to vector<8x512xf32>
    %c0_2 = arith.constant 0 : index
    %c0_3 = arith.constant 0 : index
    %c0_4 = arith.constant 0 : index
    %2 = vector.load %arg2[%c0_2, %c0_3, %c0_4] : memref<1x1x2048xi32, #tpu.memory_space<vmem>>, vector<1x1x2048xi32>
    %3 = vector.shape_cast %2 : vector<1x1x2048xi32> to vector<1x2048xi32>
    %4 = tpu.iota {dimensions = array<i32: 0>} : vector<512x2048xi32>
    %c0_i32 = arith.constant 0 : i32
    %5 = vector.broadcast %c0_i32 : i32 to vector<512x2048xi32>
    %6 = arith.addi %4, %5 : vector<512x2048xi32>
    %7 = vector.broadcast %3 : vector<1x2048xi32> to vector<512x2048xi32>
    %8 = arith.cmpi eq, %6, %7 : vector<512x2048xi32>
    %9 = arith.extui %8 : vector<512x2048xi1> to vector<512x2048xi32>
    %10 = arith.sitofp %9 : vector<512x2048xi32> to vector<512x2048xf32>
    %cst = arith.constant dense<0.000000e+00> : vector<8x2048xf32>
    %11 = tpu.matmul %1, %10, %cst {dimension_numbers = #tpu.dot_dimension_numbers<[1], [0], [0], [1], [0, 0, 1, 1], [], []>} : vector<8x512xf32>, vector<512x2048xf32>, vector<8x2048xf32> -> vector<8x2048xf32>
    %c0_5 = arith.constant 0 : index
    %c0_6 = arith.constant 0 : index
    %c0_7 = arith.constant 0 : index
    %12 = vector.load %arg3[%c0_5, %c0_6, %c0_7] : memref<1x8x2048xf32, #tpu.memory_space<vmem>>, vector<1x8x2048xf32>
    %13 = vector.shape_cast %12 : vector<1x8x2048xf32> to vector<8x2048xf32>
    %14 = vector.shape_cast %11 : vector<8x2048xf32> to vector<1x8x2048xf32>
    tpu.vector_store %arg3[%c0_5, %c0_6, %c0_7], %14 {strides = array<i32>} : memref<1x8x2048xf32, #tpu.memory_space<vmem>>, vector<1x8x2048xf32>,
    %15 = vector.extract_strided_slice %11 {offsets = [0, 1], sizes = [8, 2047], strides = [1, 1]} : vector<8x2048xf32> to vector<8x2047xf32>
    %16 = vector.extract_strided_slice %11 {offsets = [0, 0], sizes = [8, 1], strides = [1, 1]} : vector<8x2048xf32> to vector<8x1xf32>
    %17 = tpu.concatenate %15, %16 in 1 : vector<8x2047xf32>, vector<8x1xf32> -> vector<8x2048xf32>
    %18 = arith.maximumf %11, %17 : vector<8x2048xf32>
    %19 = vector.extract_strided_slice %18 {offsets = [0, 2], sizes = [8, 2046], strides = [1, 1]} : vector<8x2048xf32> to vector<8x2046xf32>
    %20 = vector.extract_strided_slice %18 {offsets = [0, 0], sizes = [8, 2], strides = [1, 1]} : vector<8x2048xf32> to vector<8x2xf32>
    %21 = tpu.concatenate %19, %20 in 1 : vector<8x2046xf32>, vector<8x2xf32> -> vector<8x2048xf32>
    %22 = arith.maximumf %18, %21 : vector<8x2048xf32>
    %23 = vector.extract_strided_slice %22 {offsets = [0, 4], sizes = [8, 2044], strides = [1, 1]} : vector<8x2048xf32> to vector<8x2044xf32>
    %24 = vector.extract_strided_slice %22 {offsets = [0, 0], sizes = [8, 4], strides = [1, 1]} : vector<8x2048xf32> to vector<8x4xf32>
    %25 = tpu.concatenate %23, %24 in 1 : vector<8x2044xf32>, vector<8x4xf32> -> vector<8x2048xf32>
    %26 = arith.maximumf %22, %25 : vector<8x2048xf32>
    %27 = vector.extract_strided_slice %26 {offsets = [0, 8], sizes = [8, 2040], strides = [1, 1]} : vector<8x2048xf32> to vector<8x2040xf32>
    %28 = vector.extract_strided_slice %26 {offsets = [0, 0], sizes = [8, 8], strides = [1, 1]} : vector<8x2048xf32> to vector<8x8xf32>
    %29 = tpu.concatenate %27, %28 in 1 : vector<8x2040xf32>, vector<8x8xf32> -> vector<8x2048xf32>
    %30 = arith.maximumf %26, %29 : vector<8x2048xf32>
    %31 = tpu.iota {dimensions = array<i32: 0>} : vector<2048x128xi32>
    %32 = tpu.iota {dimensions = array<i32: 1>} : vector<2048x128xi32>
    %c16_i32 = arith.constant 16 : i32
    %33 = vector.broadcast %c16_i32 : i32 to vector<2048x128xi32>
    %34 = arith.muli %32, %33 : vector<2048x128xi32>
    %35 = arith.cmpi eq, %31, %34 : vector<2048x128xi32>
    %36 = arith.extui %35 : vector<2048x128xi1> to vector<2048x128xi32>
    %37 = arith.sitofp %36 : vector<2048x128xi32> to vector<2048x128xf32>
    %cst_8 = arith.constant dense<0.000000e+00> : vector<8x128xf32>
    %38 = tpu.matmul %30, %37, %cst_8 {dimension_numbers = #tpu.dot_dimension_numbers<[1], [0], [0], [1], [0, 0, 1, 1], [], []>} : vector<8x2048xf32>, vector<2048x128xf32>, vector<8x128xf32> -> vector<8x128xf32>
    %c0_9 = arith.constant 0 : index
    %c0_10 = arith.constant 0 : index
    %c0_11 = arith.constant 0 : index
    %39 = vector.load %arg4[%c0_9, %c0_10, %c0_11] : memref<1x8x128xf32, #tpu.memory_space<vmem>>, vector<1x8x128xf32>
    %40 = vector.shape_cast %39 : vector<1x8x128xf32> to vector<8x128xf32>
    %41 = vector.shape_cast %38 : vector<8x128xf32> to vector<1x8x128xf32>
    tpu.vector_store %arg4[%c0_9, %c0_10, %c0_11], %41 {strides = array<i32>} : memref<1x8x128xf32, #tpu.memory_space<vmem>>, vector<1x8x128xf32>,
    return
  }
  func.func @transform_0(%arg0: i32) -> (i32, i32, i32) {
    %c0_i32 = arith.constant 0 : i32
    %c0_i32_0 = arith.constant 0 : i32
    %c0_i32_1 = arith.constant 0 : i32
    return %arg0, %c0_i32, %c0_i32_0 : i32, i32, i32
  }
  func.func @transform_1(%arg0: i32) -> (i32, i32, i32) {
    %c0_i32 = arith.constant 0 : i32
    %c0_i32_0 = arith.constant 0 : i32
    %c0_i32_1 = arith.constant 0 : i32
    return %arg0, %c0_i32, %c0_i32_0 : i32, i32, i32
  }
  func.func @transform_2(%arg0: i32) -> (i32, i32, i32) {
    %c0_i32 = arith.constant 0 : i32
    %c0_i32_0 = arith.constant 0 : i32
    %c0_i32_1 = arith.constant 0 : i32
    return %arg0, %c0_i32, %c0_i32_0 : i32, i32, i32
  }
  func.func @transform_3(%arg0: i32) -> (i32, i32, i32) {
    %c0_i32 = arith.constant 0 : i32
    %c0_i32_0 = arith.constant 0 : i32
    %c0_i32_1 = arith.constant 0 : i32
    return %arg0, %c0_i32, %c0_i32_0 : i32, i32, i32
  }
}

</mosaic_0001>

<llo_original>
// kernel: softpool_forward.2
$region0: #{softpool_forward.2}
  #allocation0 [shape = 'u32[]', space=smem, size = 0x4, offset = 0x4, fixed_abs, tag = 'smem constant byte address 0x4 - core index']
  #allocation1 [shape = 'u32[144,128]{1,0:T(1,128)}', space=vmem, size = 0x12000, scoped, tag = 'internal scratch']
  %s0 = inlined_call_operand.hbm [shape: f32[2,8,512], index: 0, kind: input, shape index: {}]
  %s1 = inlined_call_operand.vmem [shape: f32[16,8], index: 1, kind: input, shape index: {}]
  %s2 = inlined_call_operand.vmem [shape: f32[16,1], index: 2, kind: input, shape index: {}]
  %s3 = inlined_call_operand.vmem [shape: f32[2,16,512], index: 3, kind: output, shape index: {0}]
  %s4 = inlined_call_operand.vmem [shape: s32[2,1,512], index: 4, kind: output, shape index: {1}]
  %5 = xla_tuple %s3, %s4
  %s6 = sld [smem:[#allocation0]]
  $region57: #{softpool_forward.2} parent=0
    _
  %s8 = ssub.s32 1, %s6
  %s9 = scalar_select 0, %s8, %s6
  $region1: #{softpool_forward.2} parent=0
    #allocation2 [shape = 'u8[32768]{0}', space=vmem, size = 0x8000, scoped, tag = 'input window, operand 0']
    #allocation3 [shape = 's32[2]{0}', space=sflag, size = 0x8, scoped, tag = 'scoped memory for softpool_forward.2']
    %10 = vsyncpa [#allocation3], 0
    %s11 = scalar_lea.sflag [#allocation3], 1
    %12 = vsyncpa %s11, 0
    loop: start=0, step=1, limit=4
    $region2: #{softpool_forward.2} parent=1 // loop_pre_header
      _
    $region3: #{softpool_forward.2} parent=1 // loop_header
      %s14 = sphi 0, %s18
      %p15 = scmp.ge.s32.totalorder %s14, 4
      %s24 = sphi 0, %s26
      %s27 = sphi 0, %s24
      %s28 = sphi 0, %s27
      %s44 = sphi 0, %s28
      %s48 = sphi 0, %s48
      %s50 = sphi 0, %s48
      %s51 = sphi 0, %s50
      %s65 = sphi 0, %s51
      %s69 = sphi 0, %s69
      %s71 = sphi 0, %s69
      %s72 = sphi 0, %s71
      %s86 = sphi 0, %s72
      %s92 = sphi 0, %s94
      %s95 = sphi 0, %s92
      %s96 = sphi 0, %s95
      %s112 = sphi 0, %s96
      %s118 = sphi 0, %s120
      %s121 = sphi 0, %s118
      %s122 = sphi 0, %s121
      %s138 = sphi 0, %s122
    $region4: #{softpool_forward.2} parent=1 // loop_header_branch
      %17 = sbr.rel (%p15) target = $region8
    $region5: #{softpool_forward.2} parent=1 // loop_body
      %s19 = ssub.s32 %s14, 1
      %s20 = ssub.s32 %s14, 2
      %s21 = sadd.s32 %s14, 1
      %s22 = ssub.s32 %s14, %s21
      %p23 = scmp.eq.s32.totalorder %s22, 0
      %s25 = sadd.s32 %s24, 1
      %s26 = scalar_select %p23, %s24, %s25
      %p29 = pneg %p23
      %p30 = scmp.eq.s32.totalorder %s14, 1
      %p31 = por %p29, %p30
      %p32 = scmp.ne.s32.totalorder %s24, %s27
      %p33 = scmp.eq.s32.totalorder %s14, 0
      %p34 = por %p32, %p33
      %p35 = scmp.ne.s32.totalorder %s24, %s27
      %p36 = scmp.eq.s32.totalorder %s19, 1
      %p37 = por %p35, %p36
      %p38 = scmp.ne.s32.totalorder %s27, %s28
      %p39 = scmp.eq.s32.totalorder %s19, 0
      %p40 = por %p38, %p39
      %p41 = scmp.ne.s32.totalorder %s27, %s28
      %p42 = scmp.eq.s32.totalorder %s20, 1
      %p43 = por %p41, %p42
      %p45 = scmp.ne.s32.totalorder %s28, %s44
      %p46 = scmp.eq.s32.totalorder %s20, 0
      %p47 = por %p45, %p46
      %s49 = sadd.s32 %s48, 1
      %p52 = scmp.eq.s32.totalorder %s14, 1
      %p53 = scmp.ne.s32.totalorder %s48, %s50
      %p54 = scmp.eq.s32.totalorder %s14, 0
      %p55 = por %p53, %p54
      %p56 = scmp.ne.s32.totalorder %s48, %s50
      %p57 = scmp.eq.s32.totalorder %s19, 1
      %p58 = por %p56, %p57
      %p59 = scmp.ne.s32.totalorder %s50, %s51
      %p60 = scmp.eq.s32.totalorder %s19, 0
      %p61 = por %p59, %p60
      %p62 = scmp.ne.s32.totalorder %s50, %s51
      %p63 = scmp.eq.s32.totalorder %s20, 1
      %p64 = por %p62, %p63
      %p66 = scmp.ne.s32.totalorder %s51, %s65
      %p67 = scmp.eq.s32.totalorder %s20, 0
      %p68 = por %p66, %p67
      %s70 = sadd.s32 %s69, 1
      %p73 = scmp.eq.s32.totalorder %s14, 1
      %p74 = scmp.ne.s32.totalorder %s69, %s71
      %p75 = scmp.eq.s32.totalorder %s14, 0
      %p76 = por %p74, %p75
      %p77 = scmp.ne.s32.totalorder %s69, %s71
      %p78 = scmp.eq.s32.totalorder %s19, 1
      %p79 = por %p77, %p78
      %p80 = scmp.ne.s32.totalorder %s71, %s72
      %p81 = scmp.eq.s32.totalorder %s19, 0
      %p82 = por %p80, %p81
      %p83 = scmp.ne.s32.totalorder %s71, %s72
      %p84 = scmp.eq.s32.totalorder %s20, 1
      %p85 = por %p83, %p84
      %p87 = scmp.ne.s32.totalorder %s72, %s86
      %p88 = scmp.eq.s32.totalorder %s20, 0
      %p89 = por %p87, %p88
      %s90 = ssub.s32 %s14, %s21
      %p91 = scmp.eq.s32.totalorder %s90, 0
      %s93 = sadd.s32 %s92, 1
      %s94 = scalar_select %p91, %s92, %s93
      %p97 = pneg %p91
      %p98 = scmp.eq.s32.totalorder %s14, 1
      %p99 = por %p97, %p98
      %p100 = scmp.ne.s32.totalorder %s92, %s95
      %p101 = scmp.eq.s32.totalorder %s14, 0
      %p102 = por %p100, %p101
      %p103 = scmp.ne.s32.totalorder %s92, %s95
      %p104 = scmp.eq.s32.totalorder %s19, 1
      %p105 = por %p103, %p104
      %p106 = scmp.ne.s32.totalorder %s95, %s96
      %p107 = scmp.eq.s32.totalorder %s19, 0
      %p108 = por %p106, %p107
      %p109 = scmp.ne.s32.totalorder %s95, %s96
      %p110 = scmp.eq.s32.totalorder %s20, 1
      %p111 = por %p109, %p110
      %p113 = scmp.ne.s32.totalorder %s96, %s112
      %p114 = scmp.eq.s32.totalorder %s20, 0
      %p115 = por %p113, %p114
      %s116 = ssub.s32 %s14, %s21
      %p117 = scmp.eq.s32.totalorder %s116, 0
      %s119 = sadd.s32 %s118, 1
      %s120 = scalar_select %p117, %s118, %s119
      %p123 = pneg %p117
      %p124 = scmp.eq.s32.totalorder %s14, 1
      %p125 = por %p123, %p124
      %p126 = scmp.ne.s32.totalorder %s118, %s121
      %p127 = scmp.eq.s32.totalorder %s14, 0
      %p128 = por %p126, %p127
      %p129 = scmp.ne.s32.totalorder %s118, %s121
      %p130 = scmp.eq.s32.totalorder %s19, 1
      %p131 = por %p129, %p130
      %p132 = scmp.ne.s32.totalorder %s121, %s122
      %p133 = scmp.eq.s32.totalorder %s19, 0
      %p134 = por %p132, %p133
      %p135 = scmp.ne.s32.totalorder %s121, %s122
      %p136 = scmp.eq.s32.totalorder %s20, 1
      %p137 = por %p135, %p136
      %p139 = scmp.ne.s32.totalorder %s122, %s138
      %p140 = scmp.eq.s32.totalorder %s20, 0
      %p141 = por %p139, %p140
      %p142 = scmp.le.s32.totalorder 1, %s14
      %p143 = scmp.lt.s32.totalorder %s14, 3
      %p144 = pnand %p142, %p143
      %p145 = pneg %p144
      // Predicated region
      $region9: #{softpool_forward.2} parent=5 // pred_check
        _
      $region10: #{softpool_forward.2} parent=5 // pred_check_branch
        %147 = sbr.rel (%p144) target = $region12
      $region11: #{softpool_forward.2} parent=5 // pred_region
        %s148 = ssub.s32 %s14, 1
        // Predicated region
        $region13: #{softpool_forward.2} parent=11 // pred_check
          %p149 = pneg %p61
        $region14: #{softpool_forward.2} parent=11 // pred_check_branch
          %151 = sbr.rel (%p149) target = $region16
        $region15: #{softpool_forward.2} parent=11 // pred_region
          _
        $region16: #{softpool_forward.2} parent=11 // pred_fallthru
          _
        // Predicated region
        $region17: #{softpool_forward.2} parent=11 // pred_check
          %p152 = pneg %p82
        $region18: #{softpool_forward.2} parent=11 // pred_check_branch
          %154 = sbr.rel (%p152) target = $region20
        $region19: #{softpool_forward.2} parent=11 // pred_region
          _
        $region20: #{softpool_forward.2} parent=11 // pred_fallthru
          _
      $region12: #{softpool_forward.2} parent=5 // pred_fallthru
        _
      %p155 = scmp.lt.s32.totalorder %s14, 2
      // Predicated region
      $region21: #{softpool_forward.2} parent=5 // pred_check
        %p156 = pneg %p155
      $region22: #{softpool_forward.2} parent=5 // pred_check_branch
        %158 = sbr.rel (%p156) target = $region24
      $region23: #{softpool_forward.2} parent=5 // pred_region
        // Predicated region
        $region25: #{softpool_forward.2} parent=23 // pred_check
          %p159 = pneg %p34
        $region26: #{softpool_forward.2} parent=23 // pred_check_branch
          %161 = sbr.rel (%p159) target = $region28
        $region27: #{softpool_forward.2} parent=23 // pred_region
          %s162 = sand.u32 %s24, 1
          %s163 = scalar_lea.sflag [#allocation3], %s162
          %s164 = sand.u32 %s24, 1
          %s165 = smul.addr %s164, 32
          %s166 = scalar_lea.vmem [#allocation2], %s165
          %s168 = ssub.s32 512, 512
          %169 = vsyncadd %s163, %s168
          %s170 = smul.addr %s14, 4
          %s171 = smul.addr %s170, 128
          %s172 = scalar_lea.hbm %s0, %s171
          %s174 = sshll.u32 %s166, 4
          %s175 = int_to_ptr.vmem [resolvable:$true] %s174
          %177 = dma.hbm_to_vmem [thread:$0]  %s172, 512, %s175, %s163
        $region28: #{softpool_forward.2} parent=23 // pred_fallthru
          _
      $region24: #{softpool_forward.2} parent=5 // pred_fallthru
        _
      %p178 = scmp.le.s32.totalorder 1, %s14
      %p179 = scmp.lt.s32.totalorder %s14, 3
      %p180 = pnand %p178, %p179
      %p181 = pneg %p180
      // Predicated region
      $region29: #{softpool_forward.2} parent=5 // pred_check
        _
      $region30: #{softpool_forward.2} parent=5 // pred_check_branch
        %183 = sbr.rel (%p180) target = $region32
      $region31: #{softpool_forward.2} parent=5 // pred_region
        %s184 = ssub.s32 %s14, 1
        %s185 = sand.u32 %s27, 1
        %s186 = scalar_lea.sflag [#allocation3], %s185
        %s187 = sand.u32 %s27, 1
        %s188 = smul.addr %s187, 32
        %s189 = scalar_lea.vmem [#allocation2], %s188
        // Predicated region
        $region33: #{softpool_forward.2} parent=31 // pred_check
          %p190 = pneg %p40
        $region34: #{softpool_forward.2} parent=31 // pred_check_branch
          %192 = sbr.rel (%p190) target = $region36
        $region35: #{softpool_forward.2} parent=31 // pred_region
          %193 = dma.done %s186, 512
        $region36: #{softpool_forward.2} parent=31 // pred_fallthru
          _
        %s194 = sand.u32 %s27, 1
        %s195 = scalar_lea.sflag [#allocation3], %s194
        %s196 = sand.u32 %s27, 1
        %s197 = smul.addr %s196, 32
        %s198 = scalar_lea.vmem [#allocation2], %s197
        %p199 = pneg %p40
        %p200 = pneg %p37
        %p201 = pneg %p61
        %p202 = pneg %p58
        %p203 = pneg %p82
        %p204 = pneg %p79
        %p205 = pneg %p108
        %p206 = pneg %p105
        %p207 = scmp.lt.s32.totalorder %s19, 1
        %s208 = scalar_select %p207, %s19, 1
        %s209 = smul.addr %s208, 8
        %s210 = smul.addr %s209, 8
        %s211 = scalar_lea.vmem %s3, %s210
        %p212 = pneg %p134
        %p213 = pneg %p131
        %p214 = scmp.lt.s32.totalorder %s19, 1
        %s215 = scalar_select %p214, %s19, 1
        %s216 = smul.addr %s215, 4
        %s217 = scalar_lea.vmem %s4, %s216
        %p218 = scmp.lt.s32.totalorder %s19, 1
        %s219 = scalar_select %p218, %s19, 1
        %s220 = smul.addr %s219, 8
        %s221 = smul.addr %s220, 8
        %s222 = scalar_lea.vmem %s3, %s221
        %p223 = scmp.lt.s32.totalorder %s19, 1
        %s224 = scalar_select %p223, %s19, 1
        %s225 = smul.addr %s224, 4
        %s226 = scalar_lea.vmem %s4, %s225
        %v227 = vld [vmem:[%s189] sm:$0xff]
        %v228 = vld [vmem:[%s189 + $0x8] sm:$0xff]
        %v229 = vld [vmem:[%s189 + $0x10] sm:$0xff]
        %v230 = vld [vmem:[%s189 + $0x18] sm:$0xff]
        %v231 = vld [vmem:[%s1] sm:$0xff]
        %v232 = vld [vmem:[%s1 + $0x8] sm:$0xff]
        %v233 = vld [vmem:[%s2] sm:$0xff]
        %v234 = vld [vmem:[%s2 + $0x8] sm:$0xff]
        %236 = vset.pattern.permute.xlu0 0
        %237 = vperm.xlu0 %236, %v233
        %v238 = vpop.permute.xlu0 %237
        %241 = vset.pattern.permute.xlu0 0
        %242 = vperm.xlu0 %241, %v234
        %v243 = vpop.permute.xlu0 %242
        %vm245 = vcmask 64512
        %v247 = vsel %vm245, %v231, 0
        %v250 = vsel %vm245, %v232, 0
        %252 = vmatprep.subr.mxu0 0.0
        %253 = vmatpush1.msra.mxu0 0.0
        %254 = vmatprep.subr.mxu0 0.0
        %255 = vmatpush1.msra.mxu0 0.0
        %256 = vmatprep.subr.mxu0 0.0
        %257 = vmatpush1.msra.mxu0 0.0
        %258 = vmatprep.subr.mxu0 0.0
        %259 = vmatpush1.msra.mxu0 0.0
        %260 = vmatprep.subr.mxu0 0.0
        %261 = vmatpush1.msra.mxu0 0.0
        %262 = vmatprep.subr.mxu0 0.0
        %263 = vmatpush1.msra.mxu0 0.0
        %264 = vmatprep.subr.mxu0 0.0
        %265 = vmatpush1.msra.mxu0 0.0
        %266 = vmatprep.subr.mxu0 0.0
        %267 = vmatpush1.msra.mxu0 0.0
        %268 = vmatprep.subr.mxu0 0.0
        %269 = vmatpush1.msra.mxu0 0.0
        %270 = vmatprep.subr.mxu0 0.0
        %271 = vmatpush1.msra.mxu0 0.0
        %272 = vmatprep.subr.mxu0 0.0
        %273 = vmatpush1.msra.mxu0 0.0
        %274 = vmatprep.subr.mxu0 0.0
        %275 = vmatpush1.msra.mxu0 0.0
        %276 = vmatprep.subr.mxu0 0.0
        %277 = vmatpush1.msra.mxu0 0.0
        %278 = vmatprep.subr.mxu0 0.0
        %279 = vmatpush1.msra.mxu0 0.0
        %280 = vmatprep.subr.mxu0 0.0
        %281 = vmatpush1.msra.mxu0 0.0
        %282 = vmatprep.subr.mxu0 %v228
        %283 = vmatpush1.msra.mxu0 %v227
        %284 = vmatprep.subr.mxu0 0.0
        %285 = vmatpush2.msra.mxu0 0.0
        %286 = vmatprep.subr.mxu0 0.0
        %287 = vmatpush2.msra.mxu0 0.0
        %288 = vmatprep.subr.mxu0 0.0
        %289 = vmatpush2.msra.mxu0 0.0
        %290 = vmatprep.subr.mxu0 0.0
        %291 = vmatpush2.msra.mxu0 0.0
        %292 = vmatprep.subr.mxu0 0.0
        %293 = vmatpush2.msra.mxu0 0.0
        %294 = vmatprep.subr.mxu0 0.0
        %295 = vmatpush2.msra.mxu0 0.0
        %296 = vmatprep.subr.mxu0 0.0
        %297 = vmatpush2.msra.mxu0 0.0
        %298 = vmatprep.subr.mxu0 0.0
        %299 = vmatpush2.msra.mxu0 0.0
        %300 = vmatprep.subr.mxu0 0.0
        %301 = vmatpush2.msra.mxu0 0.0
        %302 = vmatprep.subr.mxu0 0.0
        %303 = vmatpush2.msra.mxu0 0.0
        %304 = vmatprep.subr.mxu0 0.0
        %305 = vmatpush2.msra.mxu0 0.0
        %306 = vmatprep.subr.mxu0 0.0
        %307 = vmatpush2.msra.mxu0 0.0
        %308 = vmatprep.subr.mxu0 0.0
        %309 = vmatpush2.msra.mxu0 0.0
        %310 = vmatprep.subr.mxu0 0.0
        %311 = vmatpush2.msra.mxu0 0.0
        %312 = vmatprep.subr.mxu0 0.0
        %313 = vmatpush2.msra.mxu0 0.0
        %314 = vmatprep.subr.mxu0 0.0
        %315 = vmatpush2.msra.mxu0 0.0
        %316 = vmatprep.mubr.f32.mxu0 0.0
        %317 = vmatmul.mubr.f32.gmra.mxu0 %v247
        %v318 = vpop.f32.mrf.mxu0
        %v319 = vadd.f32 %v238, %v318
        %v320 = vpop.f32.mrf.mxu0
        %v321 = vadd.f32 %v238, %v320
        %322 = vmatprep.mubr.f32.mxu0 0.0
        %323 = vmatmul.mubr.f32.gmra.mxu0 %v250
        %v324 = vpop.f32.mrf.mxu0
        %v325 = vadd.f32 %v243, %v324
        %v326 = vpop.f32.mrf.mxu0
        %v327 = vadd.f32 %v243, %v326
        %328 = vdwg.mxu0
        %329 = vmatprep.subr.mxu0 0.0
        %330 = vmatpush1.msra.mxu0 0.0
        %331 = vmatprep.subr.mxu0 0.0
        %332 = vmatpush1.msra.mxu0 0.0
        %333 = vmatprep.subr.mxu0 0.0
        %334 = vmatpush1.msra.mxu0 0.0
        %335 = vmatprep.subr.mxu0 0.0
        %336 = vmatpush1.msra.mxu0 0.0
        %337 = vmatprep.subr.mxu0 0.0
        %338 = vmatpush1.msra.mxu0 0.0
        %339 = vmatprep.subr.mxu0 0.0
        %340 = vmatpush1.msra.mxu0 0.0
        %341 = vmatprep.subr.mxu0 0.0
        %342 = vmatpush1.msra.mxu0 0.0
        %343 = vmatprep.subr.mxu0 0.0
        %344 = vmatpush1.msra.mxu0 0.0
        %345 = vmatprep.subr.mxu0 0.0
        %346 = vmatpush1.msra.mxu0 0.0
        %347 = vmatprep.subr.mxu0 0.0
        %348 = vmatpush1.msra.mxu0 0.0
        %349 = vmatprep.subr.mxu0 0.0
        %350 = vmatpush1.msra.mxu0 0.0
        %351 = vmatprep.subr.mxu0 0.0
        %352 = vmatpush1.msra.mxu0 0.0
        %353 = vmatprep.subr.mxu0 0.0
        %354 = vmatpush1.msra.mxu0 0.0
        %355 = vmatprep.subr.mxu0 0.0
        %356 = vmatpush1.msra.mxu0 0.0
        %357 = vmatprep.subr.mxu0 0.0
        %358 = vmatpush1.msra.mxu0 0.0
        %359 = vmatprep.subr.mxu0 %v230
        %360 = vmatpush1.msra.mxu0 %v229
        %361 = vmatprep.subr.mxu0 0.0
        %362 = vmatpush2.msra.mxu0 0.0
        %363 = vmatprep.subr.mxu0 0.0
        %364 = vmatpush2.msra.mxu0 0.0
        %365 = vmatprep.subr.mxu0 0.0
        %366 = vmatpush2.msra.mxu0 0.0
        %367 = vmatprep.subr.mxu0 0.0
        %368 = vmatpush2.msra.mxu0 0.0
        %369 = vmatprep.subr.mxu0 0.0
        %370 = vmatpush2.msra.mxu0 0.0
        %371 = vmatprep.subr.mxu0 0.0
        %372 = vmatpush2.msra.mxu0 0.0
        %373 = vmatprep.subr.mxu0 0.0
        %374 = vmatpush2.msra.mxu0 0.0
        %375 = vmatprep.subr.mxu0 0.0
        %376 = vmatpush2.msra.mxu0 0.0
        %377 = vmatprep.subr.mxu0 0.0
        %378 = vmatpush2.msra.mxu0 0.0
        %379 = vmatprep.subr.mxu0 0.0
        %380 = vmatpush2.msra.mxu0 0.0
        %381 = vmatprep.subr.mxu0 0.0
        %382 = vmatpush2.msra.mxu0 0.0
        %383 = vmatprep.subr.mxu0 0.0
        %384 = vmatpush2.msra.mxu0 0.0
        %385 = vmatprep.subr.mxu0 0.0
        %386 = vmatpush2.msra.mxu0 0.0
        %387 = vmatprep.subr.mxu0 0.0
        %388 = vmatpush2.msra.mxu0 0.0
        %389 = vmatprep.subr.mxu0 0.0
        %390 = vmatpush2.msra.mxu0 0.0
        %391 = vmatprep.subr.mxu0 0.0
        %392 = vmatpush2.msra.mxu0 0.0
        %393 = vmatprep.mubr.f32.mxu0 0.0
        %394 = vmatmul.mubr.f32.gmra.mxu0 %v247
        %v395 = vpop.f32.mrf.mxu0
        %v396 = vadd.f32 %v238, %v395
        %v397 = vpop.f32.mrf.mxu0
        %v398 = vadd.f32 %v238, %v397
        %399 = vmatprep.mubr.f32.mxu0 0.0
        %400 = vmatmul.mubr.f32.gmra.mxu0 %v250
        %v401 = vpop.f32.mrf.mxu0
        %v402 = vadd.f32 %v243, %v401
        %v403 = vpop.f32.mrf.mxu0
        %v404 = vadd.f32 %v243, %v403
        %405 = vdwg.mxu0
        %406 = vst [vmem:[%s222] sm:$0xff] %v319
        %407 = vst [vmem:[%s222 + $0x8] sm:$0xff] %v321
        %408 = vst [vmem:[%s222 + $0x10] sm:$0xff] %v396
        %409 = vst [vmem:[%s222 + $0x18] sm:$0xff] %v398
        %410 = vst [vmem:[%s222 + $0x20] sm:$0xff] %v325
        %411 = vst [vmem:[%s222 + $0x28] sm:$0xff] %v327
        %412 = vst [vmem:[%s222 + $0x30] sm:$0xff] %v402
        %413 = vst [vmem:[%s222 + $0x38] sm:$0xff] %v404
        %v414 = vlaneseq
        %v415 = vshrl.u32 %v414, 7
        %v416 = vadd.s32 %v415, 8
        %v417 = vmax.f32 %v319, %v325
        %v418 = vrot.slane %v417, 4
        %v419 = vmax.f32 %v417, %v418
        %v420 = vrot.slane %v419, 2
        %v421 = vmax.f32 %v419, %v420
        %v422 = vrot.slane %v421, 1
        %v423 = vmax.f32 %v421, %v422
        %v424 = vmax.f32 %v321, %v327
        %v425 = vrot.slane %v424, 4
        %v426 = vmax.f32 %v424, %v425
        %v427 = vrot.slane %v426, 2
        %v428 = vmax.f32 %v426, %v427
        %v429 = vrot.slane %v428, 1
        %v430 = vmax.f32 %v428, %v429
        %v431 = vmax.f32 %v396, %v402
        %v432 = vrot.slane %v431, 4
        %v433 = vmax.f32 %v431, %v432
        %v434 = vrot.slane %v433, 2
        %v435 = vmax.f32 %v433, %v434
        %v436 = vrot.slane %v435, 1
        %v437 = vmax.f32 %v435, %v436
        %v438 = vmax.f32 %v398, %v404
        %v439 = vrot.slane %v438, 4
        %v440 = vmax.f32 %v438, %v439
        %v441 = vrot.slane %v440, 2
        %v442 = vmax.f32 %v440, %v441
        %v443 = vrot.slane %v442, 1
        %v444 = vmax.f32 %v442, %v443
        %vm445 = vcmp.eq.f32.partialorder %v319, %v423
        %vm446 = vcmp.eq.f32.partialorder %v321, %v430
        %vm447 = vcmp.eq.f32.partialorder %v396, %v437
        %vm448 = vcmp.eq.f32.partialorder %v398, %v444
        %vm449 = vcmp.eq.f32.partialorder %v325, %v423
        %vm450 = vcmp.eq.f32.partialorder %v327, %v430
        %vm451 = vcmp.eq.f32.partialorder %v402, %v437
        %vm452 = vcmp.eq.f32.partialorder %v404, %v444
        %v453 = vsel %vm445, %v415, 16
        %v454 = vsel %vm446, %v415, 16
        %v455 = vsel %vm447, %v415, 16
        %v456 = vsel %vm448, %v415, 16
        %v457 = vsel %vm449, %v416, 16
        %v458 = vsel %vm450, %v416, 16
        %v459 = vsel %vm451, %v416, 16
        %v460 = vsel %vm452, %v416, 16
        %vm461 = vcmp.lt.s32.totalorder %v453, %v457
        %v462 = vsel %vm461, %v453, %v457
        %v463 = vrot.slane %v462, 4
        %vm464 = vcmp.lt.s32.totalorder %v462, %v463
        %v465 = vsel %vm464, %v462, %v463
        %v466 = vrot.slane %v465, 2
        %vm467 = vcmp.lt.s32.totalorder %v465, %v466
        %v468 = vsel %vm467, %v465, %v466
        %v469 = vrot.slane %v468, 1
        %vm470 = vcmp.lt.s32.totalorder %v468, %v469
        %v471 = vsel %vm470, %v468, %v469
        %vm472 = vcmp.lt.s32.totalorder %v454, %v458
        %v473 = vsel %vm472, %v454, %v458
        %v474 = vrot.slane %v473, 4
        %vm475 = vcmp.lt.s32.totalorder %v473, %v474
        %v476 = vsel %vm475, %v473, %v474
        %v477 = vrot.slane %v476, 2
        %vm478 = vcmp.lt.s32.totalorder %v476, %v477
        %v479 = vsel %vm478, %v476, %v477
        %v480 = vrot.slane %v479, 1
        %vm481 = vcmp.lt.s32.totalorder %v479, %v480
        %v482 = vsel %vm481, %v479, %v480
        %vm483 = vcmp.lt.s32.totalorder %v455, %v459
        %v484 = vsel %vm483, %v455, %v459
        %v485 = vrot.slane %v484, 4
        %vm486 = vcmp.lt.s32.totalorder %v484, %v485
        %v487 = vsel %vm486, %v484, %v485
        %v488 = vrot.slane %v487, 2
        %vm489 = vcmp.lt.s32.totalorder %v487, %v488
        %v490 = vsel %vm489, %v487, %v488
        %v491 = vrot.slane %v490, 1
        %vm492 = vcmp.lt.s32.totalorder %v490, %v491
        %v493 = vsel %vm492, %v490, %v491
        %vm494 = vcmp.lt.s32.totalorder %v456, %v460
        %v495 = vsel %vm494, %v456, %v460
        %v496 = vrot.slane %v495, 4
        %vm497 = vcmp.lt.s32.totalorder %v495, %v496
        %v498 = vsel %vm497, %v495, %v496
        %v499 = vrot.slane %v498, 2
        %vm500 = vcmp.lt.s32.totalorder %v498, %v499
        %v501 = vsel %vm500, %v498, %v499
        %v502 = vrot.slane %v501, 1
        %vm503 = vcmp.lt.s32.totalorder %v501, %v502
        %v504 = vsel %vm503, %v501, %v502
        %v505 = vcombine.low %v471, %v482
        %v506 = vcombine.low %v493, %v504
        %v508 = vunpack.c.l.s4 1966171168
        %v509 = vunpack.c.0.s8 %v508
        %v510 = vlaneseq
        %v511 = vshrl.u32 %v510, 7
        %v512 = vsub.s32 %v509, %v511
        %v513 = vrot.slane %v505, %v512
        %v515 = vunpack.c.l.s4 1966171168
        %v516 = vunpack.c.0.s8 %v515
        %v517 = vlaneseq
        %v518 = vshrl.u32 %v517, 7
        %v519 = vsub.s32 %v516, %v518
        %v520 = vrot.slane %v506, %v519
        %v521 = vcombine.low %v513, %v520
        %v523 = vunpack.c.l.s4 1966171168
        %v524 = vunpack.c.0.s8 %v523
        %v525 = vlaneseq
        %v526 = vshrl.u32 %v525, 7
        %v527 = vsub.s32 %v524, %v526
        %v528 = vrot.slane %v521, %v527
        %v529 = vlaneseq
        %vm530 = vcmp.ge.s32.totalorder %v529, 0
        %vm531 = vcmp.lt.s32.totalorder %v529, 512
        %vm532 = vmand %vm530, %vm531
        %533 = vst.msk [vmem:[%s226] sm:$0xf] %vm532, %v528
        %p534 = scmp.lt.s32.totalorder %s19, 1
        %s535 = scalar_select %p534, %s19, 1
        %s536 = smul.addr %s535, 8
        %s537 = smul.addr %s536, 8
        %s538 = scalar_lea.vmem %s3, %s537
        %p539 = scmp.lt.s32.totalorder %s19, 1
        %s540 = scalar_select %p539, %s19, 1
        %s541 = smul.addr %s540, 4
        %s542 = scalar_lea.vmem %s4, %s541
        // Predicated region
        $region37: #{softpool_forward.2} parent=31 // pred_check
          %p543 = pneg %p105
        $region38: #{softpool_forward.2} parent=31 // pred_check_branch
          %545 = sbr.rel (%p543) target = $region40
        $region39: #{softpool_forward.2} parent=31 // pred_region
          _
        $region40: #{softpool_forward.2} parent=31 // pred_fallthru
          _
        // Predicated region
        $region41: #{softpool_forward.2} parent=31 // pred_check
          %p546 = pneg %p131
        $region42: #{softpool_forward.2} parent=31 // pred_check_branch
          %548 = sbr.rel (%p546) target = $region44
        $region43: #{softpool_forward.2} parent=31 // pred_region
          _
        $region44: #{softpool_forward.2} parent=31 // pred_fallthru
          _
      $region32: #{softpool_forward.2} parent=5 // pred_fallthru
        _
      %p549 = scmp.le.s32.totalorder 2, %s14
      // Predicated region
      $region45: #{softpool_forward.2} parent=5 // pred_check
        %p550 = pneg %p549
      $region46: #{softpool_forward.2} parent=5 // pred_check_branch
        %552 = sbr.rel (%p550) target = $region48
      $region47: #{softpool_forward.2} parent=5 // pred_region
        %s553 = ssub.s32 %s14, 2
        // Predicated region
        $region49: #{softpool_forward.2} parent=47 // pred_check
          %p554 = pneg %p111
        $region50: #{softpool_forward.2} parent=47 // pred_check_branch
          %556 = sbr.rel (%p554) target = $region52
        $region51: #{softpool_forward.2} parent=47 // pred_region
          %p557 = scmp.lt.s32.totalorder %s20, 1
          %s558 = scalar_select %p557, %s20, 1
          %s559 = smul.addr %s558, 8
          %s560 = smul.addr %s559, 8
          %s561 = scalar_lea.vmem %s3, %s560
        $region52: #{softpool_forward.2} parent=47 // pred_fallthru
          _
        // Predicated region
        $region53: #{softpool_forward.2} parent=47 // pred_check
          %p562 = pneg %p137
        $region54: #{softpool_forward.2} parent=47 // pred_check_branch
          %564 = sbr.rel (%p562) target = $region56
        $region55: #{softpool_forward.2} parent=47 // pred_region
          %p565 = scmp.lt.s32.totalorder %s20, 1
          %s566 = scalar_select %p565, %s20, 1
          %s567 = smul.addr %s566, 4
          %s568 = scalar_lea.vmem %s4, %s567
        $region56: #{softpool_forward.2} parent=47 // pred_fallthru
          _
      $region48: #{softpool_forward.2} parent=5 // pred_fallthru
        _
    $region6: #{softpool_forward.2} parent=1 // loop_footer
      %s18 = sadd.s32 1, %s14
    $region7: #{softpool_forward.2} parent=1 // loop_footer_branch
      %13 = sbr.rel target = $region3
    $region8: #{softpool_forward.2} parent=1 // loop_exit
      _
    %569 = vsyncpa [#allocation3], 1
    %s570 = scalar_lea.sflag [#allocation3], 1
    %571 = vsyncpa %s570, 1

// kernel: softpool_forward.3
$region0: #{softpool_forward.3}
  #allocation0 [shape = 'u32[]', space=smem, size = 0x4, offset = 0x4, fixed_abs, tag = 'smem constant byte address 0x4 - core index']
  #allocation1 [shape = 'u32[144,128]{1,0:T(1,128)}', space=vmem, size = 0x12000, scoped, tag = 'internal scratch']
  %s0 = inlined_call_operand.vmem [shape: f32[2,8,512], index: 0, kind: input, shape index: {}]
  %s1 = inlined_call_operand.vmem [shape: s32[2,1,2048], index: 1, kind: input, shape index: {}]
  %s2 = inlined_call_operand.vmem [shape: f32[2,8,2048], index: 2, kind: output, shape index: {0}]
  %s3 = inlined_call_operand.vmem [shape: f32[2,8,128], index: 3, kind: output, shape index: {1}]
  %4 = xla_tuple %s2, %s3
  %s5 = sld [smem:[#allocation0]]
  $region49: #{softpool_forward.3} parent=0
    _
  %s7 = ssub.s32 1, %s5
  %s8 = scalar_select 0, %s7, %s5
  loop: start=0, step=1, limit=4
  $region2: #{softpool_forward.3} parent=0 // loop_pre_header
    _
  $region3: #{softpool_forward.3} parent=0 // loop_header
    %s10 = sphi 0, %s14
    %p11 = scmp.ge.s32.totalorder %s10, 4
    %s20 = sphi 0, %s22
    %s23 = sphi 0, %s20
    %s24 = sphi 0, %s23
    %s40 = sphi 0, %s24
    %s46 = sphi 0, %s48
    %s49 = sphi 0, %s46
    %s50 = sphi 0, %s49
    %s66 = sphi 0, %s50
    %s72 = sphi 0, %s74
    %s75 = sphi 0, %s72
    %s76 = sphi 0, %s75
    %s92 = sphi 0, %s76
    %s98 = sphi 0, %s100
    %s101 = sphi 0, %s98
    %s102 = sphi 0, %s101
    %s118 = sphi 0, %s102
  $region4: #{softpool_forward.3} parent=0 // loop_header_branch
    %13 = sbr.rel (%p11) target = $region8
  $region5: #{softpool_forward.3} parent=0 // loop_body
    %s15 = ssub.s32 %s10, 1
    %s16 = ssub.s32 %s10, 2
    %s17 = sadd.s32 %s10, 1
    %s18 = ssub.s32 %s10, %s17
    %p19 = scmp.eq.s32.totalorder %s18, 0
    %s21 = sadd.s32 %s20, 1
    %s22 = scalar_select %p19, %s20, %s21
    %p25 = pneg %p19
    %p26 = scmp.eq.s32.totalorder %s10, 1
    %p27 = por %p25, %p26
    %p28 = scmp.ne.s32.totalorder %s20, %s23
    %p29 = scmp.eq.s32.totalorder %s10, 0
    %p30 = por %p28, %p29
    %p31 = scmp.ne.s32.totalorder %s20, %s23
    %p32 = scmp.eq.s32.totalorder %s15, 1
    %p33 = por %p31, %p32
    %p34 = scmp.ne.s32.totalorder %s23, %s24
    %p35 = scmp.eq.s32.totalorder %s15, 0
    %p36 = por %p34, %p35
    %p37 = scmp.ne.s32.totalorder %s23, %s24
    %p38 = scmp.eq.s32.totalorder %s16, 1
    %p39 = por %p37, %p38
    %p41 = scmp.ne.s32.totalorder %s24, %s40
    %p42 = scmp.eq.s32.totalorder %s16, 0
    %p43 = por %p41, %p42
    %s44 = ssub.s32 %s10, %s17
    %p45 = scmp.eq.s32.totalorder %s44, 0
    %s47 = sadd.s32 %s46, 1
    %s48 = scalar_select %p45, %s46, %s47
    %p51 = pneg %p45
    %p52 = scmp.eq.s32.totalorder %s10, 1
    %p53 = por %p51, %p52
    %p54 = scmp.ne.s32.totalorder %s46, %s49
    %p55 = scmp.eq.s32.totalorder %s10, 0
    %p56 = por %p54, %p55
    %p57 = scmp.ne.s32.totalorder %s46, %s49
    %p58 = scmp.eq.s32.totalorder %s15, 1
    %p59 = por %p57, %p58
    %p60 = scmp.ne.s32.totalorder %s49, %s50
    %p61 = scmp.eq.s32.totalorder %s15, 0
    %p62 = por %p60, %p61
    %p63 = scmp.ne.s32.totalorder %s49, %s50
    %p64 = scmp.eq.s32.totalorder %s16, 1
    %p65 = por %p63, %p64
    %p67 = scmp.ne.s32.totalorder %s50, %s66
    %p68 = scmp.eq.s32.totalorder %s16, 0
    %p69 = por %p67, %p68
    %s70 = ssub.s32 %s10, %s17
    %p71 = scmp.eq.s32.totalorder %s70, 0
    %s73 = sadd.s32 %s72, 1
    %s74 = scalar_select %p71, %s72, %s73
    %p77 = pneg %p71
    %p78 = scmp.eq.s32.totalorder %s10, 1
    %p79 = por %p77, %p78
    %p80 = scmp.ne.s32.totalorder %s72, %s75
    %p81 = scmp.eq.s32.totalorder %s10, 0
    %p82 = por %p80, %p81
    %p83 = scmp.ne.s32.totalorder %s72, %s75
    %p84 = scmp.eq.s32.totalorder %s15, 1
    %p85 = por %p83, %p84
    %p86 = scmp.ne.s32.totalorder %s75, %s76
    %p87 = scmp.eq.s32.totalorder %s15, 0
    %p88 = por %p86, %p87
    %p89 = scmp.ne.s32.totalorder %s75, %s76
    %p90 = scmp.eq.s32.totalorder %s16, 1
    %p91 = por %p89, %p90
    %p93 = scmp.ne.s32.totalorder %s76, %s92
    %p94 = scmp.eq.s32.totalorder %s16, 0
    %p95 = por %p93, %p94
    %s96 = ssub.s32 %s10, %s17
    %p97 = scmp.eq.s32.totalorder %s96, 0
    %s99 = sadd.s32 %s98, 1
    %s100 = scalar_select %p97, %s98, %s99
    %p103 = pneg %p97
    %p104 = scmp.eq.s32.totalorder %s10, 1
    %p105 = por %p103, %p104
    %p106 = scmp.ne.s32.totalorder %s98, %s101
    %p107 = scmp.eq.s32.totalorder %s10, 0
    %p108 = por %p106, %p107
    %p109 = scmp.ne.s32.totalorder %s98, %s101
    %p110 = scmp.eq.s32.totalorder %s15, 1
    %p111 = por %p109, %p110
    %p112 = scmp.ne.s32.totalorder %s101, %s102
    %p113 = scmp.eq.s32.totalorder %s15, 0
    %p114 = por %p112, %p113
    %p115 = scmp.ne.s32.totalorder %s101, %s102
    %p116 = scmp.eq.s32.totalorder %s16, 1
    %p117 = por %p115, %p116
    %p119 = scmp.ne.s32.totalorder %s102, %s118
    %p120 = scmp.eq.s32.totalorder %s16, 0
    %p121 = por %p119, %p120
    %p122 = scmp.le.s32.totalorder 1, %s10
    %p123 = scmp.lt.s32.totalorder %s10, 3
    %p124 = pnand %p122, %p123
    %p125 = pneg %p124
    // Predicated region
    $region9: #{softpool_forward.3} parent=5 // pred_check
      _
    $region10: #{softpool_forward.3} parent=5 // pred_check_branch
      %127 = sbr.rel (%p124) target = $region12
    $region11: #{softpool_forward.3} parent=5 // pred_region
      %s128 = ssub.s32 %s10, 1
    $region12: #{softpool_forward.3} parent=5 // pred_fallthru
      _
    %p129 = scmp.lt.s32.totalorder %s10, 2
    // Predicated region
    $region13: #{softpool_forward.3} parent=5 // pred_check
      %p130 = pneg %p129
    $region14: #{softpool_forward.3} parent=5 // pred_check_branch
      %132 = sbr.rel (%p130) target = $region16
    $region15: #{softpool_forward.3} parent=5 // pred_region
      // Predicated region
      $region17: #{softpool_forward.3} parent=15 // pred_check
        %p133 = pneg %p30
      $region18: #{softpool_forward.3} parent=15 // pred_check_branch
        %135 = sbr.rel (%p133) target = $region20
      $region19: #{softpool_forward.3} parent=15 // pred_region
        %p136 = scmp.lt.s32.totalorder %s10, 1
        %s137 = scalar_select %p136, %s10, 1
        %s138 = smul.addr %s137, 4
        %s139 = smul.addr %s138, 8
        %s140 = scalar_lea.vmem %s0, %s139
      $region20: #{softpool_forward.3} parent=15 // pred_fallthru
        _
      // Predicated region
      $region21: #{softpool_forward.3} parent=15 // pred_check
        %p141 = pneg %p56
      $region22: #{softpool_forward.3} parent=15 // pred_check_branch
        %143 = sbr.rel (%p141) target = $region24
      $region23: #{softpool_forward.3} parent=15 // pred_region
        %p144 = scmp.lt.s32.totalorder %s10, 1
        %s145 = scalar_select %p144, %s10, 1
        %s146 = smul.addr %s145, 16
        %s147 = scalar_lea.vmem %s1, %s146
      $region24: #{softpool_forward.3} parent=15 // pred_fallthru
        _
    $region16: #{softpool_forward.3} parent=5 // pred_fallthru
      _
    %p148 = scmp.le.s32.totalorder 1, %s10
    %p149 = scmp.lt.s32.totalorder %s10, 3
    %p150 = pnand %p148, %p149
    %p151 = pneg %p150
    // Predicated region
    $region25: #{softpool_forward.3} parent=5 // pred_check
      _
    $region26: #{softpool_forward.3} parent=5 // pred_check_branch
      %153 = sbr.rel (%p150) target = $region28
    $region27: #{softpool_forward.3} parent=5 // pred_region
      %s154 = ssub.s32 %s10, 1
      %p155 = scmp.lt.s32.totalorder %s15, 1
      %s156 = scalar_select %p155, %s15, 1
      %s157 = smul.addr %s156, 4
      %s158 = smul.addr %s157, 8
      %s159 = scalar_lea.vmem %s0, %s158
      %p160 = pneg %p36
      %p161 = pneg %p33
      %p162 = scmp.lt.s32.totalorder %s15, 1
      %s163 = scalar_select %p162, %s15, 1
      %s164 = smul.addr %s163, 16
      %s165 = scalar_lea.vmem %s1, %s164
      %p166 = pneg %p62
      %p167 = pneg %p59
      %p168 = pneg %p88
      %p169 = pneg %p85
      %p170 = scmp.lt.s32.totalorder %s15, 1
      %s171 = scalar_select %p170, %s15, 1
      %s172 = smul.addr %s171, 16
      %s173 = smul.addr %s172, 8
      %s174 = scalar_lea.vmem %s2, %s173
      %p175 = pneg %p114
      %p176 = pneg %p111
      %p177 = scmp.lt.s32.totalorder %s15, 1
      %s178 = scalar_select %p177, %s15, 1
      %s179 = smul.addr %s178, 8
      %s180 = scalar_lea.vmem %s3, %s179
      %p181 = scmp.lt.s32.totalorder %s15, 1
      %s182 = scalar_select %p181, %s15, 1
      %s183 = smul.addr %s182, 4
      %s184 = smul.addr %s183, 8
      %s185 = scalar_lea.vmem %s0, %s184
      %p186 = scmp.lt.s32.totalorder %s15, 1
      %s187 = scalar_select %p186, %s15, 1
      %s188 = smul.addr %s187, 16
      %s189 = scalar_lea.vmem %s1, %s188
      %p190 = scmp.lt.s32.totalorder %s15, 1
      %s191 = scalar_select %p190, %s15, 1
      %s192 = smul.addr %s191, 16
      %s193 = smul.addr %s192, 8
      %s194 = scalar_lea.vmem %s2, %s193
      %p195 = scmp.lt.s32.totalorder %s15, 1
      %s196 = scalar_select %p195, %s15, 1
      %s197 = smul.addr %s196, 8
      %s198 = scalar_lea.vmem %s3, %s197
      %v199 = vld [vmem:[%s185] sm:$0xff]
      %v200 = vld [vmem:[%s185 + $0x8] sm:$0xff]
      %v201 = vld [vmem:[%s185 + $0x10] sm:$0xff]
      %v202 = vld [vmem:[%s185 + $0x18] sm:$0xff]
      %v203 = vld [vmem:[%s189] sm:$0xff]
      %v204 = vld [vmem:[%s189 + $0x8] sm:$0xff]
      %v205 = vlaneseq
      %v206 = vshrl.u32 %v205, 7
      %v207 = vadd.s32 %v206, 8
      %v208 = vadd.s32 %v206, 16
      %v209 = vadd.s32 %v206, 24
      %v210 = vadd.s32 %v206, 32
      %v211 = vadd.s32 %v206, 40
      %v212 = vadd.s32 %v206, 48
      %v213 = vadd.s32 %v206, 56
      %v214 = vadd.s32 %v206, 64
      %v215 = vadd.s32 %v206, 72
      %v216 = vadd.s32 %v206, 80
      %v217 = vadd.s32 %v206, 88
      %v218 = vadd.s32 %v206, 96
      %v219 = vadd.s32 %v206, 104
      %v220 = vadd.s32 %v206, 112
      %v221 = vadd.s32 %v206, 120
      %v222 = vadd.s32 %v206, 128
      %v223 = vadd.s32 %v206, 136
      %v224 = vadd.s32 %v206, 144
      %v225 = vadd.s32 %v206, 152
      %v226 = vadd.s32 %v206, 160
      %v227 = vadd.s32 %v206, 168
      %v228 = vadd.s32 %v206, 176
      %v229 = vadd.s32 %v206, 184
      %v230 = vadd.s32 %v206, 192
      %v231 = vadd.s32 %v206, 200
      %v232 = vadd.s32 %v206, 208
      %v233 = vadd.s32 %v206, 216
      %v234 = vadd.s32 %v206, 224
      %v235 = vadd.s32 %v206, 232
      %v236 = vadd.s32 %v206, 240
      %v237 = vadd.s32 %v206, 248
      %v238 = vadd.s32 %v206, 256
      %v239 = vadd.s32 %v206, 264
      %v240 = vadd.s32 %v206, 272
      %v241 = vadd.s32 %v206, 280
      %v242 = vadd.s32 %v206, 288
      %v243 = vadd.s32 %v206, 296
      %v244 = vadd.s32 %v206, 304
      %v245 = vadd.s32 %v206, 312
      %v246 = vadd.s32 %v206, 320
      %v247 = vadd.s32 %v206, 328
      %v248 = vadd.s32 %v206, 336
      %v249 = vadd.s32 %v206, 344
      %v250 = vadd.s32 %v206, 352
      %v251 = vadd.s32 %v206, 360
      %v252 = vadd.s32 %v206, 368
      %v253 = vadd.s32 %v206, 376
      %v254 = vadd.s32 %v206, 384
      %v255 = vadd.s32 %v206, 392
      %v256 = vadd.s32 %v206, 400
      %v257 = vadd.s32 %v206, 408
      %v258 = vadd.s32 %v206, 416
      %v259 = vadd.s32 %v206, 424
      %v260 = vadd.s32 %v206, 432
      %v261 = vadd.s32 %v206, 440
      %v262 = vadd.s32 %v206, 448
      %v263 = vadd.s32 %v206, 456
      %v264 = vadd.s32 %v206, 464
      %v265 = vadd.s32 %v206, 472
      %v266 = vadd.s32 %v206, 480
      %v267 = vadd.s32 %v206, 488
      %v268 = vadd.s32 %v206, 496
      %v269 = vadd.s32 %v206, 504
      %v270 = vlaneseq
      %v271 = vshrl.u32 %v270, 7
      %v272 = vsub.s32 0, %v271
      %v273 = vrot.slane %v203, %v272
      %v274 = vlaneseq
      %v275 = vshrl.u32 %v274, 7
      %v276 = vsub.s32 1, %v275
      %v277 = vrot.slane %v203, %v276
      %v278 = vlaneseq
      %v279 = vshrl.u32 %v278, 7
      %v280 = vsub.s32 2, %v279
      %v281 = vrot.slane %v203, %v280
      %v282 = vlaneseq
      %v283 = vshrl.u32 %v282, 7
      %v284 = vsub.s32 3, %v283
      %v285 = vrot.slane %v203, %v284
      %v286 = vlaneseq
      %v287 = vshrl.u32 %v286, 7
      %v288 = vsub.s32 4, %v287
      %v289 = vrot.slane %v203, %v288
      %v290 = vlaneseq
      %v291 = vshrl.u32 %v290, 7
      %v292 = vsub.s32 5, %v291
      %v293 = vrot.slane %v203, %v292
      %v294 = vlaneseq
      %v295 = vshrl.u32 %v294, 7
      %v296 = vsub.s32 6, %v295
      %v297 = vrot.slane %v203, %v296
      %v298 = vlaneseq
      %v299 = vshrl.u32 %v298, 7
      %v300 = vsub.s32 7, %v299
      %v301 = vrot.slane %v203, %v300
      %v302 = vlaneseq
      %v303 = vshrl.u32 %v302, 7
      %v304 = vsub.s32 0, %v303
      %v305 = vrot.slane %v204, %v304
      %v306 = vlaneseq
      %v307 = vshrl.u32 %v306, 7
      %v308 = vsub.s32 1, %v307
      %v309 = vrot.slane %v204, %v308
      %v310 = vlaneseq
      %v311 = vshrl.u32 %v310, 7
      %v312 = vsub.s32 2, %v311
      %v313 = vrot.slane %v204, %v312
      %v314 = vlaneseq
      %v315 = vshrl.u32 %v314, 7
      %v316 = vsub.s32 3, %v315
      %v317 = vrot.slane %v204, %v316
      %v318 = vlaneseq
      %v319 = vshrl.u32 %v318, 7
      %v320 = vsub.s32 4, %v319
      %v321 = vrot.slane %v204, %v320
      %v322 = vlaneseq
      %v323 = vshrl.u32 %v322, 7
      %v324 = vsub.s32 5, %v323
      %v325 = vrot.slane %v204, %v324
      %v326 = vlaneseq
      %v327 = vshrl.u32 %v326, 7
      %v328 = vsub.s32 6, %v327
      %v329 = vrot.slane %v204, %v328
      %v330 = vlaneseq
      %v331 = vshrl.u32 %v330, 7
      %v332 = vsub.s32 7, %v331
      %v333 = vrot.slane %v204, %v332
      %vm334 = vcmp.eq.s32.totalorder %v206, %v273
      %vm335 = vcmp.eq.s32.totalorder %v206, %v277
      %vm336 = vcmp.eq.s32.totalorder %v206, %v281
      %vm337 = vcmp.eq.s32.totalorder %v206, %v285
      %vm338 = vcmp.eq.s32.totalorder %v206, %v289
      %vm339 = vcmp.eq.s32.totalorder %v206, %v293
      %vm340 = vcmp.eq.s32.totalorder %v206, %v297
      %vm341 = vcmp.eq.s32.totalorder %v206, %v301
      %vm342 = vcmp.eq.s32.totalorder %v206, %v305
      %vm343 = vcmp.eq.s32.totalorder %v206, %v309
      %vm344 = vcmp.eq.s32.totalorder %v206, %v313
      %vm345 = vcmp.eq.s32.totalorder %v206, %v317
      %vm346 = vcmp.eq.s32.totalorder %v206, %v321
      %vm347 = vcmp.eq.s32.totalorder %v206, %v325
      %vm348 = vcmp.eq.s32.totalorder %v206, %v329
      %vm349 = vcmp.eq.s32.totalorder %v206, %v333
      %vm350 = vcmp.eq.s32.totalorder %v207, %v273
      %vm351 = vcmp.eq.s32.totalorder %v207, %v277
      %vm352 = vcmp.eq.s32.totalorder %v207, %v281
      %vm353 = vcmp.eq.s32.totalorder %v207, %v285
      %vm354 = vcmp.eq.s32.totalorder %v207, %v289
      %vm355 = vcmp.eq.s32.totalorder %v207, %v293
      %vm356 = vcmp.eq.s32.totalorder %v207, %v297
      %vm357 = vcmp.eq.s32.totalorder %v207, %v301
      %vm358 = vcmp.eq.s32.totalorder %v207, %v305
      %vm359 = vcmp.eq.s32.totalorder %v207, %v309
      %vm360 = vcmp.eq.s32.totalorder %v207, %v313
      %vm361 = vcmp.eq.s32.totalorder %v207, %v317
      %vm362 = vcmp.eq.s32.totalorder %v207, %v321
      %vm363 = vcmp.eq.s32.totalorder %v207, %v325
      %vm364 = vcmp.eq.s32.totalorder %v207, %v329
      %vm365 = vcmp.eq.s32.totalorder %v207, %v333
      %vm366 = vcmp.eq.s32.totalorder %v208, %v273
      %vm367 = vcmp.eq.s32.totalorder %v208, %v277
      %vm368 = vcmp.eq.s32.totalorder %v208, %v281
      %vm369 = vcmp.eq.s32.totalorder %v208, %v285
      %vm370 = vcmp.eq.s32.totalorder %v208, %v289
      %vm371 = vcmp.eq.s32.totalorder %v208, %v293
      %vm372 = vcmp.eq.s32.totalorder %v208, %v297
      %vm373 = vcmp.eq.s32.totalorder %v208, %v301
      %vm374 = vcmp.eq.s32.totalorder %v208, %v305
      %vm375 = vcmp.eq.s32.totalorder %v208, %v309
      %vm376 = vcmp.eq.s32.totalorder %v208, %v313
      %vm377 = vcmp.eq.s32.totalorder %v208, %v317
      %vm378 = vcmp.eq.s32.totalorder %v208, %v321
      %vm379 = vcmp.eq.s32.totalorder %v208, %v325
      %vm380 = vcmp.eq.s32.totalorder %v208, %v329
      %vm381 = vcmp.eq.s32.totalorder %v208, %v333
      %vm382 = vcmp.eq.s32.totalorder %v209, %v273
      %vm383 = vcmp.eq.s32.totalorder %v209, %v277
      %vm384 = vcmp.eq.s32.totalorder %v209, %v281
      %vm385 = vcmp.eq.s32.totalorder %v209, %v285
      %vm386 = vcmp.eq.s32.totalorder %v209, %v289
      %vm387 = vcmp.eq.s32.totalorder %v209, %v293
      %vm388 = vcmp.eq.s32.totalorder %v209, %v297
      %vm389 = vcmp.eq.s32.totalorder %v209, %v301
      %vm390 = vcmp.eq.s32.totalorder %v209, %v305
      %vm391 = vcmp.eq.s32.totalorder %v209, %v309
      %vm392 = vcmp.eq.s32.totalorder %v209, %v313
      %vm393 = vcmp.eq.s32.totalorder %v209, %v317
      %vm394 = vcmp.eq.s32.totalorder %v209, %v321
      %vm395 = vcmp.eq.s32.totalorder %v209, %v325
      %vm396 = vcmp.eq.s32.totalorder %v209, %v329
      %vm397 = vcmp.eq.s32.totalorder %v209, %v333
      %vm398 = vcmp.eq.s32.totalorder %v210, %v273
      %vm399 = vcmp.eq.s32.totalorder %v210, %v277
      %vm400 = vcmp.eq.s32.totalorder %v210, %v281
      %vm401 = vcmp.eq.s32.totalorder %v210, %v285
      %vm402 = vcmp.eq.s32.totalorder %v210, %v289
      %vm403 = vcmp.eq.s32.totalorder %v210, %v293
      %vm404 = vcmp.eq.s32.totalorder %v210, %v297
      %vm405 = vcmp.eq.s32.totalorder %v210, %v301
      %vm406 = vcmp.eq.s32.totalorder %v210, %v305
      %vm407 = vcmp.eq.s32.totalorder %v210, %v309
      %vm408 = vcmp.eq.s32.totalorder %v210, %v313
      %vm409 = vcmp.eq.s32.totalorder %v210, %v317
      %vm410 = vcmp.eq.s32.totalorder %v210, %v321
      %vm411 = vcmp.eq.s32.totalorder %v210, %v325
      %vm412 = vcmp.eq.s32.totalorder %v210, %v329
      %vm413 = vcmp.eq.s32.totalorder %v210, %v333
      %vm414 = vcmp.eq.s32.totalorder %v211, %v273
      %vm415 = vcmp.eq.s32.totalorder %v211, %v277
      %vm416 = vcmp.eq.s32.totalorder %v211, %v281
      %vm417 = vcmp.eq.s32.totalorder %v211, %v285
      %vm418 = vcmp.eq.s32.totalorder %v211, %v289
      %vm419 = vcmp.eq.s32.totalorder %v211, %v293
      %vm420 = vcmp.eq.s32.totalorder %v211, %v297
      %vm421 = vcmp.eq.s32.totalorder %v211, %v301
      %vm422 = vcmp.eq.s32.totalorder %v211, %v305
      %vm423 = vcmp.eq.s32.totalorder %v211, %v309
      %vm424 = vcmp.eq.s32.totalorder %v211, %v313
      %vm425 = vcmp.eq.s32.totalorder %v211, %v317
      %vm426 = vcmp.eq.s32.totalorder %v211, %v321
      %vm427 = vcmp.eq.s32.totalorder %v211, %v325
      %vm428 = vcmp.eq.s32.totalorder %v211, %v329
      %vm429 = vcmp.eq.s32.totalorder %v211, %v333
      %vm430 = vcmp.eq.s32.totalorder %v212, %v273
      %vm431 = vcmp.eq.s32.totalorder %v212, %v277
      %vm432 = vcmp.eq.s32.totalorder %v212, %v281
      %vm433 = vcmp.eq.s32.totalorder %v212, %v285
      %vm434 = vcmp.eq.s32.totalorder %v212, %v289
      %vm435 = vcmp.eq.s32.totalorder %v212, %v293
      %vm436 = vcmp.eq.s32.totalorder %v212, %v297
      %vm437 = vcmp.eq.s32.totalorder %v212, %v301
      %vm438 = vcmp.eq.s32.totalorder %v212, %v305
      %vm439 = vcmp.eq.s32.totalorder %v212, %v309
      %vm440 = vcmp.eq.s32.totalorder %v212, %v313
      %vm441 = vcmp.eq.s32.totalorder %v212, %v317
      %vm442 = vcmp.eq.s32.totalorder %v212, %v321
      %vm443 = vcmp.eq.s32.totalorder %v212, %v325
      %vm444 = vcmp.eq.s32.totalorder %v212, %v329
      %vm445 = vcmp.eq.s32.totalorder %v212, %v333
      %vm446 = vcmp.eq.s32.totalorder %v213, %v273
      %vm447 = vcmp.eq.s32.totalorder %v213, %v277
      %vm448 = vcmp.eq.s32.totalorder %v213, %v281
      %vm449 = vcmp.eq.s32.totalorder %v213, %v285
      %vm450 = vcmp.eq.s32.totalorder %v213, %v289
      %vm451 = vcmp.eq.s32.totalorder %v213, %v293
      %vm452 = vcmp.eq.s32.totalorder %v213, %v297
      %vm453 = vcmp.eq.s32.totalorder %v213, %v301
      %vm454 = vcmp.eq.s32.totalorder %v213, %v305
      %vm455 = vcmp.eq.s32.totalorder %v213, %v309
      %vm456 = vcmp.eq.s32.totalorder %v213, %v313
      %vm457 = vcmp.eq.s32.totalorder %v213, %v317
      %vm458 = vcmp.eq.s32.totalorder %v213, %v321
      %vm459 = vcmp.eq.s32.totalorder %v213, %v325
      %vm460 = vcmp.eq.s32.totalorder %v213, %v329
      %vm461 = vcmp.eq.s32.totalorder %v213, %v333
      %vm462 = vcmp.eq.s32.totalorder %v214, %v273
      %vm463 = vcmp.eq.s32.totalorder %v214, %v277
      %vm464 = vcmp.eq.s32.totalorder %v214, %v281
      %vm465 = vcmp.eq.s32.totalorder %v214, %v285
      %vm466 = vcmp.eq.s32.totalorder %v214, %v289
      %vm467 = vcmp.eq.s32.totalorder %v214, %v293
      %vm468 = vcmp.eq.s32.totalorder %v214, %v297
      %vm469 = vcmp.eq.s32.totalorder %v214, %v301
      %vm470 = vcmp.eq.s32.totalorder %v214, %v305
      %vm471 = vcmp.eq.s32.totalorder %v214, %v309
      %vm472 = vcmp.eq.s32.totalorder %v214, %v313
      %vm473 = vcmp.eq.s32.totalorder %v214, %v317
      %vm474 = vcmp.eq.s32.totalorder %v214, %v321
      %vm475 = vcmp.eq.s32.totalorder %v214, %v325
      %vm476 = vcmp.eq.s32.totalorder %v214, %v329
      %vm477 = vcmp.eq.s32.totalorder %v214, %v333
      %vm478 = vcmp.eq.s32.totalorder %v215, %v273
      %vm479 = vcmp.eq.s32.totalorder %v215, %v277
      %vm480 = vcmp.eq.s32.totalorder %v215, %v281
      %vm481 = vcmp.eq.s32.totalorder %v215, %v285
      %vm482 = vcmp.eq.s32.totalorder %v215, %v289
      %vm483 = vcmp.eq.s32.totalorder %v215, %v293
      %vm484 = vcmp.eq.s32.totalorder %v215, %v297
      %vm485 = vcmp.eq.s32.totalorder %v215, %v301
      %vm486 = vcmp.eq.s32.totalorder %v215, %v305
      %vm487 = vcmp.eq.s32.totalorder %v215, %v309
      %vm488 = vcmp.eq.s32.totalorder %v215, %v313
      %vm489 = vcmp.eq.s32.totalorder %v215, %v317
      %vm490 = vcmp.eq.s32.totalorder %v215, %v321
      %vm491 = vcmp.eq.s32.totalorder %v215, %v325
      %vm492 = vcmp.eq.s32.totalorder %v215, %v329
      %vm493 = vcmp.eq.s32.totalorder %v215, %v333
      %vm494 = vcmp.eq.s32.totalorder %v216, %v273
      %vm495 = vcmp.eq.s32.totalorder %v216, %v277
      %vm496 = vcmp.eq.s32.totalorder %v216, %v281
      %vm497 = vcmp.eq.s32.totalorder %v216, %v285
      %vm498 = vcmp.eq.s32.totalorder %v216, %v289
      %vm499 = vcmp.eq.s32.totalorder %v216, %v293
      %vm500 = vcmp.eq.s32.totalorder %v216, %v297
      %vm501 = vcmp.eq.s32.totalorder %v216, %v301
      %vm502 = vcmp.eq.s32.totalorder %v216, %v305
      %vm503 = vcmp.eq.s32.totalorder %v216, %v309
      %vm504 = vcmp.eq.s32.totalorder %v216, %v313
      %vm505 = vcmp.eq.s32.totalorder %v216, %v317
      %vm506 = vcmp.eq.s32.totalorder %v216, %v321
      %vm507 = vcmp.eq.s32.totalorder %v216, %v325
      %vm508 = vcmp.eq.s32.totalorder %v216, %v329
      %vm509 = vcmp.eq.s32.totalorder %v216, %v333
      %vm510 = vcmp.eq.s32.totalorder %v217, %v273
      %vm511 = vcmp.eq.s32.totalorder %v217, %v277
      %vm512 = vcmp.eq.s32.totalorder %v217, %v281
      %vm513 = vcmp.eq.s32.totalorder %v217, %v285
      %vm514 = vcmp.eq.s32.totalorder %v217, %v289
      %vm515 = vcmp.eq.s32.totalorder %v217, %v293
      %vm516 = vcmp.eq.s32.totalorder %v217, %v297
      %vm517 = vcmp.eq.s32.totalorder %v217, %v301
      %vm518 = vcmp.eq.s32.totalorder %v217, %v305
      %vm519 = vcmp.eq.s32.totalorder %v217, %v309
      %vm520 = vcmp.eq.s32.totalorder %v217, %v313
      %vm521 = vcmp.eq.s32.totalorder %v217, %v317
      %vm522 = vcmp.eq.s32.totalorder %v217, %v321
      %vm523 = vcmp.eq.s32.totalorder %v217, %v325
      %vm524 = vcmp.eq.s32.totalorder %v217, %v329
      %vm525 = vcmp.eq.s32.totalorder %v217, %v333
      %vm526 = vcmp.eq.s32.totalorder %v218, %v273
      %vm527 = vcmp.eq.s32.totalorder %v218, %v277
      %vm528 = vcmp.eq.s32.totalorder %v218, %v281
      %vm529 = vcmp.eq.s32.totalorder %v218, %v285
      %vm530 = vcmp.eq.s32.totalorder %v218, %v289
      %vm531 = vcmp.eq.s32.totalorder %v218, %v293
      %vm532 = vcmp.eq.s32.totalorder %v218, %v297
      %vm533 = vcmp.eq.s32.totalorder %v218, %v301
      %vm534 = vcmp.eq.s32.totalorder %v218, %v305
      %vm535 = vcmp.eq.s32.totalorder %v218, %v309
      %vm536 = vcmp.eq.s32.totalorder %v218, %v313
      %vm537 = vcmp.eq.s32.totalorder %v218, %v317
      %vm538 = vcmp.eq.s32.totalorder %v218, %v321
      %vm539 = vcmp.eq.s32.totalorder %v218, %v325
      %vm540 = vcmp.eq.s32.totalorder %v218, %v329
      %vm541 = vcmp.eq.s32.totalorder %v218, %v333
      %vm542 = vcmp.eq.s32.totalorder %v219, %v273
      %vm543 = vcmp.eq.s32.totalorder %v219, %v277
      %vm544 = vcmp.eq.s32.totalorder %v219, %v281
      %vm545 = vcmp.eq.s32.totalorder %v219, %v285
      %vm546 = vcmp.eq.s32.totalorder %v219, %v289
      %vm547 = vcmp.eq.s32.totalorder %v219, %v293
      %vm548 = vcmp.eq.s32.totalorder %v219, %v297
      %vm549 = vcmp.eq.s32.totalorder %v219, %v301
      %vm550 = vcmp.eq.s32.totalorder %v219, %v305
      %vm551 = vcmp.eq.s32.totalorder %v219, %v309
      %vm552 = vcmp.eq.s32.totalorder %v219, %v313
      %vm553 = vcmp.eq.s32.totalorder %v219, %v317
      %vm554 = vcmp.eq.s32.totalorder %v219, %v321
      %vm555 = vcmp.eq.s32.totalorder %v219, %v325
      %vm556 = vcmp.eq.s32.totalorder %v219, %v329
      %vm557 = vcmp.eq.s32.totalorder %v219, %v333
      %vm558 = vcmp.eq.s32.totalorder %v220, %v273
      %vm559 = vcmp.eq.s32.totalorder %v220, %v277
      %vm560 = vcmp.eq.s32.totalorder %v220, %v281
      %vm561 = vcmp.eq.s32.totalorder %v220, %v285
      %vm562 = vcmp.eq.s32.totalorder %v220, %v289
      %vm563 = vcmp.eq.s32.totalorder %v220, %v293
      %vm564 = vcmp.eq.s32.totalorder %v220, %v297
      %vm565 = vcmp.eq.s32.totalorder %v220, %v301
      %vm566 = vcmp.eq.s32.totalorder %v220, %v305
      %vm567 = vcmp.eq.s32.totalorder %v220, %v309
      %vm568 = vcmp.eq.s32.totalorder %v220, %v313
      %vm569 = vcmp.eq.s32.totalorder %v220, %v317
      %vm570 = vcmp.eq.s32.totalorder %v220, %v321
      %vm571 = vcmp.eq.s32.totalorder %v220, %v325
      %vm572 = vcmp.eq.s32.totalorder %v220, %v329
      %vm573 = vcmp.eq.s32.totalorder %v220, %v333
      %vm574 = vcmp.eq.s32.totalorder %v221, %v273
      %vm575 = vcmp.eq.s32.totalorder %v221, %v277
      %vm576 = vcmp.eq.s32.totalorder %v221, %v281
      %vm577 = vcmp.eq.s32.totalorder %v221, %v285
      %vm578 = vcmp.eq.s32.totalorder %v221, %v289
      %vm579 = vcmp.eq.s32.totalorder %v221, %v293
      %vm580 = vcmp.eq.s32.totalorder %v221, %v297
      %vm581 = vcmp.eq.s32.totalorder %v221, %v301
      %vm582 = vcmp.eq.s32.totalorder %v221, %v305
      %vm583 = vcmp.eq.s32.totalorder %v221, %v309
      %vm584 = vcmp.eq.s32.totalorder %v221, %v313
      %vm585 = vcmp.eq.s32.totalorder %v221, %v317
      %vm586 = vcmp.eq.s32.totalorder %v221, %v321
      %vm587 = vcmp.eq.s32.totalorder %v221, %v325
      %vm588 = vcmp.eq.s32.totalorder %v221, %v329
      %vm589 = vcmp.eq.s32.totalorder %v221, %v333
      %vm590 = vcmp.eq.s32.totalorder %v222, %v273
      %vm591 = vcmp.eq.s32.totalorder %v222, %v277
      %vm592 = vcmp.eq.s32.totalorder %v222, %v281
      %vm593 = vcmp.eq.s32.totalorder %v222, %v285
      %vm594 = vcmp.eq.s32.totalorder %v222, %v289
      %vm595 = vcmp.eq.s32.totalorder %v222, %v293
      %vm596 = vcmp.eq.s32.totalorder %v222, %v297
      %vm597 = vcmp.eq.s32.totalorder %v222, %v301
      %vm598 = vcmp.eq.s32.totalorder %v222, %v305
      %vm599 = vcmp.eq.s32.totalorder %v222, %v309
      %vm600 = vcmp.eq.s32.totalorder %v222, %v313
      %vm601 = vcmp.eq.s32.totalorder %v222, %v317
      %vm602 = vcmp.eq.s32.totalorder %v222, %v321
      %vm603 = vcmp.eq.s32.totalorder %v222, %v325
      %vm604 = vcmp.eq.s32.totalorder %v222, %v329
      %vm605 = vcmp.eq.s32.totalorder %v222, %v333
      %vm606 = vcmp.eq.s32.totalorder %v223, %v273
      %vm607 = vcmp.eq.s32.totalorder %v223, %v277
      %vm608 = vcmp.eq.s32.totalorder %v223, %v281
      %vm609 = vcmp.eq.s32.totalorder %v223, %v285
      %vm610 = vcmp.eq.s32.totalorder %v223, %v289
      %vm611 = vcmp.eq.s32.totalorder %v223, %v293
      %vm612 = vcmp.eq.s32.totalorder %v223, %v297
      %vm613 = vcmp.eq.s32.totalorder %v223, %v301
      %vm614 = vcmp.eq.s32.totalorder %v223, %v305
      %vm615 = vcmp.eq.s32.totalorder %v223, %v309
      %vm616 = vcmp.eq.s32.totalorder %v223, %v313
      %vm617 = vcmp.eq.s32.totalorder %v223, %v317
      %vm618 = vcmp.eq.s32.totalorder %v223, %v321
      %vm619 = vcmp.eq.s32.totalorder %v223, %v325
      %vm620 = vcmp.eq.s32.totalorder %v223, %v329
      %vm621 = vcmp.eq.s32.totalorder %v223, %v333
      %vm622 = vcmp.eq.s32.totalorder %v224, %v273
      %vm623 = vcmp.eq.s32.totalorder %v224, %v277
      %vm624 = vcmp.eq.s32.totalorder %v224, %v281
      %vm625 = vcmp.eq.s32.totalorder %v224, %v285
      %vm626 = vcmp.eq.s32.totalorder %v224, %v289
      %vm627 = vcmp.eq.s32.totalorder %v224, %v293
      %vm628 = vcmp.eq.s32.totalorder %v224, %v297
      %vm629 = vcmp.eq.s32.totalorder %v224, %v301
      %vm630 = vcmp.eq.s32.totalorder %v224, %v305
      %vm631 = vcmp.eq.s32.totalorder %v224, %v309
      %vm632 = vcmp.eq.s32.totalorder %v224, %v313
      %vm633 = vcmp.eq.s32.totalorder %v224, %v317
      %vm634 = vcmp.eq.s32.totalorder %v224, %v321
      %vm635 = vcmp.eq.s32.totalorder %v224, %v325
      %vm636 = vcmp.eq.s32.totalorder %v224, %v329
      %vm637 = vcmp.eq.s32.totalorder %v224, %v333
      %vm638 = vcmp.eq.s32.totalorder %v225, %v273
      %vm639 = vcmp.eq.s32.totalorder %v225, %v277
      %vm640 = vcmp.eq.s32.totalorder %v225, %v281
      %vm641 = vcmp.eq.s32.totalorder %v225, %v285
      %vm642 = vcmp.eq.s32.totalorder %v225, %v289
      %vm643 = vcmp.eq.s32.totalorder %v225, %v293
      %vm644 = vcmp.eq.s32.totalorder %v225, %v297
      %vm645 = vcmp.eq.s32.totalorder %v225, %v301
      %vm646 = vcmp.eq.s32.totalorder %v225, %v305
      %vm647 = vcmp.eq.s32.totalorder %v225, %v309
      %vm648 = vcmp.eq.s32.totalorder %v225, %v313
      %vm649 = vcmp.eq.s32.totalorder %v225, %v317
      %vm650 = vcmp.eq.s32.totalorder %v225, %v321
      %vm651 = vcmp.eq.s32.totalorder %v225, %v325
      %vm652 = vcmp.eq.s32.totalorder %v225, %v329
      %vm653 = vcmp.eq.s32.totalorder %v225, %v333
      %vm654 = vcmp.eq.s32.totalorder %v226, %v273
      %vm655 = vcmp.eq.s32.totalorder %v226, %v277
      %vm656 = vcmp.eq.s32.totalorder %v226, %v281
      %vm657 = vcmp.eq.s32.totalorder %v226, %v285
      %vm658 = vcmp.eq.s32.totalorder %v226, %v289
      %vm659 = vcmp.eq.s32.totalorder %v226, %v293
      %vm660 = vcmp.eq.s32.totalorder %v226, %v297
      %vm661 = vcmp.eq.s32.totalorder %v226, %v301
      %vm662 = vcmp.eq.s32.totalorder %v226, %v305
      %vm663 = vcmp.eq.s32.totalorder %v226, %v309
      %vm664 = vcmp.eq.s32.totalorder %v226, %v313
      %vm665 = vcmp.eq.s32.totalorder %v226, %v317
      %vm666 = vcmp.eq.s32.totalorder %v226, %v321
      %vm667 = vcmp.eq.s32.totalorder %v226, %v325
      %vm668 = vcmp.eq.s32.totalorder %v226, %v329
      %vm669 = vcmp.eq.s32.totalorder %v226, %v333
      %vm670 = vcmp.eq.s32.totalorder %v227, %v273
      %vm671 = vcmp.eq.s32.totalorder %v227, %v277
      %vm672 = vcmp.eq.s32.totalorder %v227, %v281
      %vm673 = vcmp.eq.s32.totalorder %v227, %v285
      %vm674 = vcmp.eq.s32.totalorder %v227, %v289
      %vm675 = vcmp.eq.s32.totalorder %v227, %v293
      %vm676 = vcmp.eq.s32.totalorder %v227, %v297
      %vm677 = vcmp.eq.s32.totalorder %v227, %v301
      %vm678 = vcmp.eq.s32.totalorder %v227, %v305
      %vm679 = vcmp.eq.s32.totalorder %v227, %v309
      %vm680 = vcmp.eq.s32.totalorder %v227, %v313
      %vm681 = vcmp.eq.s32.totalorder %v227, %v317
      %vm682 = vcmp.eq.s32.totalorder %v227, %v321
      %vm683 = vcmp.eq.s32.totalorder %v227, %v325
      %vm684 = vcmp.eq.s32.totalorder %v227, %v329
      %vm685 = vcmp.eq.s32.totalorder %v227, %v333
      %vm686 = vcmp.eq.s32.totalorder %v228, %v273
      %vm687 = vcmp.eq.s32.totalorder %v228, %v277
      %vm688 = vcmp.eq.s32.totalorder %v228, %v281
      %vm689 = vcmp.eq.s32.totalorder %v228, %v285
      %vm690 = vcmp.eq.s32.totalorder %v228, %v289
      %vm691 = vcmp.eq.s32.totalorder %v228, %v293
      %vm692 = vcmp.eq.s32.totalorder %v228, %v297
      %vm693 = vcmp.eq.s32.totalorder %v228, %v301
      %vm694 = vcmp.eq.s32.totalorder %v228, %v305
      %vm695 = vcmp.eq.s32.totalorder %v228, %v309
      %vm696 = vcmp.eq.s32.totalorder %v228, %v313
      %vm697 = vcmp.eq.s32.totalorder %v228, %v317
      %vm698 = vcmp.eq.s32.totalorder %v228, %v321
      %vm699 = vcmp.eq.s32.totalorder %v228, %v325
      %vm700 = vcmp.eq.s32.totalorder %v228, %v329
      %vm701 = vcmp.eq.s32.totalorder %v228, %v333
      %vm702 = vcmp.eq.s32.totalorder %v229, %v273
      %vm703 = vcmp.eq.s32.totalorder %v229, %v277
      %vm704 = vcmp.eq.s32.totalorder %v229, %v281
      %vm705 = vcmp.eq.s32.totalorder %v229, %v285
      %vm706 = vcmp.eq.s32.totalorder %v229, %v289
      %vm707 = vcmp.eq.s32.totalorder %v229, %v293
      %vm708 = vcmp.eq.s32.totalorder %v229, %v297
      %vm709 = vcmp.eq.s32.totalorder %v229, %v301
      %vm710 = vcmp.eq.s32.totalorder %v229, %v305
      %vm711 = vcmp.eq.s32.totalorder %v229, %v309
      %vm712 = vcmp.eq.s32.totalorder %v229, %v313
      %vm713 = vcmp.eq.s32.totalorder %v229, %v317
      %vm714 = vcmp.eq.s32.totalorder %v229, %v321
      %vm715 = vcmp.eq.s32.totalorder %v229, %v325
      %vm716 = vcmp.eq.s32.totalorder %v229, %v329
      %vm717 = vcmp.eq.s32.totalorder %v229, %v333
      %vm718 = vcmp.eq.s32.totalorder %v230, %v273
      %vm719 = vcmp.eq.s32.totalorder %v230, %v277
      %vm720 = vcmp.eq.s32.totalorder %v230, %v281
      %vm721 = vcmp.eq.s32.totalorder %v230, %v285
      %vm722 = vcmp.eq.s32.totalorder %v230, %v289
      %vm723 = vcmp.eq.s32.totalorder %v230, %v293
      %vm724 = vcmp.eq.s32.totalorder %v230, %v297
      %vm725 = vcmp.eq.s32.totalorder %v230, %v301
      %vm726 = vcmp.eq.s32.totalorder %v230, %v305
      %vm727 = vcmp.eq.s32.totalorder %v230, %v309
      %vm728 = vcmp.eq.s32.totalorder %v230, %v313
      %vm729 = vcmp.eq.s32.totalorder %v230, %v317
      %vm730 = vcmp.eq.s32.totalorder %v230, %v321
      %vm731 = vcmp.eq.s32.totalorder %v230, %v325
      %vm732 = vcmp.eq.s32.totalorder %v230, %v329
      %vm733 = vcmp.eq.s32.totalorder %v230, %v333
      %vm734 = vcmp.eq.s32.totalorder %v231, %v273
      %vm735 = vcmp.eq.s32.totalorder %v231, %v277
      %vm736 = vcmp.eq.s32.totalorder %v231, %v281
      %vm737 = vcmp.eq.s32.totalorder %v231, %v285
      %vm738 = vcmp.eq.s32.totalorder %v231, %v289
      %vm739 = vcmp.eq.s32.totalorder %v231, %v293
      %vm740 = vcmp.eq.s32.totalorder %v231, %v297
      %vm741 = vcmp.eq.s32.totalorder %v231, %v301
      %vm742 = vcmp.eq.s32.totalorder %v231, %v305
      %vm743 = vcmp.eq.s32.totalorder %v231, %v309
      %vm744 = vcmp.eq.s32.totalorder %v231, %v313
      %vm745 = vcmp.eq.s32.totalorder %v231, %v317
      %vm746 = vcmp.eq.s32.totalorder %v231, %v321
      %vm747 = vcmp.eq.s32.totalorder %v231, %v325
      %vm748 = vcmp.eq.s32.totalorder %v231, %v329
      %vm749 = vcmp.eq.s32.totalorder %v231, %v333
      %vm750 = vcmp.eq.s32.totalorder %v232, %v273
      %vm751 = vcmp.eq.s32.totalorder %v232, %v277
      %vm752 = vcmp.eq.s32.totalorder %v232, %v281
      %vm753 = vcmp.eq.s32.totalorder %v232, %v285
      %vm754 = vcmp.eq.s32.totalorder %v232, %v289
      %vm755 = vcmp.eq.s32.totalorder %v232, %v293
      %vm756 = vcmp.eq.s32.totalorder %v232, %v297
      %vm757 = vcmp.eq.s32.totalorder %v232, %v301
      %vm758 = vcmp.eq.s32.totalorder %v232, %v305
      %vm759 = vcmp.eq.s32.totalorder %v232, %v309
      %vm760 = vcmp.eq.s32.totalorder %v232, %v313
      %vm761 = vcmp.eq.s32.totalorder %v232, %v317
      %vm762 = vcmp.eq.s32.totalorder %v232, %v321
      %vm763 = vcmp.eq.s32.totalorder %v232, %v325
      %vm764 = vcmp.eq.s32.totalorder %v232, %v329
      %vm765 = vcmp.eq.s32.totalorder %v232, %v333
      %vm766 = vcmp.eq.s32.totalorder %v233, %v273
      %vm767 = vcmp.eq.s32.totalorder %v233, %v277
      %vm768 = vcmp.eq.s32.totalorder %v233, %v281
      %vm769 = vcmp.eq.s32.totalorder %v233, %v285
      %vm770 = vcmp.eq.s32.totalorder %v233, %v289
      %vm771 = vcmp.eq.s32.totalorder %v233, %v293
      %vm772 = vcmp.eq.s32.totalorder %v233, %v297
      %vm773 = vcmp.eq.s32.totalorder %v233, %v301
      %vm774 = vcmp.eq.s32.totalorder %v233, %v305
      %vm775 = vcmp.eq.s32.totalorder %v233, %v309
      %vm776 = vcmp.eq.s32.totalorder %v233, %v313
      %vm777 = vcmp.eq.s32.totalorder %v233, %v317
      %vm778 = vcmp.eq.s32.totalorder %v233, %v321
      %vm779 = vcmp.eq.s32.totalorder %v233, %v325
      %vm780 = vcmp.eq.s32.totalorder %v233, %v329
      %vm781 = vcmp.eq.s32.totalorder %v233, %v333
      %vm782 = vcmp.eq.s32.totalorder %v234, %v273
      %vm783 = vcmp.eq.s32.totalorder %v234, %v277
      %vm784 = vcmp.eq.s32.totalorder %v234, %v281
      %vm785 = vcmp.eq.s32.totalorder %v234, %v285
      %vm786 = vcmp.eq.s32.totalorder %v234, %v289
      %vm787 = vcmp.eq.s32.totalorder %v234, %v293
      %vm788 = vcmp.eq.s32.totalorder %v234, %v297
      %vm789 = vcmp.eq.s32.totalorder %v234, %v301
      %vm790 = vcmp.eq.s32.totalorder %v234, %v305
      %vm791 = vcmp.eq.s32.totalorder %v234, %v309
      %vm792 = vcmp.eq.s32.totalorder %v234, %v313
      %vm793 = vcmp.eq.s32.totalorder %v234, %v317
      %vm794 = vcmp.eq.s32.totalorder %v234, %v321
      %vm795 = vcmp.eq.s32.totalorder %v234, %v325
      %vm796 = vcmp.eq.s32.totalorder %v234, %v329
      %vm797 = vcmp.eq.s32.totalorder %v234, %v333
      %vm798 = vcmp.eq.s32.totalorder %v235, %v273
      %vm799 = vcmp.eq.s32.totalorder %v235, %v277
      %vm800 = vcmp.eq.s32.totalorder %v235, %v281
      %vm801 = vcmp.eq.s32.totalorder %v235, %v285
      %vm802 = vcmp.eq.s32.totalorder %v235, %v289
      %vm803 = vcmp.eq.s32.totalorder %v235, %v293
      %vm804 = vcmp.eq.s32.totalorder %v235, %v297
      %vm805 = vcmp.eq.s32.totalorder %v235, %v301
      %vm806 = vcmp.eq.s32.totalorder %v235, %v305
      %vm807 = vcmp.eq.s32.totalorder %v235, %v309
      %vm808 = vcmp.eq.s32.totalorder %v235, %v313
      %vm809 = vcmp.eq.s32.totalorder %v235, %v317
      %vm810 = vcmp.eq.s32.totalorder %v235, %v321
      %vm811 = vcmp.eq.s32.totalorder %v235, %v325
      %vm812 = vcmp.eq.s32.totalorder %v235, %v329
      %vm813 = vcmp.eq.s32.totalorder %v235, %v333
      %vm814 = vcmp.eq.s32.totalorder %v236, %v273
      %vm815 = vcmp.eq.s32.totalorder %v236, %v277
      %vm816 = vcmp.eq.s32.totalorder %v236, %v281
      %vm817 = vcmp.eq.s32.totalorder %v236, %v285
      %vm818 = vcmp.eq.s32.totalorder %v236, %v289
      %vm819 = vcmp.eq.s32.totalorder %v236, %v293
      %vm820 = vcmp.eq.s32.totalorder %v236, %v297
      %vm821 = vcmp.eq.s32.totalorder %v236, %v301
      %vm822 = vcmp.eq.s32.totalorder %v236, %v305
      %vm823 = vcmp.eq.s32.totalorder %v236, %v309
      %vm824 = vcmp.eq.s32.totalorder %v236, %v313
      %vm825 = vcmp.eq.s32.totalorder %v236, %v317
      %vm826 = vcmp.eq.s32.totalorder %v236, %v321
      %vm827 = vcmp.eq.s32.totalorder %v236, %v325
      %vm828 = vcmp.eq.s32.totalorder %v236, %v329
      %vm829 = vcmp.eq.s32.totalorder %v236, %v333
      %vm830 = vcmp.eq.s32.totalorder %v237, %v273
      %vm831 = vcmp.eq.s32.totalorder %v237, %v277
      %vm832 = vcmp.eq.s32.totalorder %v237, %v281
      %vm833 = vcmp.eq.s32.totalorder %v237, %v285
      %vm834 = vcmp.eq.s32.totalorder %v237, %v289
      %vm835 = vcmp.eq.s32.totalorder %v237, %v293
      %vm836 = vcmp.eq.s32.totalorder %v237, %v297
      %vm837 = vcmp.eq.s32.totalorder %v237, %v301
      %vm838 = vcmp.eq.s32.totalorder %v237, %v305
      %vm839 = vcmp.eq.s32.totalorder %v237, %v309
      %vm840 = vcmp.eq.s32.totalorder %v237, %v313
      %vm841 = vcmp.eq.s32.totalorder %v237, %v317
      %vm842 = vcmp.eq.s32.totalorder %v237, %v321
      %vm843 = vcmp.eq.s32.totalorder %v237, %v325
      %vm844 = vcmp.eq.s32.totalorder %v237, %v329
      %vm845 = vcmp.eq.s32.totalorder %v237, %v333
      %vm846 = vcmp.eq.s32.totalorder %v238, %v273
      %vm847 = vcmp.eq.s32.totalorder %v238, %v277
      %vm848 = vcmp.eq.s32.totalorder %v238, %v281
      %vm849 = vcmp.eq.s32.totalorder %v238, %v285
      %vm850 = vcmp.eq.s32.totalorder %v238, %v289
      %vm851 = vcmp.eq.s32.totalorder %v238, %v293
      %vm852 = vcmp.eq.s32.totalorder %v238, %v297
      %vm853 = vcmp.eq.s32.totalorder %v238, %v301
      %vm854 = vcmp.eq.s32.totalorder %v238, %v305
      %vm855 = vcmp.eq.s32.totalorder %v238, %v309
      %vm856 = vcmp.eq.s32.totalorder %v238, %v313
      %vm857 = vcmp.eq.s32.totalorder %v238, %v317
      %vm858 = vcmp.eq.s32.totalorder %v238, %v321
      %vm859 = vcmp.eq.s32.totalorder %v238, %v325
      %vm860 = vcmp.eq.s32.totalorder %v238, %v329
      %vm861 = vcmp.eq.s32.totalorder %v238, %v333
      %vm862 = vcmp.eq.s32.totalorder %v239, %v273
      %vm863 = vcmp.eq.s32.totalorder %v239, %v277
      %vm864 = vcmp.eq.s32.totalorder %v239, %v281
      %vm865 = vcmp.eq.s32.totalorder %v239, %v285
      %vm866 = vcmp.eq.s32.totalorder %v239, %v289
      %vm867 = vcmp.eq.s32.totalorder %v239, %v293
      %vm868 = vcmp.eq.s32.totalorder %v239, %v297
      %vm869 = vcmp.eq.s32.totalorder %v239, %v301
      %vm870 = vcmp.eq.s32.totalorder %v239, %v305
      %vm871 = vcmp.eq.s32.totalorder %v239, %v309
      %vm872 = vcmp.eq.s32.totalorder %v239, %v313
      %vm873 = vcmp.eq.s32.totalorder %v239, %v317
      %vm874 = vcmp.eq.s32.totalorder %v239, %v321
      %vm875 = vcmp.eq.s32.totalorder %v239, %v325
      %vm876 = vcmp.eq.s32.totalorder %v239, %v329
      %vm877 = vcmp.eq.s32.totalorder %v239, %v333
      %vm878 = vcmp.eq.s32.totalorder %v240, %v273
      %vm879 = vcmp.eq.s32.totalorder %v240, %v277
      %vm880 = vcmp.eq.s32.totalorder %v240, %v281
      %vm881 = vcmp.eq.s32.totalorder %v240, %v285
      %vm882 = vcmp.eq.s32.totalorder %v240, %v289
      %vm883 = vcmp.eq.s32.totalorder %v240, %v293
      %vm884 = vcmp.eq.s32.totalorder %v240, %v297
      %vm885 = vcmp.eq.s32.totalorder %v240, %v301
      %vm886 = vcmp.eq.s32.totalorder %v240, %v305
      %vm887 = vcmp.eq.s32.totalorder %v240, %v309
      %vm888 = vcmp.eq.s32.totalorder %v240, %v313
      %vm889 = vcmp.eq.s32.totalorder %v240, %v317
      %vm890 = vcmp.eq.s32.totalorder %v240, %v321
      %vm891 = vcmp.eq.s32.totalorder %v240, %v325
      %vm892 = vcmp.eq.s32.totalorder %v240, %v329
      %vm893 = vcmp.eq.s32.totalorder %v240, %v333
      %vm894 = vcmp.eq.s32.totalorder %v241, %v273
      %vm895 = vcmp.eq.s32.totalorder %v241, %v277
      %vm896 = vcmp.eq.s32.totalorder %v241, %v281
      %vm897 = vcmp.eq.s32.totalorder %v241, %v285
      %vm898 = vcmp.eq.s32.totalorder %v241, %v289
      %vm899 = vcmp.eq.s32.totalorder %v241, %v293
      %vm900 = vcmp.eq.s32.totalorder %v241, %v297
      %vm901 = vcmp.eq.s32.totalorder %v241, %v301
      %vm902 = vcmp.eq.s32.totalorder %v241, %v305
      %vm903 = vcmp.eq.s32.totalorder %v241, %v309
      %vm904 = vcmp.eq.s32.totalorder %v241, %v313
      %vm905 = vcmp.eq.s32.totalorder %v241, %v317
      %vm906 = vcmp.eq.s32.totalorder %v241, %v321
      %vm907 = vcmp.eq.s32.totalorder %v241, %v325
      %vm908 = vcmp.eq.s32.totalorder %v241, %v329
      %vm909 = vcmp.eq.s32.totalorder %v241, %v333
      %vm910 = vcmp.eq.s32.totalorder %v242, %v273
      %vm911 = vcmp.eq.s32.totalorder %v242, %v277
      %vm912 = vcmp.eq.s32.totalorder %v242, %v281
      %vm913 = vcmp.eq.s32.totalorder %v242, %v285
      %vm914 = vcmp.eq.s32.totalorder %v242, %v289
      %vm915 = vcmp.eq.s32.totalorder %v242, %v293
      %vm916 = vcmp.eq.s32.totalorder %v242, %v297
      %vm917 = vcmp.eq.s32.totalorder %v242, %v301
      %vm918 = vcmp.eq.s32.totalorder %v242, %v305
      %vm919 = vcmp.eq.s32.totalorder %v242, %v309
      %vm920 = vcmp.eq.s32.totalorder %v242, %v313
      %vm921 = vcmp.eq.s32.totalorder %v242, %v317
      %vm922 = vcmp.eq.s32.totalorder %v242, %v321
      %vm923 = vcmp.eq.s32.totalorder %v242, %v325
      %vm924 = vcmp.eq.s32.totalorder %v242, %v329
      %vm925 = vcmp.eq.s32.totalorder %v242, %v333
      %vm926 = vcmp.eq.s32.totalorder %v243, %v273
      %vm927 = vcmp.eq.s32.totalorder %v243, %v277
      %vm928 = vcmp.eq.s32.totalorder %v243, %v281
      %vm929 = vcmp.eq.s32.totalorder %v243, %v285
      %vm930 = vcmp.eq.s32.totalorder %v243, %v289
      %vm931 = vcmp.eq.s32.totalorder %v243, %v293
      %vm932 = vcmp.eq.s32.totalorder %v243, %v297
      %vm933 = vcmp.eq.s32.totalorder %v243, %v301
      %vm934 = vcmp.eq.s32.totalorder %v243, %v305
      %vm935 = vcmp.eq.s32.totalorder %v243, %v309
      %vm936 = vcmp.eq.s32.totalorder %v243, %v313
      %vm937 = vcmp.eq.s32.totalorder %v243, %v317
      %vm938 = vcmp.eq.s32.totalorder %v243, %v321
      %vm939 = vcmp.eq.s32.totalorder %v243, %v325
      %vm940 = vcmp.eq.s32.totalorder %v243, %v329
      %vm941 = vcmp.eq.s32.totalorder %v243, %v333
      %vm942 = vcmp.eq.s32.totalorder %v244, %v273
      %vm943 = vcmp.eq.s32.totalorder %v244, %v277
      %vm944 = vcmp.eq.s32.totalorder %v244, %v281
      %vm945 = vcmp.eq.s32.totalorder %v244, %v285
      %vm946 = vcmp.eq.s32.totalorder %v244, %v289
      %vm947 = vcmp.eq.s32.totalorder %v244, %v293
      %vm948 = vcmp.eq.s32.totalorder %v244, %v297
      %vm949 = vcmp.eq.s32.totalorder %v244, %v301
      %vm950 = vcmp.eq.s32.totalorder %v244, %v305
      %vm951 = vcmp.eq.s32.totalorder %v244, %v309
      %vm952 = vcmp.eq.s32.totalorder %v244, %v313
      %vm953 = vcmp.eq.s32.totalorder %v244, %v317
      %vm954 = vcmp.eq.s32.totalorder %v244, %v321
      %vm955 = vcmp.eq.s32.totalorder %v244, %v325
      %vm956 = vcmp.eq.s32.totalorder %v244, %v329
      %vm957 = vcmp.eq.s32.totalorder %v244, %v333
      %vm958 = vcmp.eq.s32.totalorder %v245, %v273
      %vm959 = vcmp.eq.s32.totalorder %v245, %v277
      %vm960 = vcmp.eq.s32.totalorder %v245, %v281
      %vm961 = vcmp.eq.s32.totalorder %v245, %v285
      %vm962 = vcmp.eq.s32.totalorder %v245, %v289
      %vm963 = vcmp.eq.s32.totalorder %v245, %v293
      %vm964 = vcmp.eq.s32.totalorder %v245, %v297
      %vm965 = vcmp.eq.s32.totalorder %v245, %v301
      %vm966 = vcmp.eq.s32.totalorder %v245, %v305
      %vm967 = vcmp.eq.s32.totalorder %v245, %v309
      %vm968 = vcmp.eq.s32.totalorder %v245, %v313
      %vm969 = vcmp.eq.s32.totalorder %v245, %v317
      %vm970 = vcmp.eq.s32.totalorder %v245, %v321
      %vm971 = vcmp.eq.s32.totalorder %v245, %v325
      %vm972 = vcmp.eq.s32.totalorder %v245, %v329
      %vm973 = vcmp.eq.s32.totalorder %v245, %v333
      %vm974 = vcmp.eq.s32.totalorder %v246, %v273
      %vm975 = vcmp.eq.s32.totalorder %v246, %v277
      %vm976 = vcmp.eq.s32.totalorder %v246, %v281
      %vm977 = vcmp.eq.s32.totalorder %v246, %v285
      %vm978 = vcmp.eq.s32.totalorder %v246, %v289
      %vm979 = vcmp.eq.s32.totalorder %v246, %v293
      %vm980 = vcmp.eq.s32.totalorder %v246, %v297
      %vm981 = vcmp.eq.s32.totalorder %v246, %v301
      %vm982 = vcmp.eq.s32.totalorder %v246, %v305
      %vm983 = vcmp.eq.s32.totalorder %v246, %v309
      %vm984 = vcmp.eq.s32.totalorder %v246, %v313
      %vm985 = vcmp.eq.s32.totalorder %v246, %v317
      %vm986 = vcmp.eq.s32.totalorder %v246, %v321
      %vm987 = vcmp.eq.s32.totalorder %v246, %v325
      %vm988 = vcmp.eq.s32.totalorder %v246, %v329
      %vm989 = vcmp.eq.s32.totalorder %v246, %v333
      %vm990 = vcmp.eq.s32.totalorder %v247, %v273
      %vm991 = vcmp.eq.s32.totalorder %v247, %v277
      %vm992 = vcmp.eq.s32.totalorder %v247, %v281
      %vm993 = vcmp.eq.s32.totalorder %v247, %v285
      %vm994 = vcmp.eq.s32.totalorder %v247, %v289
      %vm995 = vcmp.eq.s32.totalorder %v247, %v293
      %vm996 = vcmp.eq.s32.totalorder %v247, %v297
      %vm997 = vcmp.eq.s32.totalorder %v247, %v301
      %vm998 = vcmp.eq.s32.totalorder %v247, %v305
      %vm999 = vcmp.eq.s32.totalorder %v247, %v309
      %vm1000 = vcmp.eq.s32.totalorder %v247, %v313
      %vm1001 = vcmp.eq.s32.totalorder %v247, %v317
      %vm1002 = vcmp.eq.s32.totalorder %v247, %v321
      %vm1003 = vcmp.eq.s32.totalorder %v247, %v325
      %vm1004 = vcmp.eq.s32.totalorder %v247, %v329
      %vm1005 = vcmp.eq.s32.totalorder %v247, %v333
      %vm1006 = vcmp.eq.s32.totalorder %v248, %v273
      %vm1007 = vcmp.eq.s32.totalorder %v248, %v277
      %vm1008 = vcmp.eq.s32.totalorder %v248, %v281
      %vm1009 = vcmp.eq.s32.totalorder %v248, %v285
      %vm1010 = vcmp.eq.s32.totalorder %v248, %v289
      %vm1011 = vcmp.eq.s32.totalorder %v248, %v293
      %vm1012 = vcmp.eq.s32.totalorder %v248, %v297
      %vm1013 = vcmp.eq.s32.totalorder %v248, %v301
      %vm1014 = vcmp.eq.s32.totalorder %v248, %v305
      %vm1015 = vcmp.eq.s32.totalorder %v248, %v309
      %vm1016 = vcmp.eq.s32.totalorder %v248, %v313
      %vm1017 = vcmp.eq.s32.totalorder %v248, %v317
      %vm1018 = vcmp.eq.s32.totalorder %v248, %v321
      %vm1019 = vcmp.eq.s32.totalorder %v248, %v325
      %vm1020 = vcmp.eq.s32.totalorder %v248, %v329
      %vm1021 = vcmp.eq.s32.totalorder %v248, %v333
      %vm1022 = vcmp.eq.s32.totalorder %v249, %v273
      %vm1023 = vcmp.eq.s32.totalorder %v249, %v277
      %vm1024 = vcmp.eq.s32.totalorder %v249, %v281
      %vm1025 = vcmp.eq.s32.totalorder %v249, %v285
      %vm1026 = vcmp.eq.s32.totalorder %v249, %v289
      %vm1027 = vcmp.eq.s32.totalorder %v249, %v293
      %vm1028 = vcmp.eq.s32.totalorder %v249, %v297
      %vm1029 = vcmp.eq.s32.totalorder %v249, %v301
      %vm1030 = vcmp.eq.s32.totalorder %v249, %v305
      %vm1031 = vcmp.eq.s32.totalorder %v249, %v309
      %vm1032 = vcmp.eq.s32.totalorder %v249, %v313
      %vm1033 = vcmp.eq.s32.totalorder %v249, %v317
      %vm1034 = vcmp.eq.s32.totalorder %v249, %v321
      %vm1035 = vcmp.eq.s32.totalorder %v249, %v325
      %vm1036 = vcmp.eq.s32.totalorder %v249, %v329
      %vm1037 = vcmp.eq.s32.totalorder %v249, %v333
      %vm1038 = vcmp.eq.s32.totalorder %v250, %v273
      %vm1039 = vcmp.eq.s32.totalorder %v250, %v277
      %vm1040 = vcmp.eq.s32.totalorder %v250, %v281
      %vm1041 = vcmp.eq.s32.totalorder %v250, %v285
      %vm1042 = vcmp.eq.s32.totalorder %v250, %v289
      %vm1043 = vcmp.eq.s32.totalorder %v250, %v293
      %vm1044 = vcmp.eq.s32.totalorder %v250, %v297
      %vm1045 = vcmp.eq.s32.totalorder %v250, %v301
      %vm1046 = vcmp.eq.s32.totalorder %v250, %v305
      %vm1047 = vcmp.eq.s32.totalorder %v250, %v309
      %vm1048 = vcmp.eq.s32.totalorder %v250, %v313
      %vm1049 = vcmp.eq.s32.totalorder %v250, %v317
      %vm1050 = vcmp.eq.s32.totalorder %v250, %v321
      %vm1051 = vcmp.eq.s32.totalorder %v250, %v325
      %vm1052 = vcmp.eq.s32.totalorder %v250, %v329
      %vm1053 = vcmp.eq.s32.totalorder %v250, %v333
      %vm1054 = vcmp.eq.s32.totalorder %v251, %v273
      %vm1055 = vcmp.eq.s32.totalorder %v251, %v277
      %vm1056 = vcmp.eq.s32.totalorder %v251, %v281
      %vm1057 = vcmp.eq.s32.totalorder %v251, %v285
      %vm1058 = vcmp.eq.s32.totalorder %v251, %v289
      %vm1059 = vcmp.eq.s32.totalorder %v251, %v293
      %vm1060 = vcmp.eq.s32.totalorder %v251, %v297
      %vm1061 = vcmp.eq.s32.totalorder %v251, %v301
      %vm1062 = vcmp.eq.s32.totalorder %v251, %v305
      %vm1063 = vcmp.eq.s32.totalorder %v251, %v309
      %vm1064 = vcmp.eq.s32.totalorder %v251, %v313
      %vm1065 = vcmp.eq.s32.totalorder %v251, %v317
      %vm1066 = vcmp.eq.s32.totalorder %v251, %v321
      %vm1067 = vcmp.eq.s32.totalorder %v251, %v325
      %vm1068 = vcmp.eq.s32.totalorder %v251, %v329
      %vm1069 = vcmp.eq.s32.totalorder %v251, %v333
      %vm1070 = vcmp.eq.s32.totalorder %v252, %v273
      %vm1071 = vcmp.eq.s32.totalorder %v252, %v277
      %vm1072 = vcmp.eq.s32.totalorder %v252, %v281
      %vm1073 = vcmp.eq.s32.totalorder %v252, %v285
      %vm1074 = vcmp.eq.s32.totalorder %v252, %v289
      %vm1075 = vcmp.eq.s32.totalorder %v252, %v293
      %vm1076 = vcmp.eq.s32.totalorder %v252, %v297
      %vm1077 = vcmp.eq.s32.totalorder %v252, %v301
      %vm1078 = vcmp.eq.s32.totalorder %v252, %v305
      %vm1079 = vcmp.eq.s32.totalorder %v252, %v309
      %vm1080 = vcmp.eq.s32.totalorder %v252, %v313
      %vm1081 = vcmp.eq.s32.totalorder %v252, %v317
      %vm1082 = vcmp.eq.s32.totalorder %v252, %v321
      %vm1083 = vcmp.eq.s32.totalorder %v252, %v325
      %vm1084 = vcmp.eq.s32.totalorder %v252, %v329
      %vm1085 = vcmp.eq.s32.totalorder %v252, %v333
      %vm1086 = vcmp.eq.s32.totalorder %v253, %v273
      %vm1087 = vcmp.eq.s32.totalorder %v253, %v277
      %vm1088 = vcmp.eq.s32.totalorder %v253, %v281
      %vm1089 = vcmp.eq.s32.totalorder %v253, %v285
      %vm1090 = vcmp.eq.s32.totalorder %v253, %v289
      %vm1091 = vcmp.eq.s32.totalorder %v253, %v293
      %vm1092 = vcmp.eq.s32.totalorder %v253, %v297
      %vm1093 = vcmp.eq.s32.totalorder %v253, %v301
      %vm1094 = vcmp.eq.s32.totalorder %v253, %v305
      %vm1095 = vcmp.eq.s32.totalorder %v253, %v309
      %vm1096 = vcmp.eq.s32.totalorder %v253, %v313
      %vm1097 = vcmp.eq.s32.totalorder %v253, %v317
      %vm1098 = vcmp.eq.s32.totalorder %v253, %v321
      %vm1099 = vcmp.eq.s32.totalorder %v253, %v325
      %vm1100 = vcmp.eq.s32.totalorder %v253, %v329
      %vm1101 = vcmp.eq.s32.totalorder %v253, %v333
      %vm1102 = vcmp.eq.s32.totalorder %v254, %v273
      %vm1103 = vcmp.eq.s32.totalorder %v254, %v277
      %vm1104 = vcmp.eq.s32.totalorder %v254, %v281
      %vm1105 = vcmp.eq.s32.totalorder %v254, %v285
      %vm1106 = vcmp.eq.s32.totalorder %v254, %v289
      %vm1107 = vcmp.eq.s32.totalorder %v254, %v293
      %vm1108 = vcmp.eq.s32.totalorder %v254, %v297
      %vm1109 = vcmp.eq.s32.totalorder %v254, %v301
      %vm1110 = vcmp.eq.s32.totalorder %v254, %v305
      %vm1111 = vcmp.eq.s32.totalorder %v254, %v309
      %vm1112 = vcmp.eq.s32.totalorder %v254, %v313
      %vm1113 = vcmp.eq.s32.totalorder %v254, %v317
      %vm1114 = vcmp.eq.s32.totalorder %v254, %v321
      %vm1115 = vcmp.eq.s32.totalorder %v254, %v325
      %vm1116 = vcmp.eq.s32.totalorder %v254, %v329
      %vm1117 = vcmp.eq.s32.totalorder %v254, %v333
      %vm1118 = vcmp.eq.s32.totalorder %v255, %v273
      %vm1119 = vcmp.eq.s32.totalorder %v255, %v277
      %vm1120 = vcmp.eq.s32.totalorder %v255, %v281
      %vm1121 = vcmp.eq.s32.totalorder %v255, %v285
      %vm1122 = vcmp.eq.s32.totalorder %v255, %v289
      %vm1123 = vcmp.eq.s32.totalorder %v255, %v293
      %vm1124 = vcmp.eq.s32.totalorder %v255, %v297
      %vm1125 = vcmp.eq.s32.totalorder %v255, %v301
      %vm1126 = vcmp.eq.s32.totalorder %v255, %v305
      %vm1127 = vcmp.eq.s32.totalorder %v255, %v309
      %vm1128 = vcmp.eq.s32.totalorder %v255, %v313
      %vm1129 = vcmp.eq.s32.totalorder %v255, %v317
      %vm1130 = vcmp.eq.s32.totalorder %v255, %v321
      %vm1131 = vcmp.eq.s32.totalorder %v255, %v325
      %vm1132 = vcmp.eq.s32.totalorder %v255, %v329
      %vm1133 = vcmp.eq.s32.totalorder %v255, %v333
      %vm1134 = vcmp.eq.s32.totalorder %v256, %v273
      %vm1135 = vcmp.eq.s32.totalorder %v256, %v277
      %vm1136 = vcmp.eq.s32.totalorder %v256, %v281
      %vm1137 = vcmp.eq.s32.totalorder %v256, %v285
      %vm1138 = vcmp.eq.s32.totalorder %v256, %v289
      %vm1139 = vcmp.eq.s32.totalorder %v256, %v293
      %vm1140 = vcmp.eq.s32.totalorder %v256, %v297
      %vm1141 = vcmp.eq.s32.totalorder %v256, %v301
      %vm1142 = vcmp.eq.s32.totalorder %v256, %v305
      %vm1143 = vcmp.eq.s32.totalorder %v256, %v309
      %vm1144 = vcmp.eq.s32.totalorder %v256, %v313
      %vm1145 = vcmp.eq.s32.totalorder %v256, %v317
      %vm1146 = vcmp.eq.s32.totalorder %v256, %v321
      %vm1147 = vcmp.eq.s32.totalorder %v256, %v325
      %vm1148 = vcmp.eq.s32.totalorder %v256, %v329
      %vm1149 = vcmp.eq.s32.totalorder %v256, %v333
      %vm1150 = vcmp.eq.s32.totalorder %v257, %v273
      %vm1151 = vcmp.eq.s32.totalorder %v257, %v277
      %vm1152 = vcmp.eq.s32.totalorder %v257, %v281
      %vm1153 = vcmp.eq.s32.totalorder %v257, %v285
      %vm1154 = vcmp.eq.s32.totalorder %v257, %v289
      %vm1155 = vcmp.eq.s32.totalorder %v257, %v293
      %vm1156 = vcmp.eq.s32.totalorder %v257, %v297
      %vm1157 = vcmp.eq.s32.totalorder %v257, %v301
      %vm1158 = vcmp.eq.s32.totalorder %v257, %v305
      %vm1159 = vcmp.eq.s32.totalorder %v257, %v309
      %vm1160 = vcmp.eq.s32.totalorder %v257, %v313
      %vm1161 = vcmp.eq.s32.totalorder %v257, %v317
      %vm1162 = vcmp.eq.s32.totalorder %v257, %v321
      %vm1163 = vcmp.eq.s32.totalorder %v257, %v325
      %vm1164 = vcmp.eq.s32.totalorder %v257, %v329
      %vm1165 = vcmp.eq.s32.totalorder %v257, %v333
      %vm1166 = vcmp.eq.s32.totalorder %v258, %v273
      %vm1167 = vcmp.eq.s32.totalorder %v258, %v277
      %vm1168 = vcmp.eq.s32.totalorder %v258, %v281
      %vm1169 = vcmp.eq.s32.totalorder %v258, %v285
      %vm1170 = vcmp.eq.s32.totalorder %v258, %v289
      %vm1171 = vcmp.eq.s32.totalorder %v258, %v293
      %vm1172 = vcmp.eq.s32.totalorder %v258, %v297
      %vm1173 = vcmp.eq.s32.totalorder %v258, %v301
      %vm1174 = vcmp.eq.s32.totalorder %v258, %v305
      %vm1175 = vcmp.eq.s32.totalorder %v258, %v309
      %vm1176 = vcmp.eq.s32.totalorder %v258, %v313
      %vm1177 = vcmp.eq.s32.totalorder %v258, %v317
      %vm1178 = vcmp.eq.s32.totalorder %v258, %v321
      %vm1179 = vcmp.eq.s32.totalorder %v258, %v325
      %vm1180 = vcmp.eq.s32.totalorder %v258, %v329
      %vm1181 = vcmp.eq.s32.totalorder %v258, %v333
      %vm1182 = vcmp.eq.s32.totalorder %v259, %v273
      %vm1183 = vcmp.eq.s32.totalorder %v259, %v277
      %vm1184 = vcmp.eq.s32.totalorder %v259, %v281
      %vm1185 = vcmp.eq.s32.totalorder %v259, %v285
      %vm1186 = vcmp.eq.s32.totalorder %v259, %v289
      %vm1187 = vcmp.eq.s32.totalorder %v259, %v293
      %vm1188 = vcmp.eq.s32.totalorder %v259, %v297
      %vm1189 = vcmp.eq.s32.totalorder %v259, %v301
      %vm1190 = vcmp.eq.s32.totalorder %v259, %v305
      %vm1191 = vcmp.eq.s32.totalorder %v259, %v309
      %vm1192 = vcmp.eq.s32.totalorder %v259, %v313
      %vm1193 = vcmp.eq.s32.totalorder %v259, %v317
      %vm1194 = vcmp.eq.s32.totalorder %v259, %v321
      %vm1195 = vcmp.eq.s32.totalorder %v259, %v325
      %vm1196 = vcmp.eq.s32.totalorder %v259, %v329
      %vm1197 = vcmp.eq.s32.totalorder %v259, %v333
      %vm1198 = vcmp.eq.s32.totalorder %v260, %v273
      %vm1199 = vcmp.eq.s32.totalorder %v260, %v277
      %vm1200 = vcmp.eq.s32.totalorder %v260, %v281
      %vm1201 = vcmp.eq.s32.totalorder %v260, %v285
      %vm1202 = vcmp.eq.s32.totalorder %v260, %v289
      %vm1203 = vcmp.eq.s32.totalorder %v260, %v293
      %vm1204 = vcmp.eq.s32.totalorder %v260, %v297
      %vm1205 = vcmp.eq.s32.totalorder %v260, %v301
      %vm1206 = vcmp.eq.s32.totalorder %v260, %v305
      %vm1207 = vcmp.eq.s32.totalorder %v260, %v309
      %vm1208 = vcmp.eq.s32.totalorder %v260, %v313
      %vm1209 = vcmp.eq.s32.totalorder %v260, %v317
      %vm1210 = vcmp.eq.s32.totalorder %v260, %v321
      %vm1211 = vcmp.eq.s32.totalorder %v260, %v325
      %vm1212 = vcmp.eq.s32.totalorder %v260, %v329
      %vm1213 = vcmp.eq.s32.totalorder %v260, %v333
      %vm1214 = vcmp.eq.s32.totalorder %v261, %v273
      %vm1215 = vcmp.eq.s32.totalorder %v261, %v277
      %vm1216 = vcmp.eq.s32.totalorder %v261, %v281
      %vm1217 = vcmp.eq.s32.totalorder %v261, %v285
      %vm1218 = vcmp.eq.s32.totalorder %v261, %v289
      %vm1219 = vcmp.eq.s32.totalorder %v261, %v293
      %vm1220 = vcmp.eq.s32.totalorder %v261, %v297
      %vm1221 = vcmp.eq.s32.totalorder %v261, %v301
      %vm1222 = vcmp.eq.s32.totalorder %v261, %v305
      %vm1223 = vcmp.eq.s32.totalorder %v261, %v309
      %vm1224 = vcmp.eq.s32.totalorder %v261, %v313
      %vm1225 = vcmp.eq.s32.totalorder %v261, %v317
      %vm1226 = vcmp.eq.s32.totalorder %v261, %v321
      %vm1227 = vcmp.eq.s32.totalorder %v261, %v325
      %vm1228 = vcmp.eq.s32.totalorder %v261, %v329
      %vm1229 = vcmp.eq.s32.totalorder %v261, %v333
      %vm1230 = vcmp.eq.s32.totalorder %v262, %v273
      %vm1231 = vcmp.eq.s32.totalorder %v262, %v277
      %vm1232 = vcmp.eq.s32.totalorder %v262, %v281
      %vm1233 = vcmp.eq.s32.totalorder %v262, %v285
      %vm1234 = vcmp.eq.s32.totalorder %v262, %v289
      %vm1235 = vcmp.eq.s32.totalorder %v262, %v293
      %vm1236 = vcmp.eq.s32.totalorder %v262, %v297
      %vm1237 = vcmp.eq.s32.totalorder %v262, %v301
      %vm1238 = vcmp.eq.s32.totalorder %v262, %v305
      %vm1239 = vcmp.eq.s32.totalorder %v262, %v309
      %vm1240 = vcmp.eq.s32.totalorder %v262, %v313
      %vm1241 = vcmp.eq.s32.totalorder %v262, %v317
      %vm1242 = vcmp.eq.s32.totalorder %v262, %v321
      %vm1243 = vcmp.eq.s32.totalorder %v262, %v325
      %vm1244 = vcmp.eq.s32.totalorder %v262, %v329
      %vm1245 = vcmp.eq.s32.totalorder %v262, %v333
      %vm1246 = vcmp.eq.s32.totalorder %v263, %v273
      %vm1247 = vcmp.eq.s32.totalorder %v263, %v277
      %vm1248 = vcmp.eq.s32.totalorder %v263, %v281
      %vm1249 = vcmp.eq.s32.totalorder %v263, %v285
      %vm1250 = vcmp.eq.s32.totalorder %v263, %v289
      %vm1251 = vcmp.eq.s32.totalorder %v263, %v293
      %vm1252 = vcmp.eq.s32.totalorder %v263, %v297
      %vm1253 = vcmp.eq.s32.totalorder %v263, %v301
      %vm1254 = vcmp.eq.s32.totalorder %v263, %v305
      %vm1255 = vcmp.eq.s32.totalorder %v263, %v309
      %vm1256 = vcmp.eq.s32.totalorder %v263, %v313
      %vm1257 = vcmp.eq.s32.totalorder %v263, %v317
      %vm1258 = vcmp.eq.s32.totalorder %v263, %v321
      %vm1259 = vcmp.eq.s32.totalorder %v263, %v325
      %vm1260 = vcmp.eq.s32.totalorder %v263, %v329
      %vm1261 = vcmp.eq.s32.totalorder %v263, %v333
      %vm1262 = vcmp.eq.s32.totalorder %v264, %v273
      %vm1263 = vcmp.eq.s32.totalorder %v264, %v277
      %vm1264 = vcmp.eq.s32.totalorder %v264, %v281
      %vm1265 = vcmp.eq.s32.totalorder %v264, %v285
      %vm1266 = vcmp.eq.s32.totalorder %v264, %v289
      %vm1267 = vcmp.eq.s32.totalorder %v264, %v293
      %vm1268 = vcmp.eq.s32.totalorder %v264, %v297
      %vm1269 = vcmp.eq.s32.totalorder %v264, %v301
      %vm1270 = vcmp.eq.s32.totalorder %v264, %v305
      %vm1271 = vcmp.eq.s32.totalorder %v264, %v309
      %vm1272 = vcmp.eq.s32.totalorder %v264, %v313
      %vm1273 = vcmp.eq.s32.totalorder %v264, %v317
      %vm1274 = vcmp.eq.s32.totalorder %v264, %v321
      %vm1275 = vcmp.eq.s32.totalorder %v264, %v325
      %vm1276 = vcmp.eq.s32.totalorder %v264, %v329
      %vm1277 = vcmp.eq.s32.totalorder %v264, %v333
      %vm1278 = vcmp.eq.s32.totalorder %v265, %v273
      %vm1279 = vcmp.eq.s32.totalorder %v265, %v277
      %vm1280 = vcmp.eq.s32.totalorder %v265, %v281
      %vm1281 = vcmp.eq.s32.totalorder %v265, %v285
      %vm1282 = vcmp.eq.s32.totalorder %v265, %v289
      %vm1283 = vcmp.eq.s32.totalorder %v265, %v293
      %vm1284 = vcmp.eq.s32.totalorder %v265, %v297
      %vm1285 = vcmp.eq.s32.totalorder %v265, %v301
      %vm1286 = vcmp.eq.s32.totalorder %v265, %v305
      %vm1287 = vcmp.eq.s32.totalorder %v265, %v309
      %vm1288 = vcmp.eq.s32.totalorder %v265, %v313
      %vm1289 = vcmp.eq.s32.totalorder %v265, %v317
      %vm1290 = vcmp.eq.s32.totalorder %v265, %v321
      %vm1291 = vcmp.eq.s32.totalorder %v265, %v325
      %vm1292 = vcmp.eq.s32.totalorder %v265, %v329
      %vm1293 = vcmp.eq.s32.totalorder %v265, %v333
      %vm1294 = vcmp.eq.s32.totalorder %v266, %v273
      %vm1295 = vcmp.eq.s32.totalorder %v266, %v277
      %vm1296 = vcmp.eq.s32.totalorder %v266, %v281
      %vm1297 = vcmp.eq.s32.totalorder %v266, %v285
      %vm1298 = vcmp.eq.s32.totalorder %v266, %v289
      %vm1299 = vcmp.eq.s32.totalorder %v266, %v293
      %vm1300 = vcmp.eq.s32.totalorder %v266, %v297
      %vm1301 = vcmp.eq.s32.totalorder %v266, %v301
      %vm1302 = vcmp.eq.s32.totalorder %v266, %v305
      %vm1303 = vcmp.eq.s32.totalorder %v266, %v309
      %vm1304 = vcmp.eq.s32.totalorder %v266, %v313
      %vm1305 = vcmp.eq.s32.totalorder %v266, %v317
      %vm1306 = vcmp.eq.s32.totalorder %v266, %v321
      %vm1307 = vcmp.eq.s32.totalorder %v266, %v325
      %vm1308 = vcmp.eq.s32.totalorder %v266, %v329
      %vm1309 = vcmp.eq.s32.totalorder %v266, %v333
      %vm1310 = vcmp.eq.s32.totalorder %v267, %v273
      %vm1311 = vcmp.eq.s32.totalorder %v267, %v277
      %vm1312 = vcmp.eq.s32.totalorder %v267, %v281
      %vm1313 = vcmp.eq.s32.totalorder %v267, %v285
      %vm1314 = vcmp.eq.s32.totalorder %v267, %v289
      %vm1315 = vcmp.eq.s32.totalorder %v267, %v293
      %vm1316 = vcmp.eq.s32.totalorder %v267, %v297
      %vm1317 = vcmp.eq.s32.totalorder %v267, %v301
      %vm1318 = vcmp.eq.s32.totalorder %v267, %v305
      %vm1319 = vcmp.eq.s32.totalorder %v267, %v309
      %vm1320 = vcmp.eq.s32.totalorder %v267, %v313
      %vm1321 = vcmp.eq.s32.totalorder %v267, %v317
      %vm1322 = vcmp.eq.s32.totalorder %v267, %v321
      %vm1323 = vcmp.eq.s32.totalorder %v267, %v325
      %vm1324 = vcmp.eq.s32.totalorder %v267, %v329
      %vm1325 = vcmp.eq.s32.totalorder %v267, %v333
      %vm1326 = vcmp.eq.s32.totalorder %v268, %v273
      %vm1327 = vcmp.eq.s32.totalorder %v268, %v277
      %vm1328 = vcmp.eq.s32.totalorder %v268, %v281
      %vm1329 = vcmp.eq.s32.totalorder %v268, %v285
      %vm1330 = vcmp.eq.s32.totalorder %v268, %v289
      %vm1331 = vcmp.eq.s32.totalorder %v268, %v293
      %vm1332 = vcmp.eq.s32.totalorder %v268, %v297
      %vm1333 = vcmp.eq.s32.totalorder %v268, %v301
      %vm1334 = vcmp.eq.s32.totalorder %v268, %v305
      %vm1335 = vcmp.eq.s32.totalorder %v268, %v309
      %vm1336 = vcmp.eq.s32.totalorder %v268, %v313
      %vm1337 = vcmp.eq.s32.totalorder %v268, %v317
      %vm1338 = vcmp.eq.s32.totalorder %v268, %v321
      %vm1339 = vcmp.eq.s32.totalorder %v268, %v325
      %vm1340 = vcmp.eq.s32.totalorder %v268, %v329
      %vm1341 = vcmp.eq.s32.totalorder %v268, %v333
      %vm1342 = vcmp.eq.s32.totalorder %v269, %v273
      %vm1343 = vcmp.eq.s32.totalorder %v269, %v277
      %vm1344 = vcmp.eq.s32.totalorder %v269, %v281
      %vm1345 = vcmp.eq.s32.totalorder %v269, %v285
      %vm1346 = vcmp.eq.s32.totalorder %v269, %v289
      %vm1347 = vcmp.eq.s32.totalorder %v269, %v293
      %vm1348 = vcmp.eq.s32.totalorder %v269, %v297
      %vm1349 = vcmp.eq.s32.totalorder %v269, %v301
      %vm1350 = vcmp.eq.s32.totalorder %v269, %v305
      %vm1351 = vcmp.eq.s32.totalorder %v269, %v309
      %vm1352 = vcmp.eq.s32.totalorder %v269, %v313
      %vm1353 = vcmp.eq.s32.totalorder %v269, %v317
      %vm1354 = vcmp.eq.s32.totalorder %v269, %v321
      %vm1355 = vcmp.eq.s32.totalorder %v269, %v325
      %vm1356 = vcmp.eq.s32.totalorder %v269, %v329
      %vm1357 = vcmp.eq.s32.totalorder %v269, %v333
      %v1358 = vsel %vm334, 1, 0
      %v1359 = vsel %vm335, 1, 0
      %v1360 = vsel %vm336, 1, 0
      %v1361 = vsel %vm337, 1, 0
      %v1362 = vsel %vm338, 1, 0
      %v1363 = vsel %vm339, 1, 0
      %v1364 = vsel %vm340, 1, 0
      %v1365 = vsel %vm341, 1, 0
      %v1366 = vsel %vm342, 1, 0
      %v1367 = vsel %vm343, 1, 0
      %v1368 = vsel %vm344, 1, 0
      %v1369 = vsel %vm345, 1, 0
      %v1370 = vsel %vm346, 1, 0
      %v1371 = vsel %vm347, 1, 0
      %v1372 = vsel %vm348, 1, 0
      %v1373 = vsel %vm349, 1, 0
      %v1374 = vsel %vm350, 1, 0
      %v1375 = vsel %vm351, 1, 0
      %v1376 = vsel %vm352, 1, 0
      %v1377 = vsel %vm353, 1, 0
      %v1378 = vsel %vm354, 1, 0
      %v1379 = vsel %vm355, 1, 0
      %v1380 = vsel %vm356, 1, 0
      %v1381 = vsel %vm357, 1, 0
      %v1382 = vsel %vm358, 1, 0
      %v1383 = vsel %vm359, 1, 0
      %v1384 = vsel %vm360, 1, 0
      %v1385 = vsel %vm361, 1, 0
      %v1386 = vsel %vm362, 1, 0
      %v1387 = vsel %vm363, 1, 0
      %v1388 = vsel %vm364, 1, 0
      %v1389 = vsel %vm365, 1, 0
      %v1390 = vsel %vm366, 1, 0
      %v1391 = vsel %vm367, 1, 0
      %v1392 = vsel %vm368, 1, 0
      %v1393 = vsel %vm369, 1, 0
      %v1394 = vsel %vm370, 1, 0
      %v1395 = vsel %vm371, 1, 0
      %v1396 = vsel %vm372, 1, 0
      %v1397 = vsel %vm373, 1, 0
      %v1398 = vsel %vm374, 1, 0
      %v1399 = vsel %vm375, 1, 0
      %v1400 = vsel %vm376, 1, 0
      %v1401 = vsel %vm377, 1, 0
      %v1402 = vsel %vm378, 1, 0
      %v1403 = vsel %vm379, 1, 0
      %v1404 = vsel %vm380, 1, 0
      %v1405 = vsel %vm381, 1, 0
      %v1406 = vsel %vm382, 1, 0
      %v1407 = vsel %vm383, 1, 0
      %v1408 = vsel %vm384, 1, 0
      %v1409 = vsel %vm385, 1, 0
      %v1410 = vsel %vm386, 1, 0
      %v1411 = vsel %vm387, 1, 0
      %v1412 = vsel %vm388, 1, 0
      %v1413 = vsel %vm389, 1, 0
      %v1414 = vsel %vm390, 1, 0
      %v1415 = vsel %vm391, 1, 0
      %v1416 = vsel %vm392, 1, 0
      %v1417 = vsel %vm393, 1, 0
      %v1418 = vsel %vm394, 1, 0
      %v1419 = vsel %vm395, 1, 0
      %v1420 = vsel %vm396, 1, 0
      %v1421 = vsel %vm397, 1, 0
      %v1422 = vsel %vm398, 1, 0
      %v1423 = vsel %vm399, 1, 0
      %v1424 = vsel %vm400, 1, 0
      %v1425 = vsel %vm401, 1, 0
      %v1426 = vsel %vm402, 1, 0
      %v1427 = vsel %vm403, 1, 0
      %v1428 = vsel %vm404, 1, 0
      %v1429 = vsel %vm405, 1, 0
      %v1430 = vsel %vm406, 1, 0
      %v1431 = vsel %vm407, 1, 0
      %v1432 = vsel %vm408, 1, 0
      %v1433 = vsel %vm409, 1, 0
      %v1434 = vsel %vm410, 1, 0
      %v1435 = vsel %vm411, 1, 0
      %v1436 = vsel %vm412, 1, 0
      %v1437 = vsel %vm413, 1, 0
      %v1438 = vsel %vm414, 1, 0
      %v1439 = vsel %vm415, 1, 0
      %v1440 = vsel %vm416, 1, 0
      %v1441 = vsel %vm417, 1, 0
      %v1442 = vsel %vm418, 1, 0
      %v1443 = vsel %vm419, 1, 0
      %v1444 = vsel %vm420, 1, 0
      %v1445 = vsel %vm421, 1, 0
      %v1446 = vsel %vm422, 1, 0
      %v1447 = vsel %vm423, 1, 0
      %v1448 = vsel %vm424, 1, 0
      %v1449 = vsel %vm425, 1, 0
      %v1450 = vsel %vm426, 1, 0
      %v1451 = vsel %vm427, 1, 0
      %v1452 = vsel %vm428, 1, 0
      %v1453 = vsel %vm429, 1, 0
      %v1454 = vsel %vm430, 1, 0
      %v1455 = vsel %vm431, 1, 0
      %v1456 = vsel %vm432, 1, 0
      %v1457 = vsel %vm433, 1, 0
      %v1458 = vsel %vm434, 1, 0
      %v1459 = vsel %vm435, 1, 0
      %v1460 = vsel %vm436, 1, 0
      %v1461 = vsel %vm437, 1, 0
      %v1462 = vsel %vm438, 1, 0
      %v1463 = vsel %vm439, 1, 0
      %v1464 = vsel %vm440, 1, 0
      %v1465 = vsel %vm441, 1, 0
      %v1466 = vsel %vm442, 1, 0
      %v1467 = vsel %vm443, 1, 0
      %v1468 = vsel %vm444, 1, 0
      %v1469 = vsel %vm445, 1, 0
      %v1470 = vsel %vm446, 1, 0
      %v1471 = vsel %vm447, 1, 0
      %v1472 = vsel %vm448, 1, 0
      %v1473 = vsel %vm449, 1, 0
      %v1474 = vsel %vm450, 1, 0
      %v1475 = vsel %vm451, 1, 0
      %v1476 = vsel %vm452, 1, 0
      %v1477 = vsel %vm453, 1, 0
      %v1478 = vsel %vm454, 1, 0
      %v1479 = vsel %vm455, 1, 0
      %v1480 = vsel %vm456, 1, 0
      %v1481 = vsel %vm457, 1, 0
      %v1482 = vsel %vm458, 1, 0
      %v1483 = vsel %vm459, 1, 0
      %v1484 = vsel %vm460, 1, 0
      %v1485 = vsel %vm461, 1, 0
      %v1486 = vsel %vm462, 1, 0
      %v1487 = vsel %vm463, 1, 0
      %v1488 = vsel %vm464, 1, 0
      %v1489 = vsel %vm465, 1, 0
      %v1490 = vsel %vm466, 1, 0
      %v1491 = vsel %vm467, 1, 0
      %v1492 = vsel %vm468, 1, 0
      %v1493 = vsel %vm469, 1, 0
      %v1494 = vsel %vm470, 1, 0
      %v1495 = vsel %vm471, 1, 0
      %v1496 = vsel %vm472, 1, 0
      %v1497 = vsel %vm473, 1, 0
      %v1498 = vsel %vm474, 1, 0
      %v1499 = vsel %vm475, 1, 0
      %v1500 = vsel %vm476, 1, 0
      %v1501 = vsel %vm477, 1, 0
      %v1502 = vsel %vm478, 1, 0
      %v1503 = vsel %vm479, 1, 0
      %v1504 = vsel %vm480, 1, 0
      %v1505 = vsel %vm481, 1, 0
      %v1506 = vsel %vm482, 1, 0
      %v1507 = vsel %vm483, 1, 0
      %v1508 = vsel %vm484, 1, 0
      %v1509 = vsel %vm485, 1, 0
      %v1510 = vsel %vm486, 1, 0
      %v1511 = vsel %vm487, 1, 0
      %v1512 = vsel %vm488, 1, 0
      %v1513 = vsel %vm489, 1, 0
      %v1514 = vsel %vm490, 1, 0
      %v1515 = vsel %vm491, 1, 0
      %v1516 = vsel %vm492, 1, 0
      %v1517 = vsel %vm493, 1, 0
      %v1518 = vsel %vm494, 1, 0
      %v1519 = vsel %vm495, 1, 0
      %v1520 = vsel %vm496, 1, 0
      %v1521 = vsel %vm497, 1, 0
      %v1522 = vsel %vm498, 1, 0
      %v1523 = vsel %vm499, 1, 0
      %v1524 = vsel %vm500, 1, 0
      %v1525 = vsel %vm501, 1, 0
      %v1526 = vsel %vm502, 1, 0
      %v1527 = vsel %vm503, 1, 0
      %v1528 = vsel %vm504, 1, 0
      %v1529 = vsel %vm505, 1, 0
      %v1530 = vsel %vm506, 1, 0
      %v1531 = vsel %vm507, 1, 0
      %v1532 = vsel %vm508, 1, 0
      %v1533 = vsel %vm509, 1, 0
      %v1534 = vsel %vm510, 1, 0
      %v1535 = vsel %vm511, 1, 0
      %v1536 = vsel %vm512, 1, 0
      %v1537 = vsel %vm513, 1, 0
      %v1538 = vsel %vm514, 1, 0
      %v1539 = vsel %vm515, 1, 0
      %v1540 = vsel %vm516, 1, 0
      %v1541 = vsel %vm517, 1, 0
      %v1542 = vsel %vm518, 1, 0
      %v1543 = vsel %vm519, 1, 0
      %v1544 = vsel %vm520, 1, 0
      %v1545 = vsel %vm521, 1, 0
      %v1546 = vsel %vm522, 1, 0
      %v1547 = vsel %vm523, 1, 0
      %v1548 = vsel %vm524, 1, 0
      %v1549 = vsel %vm525, 1, 0
      %v1550 = vsel %vm526, 1, 0
      %v1551 = vsel %vm527, 1, 0
      %v1552 = vsel %vm528, 1, 0
      %v1553 = vsel %vm529, 1, 0
      %v1554 = vsel %vm530, 1, 0
      %v1555 = vsel %vm531, 1, 0
      %v1556 = vsel %vm532, 1, 0
      %v1557 = vsel %vm533, 1, 0
      %v1558 = vsel %vm534, 1, 0
      %v1559 = vsel %vm535, 1, 0
      %v1560 = vsel %vm536, 1, 0
      %v1561 = vsel %vm537, 1, 0
      %v1562 = vsel %vm538, 1, 0
      %v1563 = vsel %vm539, 1, 0
      %v1564 = vsel %vm540, 1, 0
      %v1565 = vsel %vm541, 1, 0
      %v1566 = vsel %vm542, 1, 0
      %v1567 = vsel %vm543, 1, 0
      %v1568 = vsel %vm544, 1, 0
      %v1569 = vsel %vm545, 1, 0
      %v1570 = vsel %vm546, 1, 0
      %v1571 = vsel %vm547, 1, 0
      %v1572 = vsel %vm548, 1, 0
      %v1573 = vsel %vm549, 1, 0
      %v1574 = vsel %vm550, 1, 0
      %v1575 = vsel %vm551, 1, 0
      %v1576 = vsel %vm552, 1, 0
      %v1577 = vsel %vm553, 1, 0
      %v1578 = vsel %vm554, 1, 0
      %v1579 = vsel %vm555, 1, 0
      %v1580 = vsel %vm556, 1, 0
      %v1581 = vsel %vm557, 1, 0
      %v1582 = vsel %vm558, 1, 0
      %v1583 = vsel %vm559, 1, 0
      %v1584 = vsel %vm560, 1, 0
      %v1585 = vsel %vm561, 1, 0
      %v1586 = vsel %vm562, 1, 0
      %v1587 = vsel %vm563, 1, 0
      %v1588 = vsel %vm564, 1, 0
      %v1589 = vsel %vm565, 1, 0
      %v1590 = vsel %vm566, 1, 0
      %v1591 = vsel %vm567, 1, 0
      %v1592 = vsel %vm568, 1, 0
      %v1593 = vsel %vm569, 1, 0
      %v1594 = vsel %vm570, 1, 0
      %v1595 = vsel %vm571, 1, 0
      %v1596 = vsel %vm572, 1, 0
      %v1597 = vsel %vm573, 1, 0
      %v1598 = vsel %vm574, 1, 0
      %v1599 = vsel %vm575, 1, 0
      %v1600 = vsel %vm576, 1, 0
      %v1601 = vsel %vm577, 1, 0
      %v1602 = vsel %vm578, 1, 0
      %v1603 = vsel %vm579, 1, 0
      %v1604 = vsel %vm580, 1, 0
      %v1605 = vsel %vm581, 1, 0
      %v1606 = vsel %vm582, 1, 0
      %v1607 = vsel %vm583, 1, 0
      %v1608 = vsel %vm584, 1, 0
      %v1609 = vsel %vm585, 1, 0
      %v1610 = vsel %vm586, 1, 0
      %v1611 = vsel %vm587, 1, 0
      %v1612 = vsel %vm588, 1, 0
      %v1613 = vsel %vm589, 1, 0
      %v1614 = vsel %vm590, 1, 0
      %v1615 = vsel %vm591, 1, 0
      %v1616 = vsel %vm592, 1, 0
      %v1617 = vsel %vm593, 1, 0
      %v1618 = vsel %vm594, 1, 0
      %v1619 = vsel %vm595, 1, 0
      %v1620 = vsel %vm596, 1, 0
      %v1621 = vsel %vm597, 1, 0
      %v1622 = vsel %vm598, 1, 0
      %v1623 = vsel %vm599, 1, 0
      %v1624 = vsel %vm600, 1, 0
      %v1625 = vsel %vm601, 1, 0
      %v1626 = vsel %vm602, 1, 0
      %v1627 = vsel %vm603, 1, 0
      %v1628 = vsel %vm604, 1, 0
      %v1629 = vsel %vm605, 1, 0
      %v1630 = vsel %vm606, 1, 0
      %v1631 = vsel %vm607, 1, 0
      %v1632 = vsel %vm608, 1, 0
      %v1633 = vsel %vm609, 1, 0
      %v1634 = vsel %vm610, 1, 0
      %v1635 = vsel %vm611, 1, 0
      %v1636 = vsel %vm612, 1, 0
      %v1637 = vsel %vm613, 1, 0
      %v1638 = vsel %vm614, 1, 0
      %v1639 = vsel %vm615, 1, 0
      %v1640 = vsel %vm616, 1, 0
      %v1641 = vsel %vm617, 1, 0
      %v1642 = vsel %vm618, 1, 0
      %v1643 = vsel %vm619, 1, 0
      %v1644 = vsel %vm620, 1, 0
      %v1645 = vsel %vm621, 1, 0
      %v1646 = vsel %vm622, 1, 0
      %v1647 = vsel %vm623, 1, 0
      %v1648 = vsel %vm624, 1, 0
      %v1649 = vsel %vm625, 1, 0
      %v1650 = vsel %vm626, 1, 0
      %v1651 = vsel %vm627, 1, 0
      %v1652 = vsel %vm628, 1, 0
      %v1653 = vsel %vm629, 1, 0
      %v1654 = vsel %vm630, 1, 0
      %v1655 = vsel %vm631, 1, 0
      %v1656 = vsel %vm632, 1, 0
      %v1657 = vsel %vm633, 1, 0
      %v1658 = vsel %vm634, 1, 0
      %v1659 = vsel %vm635, 1, 0
      %v1660 = vsel %vm636, 1, 0
      %v1661 = vsel %vm637, 1, 0
      %v1662 = vsel %vm638, 1, 0
      %v1663 = vsel %vm639, 1, 0
      %v1664 = vsel %vm640, 1, 0
      %v1665 = vsel %vm641, 1, 0
      %v1666 = vsel %vm642, 1, 0
      %v1667 = vsel %vm643, 1, 0
      %v1668 = vsel %vm644, 1, 0
      %v1669 = vsel %vm645, 1, 0
      %v1670 = vsel %vm646, 1, 0
      %v1671 = vsel %vm647, 1, 0
      %v1672 = vsel %vm648, 1, 0
      %v1673 = vsel %vm649, 1, 0
      %v1674 = vsel %vm650, 1, 0
      %v1675 = vsel %vm651, 1, 0
      %v1676 = vsel %vm652, 1, 0
      %v1677 = vsel %vm653, 1, 0
      %v1678 = vsel %vm654, 1, 0
      %v1679 = vsel %vm655, 1, 0
      %v1680 = vsel %vm656, 1, 0
      %v1681 = vsel %vm657, 1, 0
      %v1682 = vsel %vm658, 1, 0
      %v1683 = vsel %vm659, 1, 0
      %v1684 = vsel %vm660, 1, 0
      %v1685 = vsel %vm661, 1, 0
      %v1686 = vsel %vm662, 1, 0
      %v1687 = vsel %vm663, 1, 0
      %v1688 = vsel %vm664, 1, 0
      %v1689 = vsel %vm665, 1, 0
      %v1690 = vsel %vm666, 1, 0
      %v1691 = vsel %vm667, 1, 0
      %v1692 = vsel %vm668, 1, 0
      %v1693 = vsel %vm669, 1, 0
      %v1694 = vsel %vm670, 1, 0
      %v1695 = vsel %vm671, 1, 0
      %v1696 = vsel %vm672, 1, 0
      %v1697 = vsel %vm673, 1, 0
      %v1698 = vsel %vm674, 1, 0
      %v1699 = vsel %vm675, 1, 0
      %v1700 = vsel %vm676, 1, 0
      %v1701 = vsel %vm677, 1, 0
      %v1702 = vsel %vm678, 1, 0
      %v1703 = vsel %vm679, 1, 0
      %v1704 = vsel %vm680, 1, 0
      %v1705 = vsel %vm681, 1, 0
      %v1706 = vsel %vm682, 1, 0
      %v1707 = vsel %vm683, 1, 0
      %v1708 = vsel %vm684, 1, 0
      %v1709 = vsel %vm685, 1, 0
      %v1710 = vsel %vm686, 1, 0
      %v1711 = vsel %vm687, 1, 0
      %v1712 = vsel %vm688, 1, 0
      %v1713 = vsel %vm689, 1, 0
      %v1714 = vsel %vm690, 1, 0
      %v1715 = vsel %vm691, 1, 0
      %v1716 = vsel %vm692, 1, 0
      %v1717 = vsel %vm693, 1, 0
      %v1718 = vsel %vm694, 1, 0
      %v1719 = vsel %vm695, 1, 0
      %v1720 = vsel %vm696, 1, 0
      %v1721 = vsel %vm697, 1, 0
      %v1722 = vsel %vm698, 1, 0
      %v1723 = vsel %vm699, 1, 0
      %v1724 = vsel %vm700, 1, 0
      %v1725 = vsel %vm701, 1, 0
      %v1726 = vsel %vm702, 1, 0
      %v1727 = vsel %vm703, 1, 0
      %v1728 = vsel %vm704, 1, 0
      %v1729 = vsel %vm705, 1, 0
      %v1730 = vsel %vm706, 1, 0
      %v1731 = vsel %vm707, 1, 0
      %v1732 = vsel %vm708, 1, 0
      %v1733 = vsel %vm709, 1, 0
      %v1734 = vsel %vm710, 1, 0
      %v1735 = vsel %vm711, 1, 0
      %v1736 = vsel %vm712, 1, 0
      %v1737 = vsel %vm713, 1, 0
      %v1738 = vsel %vm714, 1, 0
      %v1739 = vsel %vm715, 1, 0
      %v1740 = vsel %vm716, 1, 0
      %v1741 = vsel %vm717, 1, 0
      %v1742 = vsel %vm718, 1, 0
      %v1743 = vsel %vm719, 1, 0
      %v1744 = vsel %vm720, 1, 0
      %v1745 = vsel %vm721, 1, 0
      %v1746 = vsel %vm722, 1, 0
      %v1747 = vsel %vm723, 1, 0
      %v1748 = vsel %vm724, 1, 0
      %v1749 = vsel %vm725, 1, 0
      %v1750 = vsel %vm726, 1, 0
      %v1751 = vsel %vm727, 1, 0
      %v1752 = vsel %vm728, 1, 0
      %v1753 = vsel %vm729, 1, 0
      %v1754 = vsel %vm730, 1, 0
      %v1755 = vsel %vm731, 1, 0
      %v1756 = vsel %vm732, 1, 0
      %v1757 = vsel %vm733, 1, 0
      %v1758 = vsel %vm734, 1, 0
      %v1759 = vsel %vm735, 1, 0
      %v1760 = vsel %vm736, 1, 0
      %v1761 = vsel %vm737, 1, 0
      %v1762 = vsel %vm738, 1, 0
      %v1763 = vsel %vm739, 1, 0
      %v1764 = vsel %vm740, 1, 0
      %v1765 = vsel %vm741, 1, 0
      %v1766 = vsel %vm742, 1, 0
      %v1767 = vsel %vm743, 1, 0
      %v1768 = vsel %vm744, 1, 0
      %v1769 = vsel %vm745, 1, 0
      %v1770 = vsel %vm746, 1, 0
      %v1771 = vsel %vm747, 1, 0
      %v1772 = vsel %vm748, 1, 0
      %v1773 = vsel %vm749, 1, 0
      %v1774 = vsel %vm750, 1, 0
      %v1775 = vsel %vm751, 1, 0
      %v1776 = vsel %vm752, 1, 0
      %v1777 = vsel %vm753, 1, 0
      %v1778 = vsel %vm754, 1, 0
      %v1779 = vsel %vm755, 1, 0
      %v1780 = vsel %vm756, 1, 0
      %v1781 = vsel %vm757, 1, 0
      %v1782 = vsel %vm758, 1, 0
      %v1783 = vsel %vm759, 1, 0
      %v1784 = vsel %vm760, 1, 0
      %v1785 = vsel %vm761, 1, 0
      %v1786 = vsel %vm762, 1, 0
      %v1787 = vsel %vm763, 1, 0
      %v1788 = vsel %vm764, 1, 0
      %v1789 = vsel %vm765, 1, 0
      %v1790 = vsel %vm766, 1, 0
      %v1791 = vsel %vm767, 1, 0
      %v1792 = vsel %vm768, 1, 0
      %v1793 = vsel %vm769, 1, 0
      %v1794 = vsel %vm770, 1, 0
      %v1795 = vsel %vm771, 1, 0
      %v1796 = vsel %vm772, 1, 0
      %v1797 = vsel %vm773, 1, 0
      %v1798 = vsel %vm774, 1, 0
      %v1799 = vsel %vm775, 1, 0
      %v1800 = vsel %vm776, 1, 0
      %v1801 = vsel %vm777, 1, 0
      %v1802 = vsel %vm778, 1, 0
      %v1803 = vsel %vm779, 1, 0
      %v1804 = vsel %vm780, 1, 0
      %v1805 = vsel %vm781, 1, 0
      %v1806 = vsel %vm782, 1, 0
      %v1807 = vsel %vm783, 1, 0
      %v1808 = vsel %vm784, 1, 0
      %v1809 = vsel %vm785, 1, 0
      %v1810 = vsel %vm786, 1, 0
      %v1811 = vsel %vm787, 1, 0
      %v1812 = vsel %vm788, 1, 0
      %v1813 = vsel %vm789, 1, 0
      %v1814 = vsel %vm790, 1, 0
      %v1815 = vsel %vm791, 1, 0
      %v1816 = vsel %vm792, 1, 0
      %v1817 = vsel %vm793, 1, 0
      %v1818 = vsel %vm794, 1, 0
      %v1819 = vsel %vm795, 1, 0
      %v1820 = vsel %vm796, 1, 0
      %v1821 = vsel %vm797, 1, 0
      %v1822 = vsel %vm798, 1, 0
      %v1823 = vsel %vm799, 1, 0
      %v1824 = vsel %vm800, 1, 0
      %v1825 = vsel %vm801, 1, 0
      %v1826 = vsel %vm802, 1, 0
      %v1827 = vsel %vm803, 1, 0
      %v1828 = vsel %vm804, 1, 0
      %v1829 = vsel %vm805, 1, 0
      %v1830 = vsel %vm806, 1, 0
      %v1831 = vsel %vm807, 1, 0
      %v1832 = vsel %vm808, 1, 0
      %v1833 = vsel %vm809, 1, 0
      %v1834 = vsel %vm810, 1, 0
      %v1835 = vsel %vm811, 1, 0
      %v1836 = vsel %vm812, 1, 0
      %v1837 = vsel %vm813, 1, 0
      %v1838 = vsel %vm814, 1, 0
      %v1839 = vsel %vm815, 1, 0
      %v1840 = vsel %vm816, 1, 0
      %v1841 = vsel %vm817, 1, 0
      %v1842 = vsel %vm818, 1, 0
      %v1843 = vsel %vm819, 1, 0
      %v1844 = vsel %vm820, 1, 0
      %v1845 = vsel %vm821, 1, 0
      %v1846 = vsel %vm822, 1, 0
      %v1847 = vsel %vm823, 1, 0
      %v1848 = vsel %vm824, 1, 0
      %v1849 = vsel %vm825, 1, 0
      %v1850 = vsel %vm826, 1, 0
      %v1851 = vsel %vm827, 1, 0
      %v1852 = vsel %vm828, 1, 0
      %v1853 = vsel %vm829, 1, 0
      %v1854 = vsel %vm830, 1, 0
      %v1855 = vsel %vm831, 1, 0
      %v1856 = vsel %vm832, 1, 0
      %v1857 = vsel %vm833, 1, 0
      %v1858 = vsel %vm834, 1, 0
      %v1859 = vsel %vm835, 1, 0
      %v1860 = vsel %vm836, 1, 0
      %v1861 = vsel %vm837, 1, 0
      %v1862 = vsel %vm838, 1, 0
      %v1863 = vsel %vm839, 1, 0
      %v1864 = vsel %vm840, 1, 0
      %v1865 = vsel %vm841, 1, 0
      %v1866 = vsel %vm842, 1, 0
      %v1867 = vsel %vm843, 1, 0
      %v1868 = vsel %vm844, 1, 0
      %v1869 = vsel %vm845, 1, 0
      %v1870 = vsel %vm846, 1, 0
      %v1871 = vsel %vm847, 1, 0
      %v1872 = vsel %vm848, 1, 0
      %v1873 = vsel %vm849, 1, 0
      %v1874 = vsel %vm850, 1, 0
      %v1875 = vsel %vm851, 1, 0
      %v1876 = vsel %vm852, 1, 0
      %v1877 = vsel %vm853, 1, 0
      %v1878 = vsel %vm854, 1, 0
      %v1879 = vsel %vm855, 1, 0
      %v1880 = vsel %vm856, 1, 0
      %v1881 = vsel %vm857, 1, 0
      %v1882 = vsel %vm858, 1, 0
      %v1883 = vsel %vm859, 1, 0
      %v1884 = vsel %vm860, 1, 0
      %v1885 = vsel %vm861, 1, 0
      %v1886 = vsel %vm862, 1, 0
      %v1887 = vsel %vm863, 1, 0
      %v1888 = vsel %vm864, 1, 0
      %v1889 = vsel %vm865, 1, 0
      %v1890 = vsel %vm866, 1, 0
      %v1891 = vsel %vm867, 1, 0
      %v1892 = vsel %vm868, 1, 0
      %v1893 = vsel %vm869, 1, 0
      %v1894 = vsel %vm870, 1, 0
      %v1895 = vsel %vm871, 1, 0
      %v1896 = vsel %vm872, 1, 0
      %v1897 = vsel %vm873, 1, 0
      %v1898 = vsel %vm874, 1, 0
      %v1899 = vsel %vm875, 1, 0
      %v1900 = vsel %vm876, 1, 0
      %v1901 = vsel %vm877, 1, 0
      %v1902 = vsel %vm878, 1, 0
      %v1903 = vsel %vm879, 1, 0
      %v1904 = vsel %vm880, 1, 0
      %v1905 = vsel %vm881, 1, 0
      %v1906 = vsel %vm882, 1, 0
      %v1907 = vsel %vm883, 1, 0
      %v1908 = vsel %vm884, 1, 0
      %v1909 = vsel %vm885, 1, 0
      %v1910 = vsel %vm886, 1, 0
      %v1911 = vsel %vm887, 1, 0
      %v1912 = vsel %vm888, 1, 0
      %v1913 = vsel %vm889, 1, 0
      %v1914 = vsel %vm890, 1, 0
      %v1915 = vsel %vm891, 1, 0
      %v1916 = vsel %vm892, 1, 0
      %v1917 = vsel %vm893, 1, 0
      %v1918 = vsel %vm894, 1, 0
      %v1919 = vsel %vm895, 1, 0
      %v1920 = vsel %vm896, 1, 0
      %v1921 = vsel %vm897, 1, 0
      %v1922 = vsel %vm898, 1, 0
      %v1923 = vsel %vm899, 1, 0
      %v1924 = vsel %vm900, 1, 0
      %v1925 = vsel %vm901, 1, 0
      %v1926 = vsel %vm902, 1, 0
      %v1927 = vsel %vm903, 1, 0
      %v1928 = vsel %vm904, 1, 0
      %v1929 = vsel %vm905, 1, 0
      %v1930 = vsel %vm906, 1, 0
      %v1931 = vsel %vm907, 1, 0
      %v1932 = vsel %vm908, 1, 0
      %v1933 = vsel %vm909, 1, 0
      %v1934 = vsel %vm910, 1, 0
      %v1935 = vsel %vm911, 1, 0
      %v1936 = vsel %vm912, 1, 0
      %v1937 = vsel %vm913, 1, 0
      %v1938 = vsel %vm914, 1, 0
      %v1939 = vsel %vm915, 1, 0
      %v1940 = vsel %vm916, 1, 0
      %v1941 = vsel %vm917, 1, 0
      %v1942 = vsel %vm918, 1, 0
      %v1943 = vsel %vm919, 1, 0
      %v1944 = vsel %vm920, 1, 0
      %v1945 = vsel %vm921, 1, 0
      %v1946 = vsel %vm922, 1, 0
      %v1947 = vsel %vm923, 1, 0
      %v1948 = vsel %vm924, 1, 0
      %v1949 = vsel %vm925, 1, 0
      %v1950 = vsel %vm926, 1, 0
      %v1951 = vsel %vm927, 1, 0
      %v1952 = vsel %vm928, 1, 0
      %v1953 = vsel %vm929, 1, 0
      %v1954 = vsel %vm930, 1, 0
      %v1955 = vsel %vm931, 1, 0
      %v1956 = vsel %vm932, 1, 0
      %v1957 = vsel %vm933, 1, 0
      %v1958 = vsel %vm934, 1, 0
      %v1959 = vsel %vm935, 1, 0
      %v1960 = vsel %vm936, 1, 0
      %v1961 = vsel %vm937, 1, 0
      %v1962 = vsel %vm938, 1, 0
      %v1963 = vsel %vm939, 1, 0
      %v1964 = vsel %vm940, 1, 0
      %v1965 = vsel %vm941, 1, 0
      %v1966 = vsel %vm942, 1, 0
      %v1967 = vsel %vm943, 1, 0
      %v1968 = vsel %vm944, 1, 0
      %v1969 = vsel %vm945, 1, 0
      %v1970 = vsel %vm946, 1, 0
      %v1971 = vsel %vm947, 1, 0
      %v1972 = vsel %vm948, 1, 0
      %v1973 = vsel %vm949, 1, 0
      %v1974 = vsel %vm950, 1, 0
      %v1975 = vsel %vm951, 1, 0
      %v1976 = vsel %vm952, 1, 0
      %v1977 = vsel %vm953, 1, 0
      %v1978 = vsel %vm954, 1, 0
      %v1979 = vsel %vm955, 1, 0
      %v1980 = vsel %vm956, 1, 0
      %v1981 = vsel %vm957, 1, 0
      %v1982 = vsel %vm958, 1, 0
      %v1983 = vsel %vm959, 1, 0
      %v1984 = vsel %vm960, 1, 0
      %v1985 = vsel %vm961, 1, 0
      %v1986 = vsel %vm962, 1, 0
      %v1987 = vsel %vm963, 1, 0
      %v1988 = vsel %vm964, 1, 0
      %v1989 = vsel %vm965, 1, 0
      %v1990 = vsel %vm966, 1, 0
      %v1991 = vsel %vm967, 1, 0
      %v1992 = vsel %vm968, 1, 0
      %v1993 = vsel %vm969, 1, 0
      %v1994 = vsel %vm970, 1, 0
      %v1995 = vsel %vm971, 1, 0
      %v1996 = vsel %vm972, 1, 0
      %v1997 = vsel %vm973, 1, 0
      %v1998 = vsel %vm974, 1, 0
      %v1999 = vsel %vm975, 1, 0
      %v2000 = vsel %vm976, 1, 0
      %v2001 = vsel %vm977, 1, 0
      %v2002 = vsel %vm978, 1, 0
      %v2003 = vsel %vm979, 1, 0
      %v2004 = vsel %vm980, 1, 0
      %v2005 = vsel %vm981, 1, 0
      %v2006 = vsel %vm982, 1, 0
      %v2007 = vsel %vm983, 1, 0
      %v2008 = vsel %vm984, 1, 0
      %v2009 = vsel %vm985, 1, 0
      %v2010 = vsel %vm986, 1, 0
      %v2011 = vsel %vm987, 1, 0
      %v2012 = vsel %vm988, 1, 0
      %v2013 = vsel %vm989, 1, 0
      %v2014 = vsel %vm990, 1, 0
      %v2015 = vsel %vm991, 1, 0
      %v2016 = vsel %vm992, 1, 0
      %v2017 = vsel %vm993, 1, 0
      %v2018 = vsel %vm994, 1, 0
      %v2019 = vsel %vm995, 1, 0
      %v2020 = vsel %vm996, 1, 0
      %v2021 = vsel %vm997, 1, 0
      %v2022 = vsel %vm998, 1, 0
      %v2023 = vsel %vm999, 1, 0
      %v2024 = vsel %vm1000, 1, 0
      %v2025 = vsel %vm1001, 1, 0
      %v2026 = vsel %vm1002, 1, 0
      %v2027 = vsel %vm1003, 1, 0
      %v2028 = vsel %vm1004, 1, 0
      %v2029 = vsel %vm1005, 1, 0
      %v2030 = vsel %vm1006, 1, 0
      %v2031 = vsel %vm1007, 1, 0
      %v2032 = vsel %vm1008, 1, 0
      %v2033 = vsel %vm1009, 1, 0
      %v2034 = vsel %vm1010, 1, 0
      %v2035 = vsel %vm1011, 1, 0
      %v2036 = vsel %vm1012, 1, 0
      %v2037 = vsel %vm1013, 1, 0
      %v2038 = vsel %vm1014, 1, 0
      %v2039 = vsel %vm1015, 1, 0
      %v2040 = vsel %vm1016, 1, 0
      %v2041 = vsel %vm1017, 1, 0
      %v2042 = vsel %vm1018, 1, 0
      %v2043 = vsel %vm1019, 1, 0
      %v2044 = vsel %vm1020, 1, 0
      %v2045 = vsel %vm1021, 1, 0
      %v2046 = vsel %vm1022, 1, 0
      %v2047 = vsel %vm1023, 1, 0
      %v2048 = vsel %vm1024, 1, 0
      %v2049 = vsel %vm1025, 1, 0
      %v2050 = vsel %vm1026, 1, 0
      %v2051 = vsel %vm1027, 1, 0
      %v2052 = vsel %vm1028, 1, 0
      %v2053 = vsel %vm1029, 1, 0
      %v2054 = vsel %vm1030, 1, 0
      %v2055 = vsel %vm1031, 1, 0
      %v2056 = vsel %vm1032, 1, 0
      %v2057 = vsel %vm1033, 1, 0
      %v2058 = vsel %vm1034, 1, 0
      %v2059 = vsel %vm1035, 1, 0
      %v2060 = vsel %vm1036, 1, 0
      %v2061 = vsel %vm1037, 1, 0
      %v2062 = vsel %vm1038, 1, 0
      %v2063 = vsel %vm1039, 1, 0
      %v2064 = vsel %vm1040, 1, 0
      %v2065 = vsel %vm1041, 1, 0
      %v2066 = vsel %vm1042, 1, 0
      %v2067 = vsel %vm1043, 1, 0
      %v2068 = vsel %vm1044, 1, 0
      %v2069 = vsel %vm1045, 1, 0
      %v2070 = vsel %vm1046, 1, 0
      %v2071 = vsel %vm1047, 1, 0
      %v2072 = vsel %vm1048, 1, 0
      %v2073 = vsel %vm1049, 1, 0
      %v2074 = vsel %vm1050, 1, 0
      %v2075 = vsel %vm1051, 1, 0
      %v2076 = vsel %vm1052, 1, 0
      %v2077 = vsel %vm1053, 1, 0
      %v2078 = vsel %vm1054, 1, 0
      %v2079 = vsel %vm1055, 1, 0
      %v2080 = vsel %vm1056, 1, 0
      %v2081 = vsel %vm1057, 1, 0
      %v2082 = vsel %vm1058, 1, 0
      %v2083 = vsel %vm1059, 1, 0
      %v2084 = vsel %vm1060, 1, 0
      %v2085 = vsel %vm1061, 1, 0
      %v2086 = vsel %vm1062, 1, 0
      %v2087 = vsel %vm1063, 1, 0
      %v2088 = vsel %vm1064, 1, 0
      %v2089 = vsel %vm1065, 1, 0
      %v2090 = vsel %vm1066, 1, 0
      %v2091 = vsel %vm1067, 1, 0
      %v2092 = vsel %vm1068, 1, 0
      %v2093 = vsel %vm1069, 1, 0
      %v2094 = vsel %vm1070, 1, 0
      %v2095 = vsel %vm1071, 1, 0
      %v2096 = vsel %vm1072, 1, 0
      %v2097 = vsel %vm1073, 1, 0
      %v2098 = vsel %vm1074, 1, 0
      %v2099 = vsel %vm1075, 1, 0
      %v2100 = vsel %vm1076, 1, 0
      %v2101 = vsel %vm1077, 1, 0
      %v2102 = vsel %vm1078, 1, 0
      %v2103 = vsel %vm1079, 1, 0
      %v2104 = vsel %vm1080, 1, 0
      %v2105 = vsel %vm1081, 1, 0
      %v2106 = vsel %vm1082, 1, 0
      %v2107 = vsel %vm1083, 1, 0
      %v2108 = vsel %vm1084, 1, 0
      %v2109 = vsel %vm1085, 1, 0
      %v2110 = vsel %vm1086, 1, 0
      %v2111 = vsel %vm1087, 1, 0
      %v2112 = vsel %vm1088, 1, 0
      %v2113 = vsel %vm1089, 1, 0
      %v2114 = vsel %vm1090, 1, 0
      %v2115 = vsel %vm1091, 1, 0
      %v2116 = vsel %vm1092, 1, 0
      %v2117 = vsel %vm1093, 1, 0
      %v2118 = vsel %vm1094, 1, 0
      %v2119 = vsel %vm1095, 1, 0
      %v2120 = vsel %vm1096, 1, 0
      %v2121 = vsel %vm1097, 1, 0
      %v2122 = vsel %vm1098, 1, 0
      %v2123 = vsel %vm1099, 1, 0
      %v2124 = vsel %vm1100, 1, 0
      %v2125 = vsel %vm1101, 1, 0
      %v2126 = vsel %vm1102, 1, 0
      %v2127 = vsel %vm1103, 1, 0
      %v2128 = vsel %vm1104, 1, 0
      %v2129 = vsel %vm1105, 1, 0
      %v2130 = vsel %vm1106, 1, 0
      %v2131 = vsel %vm1107, 1, 0
      %v2132 = vsel %vm1108, 1, 0
      %v2133 = vsel %vm1109, 1, 0
      %v2134 = vsel %vm1110, 1, 0
      %v2135 = vsel %vm1111, 1, 0
      %v2136 = vsel %vm1112, 1, 0
      %v2137 = vsel %vm1113, 1, 0
      %v2138 = vsel %vm1114, 1, 0
      %v2139 = vsel %vm1115, 1, 0
      %v2140 = vsel %vm1116, 1, 0
      %v2141 = vsel %vm1117, 1, 0
      %v2142 = vsel %vm1118, 1, 0
      %v2143 = vsel %vm1119, 1, 0
      %v2144 = vsel %vm1120, 1, 0
      %v2145 = vsel %vm1121, 1, 0
      %v2146 = vsel %vm1122, 1, 0
      %v2147 = vsel %vm1123, 1, 0
      %v2148 = vsel %vm1124, 1, 0
      %v2149 = vsel %vm1125, 1, 0
      %v2150 = vsel %vm1126, 1, 0
      %v2151 = vsel %vm1127, 1, 0
      %v2152 = vsel %vm1128, 1, 0
      %v2153 = vsel %vm1129, 1, 0
      %v2154 = vsel %vm1130, 1, 0
      %v2155 = vsel %vm1131, 1, 0
      %v2156 = vsel %vm1132, 1, 0
      %v2157 = vsel %vm1133, 1, 0
      %v2158 = vsel %vm1134, 1, 0
      %v2159 = vsel %vm1135, 1, 0
      %v2160 = vsel %vm1136, 1, 0
      %v2161 = vsel %vm1137, 1, 0
      %v2162 = vsel %vm1138, 1, 0
      %v2163 = vsel %vm1139, 1, 0
      %v2164 = vsel %vm1140, 1, 0
      %v2165 = vsel %vm1141, 1, 0
      %v2166 = vsel %vm1142, 1, 0
      %v2167 = vsel %vm1143, 1, 0
      %v2168 = vsel %vm1144, 1, 0
      %v2169 = vsel %vm1145, 1, 0
      %v2170 = vsel %vm1146, 1, 0
      %v2171 = vsel %vm1147, 1, 0
      %v2172 = vsel %vm1148, 1, 0
      %v2173 = vsel %vm1149, 1, 0
      %v2174 = vsel %vm1150, 1, 0
      %v2175 = vsel %vm1151, 1, 0
      %v2176 = vsel %vm1152, 1, 0
      %v2177 = vsel %vm1153, 1, 0
      %v2178 = vsel %vm1154, 1, 0
      %v2179 = vsel %vm1155, 1, 0
      %v2180 = vsel %vm1156, 1, 0
      %v2181 = vsel %vm1157, 1, 0
      %v2182 = vsel %vm1158, 1, 0
      %v2183 = vsel %vm1159, 1, 0
      %v2184 = vsel %vm1160, 1, 0
      %v2185 = vsel %vm1161, 1, 0
      %v2186 = vsel %vm1162, 1, 0
      %v2187 = vsel %vm1163, 1, 0
      %v2188 = vsel %vm1164, 1, 0
      %v2189 = vsel %vm1165, 1, 0
      %v2190 = vsel %vm1166, 1, 0
      %v2191 = vsel %vm1167, 1, 0
      %v2192 = vsel %vm1168, 1, 0
      %v2193 = vsel %vm1169, 1, 0
      %v2194 = vsel %vm1170, 1, 0
      %v2195 = vsel %vm1171, 1, 0
      %v2196 = vsel %vm1172, 1, 0
      %v2197 = vsel %vm1173, 1, 0
      %v2198 = vsel %vm1174, 1, 0
      %v2199 = vsel %vm1175, 1, 0
      %v2200 = vsel %vm1176, 1, 0
      %v2201 = vsel %vm1177, 1, 0
      %v2202 = vsel %vm1178, 1, 0
      %v2203 = vsel %vm1179, 1, 0
      %v2204 = vsel %vm1180, 1, 0
      %v2205 = vsel %vm1181, 1, 0
      %v2206 = vsel %vm1182, 1, 0
      %v2207 = vsel %vm1183, 1, 0
      %v2208 = vsel %vm1184, 1, 0
      %v2209 = vsel %vm1185, 1, 0
      %v2210 = vsel %vm1186, 1, 0
      %v2211 = vsel %vm1187, 1, 0
      %v2212 = vsel %vm1188, 1, 0
      %v2213 = vsel %vm1189, 1, 0
      %v2214 = vsel %vm1190, 1, 0
      %v2215 = vsel %vm1191, 1, 0
      %v2216 = vsel %vm1192, 1, 0
      %v2217 = vsel %vm1193, 1, 0
      %v2218 = vsel %vm1194, 1, 0
      %v2219 = vsel %vm1195, 1, 0
      %v2220 = vsel %vm1196, 1, 0
      %v2221 = vsel %vm1197, 1, 0
      %v2222 = vsel %vm1198, 1, 0
      %v2223 = vsel %vm1199, 1, 0
      %v2224 = vsel %vm1200, 1, 0
      %v2225 = vsel %vm1201, 1, 0
      %v2226 = vsel %vm1202, 1, 0
      %v2227 = vsel %vm1203, 1, 0
      %v2228 = vsel %vm1204, 1, 0
      %v2229 = vsel %vm1205, 1, 0
      %v2230 = vsel %vm1206, 1, 0
      %v2231 = vsel %vm1207, 1, 0
      %v2232 = vsel %vm1208, 1, 0
      %v2233 = vsel %vm1209, 1, 0
      %v2234 = vsel %vm1210, 1, 0
      %v2235 = vsel %vm1211, 1, 0
      %v2236 = vsel %vm1212, 1, 0
      %v2237 = vsel %vm1213, 1, 0
      %v2238 = vsel %vm1214, 1, 0
      %v2239 = vsel %vm1215, 1, 0
      %v2240 = vsel %vm1216, 1, 0
      %v2241 = vsel %vm1217, 1, 0
      %v2242 = vsel %vm1218, 1, 0
      %v2243 = vsel %vm1219, 1, 0
      %v2244 = vsel %vm1220, 1, 0
      %v2245 = vsel %vm1221, 1, 0
      %v2246 = vsel %vm1222, 1, 0
      %v2247 = vsel %vm1223, 1, 0
      %v2248 = vsel %vm1224, 1, 0
      %v2249 = vsel %vm1225, 1, 0
      %v2250 = vsel %vm1226, 1, 0
      %v2251 = vsel %vm1227, 1, 0
      %v2252 = vsel %vm1228, 1, 0
      %v2253 = vsel %vm1229, 1, 0
      %v2254 = vsel %vm1230, 1, 0
      %v2255 = vsel %vm1231, 1, 0
      %v2256 = vsel %vm1232, 1, 0
      %v2257 = vsel %vm1233, 1, 0
      %v2258 = vsel %vm1234, 1, 0
      %v2259 = vsel %vm1235, 1, 0
      %v2260 = vsel %vm1236, 1, 0
      %v2261 = vsel %vm1237, 1, 0
      %v2262 = vsel %vm1238, 1, 0
      %v2263 = vsel %vm1239, 1, 0
      %v2264 = vsel %vm1240, 1, 0
      %v2265 = vsel %vm1241, 1, 0
      %v2266 = vsel %vm1242, 1, 0
      %v2267 = vsel %vm1243, 1, 0
      %v2268 = vsel %vm1244, 1, 0
      %v2269 = vsel %vm1245, 1, 0
      %v2270 = vsel %vm1246, 1, 0
      %v2271 = vsel %vm1247, 1, 0
      %v2272 = vsel %vm1248, 1, 0
      %v2273 = vsel %vm1249, 1, 0
      %v2274 = vsel %vm1250, 1, 0
      %v2275 = vsel %vm1251, 1, 0
      %v2276 = vsel %vm1252, 1, 0
      %v2277 = vsel %vm1253, 1, 0
      %v2278 = vsel %vm1254, 1, 0
      %v2279 = vsel %vm1255, 1, 0
      %v2280 = vsel %vm1256, 1, 0
      %v2281 = vsel %vm1257, 1, 0
      %v2282 = vsel %vm1258, 1, 0
      %v2283 = vsel %vm1259, 1, 0
      %v2284 = vsel %vm1260, 1, 0
      %v2285 = vsel %vm1261, 1, 0
      %v2286 = vsel %vm1262, 1, 0
      %v2287 = vsel %vm1263, 1, 0
      %v2288 = vsel %vm1264, 1, 0
      %v2289 = vsel %vm1265, 1, 0
      %v2290 = vsel %vm1266, 1, 0
      %v2291 = vsel %vm1267, 1, 0
      %v2292 = vsel %vm1268, 1, 0
      %v2293 = vsel %vm1269, 1, 0
      %v2294 = vsel %vm1270, 1, 0
      %v2295 = vsel %vm1271, 1, 0
      %v2296 = vsel %vm1272, 1, 0
      %v2297 = vsel %vm1273, 1, 0
      %v2298 = vsel %vm1274, 1, 0
      %v2299 = vsel %vm1275, 1, 0
      %v2300 = vsel %vm1276, 1, 0
      %v2301 = vsel %vm1277, 1, 0
      %v2302 = vsel %vm1278, 1, 0
      %v2303 = vsel %vm1279, 1, 0
      %v2304 = vsel %vm1280, 1, 0
      %v2305 = vsel %vm1281, 1, 0
      %v2306 = vsel %vm1282, 1, 0
      %v2307 = vsel %vm1283, 1, 0
      %v2308 = vsel %vm1284, 1, 0
      %v2309 = vsel %vm1285, 1, 0
      %v2310 = vsel %vm1286, 1, 0
      %v2311 = vsel %vm1287, 1, 0
      %v2312 = vsel %vm1288, 1, 0
      %v2313 = vsel %vm1289, 1, 0
      %v2314 = vsel %vm1290, 1, 0
      %v2315 = vsel %vm1291, 1, 0
      %v2316 = vsel %vm1292, 1, 0
      %v2317 = vsel %vm1293, 1, 0
      %v2318 = vsel %vm1294, 1, 0
      %v2319 = vsel %vm1295, 1, 0
      %v2320 = vsel %vm1296, 1, 0
      %v2321 = vsel %vm1297, 1, 0
      %v2322 = vsel %vm1298, 1, 0
      %v2323 = vsel %vm1299, 1, 0
      %v2324 = vsel %vm1300, 1, 0
      %v2325 = vsel %vm1301, 1, 0
      %v2326 = vsel %vm1302, 1, 0
      %v2327 = vsel %vm1303, 1, 0
      %v2328 = vsel %vm1304, 1, 0
      %v2329 = vsel %vm1305, 1, 0
      %v2330 = vsel %vm1306, 1, 0
      %v2331 = vsel %vm1307, 1, 0
      %v2332 = vsel %vm1308, 1, 0
      %v2333 = vsel %vm1309, 1, 0
      %v2334 = vsel %vm1310, 1, 0
      %v2335 = vsel %vm1311, 1, 0
      %v2336 = vsel %vm1312, 1, 0
      %v2337 = vsel %vm1313, 1, 0
      %v2338 = vsel %vm1314, 1, 0
      %v2339 = vsel %vm1315, 1, 0
      %v2340 = vsel %vm1316, 1, 0
      %v2341 = vsel %vm1317, 1, 0
      %v2342 = vsel %vm1318, 1, 0
      %v2343 = vsel %vm1319, 1, 0
      %v2344 = vsel %vm1320, 1, 0
      %v2345 = vsel %vm1321, 1, 0
      %v2346 = vsel %vm1322, 1, 0
      %v2347 = vsel %vm1323, 1, 0
      %v2348 = vsel %vm1324, 1, 0
      %v2349 = vsel %vm1325, 1, 0
      %v2350 = vsel %vm1326, 1, 0
      %v2351 = vsel %vm1327, 1, 0
      %v2352 = vsel %vm1328, 1, 0
      %v2353 = vsel %vm1329, 1, 0
      %v2354 = vsel %vm1330, 1, 0
      %v2355 = vsel %vm1331, 1, 0
      %v2356 = vsel %vm1332, 1, 0
      %v2357 = vsel %vm1333, 1, 0
      %v2358 = vsel %vm1334, 1, 0
      %v2359 = vsel %vm1335, 1, 0
      %v2360 = vsel %vm1336, 1, 0
      %v2361 = vsel %vm1337, 1, 0
      %v2362 = vsel %vm1338, 1, 0
      %v2363 = vsel %vm1339, 1, 0
      %v2364 = vsel %vm1340, 1, 0
      %v2365 = vsel %vm1341, 1, 0
      %v2366 = vsel %vm1342, 1, 0
      %v2367 = vsel %vm1343, 1, 0
      %v2368 = vsel %vm1344, 1, 0
      %v2369 = vsel %vm1345, 1, 0
      %v2370 = vsel %vm1346, 1, 0
      %v2371 = vsel %vm1347, 1, 0
      %v2372 = vsel %vm1348, 1, 0
      %v2373 = vsel %vm1349, 1, 0
      %v2374 = vsel %vm1350, 1, 0
      %v2375 = vsel %vm1351, 1, 0
      %v2376 = vsel %vm1352, 1, 0
      %v2377 = vsel %vm1353, 1, 0
      %v2378 = vsel %vm1354, 1, 0
      %v2379 = vsel %vm1355, 1, 0
      %v2380 = vsel %vm1356, 1, 0
      %v2381 = vsel %vm1357, 1, 0
      %v2382 = vcvt.s32.f32 %v1358
      %v2383 = vcvt.s32.f32 %v1359
      %v2384 = vcvt.s32.f32 %v1360
      %v2385 = vcvt.s32.f32 %v1361
      %v2386 = vcvt.s32.f32 %v1362
      %v2387 = vcvt.s32.f32 %v1363
      %v2388 = vcvt.s32.f32 %v1364
      %v2389 = vcvt.s32.f32 %v1365
      %v2390 = vcvt.s32.f32 %v1366
      %v2391 = vcvt.s32.f32 %v1367
      %v2392 = vcvt.s32.f32 %v1368
      %v2393 = vcvt.s32.f32 %v1369
      %v2394 = vcvt.s32.f32 %v1370
      %v2395 = vcvt.s32.f32 %v1371
      %v2396 = vcvt.s32.f32 %v1372
      %v2397 = vcvt.s32.f32 %v1373
      %v2398 = vcvt.s32.f32 %v1374
      %v2399 = vcvt.s32.f32 %v1375
      %v2400 = vcvt.s32.f32 %v1376
      %v2401 = vcvt.s32.f32 %v1377
      %v2402 = vcvt.s32.f32 %v1378
      %v2403 = vcvt.s32.f32 %v1379
      %v2404 = vcvt.s32.f32 %v1380
      %v2405 = vcvt.s32.f32 %v1381
      %v2406 = vcvt.s32.f32 %v1382
      %v2407 = vcvt.s32.f32 %v1383
      %v2408 = vcvt.s32.f32 %v1384
      %v2409 = vcvt.s32.f32 %v1385
      %v2410 = vcvt.s32.f32 %v1386
      %v2411 = vcvt.s32.f32 %v1387
      %v2412 = vcvt.s32.f32 %v1388
      %v2413 = vcvt.s32.f32 %v1389
      %v2414 = vcvt.s32.f32 %v1390
      %v2415 = vcvt.s32.f32 %v1391
      %v2416 = vcvt.s32.f32 %v1392
      %v2417 = vcvt.s32.f32 %v1393
      %v2418 = vcvt.s32.f32 %v1394
      %v2419 = vcvt.s32.f32 %v1395
      %v2420 = vcvt.s32.f32 %v1396
      %v2421 = vcvt.s32.f32 %v1397
      %v2422 = vcvt.s32.f32 %v1398
      %v2423 = vcvt.s32.f32 %v1399
      %v2424 = vcvt.s32.f32 %v1400
      %v2425 = vcvt.s32.f32 %v1401
      %v2426 = vcvt.s32.f32 %v1402
      %v2427 = vcvt.s32.f32 %v1403
      %v2428 = vcvt.s32.f32 %v1404
      %v2429 = vcvt.s32.f32 %v1405
      %v2430 = vcvt.s32.f32 %v1406
      %v2431 = vcvt.s32.f32 %v1407
      %v2432 = vcvt.s32.f32 %v1408
      %v2433 = vcvt.s32.f32 %v1409
      %v2434 = vcvt.s32.f32 %v1410
      %v2435 = vcvt.s32.f32 %v1411
      %v2436 = vcvt.s32.f32 %v1412
      %v2437 = vcvt.s32.f32 %v1413
      %v2438 = vcvt.s32.f32 %v1414
      %v2439 = vcvt.s32.f32 %v1415
      %v2440 = vcvt.s32.f32 %v1416
      %v2441 = vcvt.s32.f32 %v1417
      %v2442 = vcvt.s32.f32 %v1418
      %v2443 = vcvt.s32.f32 %v1419
      %v2444 = vcvt.s32.f32 %v1420
      %v2445 = vcvt.s32.f32 %v1421
      %v2446 = vcvt.s32.f32 %v1422
      %v2447 = vcvt.s32.f32 %v1423
      %v2448 = vcvt.s32.f32 %v1424
      %v2449 = vcvt.s32.f32 %v1425
      %v2450 = vcvt.s32.f32 %v1426
      %v2451 = vcvt.s32.f32 %v1427
      %v2452 = vcvt.s32.f32 %v1428
      %v2453 = vcvt.s32.f32 %v1429
      %v2454 = vcvt.s32.f32 %v1430
      %v2455 = vcvt.s32.f32 %v1431
      %v2456 = vcvt.s32.f32 %v1432
      %v2457 = vcvt.s32.f32 %v1433
      %v2458 = vcvt.s32.f32 %v1434
      %v2459 = vcvt.s32.f32 %v1435
      %v2460 = vcvt.s32.f32 %v1436
      %v2461 = vcvt.s32.f32 %v1437
      %v2462 = vcvt.s32.f32 %v1438
      %v2463 = vcvt.s32.f32 %v1439
      %v2464 = vcvt.s32.f32 %v1440
      %v2465 = vcvt.s32.f32 %v1441
      %v2466 = vcvt.s32.f32 %v1442
      %v2467 = vcvt.s32.f32 %v1443
      %v2468 = vcvt.s32.f32 %v1444
      %v2469 = vcvt.s32.f32 %v1445
      %v2470 = vcvt.s32.f32 %v1446
      %v2471 = vcvt.s32.f32 %v1447
      %v2472 = vcvt.s32.f32 %v1448
      %v2473 = vcvt.s32.f32 %v1449
      %v2474 = vcvt.s32.f32 %v1450
      %v2475 = vcvt.s32.f32 %v1451
      %v2476 = vcvt.s32.f32 %v1452
      %v2477 = vcvt.s32.f32 %v1453
      %v2478 = vcvt.s32.f32 %v1454
      %v2479 = vcvt.s32.f32 %v1455
      %v2480 = vcvt.s32.f32 %v1456
      %v2481 = vcvt.s32.f32 %v1457
      %v2482 = vcvt.s32.f32 %v1458
      %v2483 = vcvt.s32.f32 %v1459
      %v2484 = vcvt.s32.f32 %v1460
      %v2485 = vcvt.s32.f32 %v1461
      %v2486 = vcvt.s32.f32 %v1462
      %v2487 = vcvt.s32.f32 %v1463
      %v2488 = vcvt.s32.f32 %v1464
      %v2489 = vcvt.s32.f32 %v1465
      %v2490 = vcvt.s32.f32 %v1466
      %v2491 = vcvt.s32.f32 %v1467
      %v2492 = vcvt.s32.f32 %v1468
      %v2493 = vcvt.s32.f32 %v1469
      %v2494 = vcvt.s32.f32 %v1470
      %v2495 = vcvt.s32.f32 %v1471
      %v2496 = vcvt.s32.f32 %v1472
      %v2497 = vcvt.s32.f32 %v1473
      %v2498 = vcvt.s32.f32 %v1474
      %v2499 = vcvt.s32.f32 %v1475
      %v2500 = vcvt.s32.f32 %v1476
      %v2501 = vcvt.s32.f32 %v1477
      %v2502 = vcvt.s32.f32 %v1478
      %v2503 = vcvt.s32.f32 %v1479
      %v2504 = vcvt.s32.f32 %v1480
      %v2505 = vcvt.s32.f32 %v1481
      %v2506 = vcvt.s32.f32 %v1482
      %v2507 = vcvt.s32.f32 %v1483
      %v2508 = vcvt.s32.f32 %v1484
      %v2509 = vcvt.s32.f32 %v1485
      %v2510 = vcvt.s32.f32 %v1486
      %v2511 = vcvt.s32.f32 %v1487
      %v2512 = vcvt.s32.f32 %v1488
      %v2513 = vcvt.s32.f32 %v1489
      %v2514 = vcvt.s32.f32 %v1490
      %v2515 = vcvt.s32.f32 %v1491
      %v2516 = vcvt.s32.f32 %v1492
      %v2517 = vcvt.s32.f32 %v1493
      %v2518 = vcvt.s32.f32 %v1494
      %v2519 = vcvt.s32.f32 %v1495
      %v2520 = vcvt.s32.f32 %v1496
      %v2521 = vcvt.s32.f32 %v1497
      %v2522 = vcvt.s32.f32 %v1498
      %v2523 = vcvt.s32.f32 %v1499
      %v2524 = vcvt.s32.f32 %v1500
      %v2525 = vcvt.s32.f32 %v1501
      %v2526 = vcvt.s32.f32 %v1502
      %v2527 = vcvt.s32.f32 %v1503
      %v2528 = vcvt.s32.f32 %v1504
      %v2529 = vcvt.s32.f32 %v1505
      %v2530 = vcvt.s32.f32 %v1506
      %v2531 = vcvt.s32.f32 %v1507
      %v2532 = vcvt.s32.f32 %v1508
      %v2533 = vcvt.s32.f32 %v1509
      %v2534 = vcvt.s32.f32 %v1510
      %v2535 = vcvt.s32.f32 %v1511
      %v2536 = vcvt.s32.f32 %v1512
      %v2537 = vcvt.s32.f32 %v1513
      %v2538 = vcvt.s32.f32 %v1514
      %v2539 = vcvt.s32.f32 %v1515
      %v2540 = vcvt.s32.f32 %v1516
      %v2541 = vcvt.s32.f32 %v1517
      %v2542 = vcvt.s32.f32 %v1518
      %v2543 = vcvt.s32.f32 %v1519
      %v2544 = vcvt.s32.f32 %v1520
      %v2545 = vcvt.s32.f32 %v1521
      %v2546 = vcvt.s32.f32 %v1522
      %v2547 = vcvt.s32.f32 %v1523
      %v2548 = vcvt.s32.f32 %v1524
      %v2549 = vcvt.s32.f32 %v1525
      %v2550 = vcvt.s32.f32 %v1526
      %v2551 = vcvt.s32.f32 %v1527
      %v2552 = vcvt.s32.f32 %v1528
      %v2553 = vcvt.s32.f32 %v1529
      %v2554 = vcvt.s32.f32 %v1530
      %v2555 = vcvt.s32.f32 %v1531
      %v2556 = vcvt.s32.f32 %v1532
      %v2557 = vcvt.s32.f32 %v1533
      %v2558 = vcvt.s32.f32 %v1534
      %v2559 = vcvt.s32.f32 %v1535
      %v2560 = vcvt.s32.f32 %v1536
      %v2561 = vcvt.s32.f32 %v1537
      %v2562 = vcvt.s32.f32 %v1538
      %v2563 = vcvt.s32.f32 %v1539
      %v2564 = vcvt.s32.f32 %v1540
      %v2565 = vcvt.s32.f32 %v1541
      %v2566 = vcvt.s32.f32 %v1542
      %v2567 = vcvt.s32.f32 %v1543
      %v2568 = vcvt.s32.f32 %v1544
      %v2569 = vcvt.s32.f32 %v1545
      %v2570 = vcvt.s32.f32 %v1546
      %v2571 = vcvt.s32.f32 %v1547
      %v2572 = vcvt.s32.f32 %v1548
      %v2573 = vcvt.s32.f32 %v1549
      %v2574 = vcvt.s32.f32 %v1550
      %v2575 = vcvt.s32.f32 %v1551
      %v2576 = vcvt.s32.f32 %v1552
      %v2577 = vcvt.s32.f32 %v1553
      %v2578 = vcvt.s32.f32 %v1554
      %v2579 = vcvt.s32.f32 %v1555
      %v2580 = vcvt.s32.f32 %v1556
      %v2581 = vcvt.s32.f32 %v1557
      %v2582 = vcvt.s32.f32 %v1558
      %v2583 = vcvt.s32.f32 %v1559
      %v2584 = vcvt.s32.f32 %v1560
      %v2585 = vcvt.s32.f32 %v1561
      %v2586 = vcvt.s32.f32 %v1562
      %v2587 = vcvt.s32.f32 %v1563
      %v2588 = vcvt.s32.f32 %v1564
      %v2589 = vcvt.s32.f32 %v1565
      %v2590 = vcvt.s32.f32 %v1566
      %v2591 = vcvt.s32.f32 %v1567
      %v2592 = vcvt.s32.f32 %v1568
      %v2593 = vcvt.s32.f32 %v1569
      %v2594 = vcvt.s32.f32 %v1570
      %v2595 = vcvt.s32.f32 %v1571
      %v2596 = vcvt.s32.f32 %v1572
      %v2597 = vcvt.s32.f32 %v1573
      %v2598 = vcvt.s32.f32 %v1574
      %v2599 = vcvt.s32.f32 %v1575
      %v2600 = vcvt.s32.f32 %v1576
      %v2601 = vcvt.s32.f32 %v1577
      %v2602 = vcvt.s32.f32 %v1578
      %v2603 = vcvt.s32.f32 %v1579
      %v2604 = vcvt.s32.f32 %v1580
      %v2605 = vcvt.s32.f32 %v1581
      %v2606 = vcvt.s32.f32 %v1582
      %v2607 = vcvt.s32.f32 %v1583
      %v2608 = vcvt.s32.f32 %v1584
      %v2609 = vcvt.s32.f32 %v1585
      %v2610 = vcvt.s32.f32 %v1586
      %v2611 = vcvt.s32.f32 %v1587
      %v2612 = vcvt.s32.f32 %v1588
      %v2613 = vcvt.s32.f32 %v1589
      %v2614 = vcvt.s32.f32 %v1590
      %v2615 = vcvt.s32.f32 %v1591
      %v2616 = vcvt.s32.f32 %v1592
      %v2617 = vcvt.s32.f32 %v1593
      %v2618 = vcvt.s32.f32 %v1594
      %v2619 = vcvt.s32.f32 %v1595
      %v2620 = vcvt.s32.f32 %v1596
      %v2621 = vcvt.s32.f32 %v1597
      %v2622 = vcvt.s32.f32 %v1598
      %v2623 = vcvt.s32.f32 %v1599
      %v2624 = vcvt.s32.f32 %v1600
      %v2625 = vcvt.s32.f32 %v1601
      %v2626 = vcvt.s32.f32 %v1602
      %v2627 = vcvt.s32.f32 %v1603
      %v2628 = vcvt.s32.f32 %v1604
      %v2629 = vcvt.s32.f32 %v1605
      %v2630 = vcvt.s32.f32 %v1606
      %v2631 = vcvt.s32.f32 %v1607
      %v2632 = vcvt.s32.f32 %v1608
      %v2633 = vcvt.s32.f32 %v1609
      %v2634 = vcvt.s32.f32 %v1610
      %v2635 = vcvt.s32.f32 %v1611
      %v2636 = vcvt.s32.f32 %v1612
      %v2637 = vcvt.s32.f32 %v1613
      %v2638 = vcvt.s32.f32 %v1614
      %v2639 = vcvt.s32.f32 %v1615
      %v2640 = vcvt.s32.f32 %v1616
      %v2641 = vcvt.s32.f32 %v1617
      %v2642 = vcvt.s32.f32 %v1618
      %v2643 = vcvt.s32.f32 %v1619
      %v2644 = vcvt.s32.f32 %v1620
      %v2645 = vcvt.s32.f32 %v1621
      %v2646 = vcvt.s32.f32 %v1622
      %v2647 = vcvt.s32.f32 %v1623
      %v2648 = vcvt.s32.f32 %v1624
      %v2649 = vcvt.s32.f32 %v1625
      %v2650 = vcvt.s32.f32 %v1626
      %v2651 = vcvt.s32.f32 %v1627
      %v2652 = vcvt.s32.f32 %v1628
      %v2653 = vcvt.s32.f32 %v1629
      %v2654 = vcvt.s32.f32 %v1630
      %v2655 = vcvt.s32.f32 %v1631
      %v2656 = vcvt.s32.f32 %v1632
      %v2657 = vcvt.s32.f32 %v1633
      %v2658 = vcvt.s32.f32 %v1634
      %v2659 = vcvt.s32.f32 %v1635
      %v2660 = vcvt.s32.f32 %v1636
      %v2661 = vcvt.s32.f32 %v1637
      %v2662 = vcvt.s32.f32 %v1638
      %v2663 = vcvt.s32.f32 %v1639
      %v2664 = vcvt.s32.f32 %v1640
      %v2665 = vcvt.s32.f32 %v1641
      %v2666 = vcvt.s32.f32 %v1642
      %v2667 = vcvt.s32.f32 %v1643
      %v2668 = vcvt.s32.f32 %v1644
      %v2669 = vcvt.s32.f32 %v1645
      %v2670 = vcvt.s32.f32 %v1646
      %v2671 = vcvt.s32.f32 %v1647
      %v2672 = vcvt.s32.f32 %v1648
      %v2673 = vcvt.s32.f32 %v1649
      %v2674 = vcvt.s32.f32 %v1650
      %v2675 = vcvt.s32.f32 %v1651
      %v2676 = vcvt.s32.f32 %v1652
      %v2677 = vcvt.s32.f32 %v1653
      %v2678 = vcvt.s32.f32 %v1654
      %v2679 = vcvt.s32.f32 %v1655
      %v2680 = vcvt.s32.f32 %v1656
      %v2681 = vcvt.s32.f32 %v1657
      %v2682 = vcvt.s32.f32 %v1658
      %v2683 = vcvt.s32.f32 %v1659
      %v2684 = vcvt.s32.f32 %v1660
      %v2685 = vcvt.s32.f32 %v1661
      %v2686 = vcvt.s32.f32 %v1662
      %v2687 = vcvt.s32.f32 %v1663
      %v2688 = vcvt.s32.f32 %v1664
      %v2689 = vcvt.s32.f32 %v1665
      %v2690 = vcvt.s32.f32 %v1666
      %v2691 = vcvt.s32.f32 %v1667
      %v2692 = vcvt.s32.f32 %v1668
      %v2693 = vcvt.s32.f32 %v1669
      %v2694 = vcvt.s32.f32 %v1670
      %v2695 = vcvt.s32.f32 %v1671
      %v2696 = vcvt.s32.f32 %v1672
      %v2697 = vcvt.s32.f32 %v1673
      %v2698 = vcvt.s32.f32 %v1674
      %v2699 = vcvt.s32.f32 %v1675
      %v2700 = vcvt.s32.f32 %v1676
      %v2701 = vcvt.s32.f32 %v1677
      %v2702 = vcvt.s32.f32 %v1678
      %v2703 = vcvt.s32.f32 %v1679
      %v2704 = vcvt.s32.f32 %v1680
      %v2705 = vcvt.s32.f32 %v1681
      %v2706 = vcvt.s32.f32 %v1682
      %v2707 = vcvt.s32.f32 %v1683
      %v2708 = vcvt.s32.f32 %v1684
      %v2709 = vcvt.s32.f32 %v1685
      %v2710 = vcvt.s32.f32 %v1686
      %v2711 = vcvt.s32.f32 %v1687
      %v2712 = vcvt.s32.f32 %v1688
      %v2713 = vcvt.s32.f32 %v1689
      %v2714 = vcvt.s32.f32 %v1690
      %v2715 = vcvt.s32.f32 %v1691
      %v2716 = vcvt.s32.f32 %v1692
      %v2717 = vcvt.s32.f32 %v1693
      %v2718 = vcvt.s32.f32 %v1694
      %v2719 = vcvt.s32.f32 %v1695
      %v2720 = vcvt.s32.f32 %v1696
      %v2721 = vcvt.s32.f32 %v1697
      %v2722 = vcvt.s32.f32 %v1698
      %v2723 = vcvt.s32.f32 %v1699
      %v2724 = vcvt.s32.f32 %v1700
      %v2725 = vcvt.s32.f32 %v1701
      %v2726 = vcvt.s32.f32 %v1702
      %v2727 = vcvt.s32.f32 %v1703
      %v2728 = vcvt.s32.f32 %v1704
      %v2729 = vcvt.s32.f32 %v1705
      %v2730 = vcvt.s32.f32 %v1706
      %v2731 = vcvt.s32.f32 %v1707
      %v2732 = vcvt.s32.f32 %v1708
      %v2733 = vcvt.s32.f32 %v1709
      %v2734 = vcvt.s32.f32 %v1710
      %v2735 = vcvt.s32.f32 %v1711
      %v2736 = vcvt.s32.f32 %v1712
      %v2737 = vcvt.s32.f32 %v1713
      %v2738 = vcvt.s32.f32 %v1714
      %v2739 = vcvt.s32.f32 %v1715
      %v2740 = vcvt.s32.f32 %v1716
      %v2741 = vcvt.s32.f32 %v1717
      %v2742 = vcvt.s32.f32 %v1718
      %v2743 = vcvt.s32.f32 %v1719
      %v2744 = vcvt.s32.f32 %v1720
      %v2745 = vcvt.s32.f32 %v1721
      %v2746 = vcvt.s32.f32 %v1722
      %v2747 = vcvt.s32.f32 %v1723
      %v2748 = vcvt.s32.f32 %v1724
      %v2749 = vcvt.s32.f32 %v1725
      %v2750 = vcvt.s32.f32 %v1726
      %v2751 = vcvt.s32.f32 %v1727
      %v2752 = vcvt.s32.f32 %v1728
      %v2753 = vcvt.s32.f32 %v1729
      %v2754 = vcvt.s32.f32 %v1730
      %v2755 = vcvt.s32.f32 %v1731
      %v2756 = vcvt.s32.f32 %v1732
      %v2757 = vcvt.s32.f32 %v1733
      %v2758 = vcvt.s32.f32 %v1734
      %v2759 = vcvt.s32.f32 %v1735
      %v2760 = vcvt.s32.f32 %v1736
      %v2761 = vcvt.s32.f32 %v1737
      %v2762 = vcvt.s32.f32 %v1738
      %v2763 = vcvt.s32.f32 %v1739
      %v2764 = vcvt.s32.f32 %v1740
      %v2765 = vcvt.s32.f32 %v1741
      %v2766 = vcvt.s32.f32 %v1742
      %v2767 = vcvt.s32.f32 %v1743
      %v2768 = vcvt.s32.f32 %v1744
      %v2769 = vcvt.s32.f32 %v1745
      %v2770 = vcvt.s32.f32 %v1746
      %v2771 = vcvt.s32.f32 %v1747
      %v2772 = vcvt.s32.f32 %v1748
      %v2773 = vcvt.s32.f32 %v1749
      %v2774 = vcvt.s32.f32 %v1750
      %v2775 = vcvt.s32.f32 %v1751
      %v2776 = vcvt.s32.f32 %v1752
      %v2777 = vcvt.s32.f32 %v1753
      %v2778 = vcvt.s32.f32 %v1754
      %v2779 = vcvt.s32.f32 %v1755
      %v2780 = vcvt.s32.f32 %v1756
      %v2781 = vcvt.s32.f32 %v1757
      %v2782 = vcvt.s32.f32 %v1758
      %v2783 = vcvt.s32.f32 %v1759
      %v2784 = vcvt.s32.f32 %v1760
      %v2785 = vcvt.s32.f32 %v1761
      %v2786 = vcvt.s32.f32 %v1762
      %v2787 = vcvt.s32.f32 %v1763
      %v2788 = vcvt.s32.f32 %v1764
      %v2789 = vcvt.s32.f32 %v1765
      %v2790 = vcvt.s32.f32 %v1766
      %v2791 = vcvt.s32.f32 %v1767
      %v2792 = vcvt.s32.f32 %v1768
      %v2793 = vcvt.s32.f32 %v1769
      %v2794 = vcvt.s32.f32 %v1770
      %v2795 = vcvt.s32.f32 %v1771
      %v2796 = vcvt.s32.f32 %v1772
      %v2797 = vcvt.s32.f32 %v1773
      %v2798 = vcvt.s32.f32 %v1774
      %v2799 = vcvt.s32.f32 %v1775
      %v2800 = vcvt.s32.f32 %v1776
      %v2801 = vcvt.s32.f32 %v1777
      %v2802 = vcvt.s32.f32 %v1778
      %v2803 = vcvt.s32.f32 %v1779
      %v2804 = vcvt.s32.f32 %v1780
      %v2805 = vcvt.s32.f32 %v1781
      %v2806 = vcvt.s32.f32 %v1782
      %v2807 = vcvt.s32.f32 %v1783
      %v2808 = vcvt.s32.f32 %v1784
      %v2809 = vcvt.s32.f32 %v1785
      %v2810 = vcvt.s32.f32 %v1786
      %v2811 = vcvt.s32.f32 %v1787
      %v2812 = vcvt.s32.f32 %v1788
      %v2813 = vcvt.s32.f32 %v1789
      %v2814 = vcvt.s32.f32 %v1790
      %v2815 = vcvt.s32.f32 %v1791
      %v2816 = vcvt.s32.f32 %v1792
      %v2817 = vcvt.s32.f32 %v1793
      %v2818 = vcvt.s32.f32 %v1794
      %v2819 = vcvt.s32.f32 %v1795
      %v2820 = vcvt.s32.f32 %v1796
      %v2821 = vcvt.s32.f32 %v1797
      %v2822 = vcvt.s32.f32 %v1798
      %v2823 = vcvt.s32.f32 %v1799
      %v2824 = vcvt.s32.f32 %v1800
      %v2825 = vcvt.s32.f32 %v1801
      %v2826 = vcvt.s32.f32 %v1802
      %v2827 = vcvt.s32.f32 %v1803
      %v2828 = vcvt.s32.f32 %v1804
      %v2829 = vcvt.s32.f32 %v1805
      %v2830 = vcvt.s32.f32 %v1806
      %v2831 = vcvt.s32.f32 %v1807
      %v2832 = vcvt.s32.f32 %v1808
      %v2833 = vcvt.s32.f32 %v1809
      %v2834 = vcvt.s32.f32 %v1810
      %v2835 = vcvt.s32.f32 %v1811
      %v2836 = vcvt.s32.f32 %v1812
      %v2837 = vcvt.s32.f32 %v1813
      %v2838 = vcvt.s32.f32 %v1814
      %v2839 = vcvt.s32.f32 %v1815
      %v2840 = vcvt.s32.f32 %v1816
      %v2841 = vcvt.s32.f32 %v1817
      %v2842 = vcvt.s32.f32 %v1818
      %v2843 = vcvt.s32.f32 %v1819
      %v2844 = vcvt.s32.f32 %v1820
      %v2845 = vcvt.s32.f32 %v1821
      %v2846 = vcvt.s32.f32 %v1822
      %v2847 = vcvt.s32.f32 %v1823
      %v2848 = vcvt.s32.f32 %v1824
      %v2849 = vcvt.s32.f32 %v1825
      %v2850 = vcvt.s32.f32 %v1826
      %v2851 = vcvt.s32.f32 %v1827
      %v2852 = vcvt.s32.f32 %v1828
      %v2853 = vcvt.s32.f32 %v1829
      %v2854 = vcvt.s32.f32 %v1830
      %v2855 = vcvt.s32.f32 %v1831
      %v2856 = vcvt.s32.f32 %v1832
      %v2857 = vcvt.s32.f32 %v1833
      %v2858 = vcvt.s32.f32 %v1834
      %v2859 = vcvt.s32.f32 %v1835
      %v2860 = vcvt.s32.f32 %v1836
      %v2861 = vcvt.s32.f32 %v1837
      %v2862 = vcvt.s32.f32 %v1838
      %v2863 = vcvt.s32.f32 %v1839
      %v2864 = vcvt.s32.f32 %v1840
      %v2865 = vcvt.s32.f32 %v1841
      %v2866 = vcvt.s32.f32 %v1842
      %v2867 = vcvt.s32.f32 %v1843
      %v2868 = vcvt.s32.f32 %v1844
      %v2869 = vcvt.s32.f32 %v1845
      %v2870 = vcvt.s32.f32 %v1846
      %v2871 = vcvt.s32.f32 %v1847
      %v2872 = vcvt.s32.f32 %v1848
      %v2873 = vcvt.s32.f32 %v1849
      %v2874 = vcvt.s32.f32 %v1850
      %v2875 = vcvt.s32.f32 %v1851
      %v2876 = vcvt.s32.f32 %v1852
      %v2877 = vcvt.s32.f32 %v1853
      %v2878 = vcvt.s32.f32 %v1854
      %v2879 = vcvt.s32.f32 %v1855
      %v2880 = vcvt.s32.f32 %v1856
      %v2881 = vcvt.s32.f32 %v1857
      %v2882 = vcvt.s32.f32 %v1858
      %v2883 = vcvt.s32.f32 %v1859
      %v2884 = vcvt.s32.f32 %v1860
      %v2885 = vcvt.s32.f32 %v1861
      %v2886 = vcvt.s32.f32 %v1862
      %v2887 = vcvt.s32.f32 %v1863
      %v2888 = vcvt.s32.f32 %v1864
      %v2889 = vcvt.s32.f32 %v1865
      %v2890 = vcvt.s32.f32 %v1866
      %v2891 = vcvt.s32.f32 %v1867
      %v2892 = vcvt.s32.f32 %v1868
      %v2893 = vcvt.s32.f32 %v1869
      %v2894 = vcvt.s32.f32 %v1870
      %v2895 = vcvt.s32.f32 %v1871
      %v2896 = vcvt.s32.f32 %v1872
      %v2897 = vcvt.s32.f32 %v1873
      %v2898 = vcvt.s32.f32 %v1874
      %v2899 = vcvt.s32.f32 %v1875
      %v2900 = vcvt.s32.f32 %v1876
      %v2901 = vcvt.s32.f32 %v1877
      %v2902 = vcvt.s32.f32 %v1878
      %v2903 = vcvt.s32.f32 %v1879
      %v2904 = vcvt.s32.f32 %v1880
      %v2905 = vcvt.s32.f32 %v1881
      %v2906 = vcvt.s32.f32 %v1882
      %v2907 = vcvt.s32.f32 %v1883
      %v2908 = vcvt.s32.f32 %v1884
      %v2909 = vcvt.s32.f32 %v1885
      %v2910 = vcvt.s32.f32 %v1886
      %v2911 = vcvt.s32.f32 %v1887
      %v2912 = vcvt.s32.f32 %v1888
      %v2913 = vcvt.s32.f32 %v1889
      %v2914 = vcvt.s32.f32 %v1890
      %v2915 = vcvt.s32.f32 %v1891
      %v2916 = vcvt.s32.f32 %v1892
      %v2917 = vcvt.s32.f32 %v1893
      %v2918 = vcvt.s32.f32 %v1894
      %v2919 = vcvt.s32.f32 %v1895
      %v2920 = vcvt.s32.f32 %v1896
      %v2921 = vcvt.s32.f32 %v1897
      %v2922 = vcvt.s32.f32 %v1898
      %v2923 = vcvt.s32.f32 %v1899
      %v2924 = vcvt.s32.f32 %v1900
      %v2925 = vcvt.s32.f32 %v1901
      %v2926 = vcvt.s32.f32 %v1902
      %v2927 = vcvt.s32.f32 %v1903
      %v2928 = vcvt.s32.f32 %v1904
      %v2929 = vcvt.s32.f32 %v1905
      %v2930 = vcvt.s32.f32 %v1906
      %v2931 = vcvt.s32.f32 %v1907
      %v2932 = vcvt.s32.f32 %v1908
      %v2933 = vcvt.s32.f32 %v1909
      %v2934 = vcvt.s32.f32 %v1910
      %v2935 = vcvt.s32.f32 %v1911
      %v2936 = vcvt.s32.f32 %v1912
      %v2937 = vcvt.s32.f32 %v1913
      %v2938 = vcvt.s32.f32 %v1914
      %v2939 = vcvt.s32.f32 %v1915
      %v2940 = vcvt.s32.f32 %v1916
      %v2941 = vcvt.s32.f32 %v1917
      %v2942 = vcvt.s32.f32 %v1918
      %v2943 = vcvt.s32.f32 %v1919
      %v2944 = vcvt.s32.f32 %v1920
      %v2945 = vcvt.s32.f32 %v1921
      %v2946 = vcvt.s32.f32 %v1922
      %v2947 = vcvt.s32.f32 %v1923
      %v2948 = vcvt.s32.f32 %v1924
      %v2949 = vcvt.s32.f32 %v1925
      %v2950 = vcvt.s32.f32 %v1926
      %v2951 = vcvt.s32.f32 %v1927
      %v2952 = vcvt.s32.f32 %v1928
      %v2953 = vcvt.s32.f32 %v1929
      %v2954 = vcvt.s32.f32 %v1930
      %v2955 = vcvt.s32.f32 %v1931
      %v2956 = vcvt.s32.f32 %v1932
      %v2957 = vcvt.s32.f32 %v1933
      %v2958 = vcvt.s32.f32 %v1934
      %v2959 = vcvt.s32.f32 %v1935
      %v2960 = vcvt.s32.f32 %v1936
      %v2961 = vcvt.s32.f32 %v1937
      %v2962 = vcvt.s32.f32 %v1938
      %v2963 = vcvt.s32.f32 %v1939
      %v2964 = vcvt.s32.f32 %v1940
      %v2965 = vcvt.s32.f32 %v1941
      %v2966 = vcvt.s32.f32 %v1942
      %v2967 = vcvt.s32.f32 %v1943
      %v2968 = vcvt.s32.f32 %v1944
      %v2969 = vcvt.s32.f32 %v1945
      %v2970 = vcvt.s32.f32 %v1946
      %v2971 = vcvt.s32.f32 %v1947
      %v2972 = vcvt.s32.f32 %v1948
      %v2973 = vcvt.s32.f32 %v1949
      %v2974 = vcvt.s32.f32 %v1950
      %v2975 = vcvt.s32.f32 %v1951
      %v2976 = vcvt.s32.f32 %v1952
      %v2977 = vcvt.s32.f32 %v1953
      %v2978 = vcvt.s32.f32 %v1954
      %v2979 = vcvt.s32.f32 %v1955
      %v2980 = vcvt.s32.f32 %v1956
      %v2981 = vcvt.s32.f32 %v1957
      %v2982 = vcvt.s32.f32 %v1958
      %v2983 = vcvt.s32.f32 %v1959
      %v2984 = vcvt.s32.f32 %v1960
      %v2985 = vcvt.s32.f32 %v1961
      %v2986 = vcvt.s32.f32 %v1962
      %v2987 = vcvt.s32.f32 %v1963
      %v2988 = vcvt.s32.f32 %v1964
      %v2989 = vcvt.s32.f32 %v1965
      %v2990 = vcvt.s32.f32 %v1966
      %v2991 = vcvt.s32.f32 %v1967
      %v2992 = vcvt.s32.f32 %v1968
      %v2993 = vcvt.s32.f32 %v1969
      %v2994 = vcvt.s32.f32 %v1970
      %v2995 = vcvt.s32.f32 %v1971
      %v2996 = vcvt.s32.f32 %v1972
      %v2997 = vcvt.s32.f32 %v1973
      %v2998 = vcvt.s32.f32 %v1974
      %v2999 = vcvt.s32.f32 %v1975
      %v3000 = vcvt.s32.f32 %v1976
      %v3001 = vcvt.s32.f32 %v1977
      %v3002 = vcvt.s32.f32 %v1978
      %v3003 = vcvt.s32.f32 %v1979
      %v3004 = vcvt.s32.f32 %v1980
      %v3005 = vcvt.s32.f32 %v1981
      %v3006 = vcvt.s32.f32 %v1982
      %v3007 = vcvt.s32.f32 %v1983
      %v3008 = vcvt.s32.f32 %v1984
      %v3009 = vcvt.s32.f32 %v1985
      %v3010 = vcvt.s32.f32 %v1986
      %v3011 = vcvt.s32.f32 %v1987
      %v3012 = vcvt.s32.f32 %v1988
      %v3013 = vcvt.s32.f32 %v1989
      %v3014 = vcvt.s32.f32 %v1990
      %v3015 = vcvt.s32.f32 %v1991
      %v3016 = vcvt.s32.f32 %v1992
      %v3017 = vcvt.s32.f32 %v1993
      %v3018 = vcvt.s32.f32 %v1994
      %v3019 = vcvt.s32.f32 %v1995
      %v3020 = vcvt.s32.f32 %v1996
      %v3021 = vcvt.s32.f32 %v1997
      %v3022 = vcvt.s32.f32 %v1998
      %v3023 = vcvt.s32.f32 %v1999
      %v3024 = vcvt.s32.f32 %v2000
      %v3025 = vcvt.s32.f32 %v2001
      %v3026 = vcvt.s32.f32 %v2002
      %v3027 = vcvt.s32.f32 %v2003
      %v3028 = vcvt.s32.f32 %v2004
      %v3029 = vcvt.s32.f32 %v2005
      %v3030 = vcvt.s32.f32 %v2006
      %v3031 = vcvt.s32.f32 %v2007
      %v3032 = vcvt.s32.f32 %v2008
      %v3033 = vcvt.s32.f32 %v2009
      %v3034 = vcvt.s32.f32 %v2010
      %v3035 = vcvt.s32.f32 %v2011
      %v3036 = vcvt.s32.f32 %v2012
      %v3037 = vcvt.s32.f32 %v2013
      %v3038 = vcvt.s32.f32 %v2014
      %v3039 = vcvt.s32.f32 %v2015
      %v3040 = vcvt.s32.f32 %v2016
      %v3041 = vcvt.s32.f32 %v2017
      %v3042 = vcvt.s32.f32 %v2018
      %v3043 = vcvt.s32.f32 %v2019
      %v3044 = vcvt.s32.f32 %v2020
      %v3045 = vcvt.s32.f32 %v2021
      %v3046 = vcvt.s32.f32 %v2022
      %v3047 = vcvt.s32.f32 %v2023
      %v3048 = vcvt.s32.f32 %v2024
      %v3049 = vcvt.s32.f32 %v2025
      %v3050 = vcvt.s32.f32 %v2026
      %v3051 = vcvt.s32.f32 %v2027
      %v3052 = vcvt.s32.f32 %v2028
      %v3053 = vcvt.s32.f32 %v2029
      %v3054 = vcvt.s32.f32 %v2030
      %v3055 = vcvt.s32.f32 %v2031
      %v3056 = vcvt.s32.f32 %v2032
      %v3057 = vcvt.s32.f32 %v2033
      %v3058 = vcvt.s32.f32 %v2034
      %v3059 = vcvt.s32.f32 %v2035
      %v3060 = vcvt.s32.f32 %v2036
      %v3061 = vcvt.s32.f32 %v2037
      %v3062 = vcvt.s32.f32 %v2038
      %v3063 = vcvt.s32.f32 %v2039
      %v3064 = vcvt.s32.f32 %v2040
      %v3065 = vcvt.s32.f32 %v2041
      %v3066 = vcvt.s32.f32 %v2042
      %v3067 = vcvt.s32.f32 %v2043
      %v3068 = vcvt.s32.f32 %v2044
      %v3069 = vcvt.s32.f32 %v2045
      %v3070 = vcvt.s32.f32 %v2046
      %v3071 = vcvt.s32.f32 %v2047
      %v3072 = vcvt.s32.f32 %v2048
      %v3073 = vcvt.s32.f32 %v2049
      %v3074 = vcvt.s32.f32 %v2050
      %v3075 = vcvt.s32.f32 %v2051
      %v3076 = vcvt.s32.f32 %v2052
      %v3077 = vcvt.s32.f32 %v2053
      %v3078 = vcvt.s32.f32 %v2054
      %v3079 = vcvt.s32.f32 %v2055
      %v3080 = vcvt.s32.f32 %v2056
      %v3081 = vcvt.s32.f32 %v2057
      %v3082 = vcvt.s32.f32 %v2058
      %v3083 = vcvt.s32.f32 %v2059
      %v3084 = vcvt.s32.f32 %v2060
      %v3085 = vcvt.s32.f32 %v2061
      %v3086 = vcvt.s32.f32 %v2062
      %v3087 = vcvt.s32.f32 %v2063
      %v3088 = vcvt.s32.f32 %v2064
      %v3089 = vcvt.s32.f32 %v2065
      %v3090 = vcvt.s32.f32 %v2066
      %v3091 = vcvt.s32.f32 %v2067
      %v3092 = vcvt.s32.f32 %v2068
      %v3093 = vcvt.s32.f32 %v2069
      %v3094 = vcvt.s32.f32 %v2070
      %v3095 = vcvt.s32.f32 %v2071
      %v3096 = vcvt.s32.f32 %v2072
      %v3097 = vcvt.s32.f32 %v2073
      %v3098 = vcvt.s32.f32 %v2074
      %v3099 = vcvt.s32.f32 %v2075
      %v3100 = vcvt.s32.f32 %v2076
      %v3101 = vcvt.s32.f32 %v2077
      %v3102 = vcvt.s32.f32 %v2078
      %v3103 = vcvt.s32.f32 %v2079
      %v3104 = vcvt.s32.f32 %v2080
      %v3105 = vcvt.s32.f32 %v2081
      %v3106 = vcvt.s32.f32 %v2082
      %v3107 = vcvt.s32.f32 %v2083
      %v3108 = vcvt.s32.f32 %v2084
      %v3109 = vcvt.s32.f32 %v2085
      %v3110 = vcvt.s32.f32 %v2086
      %v3111 = vcvt.s32.f32 %v2087
      %v3112 = vcvt.s32.f32 %v2088
      %v3113 = vcvt.s32.f32 %v2089
      %v3114 = vcvt.s32.f32 %v2090
      %v3115 = vcvt.s32.f32 %v2091
      %v3116 = vcvt.s32.f32 %v2092
      %v3117 = vcvt.s32.f32 %v2093
      %v3118 = vcvt.s32.f32 %v2094
      %v3119 = vcvt.s32.f32 %v2095
      %v3120 = vcvt.s32.f32 %v2096
      %v3121 = vcvt.s32.f32 %v2097
      %v3122 = vcvt.s32.f32 %v2098
      %v3123 = vcvt.s32.f32 %v2099
      %v3124 = vcvt.s32.f32 %v2100
      %v3125 = vcvt.s32.f32 %v2101
      %v3126 = vcvt.s32.f32 %v2102
      %v3127 = vcvt.s32.f32 %v2103
      %v3128 = vcvt.s32.f32 %v2104
      %v3129 = vcvt.s32.f32 %v2105
      %v3130 = vcvt.s32.f32 %v2106
      %v3131 = vcvt.s32.f32 %v2107
      %v3132 = vcvt.s32.f32 %v2108
      %v3133 = vcvt.s32.f32 %v2109
      %v3134 = vcvt.s32.f32 %v2110
      %v3135 = vcvt.s32.f32 %v2111
      %v3136 = vcvt.s32.f32 %v2112
      %v3137 = vcvt.s32.f32 %v2113
      %v3138 = vcvt.s32.f32 %v2114
      %v3139 = vcvt.s32.f32 %v2115
      %v3140 = vcvt.s32.f32 %v2116
      %v3141 = vcvt.s32.f32 %v2117
      %v3142 = vcvt.s32.f32 %v2118
      %v3143 = vcvt.s32.f32 %v2119
      %v3144 = vcvt.s32.f32 %v2120
      %v3145 = vcvt.s32.f32 %v2121
      %v3146 = vcvt.s32.f32 %v2122
      %v3147 = vcvt.s32.f32 %v2123
      %v3148 = vcvt.s32.f32 %v2124
      %v3149 = vcvt.s32.f32 %v2125
      %v3150 = vcvt.s32.f32 %v2126
      %v3151 = vcvt.s32.f32 %v2127
      %v3152 = vcvt.s32.f32 %v2128
      %v3153 = vcvt.s32.f32 %v2129
      %v3154 = vcvt.s32.f32 %v2130
      %v3155 = vcvt.s32.f32 %v2131
      %v3156 = vcvt.s32.f32 %v2132
      %v3157 = vcvt.s32.f32 %v2133
      %v3158 = vcvt.s32.f32 %v2134
      %v3159 = vcvt.s32.f32 %v2135
      %v3160 = vcvt.s32.f32 %v2136
      %v3161 = vcvt.s32.f32 %v2137
      %v3162 = vcvt.s32.f32 %v2138
      %v3163 = vcvt.s32.f32 %v2139
      %v3164 = vcvt.s32.f32 %v2140
      %v3165 = vcvt.s32.f32 %v2141
      %v3166 = vcvt.s32.f32 %v2142
      %v3167 = vcvt.s32.f32 %v2143
      %v3168 = vcvt.s32.f32 %v2144
      %v3169 = vcvt.s32.f32 %v2145
      %v3170 = vcvt.s32.f32 %v2146
      %v3171 = vcvt.s32.f32 %v2147
      %v3172 = vcvt.s32.f32 %v2148
      %v3173 = vcvt.s32.f32 %v2149
      %v3174 = vcvt.s32.f32 %v2150
      %v3175 = vcvt.s32.f32 %v2151
      %v3176 = vcvt.s32.f32 %v2152
      %v3177 = vcvt.s32.f32 %v2153
      %v3178 = vcvt.s32.f32 %v2154
      %v3179 = vcvt.s32.f32 %v2155
      %v3180 = vcvt.s32.f32 %v2156
      %v3181 = vcvt.s32.f32 %v2157
      %v3182 = vcvt.s32.f32 %v2158
      %v3183 = vcvt.s32.f32 %v2159
      %v3184 = vcvt.s32.f32 %v2160
      %v3185 = vcvt.s32.f32 %v2161
      %v3186 = vcvt.s32.f32 %v2162
      %v3187 = vcvt.s32.f32 %v2163
      %v3188 = vcvt.s32.f32 %v2164
      %v3189 = vcvt.s32.f32 %v2165
      %v3190 = vcvt.s32.f32 %v2166
      %v3191 = vcvt.s32.f32 %v2167
      %v3192 = vcvt.s32.f32 %v2168
      %v3193 = vcvt.s32.f32 %v2169
      %v3194 = vcvt.s32.f32 %v2170
      %v3195 = vcvt.s32.f32 %v2171
      %v3196 = vcvt.s32.f32 %v2172
      %v3197 = vcvt.s32.f32 %v2173
      %v3198 = vcvt.s32.f32 %v2174
      %v3199 = vcvt.s32.f32 %v2175
      %v3200 = vcvt.s32.f32 %v2176
      %v3201 = vcvt.s32.f32 %v2177
      %v3202 = vcvt.s32.f32 %v2178
      %v3203 = vcvt.s32.f32 %v2179
      %v3204 = vcvt.s32.f32 %v2180
      %v3205 = vcvt.s32.f32 %v2181
      %v3206 = vcvt.s32.f32 %v2182
      %v3207 = vcvt.s32.f32 %v2183
      %v3208 = vcvt.s32.f32 %v2184
      %v3209 = vcvt.s32.f32 %v2185
      %v3210 = vcvt.s32.f32 %v2186
      %v3211 = vcvt.s32.f32 %v2187
      %v3212 = vcvt.s32.f32 %v2188
      %v3213 = vcvt.s32.f32 %v2189
      %v3214 = vcvt.s32.f32 %v2190
      %v3215 = vcvt.s32.f32 %v2191
      %v3216 = vcvt.s32.f32 %v2192
      %v3217 = vcvt.s32.f32 %v2193
      %v3218 = vcvt.s32.f32 %v2194
      %v3219 = vcvt.s32.f32 %v2195
      %v3220 = vcvt.s32.f32 %v2196
      %v3221 = vcvt.s32.f32 %v2197
      %v3222 = vcvt.s32.f32 %v2198
      %v3223 = vcvt.s32.f32 %v2199
      %v3224 = vcvt.s32.f32 %v2200
      %v3225 = vcvt.s32.f32 %v2201
      %v3226 = vcvt.s32.f32 %v2202
      %v3227 = vcvt.s32.f32 %v2203
      %v3228 = vcvt.s32.f32 %v2204
      %v3229 = vcvt.s32.f32 %v2205
      %v3230 = vcvt.s32.f32 %v2206
      %v3231 = vcvt.s32.f32 %v2207
      %v3232 = vcvt.s32.f32 %v2208
      %v3233 = vcvt.s32.f32 %v2209
      %v3234 = vcvt.s32.f32 %v2210
      %v3235 = vcvt.s32.f32 %v2211
      %v3236 = vcvt.s32.f32 %v2212
      %v3237 = vcvt.s32.f32 %v2213
      %v3238 = vcvt.s32.f32 %v2214
      %v3239 = vcvt.s32.f32 %v2215
      %v3240 = vcvt.s32.f32 %v2216
      %v3241 = vcvt.s32.f32 %v2217
      %v3242 = vcvt.s32.f32 %v2218
      %v3243 = vcvt.s32.f32 %v2219
      %v3244 = vcvt.s32.f32 %v2220
      %v3245 = vcvt.s32.f32 %v2221
      %v3246 = vcvt.s32.f32 %v2222
      %v3247 = vcvt.s32.f32 %v2223
      %v3248 = vcvt.s32.f32 %v2224
      %v3249 = vcvt.s32.f32 %v2225
      %v3250 = vcvt.s32.f32 %v2226
      %v3251 = vcvt.s32.f32 %v2227
      %v3252 = vcvt.s32.f32 %v2228
      %v3253 = vcvt.s32.f32 %v2229
      %v3254 = vcvt.s32.f32 %v2230
      %v3255 = vcvt.s32.f32 %v2231
      %v3256 = vcvt.s32.f32 %v2232
      %v3257 = vcvt.s32.f32 %v2233
      %v3258 = vcvt.s32.f32 %v2234
      %v3259 = vcvt.s32.f32 %v2235
      %v3260 = vcvt.s32.f32 %v2236
      %v3261 = vcvt.s32.f32 %v2237
      %v3262 = vcvt.s32.f32 %v2238
      %v3263 = vcvt.s32.f32 %v2239
      %v3264 = vcvt.s32.f32 %v2240
      %v3265 = vcvt.s32.f32 %v2241
      %v3266 = vcvt.s32.f32 %v2242
      %v3267 = vcvt.s32.f32 %v2243
      %v3268 = vcvt.s32.f32 %v2244
      %v3269 = vcvt.s32.f32 %v2245
      %v3270 = vcvt.s32.f32 %v2246
      %v3271 = vcvt.s32.f32 %v2247
      %v3272 = vcvt.s32.f32 %v2248
      %v3273 = vcvt.s32.f32 %v2249
      %v3274 = vcvt.s32.f32 %v2250
      %v3275 = vcvt.s32.f32 %v2251
      %v3276 = vcvt.s32.f32 %v2252
      %v3277 = vcvt.s32.f32 %v2253
      %v3278 = vcvt.s32.f32 %v2254
      %v3279 = vcvt.s32.f32 %v2255
      %v3280 = vcvt.s32.f32 %v2256
      %v3281 = vcvt.s32.f32 %v2257
      %v3282 = vcvt.s32.f32 %v2258
      %v3283 = vcvt.s32.f32 %v2259
      %v3284 = vcvt.s32.f32 %v2260
      %v3285 = vcvt.s32.f32 %v2261
      %v3286 = vcvt.s32.f32 %v2262
      %v3287 = vcvt.s32.f32 %v2263
      %v3288 = vcvt.s32.f32 %v2264
      %v3289 = vcvt.s32.f32 %v2265
      %v3290 = vcvt.s32.f32 %v2266
      %v3291 = vcvt.s32.f32 %v2267
      %v3292 = vcvt.s32.f32 %v2268
      %v3293 = vcvt.s32.f32 %v2269
      %v3294 = vcvt.s32.f32 %v2270
      %v3295 = vcvt.s32.f32 %v2271
      %v3296 = vcvt.s32.f32 %v2272
      %v3297 = vcvt.s32.f32 %v2273
      %v3298 = vcvt.s32.f32 %v2274
      %v3299 = vcvt.s32.f32 %v2275
      %v3300 = vcvt.s32.f32 %v2276
      %v3301 = vcvt.s32.f32 %v2277
      %v3302 = vcvt.s32.f32 %v2278
      %v3303 = vcvt.s32.f32 %v2279
      %v3304 = vcvt.s32.f32 %v2280
      %v3305 = vcvt.s32.f32 %v2281
      %v3306 = vcvt.s32.f32 %v2282
      %v3307 = vcvt.s32.f32 %v2283
      %v3308 = vcvt.s32.f32 %v2284
      %v3309 = vcvt.s32.f32 %v2285
      %v3310 = vcvt.s32.f32 %v2286
      %v3311 = vcvt.s32.f32 %v2287
      %v3312 = vcvt.s32.f32 %v2288
      %v3313 = vcvt.s32.f32 %v2289
      %v3314 = vcvt.s32.f32 %v2290
      %v3315 = vcvt.s32.f32 %v2291
      %v3316 = vcvt.s32.f32 %v2292
      %v3317 = vcvt.s32.f32 %v2293
      %v3318 = vcvt.s32.f32 %v2294
      %v3319 = vcvt.s32.f32 %v2295
      %v3320 = vcvt.s32.f32 %v2296
      %v3321 = vcvt.s32.f32 %v2297
      %v3322 = vcvt.s32.f32 %v2298
      %v3323 = vcvt.s32.f32 %v2299
      %v3324 = vcvt.s32.f32 %v2300
      %v3325 = vcvt.s32.f32 %v2301
      %v3326 = vcvt.s32.f32 %v2302
      %v3327 = vcvt.s32.f32 %v2303
      %v3328 = vcvt.s32.f32 %v2304
      %v3329 = vcvt.s32.f32 %v2305
      %v3330 = vcvt.s32.f32 %v2306
      %v3331 = vcvt.s32.f32 %v2307
      %v3332 = vcvt.s32.f32 %v2308
      %v3333 = vcvt.s32.f32 %v2309
      %v3334 = vcvt.s32.f32 %v2310
      %v3335 = vcvt.s32.f32 %v2311
      %v3336 = vcvt.s32.f32 %v2312
      %v3337 = vcvt.s32.f32 %v2313
      %v3338 = vcvt.s32.f32 %v2314
      %v3339 = vcvt.s32.f32 %v2315
      %v3340 = vcvt.s32.f32 %v2316
      %v3341 = vcvt.s32.f32 %v2317
      %v3342 = vcvt.s32.f32 %v2318
      %v3343 = vcvt.s32.f32 %v2319
      %v3344 = vcvt.s32.f32 %v2320
      %v3345 = vcvt.s32.f32 %v2321
      %v3346 = vcvt.s32.f32 %v2322
      %v3347 = vcvt.s32.f32 %v2323
      %v3348 = vcvt.s32.f32 %v2324
      %v3349 = vcvt.s32.f32 %v2325
      %v3350 = vcvt.s32.f32 %v2326
      %v3351 = vcvt.s32.f32 %v2327
      %v3352 = vcvt.s32.f32 %v2328
      %v3353 = vcvt.s32.f32 %v2329
      %v3354 = vcvt.s32.f32 %v2330
      %v3355 = vcvt.s32.f32 %v2331
      %v3356 = vcvt.s32.f32 %v2332
      %v3357 = vcvt.s32.f32 %v2333
      %v3358 = vcvt.s32.f32 %v2334
      %v3359 = vcvt.s32.f32 %v2335
      %v3360 = vcvt.s32.f32 %v2336
      %v3361 = vcvt.s32.f32 %v2337
      %v3362 = vcvt.s32.f32 %v2338
      %v3363 = vcvt.s32.f32 %v2339
      %v3364 = vcvt.s32.f32 %v2340
      %v3365 = vcvt.s32.f32 %v2341
      %v3366 = vcvt.s32.f32 %v2342
      %v3367 = vcvt.s32.f32 %v2343
      %v3368 = vcvt.s32.f32 %v2344
      %v3369 = vcvt.s32.f32 %v2345
      %v3370 = vcvt.s32.f32 %v2346
      %v3371 = vcvt.s32.f32 %v2347
      %v3372 = vcvt.s32.f32 %v2348
      %v3373 = vcvt.s32.f32 %v2349
      %v3374 = vcvt.s32.f32 %v2350
      %v3375 = vcvt.s32.f32 %v2351
      %v3376 = vcvt.s32.f32 %v2352
      %v3377 = vcvt.s32.f32 %v2353
      %v3378 = vcvt.s32.f32 %v2354
      %v3379 = vcvt.s32.f32 %v2355
      %v3380 = vcvt.s32.f32 %v2356
      %v3381 = vcvt.s32.f32 %v2357
      %v3382 = vcvt.s32.f32 %v2358
      %v3383 = vcvt.s32.f32 %v2359
      %v3384 = vcvt.s32.f32 %v2360
      %v3385 = vcvt.s32.f32 %v2361
      %v3386 = vcvt.s32.f32 %v2362
      %v3387 = vcvt.s32.f32 %v2363
      %v3388 = vcvt.s32.f32 %v2364
      %v3389 = vcvt.s32.f32 %v2365
      %v3390 = vcvt.s32.f32 %v2366
      %v3391 = vcvt.s32.f32 %v2367
      %v3392 = vcvt.s32.f32 %v2368
      %v3393 = vcvt.s32.f32 %v2369
      %v3394 = vcvt.s32.f32 %v2370
      %v3395 = vcvt.s32.f32 %v2371
      %v3396 = vcvt.s32.f32 %v2372
      %v3397 = vcvt.s32.f32 %v2373
      %v3398 = vcvt.s32.f32 %v2374
      %v3399 = vcvt.s32.f32 %v2375
      %v3400 = vcvt.s32.f32 %v2376
      %v3401 = vcvt.s32.f32 %v2377
      %v3402 = vcvt.s32.f32 %v2378
      %v3403 = vcvt.s32.f32 %v2379
      %v3404 = vcvt.s32.f32 %v2380
      %v3405 = vcvt.s32.f32 %v2381
      %3406 = vmatprep.subr.mxu0 %v2623
      %3407 = vmatpush1.msra.mxu0 %v2622
      %3408 = vmatprep.subr.mxu0 %v2607
      %3409 = vmatpush1.msra.mxu0 %v2606
      %3410 = vmatprep.subr.mxu0 %v2591
      %3411 = vmatpush1.msra.mxu0 %v2590
      %3412 = vmatprep.subr.mxu0 %v2575
      %3413 = vmatpush1.msra.mxu0 %v2574
      %3414 = vmatprep.subr.mxu0 %v2559
      %3415 = vmatpush1.msra.mxu0 %v2558
      %3416 = vmatprep.subr.mxu0 %v2543
      %3417 = vmatpush1.msra.mxu0 %v2542
      %3418 = vmatprep.subr.mxu0 %v2527
      %3419 = vmatpush1.msra.mxu0 %v2526
      %3420 = vmatprep.subr.mxu0 %v2511
      %3421 = vmatpush1.msra.mxu0 %v2510
      %3422 = vmatprep.subr.mxu0 %v2495
      %3423 = vmatpush1.msra.mxu0 %v2494
      %3424 = vmatprep.subr.mxu0 %v2479
      %3425 = vmatpush1.msra.mxu0 %v2478
      %3426 = vmatprep.subr.mxu0 %v2463
      %3427 = vmatpush1.msra.mxu0 %v2462
      %3428 = vmatprep.subr.mxu0 %v2447
      %3429 = vmatpush1.msra.mxu0 %v2446
      %3430 = vmatprep.subr.mxu0 %v2431
      %3431 = vmatpush1.msra.mxu0 %v2430
      %3432 = vmatprep.subr.mxu0 %v2415
      %3433 = vmatpush1.msra.mxu0 %v2414
      %3434 = vmatprep.subr.mxu0 %v2399
      %3435 = vmatpush1.msra.mxu0 %v2398
      %3436 = vmatprep.subr.mxu0 %v2383
      %3437 = vmatpush1.msra.mxu0 %v2382
      %3438 = vmatprep.subr.mxu0 %v2879
      %3439 = vmatpush2.msra.mxu0 %v2878
      %3440 = vmatprep.subr.mxu0 %v2863
      %3441 = vmatpush2.msra.mxu0 %v2862
      %3442 = vmatprep.subr.mxu0 %v2847
      %3443 = vmatpush2.msra.mxu0 %v2846
      %3444 = vmatprep.subr.mxu0 %v2831
      %3445 = vmatpush2.msra.mxu0 %v2830
      %3446 = vmatprep.subr.mxu0 %v2815
      %3447 = vmatpush2.msra.mxu0 %v2814
      %3448 = vmatprep.subr.mxu0 %v2799
      %3449 = vmatpush2.msra.mxu0 %v2798
      %3450 = vmatprep.subr.mxu0 %v2783
      %3451 = vmatpush2.msra.mxu0 %v2782
      %3452 = vmatprep.subr.mxu0 %v2767
      %3453 = vmatpush2.msra.mxu0 %v2766
      %3454 = vmatprep.subr.mxu0 %v2751
      %3455 = vmatpush2.msra.mxu0 %v2750
      %3456 = vmatprep.subr.mxu0 %v2735
      %3457 = vmatpush2.msra.mxu0 %v2734
      %3458 = vmatprep.subr.mxu0 %v2719
      %3459 = vmatpush2.msra.mxu0 %v2718
      %3460 = vmatprep.subr.mxu0 %v2703
      %3461 = vmatpush2.msra.mxu0 %v2702
      %3462 = vmatprep.subr.mxu0 %v2687
      %3463 = vmatpush2.msra.mxu0 %v2686
      %3464 = vmatprep.subr.mxu0 %v2671
      %3465 = vmatpush2.msra.mxu0 %v2670
      %3466 = vmatprep.subr.mxu0 %v2655
      %3467 = vmatpush2.msra.mxu0 %v2654
      %3468 = vmatprep.subr.mxu0 %v2639
      %3469 = vmatpush2.msra.mxu0 %v2638
      %3470 = vmatprep.mubr.f32.mxu0 %v200
      %3471 = vmatmul.mubr.f32.gmra.mxu0 %v199
      %v3472 = vpop.f32.mrf.mxu0
      %v3473 = vadd.f32 0.0, %v3472
      %v3474 = vpop.f32.mrf.mxu0
      %v3475 = vadd.f32 0.0, %v3474
      %3476 = vdwg.mxu0
      %3477 = vmatprep.subr.mxu0 %v3135
      %3478 = vmatpush1.msra.mxu0 %v3134
      %3479 = vmatprep.subr.mxu0 %v3119
      %3480 = vmatpush1.msra.mxu0 %v3118
      %3481 = vmatprep.subr.mxu0 %v3103
      %3482 = vmatpush1.msra.mxu0 %v3102
      %3483 = vmatprep.subr.mxu0 %v3087
      %3484 = vmatpush1.msra.mxu0 %v3086
      %3485 = vmatprep.subr.mxu0 %v3071
      %3486 = vmatpush1.msra.mxu0 %v3070
      %3487 = vmatprep.subr.mxu0 %v3055
      %3488 = vmatpush1.msra.mxu0 %v3054
      %3489 = vmatprep.subr.mxu0 %v3039
      %3490 = vmatpush1.msra.mxu0 %v3038
      %3491 = vmatprep.subr.mxu0 %v3023
      %3492 = vmatpush1.msra.mxu0 %v3022
      %3493 = vmatprep.subr.mxu0 %v3007
      %3494 = vmatpush1.msra.mxu0 %v3006
      %3495 = vmatprep.subr.mxu0 %v2991
      %3496 = vmatpush1.msra.mxu0 %v2990
      %3497 = vmatprep.subr.mxu0 %v2975
      %3498 = vmatpush1.msra.mxu0 %v2974
      %3499 = vmatprep.subr.mxu0 %v2959
      %3500 = vmatpush1.msra.mxu0 %v2958
      %3501 = vmatprep.subr.mxu0 %v2943
      %3502 = vmatpush1.msra.mxu0 %v2942
      %3503 = vmatprep.subr.mxu0 %v2927
      %3504 = vmatpush1.msra.mxu0 %v2926
      %3505 = vmatprep.subr.mxu0 %v2911
      %3506 = vmatpush1.msra.mxu0 %v2910
      %3507 = vmatprep.subr.mxu0 %v2895
      %3508 = vmatpush1.msra.mxu0 %v2894
      %3509 = vmatprep.subr.mxu0 %v3391
      %3510 = vmatpush2.msra.mxu0 %v3390
      %3511 = vmatprep.subr.mxu0 %v3375
      %3512 = vmatpush2.msra.mxu0 %v3374
      %3513 = vmatprep.subr.mxu0 %v3359
      %3514 = vmatpush2.msra.mxu0 %v3358
      %3515 = vmatprep.subr.mxu0 %v3343
      %3516 = vmatpush2.msra.mxu0 %v3342
      %3517 = vmatprep.subr.mxu0 %v3327
      %3518 = vmatpush2.msra.mxu0 %v3326
      %3519 = vmatprep.subr.mxu0 %v3311
      %3520 = vmatpush2.msra.mxu0 %v3310
      %3521 = vmatprep.subr.mxu0 %v3295
      %3522 = vmatpush2.msra.mxu0 %v3294
      %3523 = vmatprep.subr.mxu0 %v3279
      %3524 = vmatpush2.msra.mxu0 %v3278
      %3525 = vmatprep.subr.mxu0 %v3263
      %3526 = vmatpush2.msra.mxu0 %v3262
      %3527 = vmatprep.subr.mxu0 %v3247
      %3528 = vmatpush2.msra.mxu0 %v3246
      %3529 = vmatprep.subr.mxu0 %v3231
      %3530 = vmatpush2.msra.mxu0 %v3230
      %3531 = vmatprep.subr.mxu0 %v3215
      %3532 = vmatpush2.msra.mxu0 %v3214
      %3533 = vmatprep.subr.mxu0 %v3199
      %3534 = vmatpush2.msra.mxu0 %v3198
      %3535 = vmatprep.subr.mxu0 %v3183
      %3536 = vmatpush2.msra.mxu0 %v3182
      %3537 = vmatprep.subr.mxu0 %v3167
      %3538 = vmatpush2.msra.mxu0 %v3166
      %3539 = vmatprep.subr.mxu0 %v3151
      %3540 = vmatpush2.msra.mxu0 %v3150
      %3541 = vmatprep.mubr.f32.mxu0 %v202
      %3542 = vmatmul.mubr.f32.gmra.mxu0 %v201
      %v3543 = vpop.f32.mrf.mxu0
      %v3544 = vadd.f32 %v3473, %v3543
      %v3545 = vpop.f32.mrf.mxu0
      %v3546 = vadd.f32 %v3475, %v3545
      %3547 = vdwg.mxu0
      %3548 = vmatprep.subr.mxu0 %v2625
      %3549 = vmatpush1.msra.mxu0 %v2624
      %3550 = vmatprep.subr.mxu0 %v2609
      %3551 = vmatpush1.msra.mxu0 %v2608
      %3552 = vmatprep.subr.mxu0 %v2593
      %3553 = vmatpush1.msra.mxu0 %v2592
      %3554 = vmatprep.subr.mxu0 %v2577
      %3555 = vmatpush1.msra.mxu0 %v2576
      %3556 = vmatprep.subr.mxu0 %v2561
      %3557 = vmatpush1.msra.mxu0 %v2560
      %3558 = vmatprep.subr.mxu0 %v2545
      %3559 = vmatpush1.msra.mxu0 %v2544
      %3560 = vmatprep.subr.mxu0 %v2529
      %3561 = vmatpush1.msra.mxu0 %v2528
      %3562 = vmatprep.subr.mxu0 %v2513
      %3563 = vmatpush1.msra.mxu0 %v2512
      %3564 = vmatprep.subr.mxu0 %v2497
      %3565 = vmatpush1.msra.mxu0 %v2496
      %3566 = vmatprep.subr.mxu0 %v2481
      %3567 = vmatpush1.msra.mxu0 %v2480
      %3568 = vmatprep.subr.mxu0 %v2465
      %3569 = vmatpush1.msra.mxu0 %v2464
      %3570 = vmatprep.subr.mxu0 %v2449
      %3571 = vmatpush1.msra.mxu0 %v2448
      %3572 = vmatprep.subr.mxu0 %v2433
      %3573 = vmatpush1.msra.mxu0 %v2432
      %3574 = vmatprep.subr.mxu0 %v2417
      %3575 = vmatpush1.msra.mxu0 %v2416
      %3576 = vmatprep.subr.mxu0 %v2401
      %3577 = vmatpush1.msra.mxu0 %v2400
      %3578 = vmatprep.subr.mxu0 %v2385
      %3579 = vmatpush1.msra.mxu0 %v2384
      %3580 = vmatprep.subr.mxu0 %v2881
      %3581 = vmatpush2.msra.mxu0 %v2880
      %3582 = vmatprep.subr.mxu0 %v2865
      %3583 = vmatpush2.msra.mxu0 %v2864
      %3584 = vmatprep.subr.mxu0 %v2849
      %3585 = vmatpush2.msra.mxu0 %v2848
      %3586 = vmatprep.subr.mxu0 %v2833
      %3587 = vmatpush2.msra.mxu0 %v2832
      %3588 = vmatprep.subr.mxu0 %v2817
      %3589 = vmatpush2.msra.mxu0 %v2816
      %3590 = vmatprep.subr.mxu0 %v2801
      %3591 = vmatpush2.msra.mxu0 %v2800
      %3592 = vmatprep.subr.mxu0 %v2785
      %3593 = vmatpush2.msra.mxu0 %v2784
      %3594 = vmatprep.subr.mxu0 %v2769
      %3595 = vmatpush2.msra.mxu0 %v2768
      %3596 = vmatprep.subr.mxu0 %v2753
      %3597 = vmatpush2.msra.mxu0 %v2752
      %3598 = vmatprep.subr.mxu0 %v2737
      %3599 = vmatpush2.msra.mxu0 %v2736
      %3600 = vmatprep.subr.mxu0 %v2721
      %3601 = vmatpush2.msra.mxu0 %v2720
      %3602 = vmatprep.subr.mxu0 %v2705
      %3603 = vmatpush2.msra.mxu0 %v2704
      %3604 = vmatprep.subr.mxu0 %v2689
      %3605 = vmatpush2.msra.mxu0 %v2688
      %3606 = vmatprep.subr.mxu0 %v2673
      %3607 = vmatpush2.msra.mxu0 %v2672
      %3608 = vmatprep.subr.mxu0 %v2657
      %3609 = vmatpush2.msra.mxu0 %v2656
      %3610 = vmatprep.subr.mxu0 %v2641
      %3611 = vmatpush2.msra.mxu0 %v2640
      %3612 = vmatprep.mubr.f32.mxu0 %v200
      %3613 = vmatmul.mubr.f32.gmra.mxu0 %v199
      %v3614 = vpop.f32.mrf.mxu0
      %v3615 = vadd.f32 0.0, %v3614
      %v3616 = vpop.f32.mrf.mxu0
      %v3617 = vadd.f32 0.0, %v3616
      %3618 = vdwg.mxu0
      %3619 = vmatprep.subr.mxu0 %v3137
      %3620 = vmatpush1.msra.mxu0 %v3136
      %3621 = vmatprep.subr.mxu0 %v3121
      %3622 = vmatpush1.msra.mxu0 %v3120
      %3623 = vmatprep.subr.mxu0 %v3105
      %3624 = vmatpush1.msra.mxu0 %v3104
      %3625 = vmatprep.subr.mxu0 %v3089
      %3626 = vmatpush1.msra.mxu0 %v3088
      %3627 = vmatprep.subr.mxu0 %v3073
      %3628 = vmatpush1.msra.mxu0 %v3072
      %3629 = vmatprep.subr.mxu0 %v3057
      %3630 = vmatpush1.msra.mxu0 %v3056
      %3631 = vmatprep.subr.mxu0 %v3041
      %3632 = vmatpush1.msra.mxu0 %v3040
      %3633 = vmatprep.subr.mxu0 %v3025
      %3634 = vmatpush1.msra.mxu0 %v3024
      %3635 = vmatprep.subr.mxu0 %v3009
      %3636 = vmatpush1.msra.mxu0 %v3008
      %3637 = vmatprep.subr.mxu0 %v2993
      %3638 = vmatpush1.msra.mxu0 %v2992
      %3639 = vmatprep.subr.mxu0 %v2977
      %3640 = vmatpush1.msra.mxu0 %v2976
      %3641 = vmatprep.subr.mxu0 %v2961
      %3642 = vmatpush1.msra.mxu0 %v2960
      %3643 = vmatprep.subr.mxu0 %v2945
      %3644 = vmatpush1.msra.mxu0 %v2944
      %3645 = vmatprep.subr.mxu0 %v2929
      %3646 = vmatpush1.msra.mxu0 %v2928
      %3647 = vmatprep.subr.mxu0 %v2913
      %3648 = vmatpush1.msra.mxu0 %v2912
      %3649 = vmatprep.subr.mxu0 %v2897
      %3650 = vmatpush1.msra.mxu0 %v2896
      %3651 = vmatprep.subr.mxu0 %v3393
      %3652 = vmatpush2.msra.mxu0 %v3392
      %3653 = vmatprep.subr.mxu0 %v3377
      %3654 = vmatpush2.msra.mxu0 %v3376
      %3655 = vmatprep.subr.mxu0 %v3361
      %3656 = vmatpush2.msra.mxu0 %v3360
      %3657 = vmatprep.subr.mxu0 %v3345
      %3658 = vmatpush2.msra.mxu0 %v3344
      %3659 = vmatprep.subr.mxu0 %v3329
      %3660 = vmatpush2.msra.mxu0 %v3328
      %3661 = vmatprep.subr.mxu0 %v3313
      %3662 = vmatpush2.msra.mxu0 %v3312
      %3663 = vmatprep.subr.mxu0 %v3297
      %3664 = vmatpush2.msra.mxu0 %v3296
      %3665 = vmatprep.subr.mxu0 %v3281
      %3666 = vmatpush2.msra.mxu0 %v3280
      %3667 = vmatprep.subr.mxu0 %v3265
      %3668 = vmatpush2.msra.mxu0 %v3264
      %3669 = vmatprep.subr.mxu0 %v3249
      %3670 = vmatpush2.msra.mxu0 %v3248
      %3671 = vmatprep.subr.mxu0 %v3233
      %3672 = vmatpush2.msra.mxu0 %v3232
      %3673 = vmatprep.subr.mxu0 %v3217
      %3674 = vmatpush2.msra.mxu0 %v3216
      %3675 = vmatprep.subr.mxu0 %v3201
      %3676 = vmatpush2.msra.mxu0 %v3200
      %3677 = vmatprep.subr.mxu0 %v3185
      %3678 = vmatpush2.msra.mxu0 %v3184
      %3679 = vmatprep.subr.mxu0 %v3169
      %3680 = vmatpush2.msra.mxu0 %v3168
      %3681 = vmatprep.subr.mxu0 %v3153
      %3682 = vmatpush2.msra.mxu0 %v3152
      %3683 = vmatprep.mubr.f32.mxu0 %v202
      %3684 = vmatmul.mubr.f32.gmra.mxu0 %v201
      %v3685 = vpop.f32.mrf.mxu0
      %v3686 = vadd.f32 %v3615, %v3685
      %v3687 = vpop.f32.mrf.mxu0
      %v3688 = vadd.f32 %v3617, %v3687
      %3689 = vdwg.mxu0
      %3690 = vmatprep.subr.mxu0 %v2627
      %3691 = vmatpush1.msra.mxu0 %v2626
      %3692 = vmatprep.subr.mxu0 %v2611
      %3693 = vmatpush1.msra.mxu0 %v2610
      %3694 = vmatprep.subr.mxu0 %v2595
      %3695 = vmatpush1.msra.mxu0 %v2594
      %3696 = vmatprep.subr.mxu0 %v2579
      %3697 = vmatpush1.msra.mxu0 %v2578
      %3698 = vmatprep.subr.mxu0 %v2563
      %3699 = vmatpush1.msra.mxu0 %v2562
      %3700 = vmatprep.subr.mxu0 %v2547
      %3701 = vmatpush1.msra.mxu0 %v2546
      %3702 = vmatprep.subr.mxu0 %v2531
      %3703 = vmatpush1.msra.mxu0 %v2530
      %3704 = vmatprep.subr.mxu0 %v2515
      %3705 = vmatpush1.msra.mxu0 %v2514
      %3706 = vmatprep.subr.mxu0 %v2499
      %3707 = vmatpush1.msra.mxu0 %v2498
      %3708 = vmatprep.subr.mxu0 %v2483
      %3709 = vmatpush1.msra.mxu0 %v2482
      %3710 = vmatprep.subr.mxu0 %v2467
      %3711 = vmatpush1.msra.mxu0 %v2466
      %3712 = vmatprep.subr.mxu0 %v2451
      %3713 = vmatpush1.msra.mxu0 %v2450
      %3714 = vmatprep.subr.mxu0 %v2435
      %3715 = vmatpush1.msra.mxu0 %v2434
      %3716 = vmatprep.subr.mxu0 %v2419
      %3717 = vmatpush1.msra.mxu0 %v2418
      %3718 = vmatprep.subr.mxu0 %v2403
      %3719 = vmatpush1.msra.mxu0 %v2402
      %3720 = vmatprep.subr.mxu0 %v2387
      %3721 = vmatpush1.msra.mxu0 %v2386
      %3722 = vmatprep.subr.mxu0 %v2883
      %3723 = vmatpush2.msra.mxu0 %v2882
      %3724 = vmatprep.subr.mxu0 %v2867
      %3725 = vmatpush2.msra.mxu0 %v2866
      %3726 = vmatprep.subr.mxu0 %v2851
      %3727 = vmatpush2.msra.mxu0 %v2850
      %3728 = vmatprep.subr.mxu0 %v2835
      %3729 = vmatpush2.msra.mxu0 %v2834
      %3730 = vmatprep.subr.mxu0 %v2819
      %3731 = vmatpush2.msra.mxu0 %v2818
      %3732 = vmatprep.subr.mxu0 %v2803
      %3733 = vmatpush2.msra.mxu0 %v2802
      %3734 = vmatprep.subr.mxu0 %v2787
      %3735 = vmatpush2.msra.mxu0 %v2786
      %3736 = vmatprep.subr.mxu0 %v2771
      %3737 = vmatpush2.msra.mxu0 %v2770
      %3738 = vmatprep.subr.mxu0 %v2755
      %3739 = vmatpush2.msra.mxu0 %v2754
      %3740 = vmatprep.subr.mxu0 %v2739
      %3741 = vmatpush2.msra.mxu0 %v2738
      %3742 = vmatprep.subr.mxu0 %v2723
      %3743 = vmatpush2.msra.mxu0 %v2722
      %3744 = vmatprep.subr.mxu0 %v2707
      %3745 = vmatpush2.msra.mxu0 %v2706
      %3746 = vmatprep.subr.mxu0 %v2691
      %3747 = vmatpush2.msra.mxu0 %v2690
      %3748 = vmatprep.subr.mxu0 %v2675
      %3749 = vmatpush2.msra.mxu0 %v2674
      %3750 = vmatprep.subr.mxu0 %v2659
      %3751 = vmatpush2.msra.mxu0 %v2658
      %3752 = vmatprep.subr.mxu0 %v2643
      %3753 = vmatpush2.msra.mxu0 %v2642
      %3754 = vmatprep.mubr.f32.mxu0 %v200
      %3755 = vmatmul.mubr.f32.gmra.mxu0 %v199
      %v3756 = vpop.f32.mrf.mxu0
      %v3757 = vadd.f32 0.0, %v3756
      %v3758 = vpop.f32.mrf.mxu0
      %v3759 = vadd.f32 0.0, %v3758
      %3760 = vdwg.mxu0
      %3761 = vmatprep.subr.mxu0 %v3139
      %3762 = vmatpush1.msra.mxu0 %v3138
      %3763 = vmatprep.subr.mxu0 %v3123
      %3764 = vmatpush1.msra.mxu0 %v3122
      %3765 = vmatprep.subr.mxu0 %v3107
      %3766 = vmatpush1.msra.mxu0 %v3106
      %3767 = vmatprep.subr.mxu0 %v3091
      %3768 = vmatpush1.msra.mxu0 %v3090
      %3769 = vmatprep.subr.mxu0 %v3075
      %3770 = vmatpush1.msra.mxu0 %v3074
      %3771 = vmatprep.subr.mxu0 %v3059
      %3772 = vmatpush1.msra.mxu0 %v3058
      %3773 = vmatprep.subr.mxu0 %v3043
      %3774 = vmatpush1.msra.mxu0 %v3042
      %3775 = vmatprep.subr.mxu0 %v3027
      %3776 = vmatpush1.msra.mxu0 %v3026
      %3777 = vmatprep.subr.mxu0 %v3011
      %3778 = vmatpush1.msra.mxu0 %v3010
      %3779 = vmatprep.subr.mxu0 %v2995
      %3780 = vmatpush1.msra.mxu0 %v2994
      %3781 = vmatprep.subr.mxu0 %v2979
      %3782 = vmatpush1.msra.mxu0 %v2978
      %3783 = vmatprep.subr.mxu0 %v2963
      %3784 = vmatpush1.msra.mxu0 %v2962
      %3785 = vmatprep.subr.mxu0 %v2947
      %3786 = vmatpush1.msra.mxu0 %v2946
      %3787 = vmatprep.subr.mxu0 %v2931
      %3788 = vmatpush1.msra.mxu0 %v2930
      %3789 = vmatprep.subr.mxu0 %v2915
      %3790 = vmatpush1.msra.mxu0 %v2914
      %3791 = vmatprep.subr.mxu0 %v2899
      %3792 = vmatpush1.msra.mxu0 %v2898
      %3793 = vmatprep.subr.mxu0 %v3395
      %3794 = vmatpush2.msra.mxu0 %v3394
      %3795 = vmatprep.subr.mxu0 %v3379
      %3796 = vmatpush2.msra.mxu0 %v3378
      %3797 = vmatprep.subr.mxu0 %v3363
      %3798 = vmatpush2.msra.mxu0 %v3362
      %3799 = vmatprep.subr.mxu0 %v3347
      %3800 = vmatpush2.msra.mxu0 %v3346
      %3801 = vmatprep.subr.mxu0 %v3331
      %3802 = vmatpush2.msra.mxu0 %v3330
      %3803 = vmatprep.subr.mxu0 %v3315
      %3804 = vmatpush2.msra.mxu0 %v3314
      %3805 = vmatprep.subr.mxu0 %v3299
      %3806 = vmatpush2.msra.mxu0 %v3298
      %3807 = vmatprep.subr.mxu0 %v3283
      %3808 = vmatpush2.msra.mxu0 %v3282
      %3809 = vmatprep.subr.mxu0 %v3267
      %3810 = vmatpush2.msra.mxu0 %v3266
      %3811 = vmatprep.subr.mxu0 %v3251
      %3812 = vmatpush2.msra.mxu0 %v3250
      %3813 = vmatprep.subr.mxu0 %v3235
      %3814 = vmatpush2.msra.mxu0 %v3234
      %3815 = vmatprep.subr.mxu0 %v3219
      %3816 = vmatpush2.msra.mxu0 %v3218
      %3817 = vmatprep.subr.mxu0 %v3203
      %3818 = vmatpush2.msra.mxu0 %v3202
      %3819 = vmatprep.subr.mxu0 %v3187
      %3820 = vmatpush2.msra.mxu0 %v3186
      %3821 = vmatprep.subr.mxu0 %v3171
      %3822 = vmatpush2.msra.mxu0 %v3170
      %3823 = vmatprep.subr.mxu0 %v3155
      %3824 = vmatpush2.msra.mxu0 %v3154
      %3825 = vmatprep.mubr.f32.mxu0 %v202
      %3826 = vmatmul.mubr.f32.gmra.mxu0 %v201
      %v3827 = vpop.f32.mrf.mxu0
      %v3828 = vadd.f32 %v3757, %v3827
      %v3829 = vpop.f32.mrf.mxu0
      %v3830 = vadd.f32 %v3759, %v3829
      %3831 = vdwg.mxu0
      %3832 = vmatprep.subr.mxu0 %v2629
      %3833 = vmatpush1.msra.mxu0 %v2628
      %3834 = vmatprep.subr.mxu0 %v2613
      %3835 = vmatpush1.msra.mxu0 %v2612
      %3836 = vmatprep.subr.mxu0 %v2597
      %3837 = vmatpush1.msra.mxu0 %v2596
      %3838 = vmatprep.subr.mxu0 %v2581
      %3839 = vmatpush1.msra.mxu0 %v2580
      %3840 = vmatprep.subr.mxu0 %v2565
      %3841 = vmatpush1.msra.mxu0 %v2564
      %3842 = vmatprep.subr.mxu0 %v2549
      %3843 = vmatpush1.msra.mxu0 %v2548
      %3844 = vmatprep.subr.mxu0 %v2533
      %3845 = vmatpush1.msra.mxu0 %v2532
      %3846 = vmatprep.subr.mxu0 %v2517
      %3847 = vmatpush1.msra.mxu0 %v2516
      %3848 = vmatprep.subr.mxu0 %v2501
      %3849 = vmatpush1.msra.mxu0 %v2500
      %3850 = vmatprep.subr.mxu0 %v2485
      %3851 = vmatpush1.msra.mxu0 %v2484
      %3852 = vmatprep.subr.mxu0 %v2469
      %3853 = vmatpush1.msra.mxu0 %v2468
      %3854 = vmatprep.subr.mxu0 %v2453
      %3855 = vmatpush1.msra.mxu0 %v2452
      %3856 = vmatprep.subr.mxu0 %v2437
      %3857 = vmatpush1.msra.mxu0 %v2436
      %3858 = vmatprep.subr.mxu0 %v2421
      %3859 = vmatpush1.msra.mxu0 %v2420
      %3860 = vmatprep.subr.mxu0 %v2405
      %3861 = vmatpush1.msra.mxu0 %v2404
      %3862 = vmatprep.subr.mxu0 %v2389
      %3863 = vmatpush1.msra.mxu0 %v2388
      %3864 = vmatprep.subr.mxu0 %v2885
      %3865 = vmatpush2.msra.mxu0 %v2884
      %3866 = vmatprep.subr.mxu0 %v2869
      %3867 = vmatpush2.msra.mxu0 %v2868
      %3868 = vmatprep.subr.mxu0 %v2853
      %3869 = vmatpush2.msra.mxu0 %v2852
      %3870 = vmatprep.subr.mxu0 %v2837
      %3871 = vmatpush2.msra.mxu0 %v2836
      %3872 = vmatprep.subr.mxu0 %v2821
      %3873 = vmatpush2.msra.mxu0 %v2820
      %3874 = vmatprep.subr.mxu0 %v2805
      %3875 = vmatpush2.msra.mxu0 %v2804
      %3876 = vmatprep.subr.mxu0 %v2789
      %3877 = vmatpush2.msra.mxu0 %v2788
      %3878 = vmatprep.subr.mxu0 %v2773
      %3879 = vmatpush2.msra.mxu0 %v2772
      %3880 = vmatprep.subr.mxu0 %v2757
      %3881 = vmatpush2.msra.mxu0 %v2756
      %3882 = vmatprep.subr.mxu0 %v2741
      %3883 = vmatpush2.msra.mxu0 %v2740
      %3884 = vmatprep.subr.mxu0 %v2725
      %3885 = vmatpush2.msra.mxu0 %v2724
      %3886 = vmatprep.subr.mxu0 %v2709
      %3887 = vmatpush2.msra.mxu0 %v2708
      %3888 = vmatprep.subr.mxu0 %v2693
      %3889 = vmatpush2.msra.mxu0 %v2692
      %3890 = vmatprep.subr.mxu0 %v2677
      %3891 = vmatpush2.msra.mxu0 %v2676
      %3892 = vmatprep.subr.mxu0 %v2661
      %3893 = vmatpush2.msra.mxu0 %v2660
      %3894 = vmatprep.subr.mxu0 %v2645
      %3895 = vmatpush2.msra.mxu0 %v2644
      %3896 = vmatprep.mubr.f32.mxu0 %v200
      %3897 = vmatmul.mubr.f32.gmra.mxu0 %v199
      %v3898 = vpop.f32.mrf.mxu0
      %v3899 = vadd.f32 0.0, %v3898
      %v3900 = vpop.f32.mrf.mxu0
      %v3901 = vadd.f32 0.0, %v3900
      %3902 = vdwg.mxu0
      %3903 = vmatprep.subr.mxu0 %v3141
      %3904 = vmatpush1.msra.mxu0 %v3140
      %3905 = vmatprep.subr.mxu0 %v3125
      %3906 = vmatpush1.msra.mxu0 %v3124
      %3907 = vmatprep.subr.mxu0 %v3109
      %3908 = vmatpush1.msra.mxu0 %v3108
      %3909 = vmatprep.subr.mxu0 %v3093
      %3910 = vmatpush1.msra.mxu0 %v3092
      %3911 = vmatprep.subr.mxu0 %v3077
      %3912 = vmatpush1.msra.mxu0 %v3076
      %3913 = vmatprep.subr.mxu0 %v3061
      %3914 = vmatpush1.msra.mxu0 %v3060
      %3915 = vmatprep.subr.mxu0 %v3045
      %3916 = vmatpush1.msra.mxu0 %v3044
      %3917 = vmatprep.subr.mxu0 %v3029
      %3918 = vmatpush1.msra.mxu0 %v3028
      %3919 = vmatprep.subr.mxu0 %v3013
      %3920 = vmatpush1.msra.mxu0 %v3012
      %3921 = vmatprep.subr.mxu0 %v2997
      %3922 = vmatpush1.msra.mxu0 %v2996
      %3923 = vmatprep.subr.mxu0 %v2981
      %3924 = vmatpush1.msra.mxu0 %v2980
      %3925 = vmatprep.subr.mxu0 %v2965
      %3926 = vmatpush1.msra.mxu0 %v2964
      %3927 = vmatprep.subr.mxu0 %v2949
      %3928 = vmatpush1.msra.mxu0 %v2948
      %3929 = vmatprep.subr.mxu0 %v2933
      %3930 = vmatpush1.msra.mxu0 %v2932
      %3931 = vmatprep.subr.mxu0 %v2917
      %3932 = vmatpush1.msra.mxu0 %v2916
      %3933 = vmatprep.subr.mxu0 %v2901
      %3934 = vmatpush1.msra.mxu0 %v2900
      %3935 = vmatprep.subr.mxu0 %v3397
      %3936 = vmatpush2.msra.mxu0 %v3396
      %3937 = vmatprep.subr.mxu0 %v3381
      %3938 = vmatpush2.msra.mxu0 %v3380
      %3939 = vmatprep.subr.mxu0 %v3365
      %3940 = vmatpush2.msra.mxu0 %v3364
      %3941 = vmatprep.subr.mxu0 %v3349
      %3942 = vmatpush2.msra.mxu0 %v3348
      %3943 = vmatprep.subr.mxu0 %v3333
      %3944 = vmatpush2.msra.mxu0 %v3332
      %3945 = vmatprep.subr.mxu0 %v3317
      %3946 = vmatpush2.msra.mxu0 %v3316
      %3947 = vmatprep.subr.mxu0 %v3301
      %3948 = vmatpush2.msra.mxu0 %v3300
      %3949 = vmatprep.subr.mxu0 %v3285
      %3950 = vmatpush2.msra.mxu0 %v3284
      %3951 = vmatprep.subr.mxu0 %v3269
      %3952 = vmatpush2.msra.mxu0 %v3268
      %3953 = vmatprep.subr.mxu0 %v3253
      %3954 = vmatpush2.msra.mxu0 %v3252
      %3955 = vmatprep.subr.mxu0 %v3237
      %3956 = vmatpush2.msra.mxu0 %v3236
      %3957 = vmatprep.subr.mxu0 %v3221
      %3958 = vmatpush2.msra.mxu0 %v3220
      %3959 = vmatprep.subr.mxu0 %v3205
      %3960 = vmatpush2.msra.mxu0 %v3204
      %3961 = vmatprep.subr.mxu0 %v3189
      %3962 = vmatpush2.msra.mxu0 %v3188
      %3963 = vmatprep.subr.mxu0 %v3173
      %3964 = vmatpush2.msra.mxu0 %v3172
      %3965 = vmatprep.subr.mxu0 %v3157
      %3966 = vmatpush2.msra.mxu0 %v3156
      %3967 = vmatprep.mubr.f32.mxu0 %v202
      %3968 = vmatmul.mubr.f32.gmra.mxu0 %v201
      %v3969 = vpop.f32.mrf.mxu0
      %v3970 = vadd.f32 %v3899, %v3969
      %v3971 = vpop.f32.mrf.mxu0
      %v3972 = vadd.f32 %v3901, %v3971
      %3973 = vdwg.mxu0
      %3974 = vmatprep.subr.mxu0 %v2631
      %3975 = vmatpush1.msra.mxu0 %v2630
      %3976 = vmatprep.subr.mxu0 %v2615
      %3977 = vmatpush1.msra.mxu0 %v2614
      %3978 = vmatprep.subr.mxu0 %v2599
      %3979 = vmatpush1.msra.mxu0 %v2598
      %3980 = vmatprep.subr.mxu0 %v2583
      %3981 = vmatpush1.msra.mxu0 %v2582
      %3982 = vmatprep.subr.mxu0 %v2567
      %3983 = vmatpush1.msra.mxu0 %v2566
      %3984 = vmatprep.subr.mxu0 %v2551
      %3985 = vmatpush1.msra.mxu0 %v2550
      %3986 = vmatprep.subr.mxu0 %v2535
      %3987 = vmatpush1.msra.mxu0 %v2534
      %3988 = vmatprep.subr.mxu0 %v2519
      %3989 = vmatpush1.msra.mxu0 %v2518
      %3990 = vmatprep.subr.mxu0 %v2503
      %3991 = vmatpush1.msra.mxu0 %v2502
      %3992 = vmatprep.subr.mxu0 %v2487
      %3993 = vmatpush1.msra.mxu0 %v2486
      %3994 = vmatprep.subr.mxu0 %v2471
      %3995 = vmatpush1.msra.mxu0 %v2470
      %3996 = vmatprep.subr.mxu0 %v2455
      %3997 = vmatpush1.msra.mxu0 %v2454
      %3998 = vmatprep.subr.mxu0 %v2439
      %3999 = vmatpush1.msra.mxu0 %v2438
      %4000 = vmatprep.subr.mxu0 %v2423
      %4001 = vmatpush1.msra.mxu0 %v2422
      %4002 = vmatprep.subr.mxu0 %v2407
      %4003 = vmatpush1.msra.mxu0 %v2406
      %4004 = vmatprep.subr.mxu0 %v2391
      %4005 = vmatpush1.msra.mxu0 %v2390
      %4006 = vmatprep.subr.mxu0 %v2887
      %4007 = vmatpush2.msra.mxu0 %v2886
      %4008 = vmatprep.subr.mxu0 %v2871
      %4009 = vmatpush2.msra.mxu0 %v2870
      %4010 = vmatprep.subr.mxu0 %v2855
      %4011 = vmatpush2.msra.mxu0 %v2854
      %4012 = vmatprep.subr.mxu0 %v2839
      %4013 = vmatpush2.msra.mxu0 %v2838
      %4014 = vmatprep.subr.mxu0 %v2823
      %4015 = vmatpush2.msra.mxu0 %v2822
      %4016 = vmatprep.subr.mxu0 %v2807
      %4017 = vmatpush2.msra.mxu0 %v2806
      %4018 = vmatprep.subr.mxu0 %v2791
      %4019 = vmatpush2.msra.mxu0 %v2790
      %4020 = vmatprep.subr.mxu0 %v2775
      %4021 = vmatpush2.msra.mxu0 %v2774
      %4022 = vmatprep.subr.mxu0 %v2759
      %4023 = vmatpush2.msra.mxu0 %v2758
      %4024 = vmatprep.subr.mxu0 %v2743
      %4025 = vmatpush2.msra.mxu0 %v2742
      %4026 = vmatprep.subr.mxu0 %v2727
      %4027 = vmatpush2.msra.mxu0 %v2726
      %4028 = vmatprep.subr.mxu0 %v2711
      %4029 = vmatpush2.msra.mxu0 %v2710
      %4030 = vmatprep.subr.mxu0 %v2695
      %4031 = vmatpush2.msra.mxu0 %v2694
      %4032 = vmatprep.subr.mxu0 %v2679
      %4033 = vmatpush2.msra.mxu0 %v2678
      %4034 = vmatprep.subr.mxu0 %v2663
      %4035 = vmatpush2.msra.mxu0 %v2662
      %4036 = vmatprep.subr.mxu0 %v2647
      %4037 = vmatpush2.msra.mxu0 %v2646
      %4038 = vmatprep.mubr.f32.mxu0 %v200
      %4039 = vmatmul.mubr.f32.gmra.mxu0 %v199
      %v4040 = vpop.f32.mrf.mxu0
      %v4041 = vadd.f32 0.0, %v4040
      %v4042 = vpop.f32.mrf.mxu0
      %v4043 = vadd.f32 0.0, %v4042
      %4044 = vdwg.mxu0
      %4045 = vmatprep.subr.mxu0 %v3143
      %4046 = vmatpush1.msra.mxu0 %v3142
      %4047 = vmatprep.subr.mxu0 %v3127
      %4048 = vmatpush1.msra.mxu0 %v3126
      %4049 = vmatprep.subr.mxu0 %v3111
      %4050 = vmatpush1.msra.mxu0 %v3110
      %4051 = vmatprep.subr.mxu0 %v3095
      %4052 = vmatpush1.msra.mxu0 %v3094
      %4053 = vmatprep.subr.mxu0 %v3079
      %4054 = vmatpush1.msra.mxu0 %v3078
      %4055 = vmatprep.subr.mxu0 %v3063
      %4056 = vmatpush1.msra.mxu0 %v3062
      %4057 = vmatprep.subr.mxu0 %v3047
      %4058 = vmatpush1.msra.mxu0 %v3046
      %4059 = vmatprep.subr.mxu0 %v3031
      %4060 = vmatpush1.msra.mxu0 %v3030
      %4061 = vmatprep.subr.mxu0 %v3015
      %4062 = vmatpush1.msra.mxu0 %v3014
      %4063 = vmatprep.subr.mxu0 %v2999
      %4064 = vmatpush1.msra.mxu0 %v2998
      %4065 = vmatprep.subr.mxu0 %v2983
      %4066 = vmatpush1.msra.mxu0 %v2982
      %4067 = vmatprep.subr.mxu0 %v2967
      %4068 = vmatpush1.msra.mxu0 %v2966
      %4069 = vmatprep.subr.mxu0 %v2951
      %4070 = vmatpush1.msra.mxu0 %v2950
      %4071 = vmatprep.subr.mxu0 %v2935
      %4072 = vmatpush1.msra.mxu0 %v2934
      %4073 = vmatprep.subr.mxu0 %v2919
      %4074 = vmatpush1.msra.mxu0 %v2918
      %4075 = vmatprep.subr.mxu0 %v2903
      %4076 = vmatpush1.msra.mxu0 %v2902
      %4077 = vmatprep.subr.mxu0 %v3399
      %4078 = vmatpush2.msra.mxu0 %v3398
      %4079 = vmatprep.subr.mxu0 %v3383
      %4080 = vmatpush2.msra.mxu0 %v3382
      %4081 = vmatprep.subr.mxu0 %v3367
      %4082 = vmatpush2.msra.mxu0 %v3366
      %4083 = vmatprep.subr.mxu0 %v3351
      %4084 = vmatpush2.msra.mxu0 %v3350
      %4085 = vmatprep.subr.mxu0 %v3335
      %4086 = vmatpush2.msra.mxu0 %v3334
      %4087 = vmatprep.subr.mxu0 %v3319
      %4088 = vmatpush2.msra.mxu0 %v3318
      %4089 = vmatprep.subr.mxu0 %v3303
      %4090 = vmatpush2.msra.mxu0 %v3302
      %4091 = vmatprep.subr.mxu0 %v3287
      %4092 = vmatpush2.msra.mxu0 %v3286
      %4093 = vmatprep.subr.mxu0 %v3271
      %4094 = vmatpush2.msra.mxu0 %v3270
      %4095 = vmatprep.subr.mxu0 %v3255
      %4096 = vmatpush2.msra.mxu0 %v3254
      %4097 = vmatprep.subr.mxu0 %v3239
      %4098 = vmatpush2.msra.mxu0 %v3238
      %4099 = vmatprep.subr.mxu0 %v3223
      %4100 = vmatpush2.msra.mxu0 %v3222
      %4101 = vmatprep.subr.mxu0 %v3207
      %4102 = vmatpush2.msra.mxu0 %v3206
      %4103 = vmatprep.subr.mxu0 %v3191
      %4104 = vmatpush2.msra.mxu0 %v3190
      %4105 = vmatprep.subr.mxu0 %v3175
      %4106 = vmatpush2.msra.mxu0 %v3174
      %4107 = vmatprep.subr.mxu0 %v3159
      %4108 = vmatpush2.msra.mxu0 %v3158
      %4109 = vmatprep.mubr.f32.mxu0 %v202
      %4110 = vmatmul.mubr.f32.gmra.mxu0 %v201
      %v4111 = vpop.f32.mrf.mxu0
      %v4112 = vadd.f32 %v4041, %v4111
      %v4113 = vpop.f32.mrf.mxu0
      %v4114 = vadd.f32 %v4043, %v4113
      %4115 = vdwg.mxu0
      %4116 = vmatprep.subr.mxu0 %v2633
      %4117 = vmatpush1.msra.mxu0 %v2632
      %4118 = vmatprep.subr.mxu0 %v2617
      %4119 = vmatpush1.msra.mxu0 %v2616
      %4120 = vmatprep.subr.mxu0 %v2601
      %4121 = vmatpush1.msra.mxu0 %v2600
      %4122 = vmatprep.subr.mxu0 %v2585
      %4123 = vmatpush1.msra.mxu0 %v2584
      %4124 = vmatprep.subr.mxu0 %v2569
      %4125 = vmatpush1.msra.mxu0 %v2568
      %4126 = vmatprep.subr.mxu0 %v2553
      %4127 = vmatpush1.msra.mxu0 %v2552
      %4128 = vmatprep.subr.mxu0 %v2537
      %4129 = vmatpush1.msra.mxu0 %v2536
      %4130 = vmatprep.subr.mxu0 %v2521
      %4131 = vmatpush1.msra.mxu0 %v2520
      %4132 = vmatprep.subr.mxu0 %v2505
      %4133 = vmatpush1.msra.mxu0 %v2504
      %4134 = vmatprep.subr.mxu0 %v2489
      %4135 = vmatpush1.msra.mxu0 %v2488
      %4136 = vmatprep.subr.mxu0 %v2473
      %4137 = vmatpush1.msra.mxu0 %v2472
      %4138 = vmatprep.subr.mxu0 %v2457
      %4139 = vmatpush1.msra.mxu0 %v2456
      %4140 = vmatprep.subr.mxu0 %v2441
      %4141 = vmatpush1.msra.mxu0 %v2440
      %4142 = vmatprep.subr.mxu0 %v2425
      %4143 = vmatpush1.msra.mxu0 %v2424
      %4144 = vmatprep.subr.mxu0 %v2409
      %4145 = vmatpush1.msra.mxu0 %v2408
      %4146 = vmatprep.subr.mxu0 %v2393
      %4147 = vmatpush1.msra.mxu0 %v2392
      %4148 = vmatprep.subr.mxu0 %v2889
      %4149 = vmatpush2.msra.mxu0 %v2888
      %4150 = vmatprep.subr.mxu0 %v2873
      %4151 = vmatpush2.msra.mxu0 %v2872
      %4152 = vmatprep.subr.mxu0 %v2857
      %4153 = vmatpush2.msra.mxu0 %v2856
      %4154 = vmatprep.subr.mxu0 %v2841
      %4155 = vmatpush2.msra.mxu0 %v2840
      %4156 = vmatprep.subr.mxu0 %v2825
      %4157 = vmatpush2.msra.mxu0 %v2824
      %4158 = vmatprep.subr.mxu0 %v2809
      %4159 = vmatpush2.msra.mxu0 %v2808
      %4160 = vmatprep.subr.mxu0 %v2793
      %4161 = vmatpush2.msra.mxu0 %v2792
      %4162 = vmatprep.subr.mxu0 %v2777
      %4163 = vmatpush2.msra.mxu0 %v2776
      %4164 = vmatprep.subr.mxu0 %v2761
      %4165 = vmatpush2.msra.mxu0 %v2760
      %4166 = vmatprep.subr.mxu0 %v2745
      %4167 = vmatpush2.msra.mxu0 %v2744
      %4168 = vmatprep.subr.mxu0 %v2729
      %4169 = vmatpush2.msra.mxu0 %v2728
      %4170 = vmatprep.subr.mxu0 %v2713
      %4171 = vmatpush2.msra.mxu0 %v2712
      %4172 = vmatprep.subr.mxu0 %v2697
      %4173 = vmatpush2.msra.mxu0 %v2696
      %4174 = vmatprep.subr.mxu0 %v2681
      %4175 = vmatpush2.msra.mxu0 %v2680
      %4176 = vmatprep.subr.mxu0 %v2665
      %4177 = vmatpush2.msra.mxu0 %v2664
      %4178 = vmatprep.subr.mxu0 %v2649
      %4179 = vmatpush2.msra.mxu0 %v2648
      %4180 = vmatprep.mubr.f32.mxu0 %v200
      %4181 = vmatmul.mubr.f32.gmra.mxu0 %v199
      %v4182 = vpop.f32.mrf.mxu0
      %v4183 = vadd.f32 0.0, %v4182
      %v4184 = vpop.f32.mrf.mxu0
      %v4185 = vadd.f32 0.0, %v4184
      %4186 = vdwg.mxu0
      %4187 = vmatprep.subr.mxu0 %v3145
      %4188 = vmatpush1.msra.mxu0 %v3144
      %4189 = vmatprep.subr.mxu0 %v3129
      %4190 = vmatpush1.msra.mxu0 %v3128
      %4191 = vmatprep.subr.mxu0 %v3113
      %4192 = vmatpush1.msra.mxu0 %v3112
      %4193 = vmatprep.subr.mxu0 %v3097
      %4194 = vmatpush1.msra.mxu0 %v3096
      %4195 = vmatprep.subr.mxu0 %v3081
      %4196 = vmatpush1.msra.mxu0 %v3080
      %4197 = vmatprep.subr.mxu0 %v3065
      %4198 = vmatpush1.msra.mxu0 %v3064
      %4199 = vmatprep.subr.mxu0 %v3049
      %4200 = vmatpush1.msra.mxu0 %v3048
      %4201 = vmatprep.subr.mxu0 %v3033
      %4202 = vmatpush1.msra.mxu0 %v3032
      %4203 = vmatprep.subr.mxu0 %v3017
      %4204 = vmatpush1.msra.mxu0 %v3016
      %4205 = vmatprep.subr.mxu0 %v3001
      %4206 = vmatpush1.msra.mxu0 %v3000
      %4207 = vmatprep.subr.mxu0 %v2985
      %4208 = vmatpush1.msra.mxu0 %v2984
      %4209 = vmatprep.subr.mxu0 %v2969
      %4210 = vmatpush1.msra.mxu0 %v2968
      %4211 = vmatprep.subr.mxu0 %v2953
      %4212 = vmatpush1.msra.mxu0 %v2952
      %4213 = vmatprep.subr.mxu0 %v2937
      %4214 = vmatpush1.msra.mxu0 %v2936
      %4215 = vmatprep.subr.mxu0 %v2921
      %4216 = vmatpush1.msra.mxu0 %v2920
      %4217 = vmatprep.subr.mxu0 %v2905
      %4218 = vmatpush1.msra.mxu0 %v2904
      %4219 = vmatprep.subr.mxu0 %v3401
      %4220 = vmatpush2.msra.mxu0 %v3400
      %4221 = vmatprep.subr.mxu0 %v3385
      %4222 = vmatpush2.msra.mxu0 %v3384
      %4223 = vmatprep.subr.mxu0 %v3369
      %4224 = vmatpush2.msra.mxu0 %v3368
      %4225 = vmatprep.subr.mxu0 %v3353
      %4226 = vmatpush2.msra.mxu0 %v3352
      %4227 = vmatprep.subr.mxu0 %v3337
      %4228 = vmatpush2.msra.mxu0 %v3336
      %4229 = vmatprep.subr.mxu0 %v3321
      %4230 = vmatpush2.msra.mxu0 %v3320
      %4231 = vmatprep.subr.mxu0 %v3305
      %4232 = vmatpush2.msra.mxu0 %v3304
      %4233 = vmatprep.subr.mxu0 %v3289
      %4234 = vmatpush2.msra.mxu0 %v3288
      %4235 = vmatprep.subr.mxu0 %v3273
      %4236 = vmatpush2.msra.mxu0 %v3272
      %4237 = vmatprep.subr.mxu0 %v3257
      %4238 = vmatpush2.msra.mxu0 %v3256
      %4239 = vmatprep.subr.mxu0 %v3241
      %4240 = vmatpush2.msra.mxu0 %v3240
      %4241 = vmatprep.subr.mxu0 %v3225
      %4242 = vmatpush2.msra.mxu0 %v3224
      %4243 = vmatprep.subr.mxu0 %v3209
      %4244 = vmatpush2.msra.mxu0 %v3208
      %4245 = vmatprep.subr.mxu0 %v3193
      %4246 = vmatpush2.msra.mxu0 %v3192
      %4247 = vmatprep.subr.mxu0 %v3177
      %4248 = vmatpush2.msra.mxu0 %v3176
      %4249 = vmatprep.subr.mxu0 %v3161
      %4250 = vmatpush2.msra.mxu0 %v3160
      %4251 = vmatprep.mubr.f32.mxu0 %v202
      %4252 = vmatmul.mubr.f32.gmra.mxu0 %v201
      %v4253 = vpop.f32.mrf.mxu0
      %v4254 = vadd.f32 %v4183, %v4253
      %v4255 = vpop.f32.mrf.mxu0
      %v4256 = vadd.f32 %v4185, %v4255
      %4257 = vdwg.mxu0
      %4258 = vmatprep.subr.mxu0 %v2635
      %4259 = vmatpush1.msra.mxu0 %v2634
      %4260 = vmatprep.subr.mxu0 %v2619
      %4261 = vmatpush1.msra.mxu0 %v2618
      %4262 = vmatprep.subr.mxu0 %v2603
      %4263 = vmatpush1.msra.mxu0 %v2602
      %4264 = vmatprep.subr.mxu0 %v2587
      %4265 = vmatpush1.msra.mxu0 %v2586
      %4266 = vmatprep.subr.mxu0 %v2571
      %4267 = vmatpush1.msra.mxu0 %v2570
      %4268 = vmatprep.subr.mxu0 %v2555
      %4269 = vmatpush1.msra.mxu0 %v2554
      %4270 = vmatprep.subr.mxu0 %v2539
      %4271 = vmatpush1.msra.mxu0 %v2538
      %4272 = vmatprep.subr.mxu0 %v2523
      %4273 = vmatpush1.msra.mxu0 %v2522
      %4274 = vmatprep.subr.mxu0 %v2507
      %4275 = vmatpush1.msra.mxu0 %v2506
      %4276 = vmatprep.subr.mxu0 %v2491
      %4277 = vmatpush1.msra.mxu0 %v2490
      %4278 = vmatprep.subr.mxu0 %v2475
      %4279 = vmatpush1.msra.mxu0 %v2474
      %4280 = vmatprep.subr.mxu0 %v2459
      %4281 = vmatpush1.msra.mxu0 %v2458
      %4282 = vmatprep.subr.mxu0 %v2443
      %4283 = vmatpush1.msra.mxu0 %v2442
      %4284 = vmatprep.subr.mxu0 %v2427
      %4285 = vmatpush1.msra.mxu0 %v2426
      %4286 = vmatprep.subr.mxu0 %v2411
      %4287 = vmatpush1.msra.mxu0 %v2410
      %4288 = vmatprep.subr.mxu0 %v2395
      %4289 = vmatpush1.msra.mxu0 %v2394
      %4290 = vmatprep.subr.mxu0 %v2891
      %4291 = vmatpush2.msra.mxu0 %v2890
      %4292 = vmatprep.subr.mxu0 %v2875
      %4293 = vmatpush2.msra.mxu0 %v2874
      %4294 = vmatprep.subr.mxu0 %v2859
      %4295 = vmatpush2.msra.mxu0 %v2858
      %4296 = vmatprep.subr.mxu0 %v2843
      %4297 = vmatpush2.msra.mxu0 %v2842
      %4298 = vmatprep.subr.mxu0 %v2827
      %4299 = vmatpush2.msra.mxu0 %v2826
      %4300 = vmatprep.subr.mxu0 %v2811
      %4301 = vmatpush2.msra.mxu0 %v2810
      %4302 = vmatprep.subr.mxu0 %v2795
      %4303 = vmatpush2.msra.mxu0 %v2794
      %4304 = vmatprep.subr.mxu0 %v2779
      %4305 = vmatpush2.msra.mxu0 %v2778
      %4306 = vmatprep.subr.mxu0 %v2763
      %4307 = vmatpush2.msra.mxu0 %v2762
      %4308 = vmatprep.subr.mxu0 %v2747
      %4309 = vmatpush2.msra.mxu0 %v2746
      %4310 = vmatprep.subr.mxu0 %v2731
      %4311 = vmatpush2.msra.mxu0 %v2730
      %4312 = vmatprep.subr.mxu0 %v2715
      %4313 = vmatpush2.msra.mxu0 %v2714
      %4314 = vmatprep.subr.mxu0 %v2699
      %4315 = vmatpush2.msra.mxu0 %v2698
      %4316 = vmatprep.subr.mxu0 %v2683
      %4317 = vmatpush2.msra.mxu0 %v2682
      %4318 = vmatprep.subr.mxu0 %v2667
      %4319 = vmatpush2.msra.mxu0 %v2666
      %4320 = vmatprep.subr.mxu0 %v2651
      %4321 = vmatpush2.msra.mxu0 %v2650
      %4322 = vmatprep.mubr.f32.mxu0 %v200
      %4323 = vmatmul.mubr.f32.gmra.mxu0 %v199
      %v4324 = vpop.f32.mrf.mxu0
      %v4325 = vadd.f32 0.0, %v4324
      %v4326 = vpop.f32.mrf.mxu0
      %v4327 = vadd.f32 0.0, %v4326
      %4328 = vdwg.mxu0
      %4329 = vmatprep.subr.mxu0 %v3147
      %4330 = vmatpush1.msra.mxu0 %v3146
      %4331 = vmatprep.subr.mxu0 %v3131
      %4332 = vmatpush1.msra.mxu0 %v3130
      %4333 = vmatprep.subr.mxu0 %v3115
      %4334 = vmatpush1.msra.mxu0 %v3114
      %4335 = vmatprep.subr.mxu0 %v3099
      %4336 = vmatpush1.msra.mxu0 %v3098
      %4337 = vmatprep.subr.mxu0 %v3083
      %4338 = vmatpush1.msra.mxu0 %v3082
      %4339 = vmatprep.subr.mxu0 %v3067
      %4340 = vmatpush1.msra.mxu0 %v3066
      %4341 = vmatprep.subr.mxu0 %v3051
      %4342 = vmatpush1.msra.mxu0 %v3050
      %4343 = vmatprep.subr.mxu0 %v3035
      %4344 = vmatpush1.msra.mxu0 %v3034
      %4345 = vmatprep.subr.mxu0 %v3019
      %4346 = vmatpush1.msra.mxu0 %v3018
      %4347 = vmatprep.subr.mxu0 %v3003
      %4348 = vmatpush1.msra.mxu0 %v3002
      %4349 = vmatprep.subr.mxu0 %v2987
      %4350 = vmatpush1.msra.mxu0 %v2986
      %4351 = vmatprep.subr.mxu0 %v2971
      %4352 = vmatpush1.msra.mxu0 %v2970
      %4353 = vmatprep.subr.mxu0 %v2955
      %4354 = vmatpush1.msra.mxu0 %v2954
      %4355 = vmatprep.subr.mxu0 %v2939
      %4356 = vmatpush1.msra.mxu0 %v2938
      %4357 = vmatprep.subr.mxu0 %v2923
      %4358 = vmatpush1.msra.mxu0 %v2922
      %4359 = vmatprep.subr.mxu0 %v2907
      %4360 = vmatpush1.msra.mxu0 %v2906
      %4361 = vmatprep.subr.mxu0 %v3403
      %4362 = vmatpush2.msra.mxu0 %v3402
      %4363 = vmatprep.subr.mxu0 %v3387
      %4364 = vmatpush2.msra.mxu0 %v3386
      %4365 = vmatprep.subr.mxu0 %v3371
      %4366 = vmatpush2.msra.mxu0 %v3370
      %4367 = vmatprep.subr.mxu0 %v3355
      %4368 = vmatpush2.msra.mxu0 %v3354
      %4369 = vmatprep.subr.mxu0 %v3339
      %4370 = vmatpush2.msra.mxu0 %v3338
      %4371 = vmatprep.subr.mxu0 %v3323
      %4372 = vmatpush2.msra.mxu0 %v3322
      %4373 = vmatprep.subr.mxu0 %v3307
      %4374 = vmatpush2.msra.mxu0 %v3306
      %4375 = vmatprep.subr.mxu0 %v3291
      %4376 = vmatpush2.msra.mxu0 %v3290
      %4377 = vmatprep.subr.mxu0 %v3275
      %4378 = vmatpush2.msra.mxu0 %v3274
      %4379 = vmatprep.subr.mxu0 %v3259
      %4380 = vmatpush2.msra.mxu0 %v3258
      %4381 = vmatprep.subr.mxu0 %v3243
      %4382 = vmatpush2.msra.mxu0 %v3242
      %4383 = vmatprep.subr.mxu0 %v3227
      %4384 = vmatpush2.msra.mxu0 %v3226
      %4385 = vmatprep.subr.mxu0 %v3211
      %4386 = vmatpush2.msra.mxu0 %v3210
      %4387 = vmatprep.subr.mxu0 %v3195
      %4388 = vmatpush2.msra.mxu0 %v3194
      %4389 = vmatprep.subr.mxu0 %v3179
      %4390 = vmatpush2.msra.mxu0 %v3178
      %4391 = vmatprep.subr.mxu0 %v3163
      %4392 = vmatpush2.msra.mxu0 %v3162
      %4393 = vmatprep.mubr.f32.mxu0 %v202
      %4394 = vmatmul.mubr.f32.gmra.mxu0 %v201
      %v4395 = vpop.f32.mrf.mxu0
      %v4396 = vadd.f32 %v4325, %v4395
      %v4397 = vpop.f32.mrf.mxu0
      %v4398 = vadd.f32 %v4327, %v4397
      %4399 = vdwg.mxu0
      %4400 = vmatprep.subr.mxu0 %v2637
      %4401 = vmatpush1.msra.mxu0 %v2636
      %4402 = vmatprep.subr.mxu0 %v2621
      %4403 = vmatpush1.msra.mxu0 %v2620
      %4404 = vmatprep.subr.mxu0 %v2605
      %4405 = vmatpush1.msra.mxu0 %v2604
      %4406 = vmatprep.subr.mxu0 %v2589
      %4407 = vmatpush1.msra.mxu0 %v2588
      %4408 = vmatprep.subr.mxu0 %v2573
      %4409 = vmatpush1.msra.mxu0 %v2572
      %4410 = vmatprep.subr.mxu0 %v2557
      %4411 = vmatpush1.msra.mxu0 %v2556
      %4412 = vmatprep.subr.mxu0 %v2541
      %4413 = vmatpush1.msra.mxu0 %v2540
      %4414 = vmatprep.subr.mxu0 %v2525
      %4415 = vmatpush1.msra.mxu0 %v2524
      %4416 = vmatprep.subr.mxu0 %v2509
      %4417 = vmatpush1.msra.mxu0 %v2508
      %4418 = vmatprep.subr.mxu0 %v2493
      %4419 = vmatpush1.msra.mxu0 %v2492
      %4420 = vmatprep.subr.mxu0 %v2477
      %4421 = vmatpush1.msra.mxu0 %v2476
      %4422 = vmatprep.subr.mxu0 %v2461
      %4423 = vmatpush1.msra.mxu0 %v2460
      %4424 = vmatprep.subr.mxu0 %v2445
      %4425 = vmatpush1.msra.mxu0 %v2444
      %4426 = vmatprep.subr.mxu0 %v2429
      %4427 = vmatpush1.msra.mxu0 %v2428
      %4428 = vmatprep.subr.mxu0 %v2413
      %4429 = vmatpush1.msra.mxu0 %v2412
      %4430 = vmatprep.subr.mxu0 %v2397
      %4431 = vmatpush1.msra.mxu0 %v2396
      %4432 = vmatprep.subr.mxu0 %v2893
      %4433 = vmatpush2.msra.mxu0 %v2892
      %4434 = vmatprep.subr.mxu0 %v2877
      %4435 = vmatpush2.msra.mxu0 %v2876
      %4436 = vmatprep.subr.mxu0 %v2861
      %4437 = vmatpush2.msra.mxu0 %v2860
      %4438 = vmatprep.subr.mxu0 %v2845
      %4439 = vmatpush2.msra.mxu0 %v2844
      %4440 = vmatprep.subr.mxu0 %v2829
      %4441 = vmatpush2.msra.mxu0 %v2828
      %4442 = vmatprep.subr.mxu0 %v2813
      %4443 = vmatpush2.msra.mxu0 %v2812
      %4444 = vmatprep.subr.mxu0 %v2797
      %4445 = vmatpush2.msra.mxu0 %v2796
      %4446 = vmatprep.subr.mxu0 %v2781
      %4447 = vmatpush2.msra.mxu0 %v2780
      %4448 = vmatprep.subr.mxu0 %v2765
      %4449 = vmatpush2.msra.mxu0 %v2764
      %4450 = vmatprep.subr.mxu0 %v2749
      %4451 = vmatpush2.msra.mxu0 %v2748
      %4452 = vmatprep.subr.mxu0 %v2733
      %4453 = vmatpush2.msra.mxu0 %v2732
      %4454 = vmatprep.subr.mxu0 %v2717
      %4455 = vmatpush2.msra.mxu0 %v2716
      %4456 = vmatprep.subr.mxu0 %v2701
      %4457 = vmatpush2.msra.mxu0 %v2700
      %4458 = vmatprep.subr.mxu0 %v2685
      %4459 = vmatpush2.msra.mxu0 %v2684
      %4460 = vmatprep.subr.mxu0 %v2669
      %4461 = vmatpush2.msra.mxu0 %v2668
      %4462 = vmatprep.subr.mxu0 %v2653
      %4463 = vmatpush2.msra.mxu0 %v2652
      %4464 = vmatprep.mubr.f32.mxu0 %v200
      %4465 = vmatmul.mubr.f32.gmra.mxu0 %v199
      %v4466 = vpop.f32.mrf.mxu0
      %v4467 = vadd.f32 0.0, %v4466
      %v4468 = vpop.f32.mrf.mxu0
      %v4469 = vadd.f32 0.0, %v4468
      %4470 = vdwg.mxu0
      %4471 = vmatprep.subr.mxu0 %v3149
      %4472 = vmatpush1.msra.mxu0 %v3148
      %4473 = vmatprep.subr.mxu0 %v3133
      %4474 = vmatpush1.msra.mxu0 %v3132
      %4475 = vmatprep.subr.mxu0 %v3117
      %4476 = vmatpush1.msra.mxu0 %v3116
      %4477 = vmatprep.subr.mxu0 %v3101
      %4478 = vmatpush1.msra.mxu0 %v3100
      %4479 = vmatprep.subr.mxu0 %v3085
      %4480 = vmatpush1.msra.mxu0 %v3084
      %4481 = vmatprep.subr.mxu0 %v3069
      %4482 = vmatpush1.msra.mxu0 %v3068
      %4483 = vmatprep.subr.mxu0 %v3053
      %4484 = vmatpush1.msra.mxu0 %v3052
      %4485 = vmatprep.subr.mxu0 %v3037
      %4486 = vmatpush1.msra.mxu0 %v3036
      %4487 = vmatprep.subr.mxu0 %v3021
      %4488 = vmatpush1.msra.mxu0 %v3020
      %4489 = vmatprep.subr.mxu0 %v3005
      %4490 = vmatpush1.msra.mxu0 %v3004
      %4491 = vmatprep.subr.mxu0 %v2989
      %4492 = vmatpush1.msra.mxu0 %v2988
      %4493 = vmatprep.subr.mxu0 %v2973
      %4494 = vmatpush1.msra.mxu0 %v2972
      %4495 = vmatprep.subr.mxu0 %v2957
      %4496 = vmatpush1.msra.mxu0 %v2956
      %4497 = vmatprep.subr.mxu0 %v2941
      %4498 = vmatpush1.msra.mxu0 %v2940
      %4499 = vmatprep.subr.mxu0 %v2925
      %4500 = vmatpush1.msra.mxu0 %v2924
      %4501 = vmatprep.subr.mxu0 %v2909
      %4502 = vmatpush1.msra.mxu0 %v2908
      %4503 = vmatprep.subr.mxu0 %v3405
      %4504 = vmatpush2.msra.mxu0 %v3404
      %4505 = vmatprep.subr.mxu0 %v3389
      %4506 = vmatpush2.msra.mxu0 %v3388
      %4507 = vmatprep.subr.mxu0 %v3373
      %4508 = vmatpush2.msra.mxu0 %v3372
      %4509 = vmatprep.subr.mxu0 %v3357
      %4510 = vmatpush2.msra.mxu0 %v3356
      %4511 = vmatprep.subr.mxu0 %v3341
      %4512 = vmatpush2.msra.mxu0 %v3340
      %4513 = vmatprep.subr.mxu0 %v3325
      %4514 = vmatpush2.msra.mxu0 %v3324
      %4515 = vmatprep.subr.mxu0 %v3309
      %4516 = vmatpush2.msra.mxu0 %v3308
      %4517 = vmatprep.subr.mxu0 %v3293
      %4518 = vmatpush2.msra.mxu0 %v3292
      %4519 = vmatprep.subr.mxu0 %v3277
      %4520 = vmatpush2.msra.mxu0 %v3276
      %4521 = vmatprep.subr.mxu0 %v3261
      %4522 = vmatpush2.msra.mxu0 %v3260
      %4523 = vmatprep.subr.mxu0 %v3245
      %4524 = vmatpush2.msra.mxu0 %v3244
      %4525 = vmatprep.subr.mxu0 %v3229
      %4526 = vmatpush2.msra.mxu0 %v3228
      %4527 = vmatprep.subr.mxu0 %v3213
      %4528 = vmatpush2.msra.mxu0 %v3212
      %4529 = vmatprep.subr.mxu0 %v3197
      %4530 = vmatpush2.msra.mxu0 %v3196
      %4531 = vmatprep.subr.mxu0 %v3181
      %4532 = vmatpush2.msra.mxu0 %v3180
      %4533 = vmatprep.subr.mxu0 %v3165
      %4534 = vmatpush2.msra.mxu0 %v3164
      %4535 = vmatprep.mubr.f32.mxu0 %v202
      %4536 = vmatmul.mubr.f32.gmra.mxu0 %v201
      %v4537 = vpop.f32.mrf.mxu0
      %v4538 = vadd.f32 %v4467, %v4537
      %v4539 = vpop.f32.mrf.mxu0
      %v4540 = vadd.f32 %v4469, %v4539
      %4541 = vdwg.mxu0
      %4542 = vst [vmem:[%s194] sm:$0xff] %v3544
      %4543 = vst [vmem:[%s194 + $0x8] sm:$0xff] %v3546
      %4544 = vst [vmem:[%s194 + $0x10] sm:$0xff] %v3686
      %4545 = vst [vmem:[%s194 + $0x18] sm:$0xff] %v3688
      %4546 = vst [vmem:[%s194 + $0x20] sm:$0xff] %v3828
      %4547 = vst [vmem:[%s194 + $0x28] sm:$0xff] %v3830
      %4548 = vst [vmem:[%s194 + $0x30] sm:$0xff] %v3970
      %4549 = vst [vmem:[%s194 + $0x38] sm:$0xff] %v3972
      %4550 = vst [vmem:[%s194 + $0x40] sm:$0xff] %v4112
      %4551 = vst [vmem:[%s194 + $0x48] sm:$0xff] %v4114
      %4552 = vst [vmem:[%s194 + $0x50] sm:$0xff] %v4254
      %4553 = vst [vmem:[%s194 + $0x58] sm:$0xff] %v4256
      %4554 = vst [vmem:[%s194 + $0x60] sm:$0xff] %v4396
      %4555 = vst [vmem:[%s194 + $0x68] sm:$0xff] %v4398
      %4556 = vst [vmem:[%s194 + $0x70] sm:$0xff] %v4538
      %4557 = vst [vmem:[%s194 + $0x78] sm:$0xff] %v4540
      %4574 = vrot.lane.b32.xlu0 %v3544, 127
      %v4575 = vpop.permute.xlu0 %4574
      %4576 = vrot.lane.b32.xlu0 %v3546, 127
      %v4577 = vpop.permute.xlu0 %4576
      %4578 = vrot.lane.b32.xlu0 %v3686, 127
      %v4579 = vpop.permute.xlu0 %4578
      %4580 = vrot.lane.b32.xlu0 %v3688, 127
      %v4581 = vpop.permute.xlu0 %4580
      %4582 = vrot.lane.b32.xlu0 %v3828, 127
      %v4583 = vpop.permute.xlu0 %4582
      %4584 = vrot.lane.b32.xlu0 %v3830, 127
      %v4585 = vpop.permute.xlu0 %4584
      %4586 = vrot.lane.b32.xlu0 %v3970, 127
      %v4587 = vpop.permute.xlu0 %4586
      %4588 = vrot.lane.b32.xlu0 %v3972, 127
      %v4589 = vpop.permute.xlu0 %4588
      %4590 = vrot.lane.b32.xlu0 %v4112, 127
      %v4591 = vpop.permute.xlu0 %4590
      %4592 = vrot.lane.b32.xlu0 %v4114, 127
      %v4593 = vpop.permute.xlu0 %4592
      %4594 = vrot.lane.b32.xlu0 %v4254, 127
      %v4595 = vpop.permute.xlu0 %4594
      %4596 = vrot.lane.b32.xlu0 %v4256, 127
      %v4597 = vpop.permute.xlu0 %4596
      %4598 = vrot.lane.b32.xlu0 %v4396, 127
      %v4599 = vpop.permute.xlu0 %4598
      %4600 = vrot.lane.b32.xlu0 %v4398, 127
      %v4601 = vpop.permute.xlu0 %4600
      %4602 = vrot.lane.b32.xlu0 %v4538, 127
      %v4603 = vpop.permute.xlu0 %4602
      %4604 = vrot.lane.b32.xlu0 %v4540, 127
      %v4605 = vpop.permute.xlu0 %4604
      %vm4606 = vcmask 1039360
      %v4607 = vsel %vm4606, %v4575, %v4577
      %v4608 = vsel %vm4606, %v4577, %v4579
      %v4609 = vsel %vm4606, %v4579, %v4581
      %v4610 = vsel %vm4606, %v4581, %v4583
      %v4611 = vsel %vm4606, %v4583, %v4585
      %v4612 = vsel %vm4606, %v4585, %v4587
      %v4613 = vsel %vm4606, %v4587, %v4589
      %v4614 = vsel %vm4606, %v4589, %v4591
      %v4615 = vsel %vm4606, %v4591, %v4593
      %v4616 = vsel %vm4606, %v4593, %v4595
      %v4617 = vsel %vm4606, %v4595, %v4597
      %v4618 = vsel %vm4606, %v4597, %v4599
      %v4619 = vsel %vm4606, %v4599, %v4601
      %v4620 = vsel %vm4606, %v4601, %v4603
      %v4621 = vsel %vm4606, %v4603, %v4605
      %v4639 = vsel %vm4606, %v4605, %v4575
      %v4640 = vmax.f32 %v3544, %v4607
      %v4641 = vmax.f32 %v3546, %v4608
      %v4642 = vmax.f32 %v3686, %v4609
      %v4643 = vmax.f32 %v3688, %v4610
      %v4644 = vmax.f32 %v3828, %v4611
      %v4645 = vmax.f32 %v3830, %v4612
      %v4646 = vmax.f32 %v3970, %v4613
      %v4647 = vmax.f32 %v3972, %v4614
      %v4648 = vmax.f32 %v4112, %v4615
      %v4649 = vmax.f32 %v4114, %v4616
      %v4650 = vmax.f32 %v4254, %v4617
      %v4651 = vmax.f32 %v4256, %v4618
      %v4652 = vmax.f32 %v4396, %v4619
      %v4653 = vmax.f32 %v4398, %v4620
      %v4654 = vmax.f32 %v4538, %v4621
      %v4655 = vmax.f32 %v4540, %v4639
      %4672 = vrot.lane.b32.xlu0 %v4640, 126
      %v4673 = vpop.permute.xlu0 %4672
      %4674 = vrot.lane.b32.xlu0 %v4641, 126
      %v4675 = vpop.permute.xlu0 %4674
      %4676 = vrot.lane.b32.xlu0 %v4642, 126
      %v4677 = vpop.permute.xlu0 %4676
      %4678 = vrot.lane.b32.xlu0 %v4643, 126
      %v4679 = vpop.permute.xlu0 %4678
      %4680 = vrot.lane.b32.xlu0 %v4644, 126
      %v4681 = vpop.permute.xlu0 %4680
      %4682 = vrot.lane.b32.xlu0 %v4645, 126
      %v4683 = vpop.permute.xlu0 %4682
      %4684 = vrot.lane.b32.xlu0 %v4646, 126
      %v4685 = vpop.permute.xlu0 %4684
      %4686 = vrot.lane.b32.xlu0 %v4647, 126
      %v4687 = vpop.permute.xlu0 %4686
      %4688 = vrot.lane.b32.xlu0 %v4648, 126
      %v4689 = vpop.permute.xlu0 %4688
      %4690 = vrot.lane.b32.xlu0 %v4649, 126
      %v4691 = vpop.permute.xlu0 %4690
      %4692 = vrot.lane.b32.xlu0 %v4650, 126
      %v4693 = vpop.permute.xlu0 %4692
      %4694 = vrot.lane.b32.xlu0 %v4651, 126
      %v4695 = vpop.permute.xlu0 %4694
      %4696 = vrot.lane.b32.xlu0 %v4652, 126
      %v4697 = vpop.permute.xlu0 %4696
      %4698 = vrot.lane.b32.xlu0 %v4653, 126
      %v4699 = vpop.permute.xlu0 %4698
      %4700 = vrot.lane.b32.xlu0 %v4654, 126
      %v4701 = vpop.permute.xlu0 %4700
      %4702 = vrot.lane.b32.xlu0 %v4655, 126
      %v4703 = vpop.permute.xlu0 %4702
      %vm4704 = vcmask 1031168
      %v4705 = vsel %vm4704, %v4673, %v4675
      %v4706 = vsel %vm4704, %v4675, %v4677
      %v4707 = vsel %vm4704, %v4677, %v4679
      %v4708 = vsel %vm4704, %v4679, %v4681
      %v4709 = vsel %vm4704, %v4681, %v4683
      %v4710 = vsel %vm4704, %v4683, %v4685
      %v4711 = vsel %vm4704, %v4685, %v4687
      %v4712 = vsel %vm4704, %v4687, %v4689
      %v4713 = vsel %vm4704, %v4689, %v4691
      %v4714 = vsel %vm4704, %v4691, %v4693
      %v4715 = vsel %vm4704, %v4693, %v4695
      %v4716 = vsel %vm4704, %v4695, %v4697
      %v4717 = vsel %vm4704, %v4697, %v4699
      %v4718 = vsel %vm4704, %v4699, %v4701
      %v4719 = vsel %vm4704, %v4701, %v4703
      %v4737 = vsel %vm4704, %v4703, %v4673
      %v4738 = vmax.f32 %v4640, %v4705
      %v4739 = vmax.f32 %v4641, %v4706
      %v4740 = vmax.f32 %v4642, %v4707
      %v4741 = vmax.f32 %v4643, %v4708
      %v4742 = vmax.f32 %v4644, %v4709
      %v4743 = vmax.f32 %v4645, %v4710
      %v4744 = vmax.f32 %v4646, %v4711
      %v4745 = vmax.f32 %v4647, %v4712
      %v4746 = vmax.f32 %v4648, %v4713
      %v4747 = vmax.f32 %v4649, %v4714
      %v4748 = vmax.f32 %v4650, %v4715
      %v4749 = vmax.f32 %v4651, %v4716
      %v4750 = vmax.f32 %v4652, %v4717
      %v4751 = vmax.f32 %v4653, %v4718
      %v4752 = vmax.f32 %v4654, %v4719
      %v4753 = vmax.f32 %v4655, %v4737
      %4770 = vrot.lane.b32.xlu0 %v4738, 124
      %v4771 = vpop.permute.xlu0 %4770
      %4772 = vrot.lane.b32.xlu0 %v4739, 124
      %v4773 = vpop.permute.xlu0 %4772
      %4774 = vrot.lane.b32.xlu0 %v4740, 124
      %v4775 = vpop.permute.xlu0 %4774
      %4776 = vrot.lane.b32.xlu0 %v4741, 124
      %v4777 = vpop.permute.xlu0 %4776
      %4778 = vrot.lane.b32.xlu0 %v4742, 124
      %v4779 = vpop.permute.xlu0 %4778
      %4780 = vrot.lane.b32.xlu0 %v4743, 124
      %v4781 = vpop.permute.xlu0 %4780
      %4782 = vrot.lane.b32.xlu0 %v4744, 124
      %v4783 = vpop.permute.xlu0 %4782
      %4784 = vrot.lane.b32.xlu0 %v4745, 124
      %v4785 = vpop.permute.xlu0 %4784
      %4786 = vrot.lane.b32.xlu0 %v4746, 124
      %v4787 = vpop.permute.xlu0 %4786
      %4788 = vrot.lane.b32.xlu0 %v4747, 124
      %v4789 = vpop.permute.xlu0 %4788
      %4790 = vrot.lane.b32.xlu0 %v4748, 124
      %v4791 = vpop.permute.xlu0 %4790
      %4792 = vrot.lane.b32.xlu0 %v4749, 124
      %v4793 = vpop.permute.xlu0 %4792
      %4794 = vrot.lane.b32.xlu0 %v4750, 124
      %v4795 = vpop.permute.xlu0 %4794
      %4796 = vrot.lane.b32.xlu0 %v4751, 124
      %v4797 = vpop.permute.xlu0 %4796
      %4798 = vrot.lane.b32.xlu0 %v4752, 124
      %v4799 = vpop.permute.xlu0 %4798
      %4800 = vrot.lane.b32.xlu0 %v4753, 124
      %v4801 = vpop.permute.xlu0 %4800
      %vm4802 = vcmask 1014784
      %v4803 = vsel %vm4802, %v4771, %v4773
      %v4804 = vsel %vm4802, %v4773, %v4775
      %v4805 = vsel %vm4802, %v4775, %v4777
      %v4806 = vsel %vm4802, %v4777, %v4779
      %v4807 = vsel %vm4802, %v4779, %v4781
      %v4808 = vsel %vm4802, %v4781, %v4783
      %v4809 = vsel %vm4802, %v4783, %v4785
      %v4810 = vsel %vm4802, %v4785, %v4787
      %v4811 = vsel %vm4802, %v4787, %v4789
      %v4812 = vsel %vm4802, %v4789, %v4791
      %v4813 = vsel %vm4802, %v4791, %v4793
      %v4814 = vsel %vm4802, %v4793, %v4795
      %v4815 = vsel %vm4802, %v4795, %v4797
      %v4816 = vsel %vm4802, %v4797, %v4799
      %v4817 = vsel %vm4802, %v4799, %v4801
      %v4835 = vsel %vm4802, %v4801, %v4771
      %v4836 = vmax.f32 %v4738, %v4803
      %v4837 = vmax.f32 %v4739, %v4804
      %v4838 = vmax.f32 %v4740, %v4805
      %v4839 = vmax.f32 %v4741, %v4806
      %v4840 = vmax.f32 %v4742, %v4807
      %v4841 = vmax.f32 %v4743, %v4808
      %v4842 = vmax.f32 %v4744, %v4809
      %v4843 = vmax.f32 %v4745, %v4810
      %v4844 = vmax.f32 %v4746, %v4811
      %v4845 = vmax.f32 %v4747, %v4812
      %v4846 = vmax.f32 %v4748, %v4813
      %v4847 = vmax.f32 %v4749, %v4814
      %v4848 = vmax.f32 %v4750, %v4815
      %v4849 = vmax.f32 %v4751, %v4816
      %v4850 = vmax.f32 %v4752, %v4817
      %v4851 = vmax.f32 %v4753, %v4835
      %4868 = vrot.lane.b32.xlu0 %v4836, 120
      %v4869 = vpop.permute.xlu0 %4868
      %4870 = vrot.lane.b32.xlu0 %v4837, 120
      %v4871 = vpop.permute.xlu0 %4870
      %4872 = vrot.lane.b32.xlu0 %v4838, 120
      %v4873 = vpop.permute.xlu0 %4872
      %4874 = vrot.lane.b32.xlu0 %v4839, 120
      %v4875 = vpop.permute.xlu0 %4874
      %4876 = vrot.lane.b32.xlu0 %v4840, 120
      %v4877 = vpop.permute.xlu0 %4876
      %4878 = vrot.lane.b32.xlu0 %v4841, 120
      %v4879 = vpop.permute.xlu0 %4878
      %4880 = vrot.lane.b32.xlu0 %v4842, 120
      %v4881 = vpop.permute.xlu0 %4880
      %4882 = vrot.lane.b32.xlu0 %v4843, 120
      %v4883 = vpop.permute.xlu0 %4882
      %4884 = vrot.lane.b32.xlu0 %v4844, 120
      %v4885 = vpop.permute.xlu0 %4884
      %4886 = vrot.lane.b32.xlu0 %v4845, 120
      %v4887 = vpop.permute.xlu0 %4886
      %4888 = vrot.lane.b32.xlu0 %v4846, 120
      %v4889 = vpop.permute.xlu0 %4888
      %4890 = vrot.lane.b32.xlu0 %v4847, 120
      %v4891 = vpop.permute.xlu0 %4890
      %4892 = vrot.lane.b32.xlu0 %v4848, 120
      %v4893 = vpop.permute.xlu0 %4892
      %4894 = vrot.lane.b32.xlu0 %v4849, 120
      %v4895 = vpop.permute.xlu0 %4894
      %4896 = vrot.lane.b32.xlu0 %v4850, 120
      %v4897 = vpop.permute.xlu0 %4896
      %4898 = vrot.lane.b32.xlu0 %v4851, 120
      %v4899 = vpop.permute.xlu0 %4898
      %vm4900 = vcmask 982016
      %v4901 = vsel %vm4900, %v4869, %v4871
      %v4902 = vsel %vm4900, %v4871, %v4873
      %v4903 = vsel %vm4900, %v4873, %v4875
      %v4904 = vsel %vm4900, %v4875, %v4877
      %v4905 = vsel %vm4900, %v4877, %v4879
      %v4906 = vsel %vm4900, %v4879, %v4881
      %v4907 = vsel %vm4900, %v4881, %v4883
      %v4908 = vsel %vm4900, %v4883, %v4885
      %v4909 = vsel %vm4900, %v4885, %v4887
      %v4910 = vsel %vm4900, %v4887, %v4889
      %v4911 = vsel %vm4900, %v4889, %v4891
      %v4912 = vsel %vm4900, %v4891, %v4893
      %v4913 = vsel %vm4900, %v4893, %v4895
      %v4914 = vsel %vm4900, %v4895, %v4897
      %v4915 = vsel %vm4900, %v4897, %v4899
      %v4933 = vsel %vm4900, %v4899, %v4869
      %v4934 = vmax.f32 %v4836, %v4901
      %v4935 = vmax.f32 %v4837, %v4902
      %v4936 = vmax.f32 %v4838, %v4903
      %v4937 = vmax.f32 %v4839, %v4904
      %v4938 = vmax.f32 %v4840, %v4905
      %v4939 = vmax.f32 %v4841, %v4906
      %v4940 = vmax.f32 %v4842, %v4907
      %v4941 = vmax.f32 %v4843, %v4908
      %v4942 = vmax.f32 %v4844, %v4909
      %v4943 = vmax.f32 %v4845, %v4910
      %v4944 = vmax.f32 %v4846, %v4911
      %v4945 = vmax.f32 %v4847, %v4912
      %v4946 = vmax.f32 %v4848, %v4913
      %v4947 = vmax.f32 %v4849, %v4914
      %v4948 = vmax.f32 %v4850, %v4915
      %v4949 = vmax.f32 %v4851, %v4933
      %v4950 = vadd.s32 %v206, 512
      %v4951 = vadd.s32 %v206, 520
      %v4952 = vadd.s32 %v206, 528
      %v4953 = vadd.s32 %v206, 536
      %v4954 = vadd.s32 %v206, 544
      %v4955 = vadd.s32 %v206, 552
      %v4956 = vadd.s32 %v206, 560
      %v4957 = vadd.s32 %v206, 568
      %v4958 = vadd.s32 %v206, 576
      %v4959 = vadd.s32 %v206, 584
      %v4960 = vadd.s32 %v206, 592
      %v4961 = vadd.s32 %v206, 600
      %v4962 = vadd.s32 %v206, 608
      %v4963 = vadd.s32 %v206, 616
      %v4964 = vadd.s32 %v206, 624
      %v4965 = vadd.s32 %v206, 632
      %v4966 = vadd.s32 %v206, 640
      %v4967 = vadd.s32 %v206, 648
      %v4968 = vadd.s32 %v206, 656
      %v4969 = vadd.s32 %v206, 664
      %v4970 = vadd.s32 %v206, 672
      %v4971 = vadd.s32 %v206, 680
      %v4972 = vadd.s32 %v206, 688
      %v4973 = vadd.s32 %v206, 696
      %v4974 = vadd.s32 %v206, 704
      %v4975 = vadd.s32 %v206, 712
      %v4976 = vadd.s32 %v206, 720
      %v4977 = vadd.s32 %v206, 728
      %v4978 = vadd.s32 %v206, 736
      %v4979 = vadd.s32 %v206, 744
      %v4980 = vadd.s32 %v206, 752
      %v4981 = vadd.s32 %v206, 760
      %v4982 = vadd.s32 %v206, 768
      %v4983 = vadd.s32 %v206, 776
      %v4984 = vadd.s32 %v206, 784
      %v4985 = vadd.s32 %v206, 792
      %v4986 = vadd.s32 %v206, 800
      %v4987 = vadd.s32 %v206, 808
      %v4988 = vadd.s32 %v206, 816
      %v4989 = vadd.s32 %v206, 824
      %v4990 = vadd.s32 %v206, 832
      %v4991 = vadd.s32 %v206, 840
      %v4992 = vadd.s32 %v206, 848
      %v4993 = vadd.s32 %v206, 856
      %v4994 = vadd.s32 %v206, 864
      %v4995 = vadd.s32 %v206, 872
      %v4996 = vadd.s32 %v206, 880
      %v4997 = vadd.s32 %v206, 888
      %v4998 = vadd.s32 %v206, 896
      %v4999 = vadd.s32 %v206, 904
      %v5000 = vadd.s32 %v206, 912
      %v5001 = vadd.s32 %v206, 920
      %v5002 = vadd.s32 %v206, 928
      %v5003 = vadd.s32 %v206, 936
      %v5004 = vadd.s32 %v206, 944
      %v5005 = vadd.s32 %v206, 952
      %v5006 = vadd.s32 %v206, 960
      %v5007 = vadd.s32 %v206, 968
      %v5008 = vadd.s32 %v206, 976
      %v5009 = vadd.s32 %v206, 984
      %v5010 = vadd.s32 %v206, 992
      %v5011 = vadd.s32 %v206, 1000
      %v5012 = vadd.s32 %v206, 1008
      %v5013 = vadd.s32 %v206, 1016
      %v5014 = vadd.s32 %v206, 1024
      %v5015 = vadd.s32 %v206, 1032
      %v5016 = vadd.s32 %v206, 1040
      %v5017 = vadd.s32 %v206, 1048
      %v5018 = vadd.s32 %v206, 1056
      %v5019 = vadd.s32 %v206, 1064
      %v5020 = vadd.s32 %v206, 1072
      %v5021 = vadd.s32 %v206, 1080
      %v5022 = vadd.s32 %v206, 1088
      %v5023 = vadd.s32 %v206, 1096
      %v5024 = vadd.s32 %v206, 1104
      %v5025 = vadd.s32 %v206, 1112
      %v5026 = vadd.s32 %v206, 1120
      %v5027 = vadd.s32 %v206, 1128
      %v5028 = vadd.s32 %v206, 1136
      %v5029 = vadd.s32 %v206, 1144
      %v5030 = vadd.s32 %v206, 1152
      %v5031 = vadd.s32 %v206, 1160
      %v5032 = vadd.s32 %v206, 1168
      %v5033 = vadd.s32 %v206, 1176
      %v5034 = vadd.s32 %v206, 1184
      %v5035 = vadd.s32 %v206, 1192
      %v5036 = vadd.s32 %v206, 1200
      %v5037 = vadd.s32 %v206, 1208
      %v5038 = vadd.s32 %v206, 1216
      %v5039 = vadd.s32 %v206, 1224
      %v5040 = vadd.s32 %v206, 1232
      %v5041 = vadd.s32 %v206, 1240
      %v5042 = vadd.s32 %v206, 1248
      %v5043 = vadd.s32 %v206, 1256
      %v5044 = vadd.s32 %v206, 1264
      %v5045 = vadd.s32 %v206, 1272
      %v5046 = vadd.s32 %v206, 1280
      %v5047 = vadd.s32 %v206, 1288
      %v5048 = vadd.s32 %v206, 1296
      %v5049 = vadd.s32 %v206, 1304
      %v5050 = vadd.s32 %v206, 1312
      %v5051 = vadd.s32 %v206, 1320
      %v5052 = vadd.s32 %v206, 1328
      %v5053 = vadd.s32 %v206, 1336
      %v5054 = vadd.s32 %v206, 1344
      %v5055 = vadd.s32 %v206, 1352
      %v5056 = vadd.s32 %v206, 1360
      %v5057 = vadd.s32 %v206, 1368
      %v5058 = vadd.s32 %v206, 1376
      %v5059 = vadd.s32 %v206, 1384
      %v5060 = vadd.s32 %v206, 1392
      %v5061 = vadd.s32 %v206, 1400
      %v5062 = vadd.s32 %v206, 1408
      %v5063 = vadd.s32 %v206, 1416
      %v5064 = vadd.s32 %v206, 1424
      %v5065 = vadd.s32 %v206, 1432
      %v5066 = vadd.s32 %v206, 1440
      %v5067 = vadd.s32 %v206, 1448
      %v5068 = vadd.s32 %v206, 1456
      %v5069 = vadd.s32 %v206, 1464
      %v5070 = vadd.s32 %v206, 1472
      %v5071 = vadd.s32 %v206, 1480
      %v5072 = vadd.s32 %v206, 1488
      %v5073 = vadd.s32 %v206, 1496
      %v5074 = vadd.s32 %v206, 1504
      %v5075 = vadd.s32 %v206, 1512
      %v5076 = vadd.s32 %v206, 1520
      %v5077 = vadd.s32 %v206, 1528
      %v5078 = vadd.s32 %v206, 1536
      %v5079 = vadd.s32 %v206, 1544
      %v5080 = vadd.s32 %v206, 1552
      %v5081 = vadd.s32 %v206, 1560
      %v5082 = vadd.s32 %v206, 1568
      %v5083 = vadd.s32 %v206, 1576
      %v5084 = vadd.s32 %v206, 1584
      %v5085 = vadd.s32 %v206, 1592
      %v5086 = vadd.s32 %v206, 1600
      %v5087 = vadd.s32 %v206, 1608
      %v5088 = vadd.s32 %v206, 1616
      %v5089 = vadd.s32 %v206, 1624
      %v5090 = vadd.s32 %v206, 1632
      %v5091 = vadd.s32 %v206, 1640
      %v5092 = vadd.s32 %v206, 1648
      %v5093 = vadd.s32 %v206, 1656
      %v5094 = vadd.s32 %v206, 1664
      %v5095 = vadd.s32 %v206, 1672
      %v5096 = vadd.s32 %v206, 1680
      %v5097 = vadd.s32 %v206, 1688
      %v5098 = vadd.s32 %v206, 1696
      %v5099 = vadd.s32 %v206, 1704
      %v5100 = vadd.s32 %v206, 1712
      %v5101 = vadd.s32 %v206, 1720
      %v5102 = vadd.s32 %v206, 1728
      %v5103 = vadd.s32 %v206, 1736
      %v5104 = vadd.s32 %v206, 1744
      %v5105 = vadd.s32 %v206, 1752
      %v5106 = vadd.s32 %v206, 1760
      %v5107 = vadd.s32 %v206, 1768
      %v5108 = vadd.s32 %v206, 1776
      %v5109 = vadd.s32 %v206, 1784
      %v5110 = vadd.s32 %v206, 1792
      %v5111 = vadd.s32 %v206, 1800
      %v5112 = vadd.s32 %v206, 1808
      %v5113 = vadd.s32 %v206, 1816
      %v5114 = vadd.s32 %v206, 1824
      %v5115 = vadd.s32 %v206, 1832
      %v5116 = vadd.s32 %v206, 1840
      %v5117 = vadd.s32 %v206, 1848
      %v5118 = vadd.s32 %v206, 1856
      %v5119 = vadd.s32 %v206, 1864
      %v5120 = vadd.s32 %v206, 1872
      %v5121 = vadd.s32 %v206, 1880
      %v5122 = vadd.s32 %v206, 1888
      %v5123 = vadd.s32 %v206, 1896
      %v5124 = vadd.s32 %v206, 1904
      %v5125 = vadd.s32 %v206, 1912
      %v5126 = vadd.s32 %v206, 1920
      %v5127 = vadd.s32 %v206, 1928
      %v5128 = vadd.s32 %v206, 1936
      %v5129 = vadd.s32 %v206, 1944
      %v5130 = vadd.s32 %v206, 1952
      %v5131 = vadd.s32 %v206, 1960
      %v5132 = vadd.s32 %v206, 1968
      %v5133 = vadd.s32 %v206, 1976
      %v5134 = vadd.s32 %v206, 1984
      %v5135 = vadd.s32 %v206, 1992
      %v5136 = vadd.s32 %v206, 2000
      %v5137 = vadd.s32 %v206, 2008
      %v5138 = vadd.s32 %v206, 2016
      %v5139 = vadd.s32 %v206, 2024
      %v5140 = vadd.s32 %v206, 2032
      %v5141 = vadd.s32 %v206, 2040
      %v5142 = vlaneseq
      %v5143 = vand.u32 %v5142, 127
      %v5144 = vmul.u32 %v5143, 16
      %vm5145 = vcmp.eq.s32.totalorder %v206, %v5144
      %vm5146 = vcmp.eq.s32.totalorder %v207, %v5144
      %vm5147 = vcmp.eq.s32.totalorder %v208, %v5144
      %vm5148 = vcmp.eq.s32.totalorder %v209, %v5144
      %vm5149 = vcmp.eq.s32.totalorder %v210, %v5144
      %vm5150 = vcmp.eq.s32.totalorder %v211, %v5144
      %vm5151 = vcmp.eq.s32.totalorder %v212, %v5144
      %vm5152 = vcmp.eq.s32.totalorder %v213, %v5144
      %vm5153 = vcmp.eq.s32.totalorder %v214, %v5144
      %vm5154 = vcmp.eq.s32.totalorder %v215, %v5144
      %vm5155 = vcmp.eq.s32.totalorder %v216, %v5144
      %vm5156 = vcmp.eq.s32.totalorder %v217, %v5144
      %vm5157 = vcmp.eq.s32.totalorder %v218, %v5144
      %vm5158 = vcmp.eq.s32.totalorder %v219, %v5144
      %vm5159 = vcmp.eq.s32.totalorder %v220, %v5144
      %vm5160 = vcmp.eq.s32.totalorder %v221, %v5144
      %vm5161 = vcmp.eq.s32.totalorder %v222, %v5144
      %vm5162 = vcmp.eq.s32.totalorder %v223, %v5144
      %vm5163 = vcmp.eq.s32.totalorder %v224, %v5144
      %vm5164 = vcmp.eq.s32.totalorder %v225, %v5144
      %vm5165 = vcmp.eq.s32.totalorder %v226, %v5144
      %vm5166 = vcmp.eq.s32.totalorder %v227, %v5144
      %vm5167 = vcmp.eq.s32.totalorder %v228, %v5144
      %vm5168 = vcmp.eq.s32.totalorder %v229, %v5144
      %vm5169 = vcmp.eq.s32.totalorder %v230, %v5144
      %vm5170 = vcmp.eq.s32.totalorder %v231, %v5144
      %vm5171 = vcmp.eq.s32.totalorder %v232, %v5144
      %vm5172 = vcmp.eq.s32.totalorder %v233, %v5144
      %vm5173 = vcmp.eq.s32.totalorder %v234, %v5144
      %vm5174 = vcmp.eq.s32.totalorder %v235, %v5144
      %vm5175 = vcmp.eq.s32.totalorder %v236, %v5144
      %vm5176 = vcmp.eq.s32.totalorder %v237, %v5144
      %vm5177 = vcmp.eq.s32.totalorder %v238, %v5144
      %vm5178 = vcmp.eq.s32.totalorder %v239, %v5144
      %vm5179 = vcmp.eq.s32.totalorder %v240, %v5144
      %vm5180 = vcmp.eq.s32.totalorder %v241, %v5144
      %vm5181 = vcmp.eq.s32.totalorder %v242, %v5144
      %vm5182 = vcmp.eq.s32.totalorder %v243, %v5144
      %vm5183 = vcmp.eq.s32.totalorder %v244, %v5144
      %vm5184 = vcmp.eq.s32.totalorder %v245, %v5144
      %vm5185 = vcmp.eq.s32.totalorder %v246, %v5144
      %vm5186 = vcmp.eq.s32.totalorder %v247, %v5144
      %vm5187 = vcmp.eq.s32.totalorder %v248, %v5144
      %vm5188 = vcmp.eq.s32.totalorder %v249, %v5144
      %vm5189 = vcmp.eq.s32.totalorder %v250, %v5144
      %vm5190 = vcmp.eq.s32.totalorder %v251, %v5144
      %vm5191 = vcmp.eq.s32.totalorder %v252, %v5144
      %vm5192 = vcmp.eq.s32.totalorder %v253, %v5144
      %vm5193 = vcmp.eq.s32.totalorder %v254, %v5144
      %vm5194 = vcmp.eq.s32.totalorder %v255, %v5144
      %vm5195 = vcmp.eq.s32.totalorder %v256, %v5144
      %vm5196 = vcmp.eq.s32.totalorder %v257, %v5144
      %vm5197 = vcmp.eq.s32.totalorder %v258, %v5144
      %vm5198 = vcmp.eq.s32.totalorder %v259, %v5144
      %vm5199 = vcmp.eq.s32.totalorder %v260, %v5144
      %vm5200 = vcmp.eq.s32.totalorder %v261, %v5144
      %vm5201 = vcmp.eq.s32.totalorder %v262, %v5144
      %vm5202 = vcmp.eq.s32.totalorder %v263, %v5144
      %vm5203 = vcmp.eq.s32.totalorder %v264, %v5144
      %vm5204 = vcmp.eq.s32.totalorder %v265, %v5144
      %vm5205 = vcmp.eq.s32.totalorder %v266, %v5144
      %vm5206 = vcmp.eq.s32.totalorder %v267, %v5144
      %vm5207 = vcmp.eq.s32.totalorder %v268, %v5144
      %vm5208 = vcmp.eq.s32.totalorder %v269, %v5144
      %vm5209 = vcmp.eq.s32.totalorder %v4950, %v5144
      %vm5210 = vcmp.eq.s32.totalorder %v4951, %v5144
      %vm5211 = vcmp.eq.s32.totalorder %v4952, %v5144
      %vm5212 = vcmp.eq.s32.totalorder %v4953, %v5144
      %vm5213 = vcmp.eq.s32.totalorder %v4954, %v5144
      %vm5214 = vcmp.eq.s32.totalorder %v4955, %v5144
      %vm5215 = vcmp.eq.s32.totalorder %v4956, %v5144
      %vm5216 = vcmp.eq.s32.totalorder %v4957, %v5144
      %vm5217 = vcmp.eq.s32.totalorder %v4958, %v5144
      %vm5218 = vcmp.eq.s32.totalorder %v4959, %v5144
      %vm5219 = vcmp.eq.s32.totalorder %v4960, %v5144
      %vm5220 = vcmp.eq.s32.totalorder %v4961, %v5144
      %vm5221 = vcmp.eq.s32.totalorder %v4962, %v5144
      %vm5222 = vcmp.eq.s32.totalorder %v4963, %v5144
      %vm5223 = vcmp.eq.s32.totalorder %v4964, %v5144
      %vm5224 = vcmp.eq.s32.totalorder %v4965, %v5144
      %vm5225 = vcmp.eq.s32.totalorder %v4966, %v5144
      %vm5226 = vcmp.eq.s32.totalorder %v4967, %v5144
      %vm5227 = vcmp.eq.s32.totalorder %v4968, %v5144
      %vm5228 = vcmp.eq.s32.totalorder %v4969, %v5144
      %vm5229 = vcmp.eq.s32.totalorder %v4970, %v5144
      %vm5230 = vcmp.eq.s32.totalorder %v4971, %v5144
      %vm5231 = vcmp.eq.s32.totalorder %v4972, %v5144
      %vm5232 = vcmp.eq.s32.totalorder %v4973, %v5144
      %vm5233 = vcmp.eq.s32.totalorder %v4974, %v5144
      %vm5234 = vcmp.eq.s32.totalorder %v4975, %v5144
      %vm5235 = vcmp.eq.s32.totalorder %v4976, %v5144
      %vm5236 = vcmp.eq.s32.totalorder %v4977, %v5144
      %vm5237 = vcmp.eq.s32.totalorder %v4978, %v5144
      %vm5238 = vcmp.eq.s32.totalorder %v4979, %v5144
      %vm5239 = vcmp.eq.s32.totalorder %v4980, %v5144
      %vm5240 = vcmp.eq.s32.totalorder %v4981, %v5144
      %vm5241 = vcmp.eq.s32.totalorder %v4982, %v5144
      %vm5242 = vcmp.eq.s32.totalorder %v4983, %v5144
      %vm5243 = vcmp.eq.s32.totalorder %v4984, %v5144
      %vm5244 = vcmp.eq.s32.totalorder %v4985, %v5144
      %vm5245 = vcmp.eq.s32.totalorder %v4986, %v5144
      %vm5246 = vcmp.eq.s32.totalorder %v4987, %v5144
      %vm5247 = vcmp.eq.s32.totalorder %v4988, %v5144
      %vm5248 = vcmp.eq.s32.totalorder %v4989, %v5144
      %vm5249 = vcmp.eq.s32.totalorder %v4990, %v5144
      %vm5250 = vcmp.eq.s32.totalorder %v4991, %v5144
      %vm5251 = vcmp.eq.s32.totalorder %v4992, %v5144
      %vm5252 = vcmp.eq.s32.totalorder %v4993, %v5144
      %vm5253 = vcmp.eq.s32.totalorder %v4994, %v5144
      %vm5254 = vcmp.eq.s32.totalorder %v4995, %v5144
      %vm5255 = vcmp.eq.s32.totalorder %v4996, %v5144
      %vm5256 = vcmp.eq.s32.totalorder %v4997, %v5144
      %vm5257 = vcmp.eq.s32.totalorder %v4998, %v5144
      %vm5258 = vcmp.eq.s32.totalorder %v4999, %v5144
      %vm5259 = vcmp.eq.s32.totalorder %v5000, %v5144
      %vm5260 = vcmp.eq.s32.totalorder %v5001, %v5144
      %vm5261 = vcmp.eq.s32.totalorder %v5002, %v5144
      %vm5262 = vcmp.eq.s32.totalorder %v5003, %v5144
      %vm5263 = vcmp.eq.s32.totalorder %v5004, %v5144
      %vm5264 = vcmp.eq.s32.totalorder %v5005, %v5144
      %vm5265 = vcmp.eq.s32.totalorder %v5006, %v5144
      %vm5266 = vcmp.eq.s32.totalorder %v5007, %v5144
      %vm5267 = vcmp.eq.s32.totalorder %v5008, %v5144
      %vm5268 = vcmp.eq.s32.totalorder %v5009, %v5144
      %vm5269 = vcmp.eq.s32.totalorder %v5010, %v5144
      %vm5270 = vcmp.eq.s32.totalorder %v5011, %v5144
      %vm5271 = vcmp.eq.s32.totalorder %v5012, %v5144
      %vm5272 = vcmp.eq.s32.totalorder %v5013, %v5144
      %vm5273 = vcmp.eq.s32.totalorder %v5014, %v5144
      %vm5274 = vcmp.eq.s32.totalorder %v5015, %v5144
      %vm5275 = vcmp.eq.s32.totalorder %v5016, %v5144
      %vm5276 = vcmp.eq.s32.totalorder %v5017, %v5144
      %vm5277 = vcmp.eq.s32.totalorder %v5018, %v5144
      %vm5278 = vcmp.eq.s32.totalorder %v5019, %v5144
      %vm5279 = vcmp.eq.s32.totalorder %v5020, %v5144
      %vm5280 = vcmp.eq.s32.totalorder %v5021, %v5144
      %vm5281 = vcmp.eq.s32.totalorder %v5022, %v5144
      %vm5282 = vcmp.eq.s32.totalorder %v5023, %v5144
      %vm5283 = vcmp.eq.s32.totalorder %v5024, %v5144
      %vm5284 = vcmp.eq.s32.totalorder %v5025, %v5144
      %vm5285 = vcmp.eq.s32.totalorder %v5026, %v5144
      %vm5286 = vcmp.eq.s32.totalorder %v5027, %v5144
      %vm5287 = vcmp.eq.s32.totalorder %v5028, %v5144
      %vm5288 = vcmp.eq.s32.totalorder %v5029, %v5144
      %vm5289 = vcmp.eq.s32.totalorder %v5030, %v5144
      %vm5290 = vcmp.eq.s32.totalorder %v5031, %v5144
      %vm5291 = vcmp.eq.s32.totalorder %v5032, %v5144
      %vm5292 = vcmp.eq.s32.totalorder %v5033, %v5144
      %vm5293 = vcmp.eq.s32.totalorder %v5034, %v5144
      %vm5294 = vcmp.eq.s32.totalorder %v5035, %v5144
      %vm5295 = vcmp.eq.s32.totalorder %v5036, %v5144
      %vm5296 = vcmp.eq.s32.totalorder %v5037, %v5144
      %vm5297 = vcmp.eq.s32.totalorder %v5038, %v5144
      %vm5298 = vcmp.eq.s32.totalorder %v5039, %v5144
      %vm5299 = vcmp.eq.s32.totalorder %v5040, %v5144
      %vm5300 = vcmp.eq.s32.totalorder %v5041, %v5144
      %vm5301 = vcmp.eq.s32.totalorder %v5042, %v5144
      %vm5302 = vcmp.eq.s32.totalorder %v5043, %v5144
      %vm5303 = vcmp.eq.s32.totalorder %v5044, %v5144
      %vm5304 = vcmp.eq.s32.totalorder %v5045, %v5144
      %vm5305 = vcmp.eq.s32.totalorder %v5046, %v5144
      %vm5306 = vcmp.eq.s32.totalorder %v5047, %v5144
      %vm5307 = vcmp.eq.s32.totalorder %v5048, %v5144
      %vm5308 = vcmp.eq.s32.totalorder %v5049, %v5144
      %vm5309 = vcmp.eq.s32.totalorder %v5050, %v5144
      %vm5310 = vcmp.eq.s32.totalorder %v5051, %v5144
      %vm5311 = vcmp.eq.s32.totalorder %v5052, %v5144
      %vm5312 = vcmp.eq.s32.totalorder %v5053, %v5144
      %vm5313 = vcmp.eq.s32.totalorder %v5054, %v5144
      %vm5314 = vcmp.eq.s32.totalorder %v5055, %v5144
      %vm5315 = vcmp.eq.s32.totalorder %v5056, %v5144
      %vm5316 = vcmp.eq.s32.totalorder %v5057, %v5144
      %vm5317 = vcmp.eq.s32.totalorder %v5058, %v5144
      %vm5318 = vcmp.eq.s32.totalorder %v5059, %v5144
      %vm5319 = vcmp.eq.s32.totalorder %v5060, %v5144
      %vm5320 = vcmp.eq.s32.totalorder %v5061, %v5144
      %vm5321 = vcmp.eq.s32.totalorder %v5062, %v5144
      %vm5322 = vcmp.eq.s32.totalorder %v5063, %v5144
      %vm5323 = vcmp.eq.s32.totalorder %v5064, %v5144
      %vm5324 = vcmp.eq.s32.totalorder %v5065, %v5144
      %vm5325 = vcmp.eq.s32.totalorder %v5066, %v5144
      %vm5326 = vcmp.eq.s32.totalorder %v5067, %v5144
      %vm5327 = vcmp.eq.s32.totalorder %v5068, %v5144
      %vm5328 = vcmp.eq.s32.totalorder %v5069, %v5144
      %vm5329 = vcmp.eq.s32.totalorder %v5070, %v5144
      %vm5330 = vcmp.eq.s32.totalorder %v5071, %v5144
      %vm5331 = vcmp.eq.s32.totalorder %v5072, %v5144
      %vm5332 = vcmp.eq.s32.totalorder %v5073, %v5144
      %vm5333 = vcmp.eq.s32.totalorder %v5074, %v5144
      %vm5334 = vcmp.eq.s32.totalorder %v5075, %v5144
      %vm5335 = vcmp.eq.s32.totalorder %v5076, %v5144
      %vm5336 = vcmp.eq.s32.totalorder %v5077, %v5144
      %vm5337 = vcmp.eq.s32.totalorder %v5078, %v5144
      %vm5338 = vcmp.eq.s32.totalorder %v5079, %v5144
      %vm5339 = vcmp.eq.s32.totalorder %v5080, %v5144
      %vm5340 = vcmp.eq.s32.totalorder %v5081, %v5144
      %vm5341 = vcmp.eq.s32.totalorder %v5082, %v5144
      %vm5342 = vcmp.eq.s32.totalorder %v5083, %v5144
      %vm5343 = vcmp.eq.s32.totalorder %v5084, %v5144
      %vm5344 = vcmp.eq.s32.totalorder %v5085, %v5144
      %vm5345 = vcmp.eq.s32.totalorder %v5086, %v5144
      %vm5346 = vcmp.eq.s32.totalorder %v5087, %v5144
      %vm5347 = vcmp.eq.s32.totalorder %v5088, %v5144
      %vm5348 = vcmp.eq.s32.totalorder %v5089, %v5144
      %vm5349 = vcmp.eq.s32.totalorder %v5090, %v5144
      %vm5350 = vcmp.eq.s32.totalorder %v5091, %v5144
      %vm5351 = vcmp.eq.s32.totalorder %v5092, %v5144
      %vm5352 = vcmp.eq.s32.totalorder %v5093, %v5144
      %vm5353 = vcmp.eq.s32.totalorder %v5094, %v5144
      %vm5354 = vcmp.eq.s32.totalorder %v5095, %v5144
      %vm5355 = vcmp.eq.s32.totalorder %v5096, %v5144
      %vm5356 = vcmp.eq.s32.totalorder %v5097, %v5144
      %vm5357 = vcmp.eq.s32.totalorder %v5098, %v5144
      %vm5358 = vcmp.eq.s32.totalorder %v5099, %v5144
      %vm5359 = vcmp.eq.s32.totalorder %v5100, %v5144
      %vm5360 = vcmp.eq.s32.totalorder %v5101, %v5144
      %vm5361 = vcmp.eq.s32.totalorder %v5102, %v5144
      %vm5362 = vcmp.eq.s32.totalorder %v5103, %v5144
      %vm5363 = vcmp.eq.s32.totalorder %v5104, %v5144
      %vm5364 = vcmp.eq.s32.totalorder %v5105, %v5144
      %vm5365 = vcmp.eq.s32.totalorder %v5106, %v5144
      %vm5366 = vcmp.eq.s32.totalorder %v5107, %v5144
      %vm5367 = vcmp.eq.s32.totalorder %v5108, %v5144
      %vm5368 = vcmp.eq.s32.totalorder %v5109, %v5144
      %vm5369 = vcmp.eq.s32.totalorder %v5110, %v5144
      %vm5370 = vcmp.eq.s32.totalorder %v5111, %v5144
      %vm5371 = vcmp.eq.s32.totalorder %v5112, %v5144
      %vm5372 = vcmp.eq.s32.totalorder %v5113, %v5144
      %vm5373 = vcmp.eq.s32.totalorder %v5114, %v5144
      %vm5374 = vcmp.eq.s32.totalorder %v5115, %v5144
      %vm5375 = vcmp.eq.s32.totalorder %v5116, %v5144
      %vm5376 = vcmp.eq.s32.totalorder %v5117, %v5144
      %vm5377 = vcmp.eq.s32.totalorder %v5118, %v5144
      %vm5378 = vcmp.eq.s32.totalorder %v5119, %v5144
      %vm5379 = vcmp.eq.s32.totalorder %v5120, %v5144
      %vm5380 = vcmp.eq.s32.totalorder %v5121, %v5144
      %vm5381 = vcmp.eq.s32.totalorder %v5122, %v5144
      %vm5382 = vcmp.eq.s32.totalorder %v5123, %v5144
      %vm5383 = vcmp.eq.s32.totalorder %v5124, %v5144
      %vm5384 = vcmp.eq.s32.totalorder %v5125, %v5144
      %vm5385 = vcmp.eq.s32.totalorder %v5126, %v5144
      %vm5386 = vcmp.eq.s32.totalorder %v5127, %v5144
      %vm5387 = vcmp.eq.s32.totalorder %v5128, %v5144
      %vm5388 = vcmp.eq.s32.totalorder %v5129, %v5144
      %vm5389 = vcmp.eq.s32.totalorder %v5130, %v5144
      %vm5390 = vcmp.eq.s32.totalorder %v5131, %v5144
      %vm5391 = vcmp.eq.s32.totalorder %v5132, %v5144
      %vm5392 = vcmp.eq.s32.totalorder %v5133, %v5144
      %vm5393 = vcmp.eq.s32.totalorder %v5134, %v5144
      %vm5394 = vcmp.eq.s32.totalorder %v5135, %v5144
      %vm5395 = vcmp.eq.s32.totalorder %v5136, %v5144
      %vm5396 = vcmp.eq.s32.totalorder %v5137, %v5144
      %vm5397 = vcmp.eq.s32.totalorder %v5138, %v5144
      %vm5398 = vcmp.eq.s32.totalorder %v5139, %v5144
      %vm5399 = vcmp.eq.s32.totalorder %v5140, %v5144
      %vm5400 = vcmp.eq.s32.totalorder %v5141, %v5144
      %v5401 = vsel %vm5145, 1, 0
      %v5402 = vsel %vm5146, 1, 0
      %v5403 = vsel %vm5147, 1, 0
      %v5404 = vsel %vm5148, 1, 0
      %v5405 = vsel %vm5149, 1, 0
      %v5406 = vsel %vm5150, 1, 0
      %v5407 = vsel %vm5151, 1, 0
      %v5408 = vsel %vm5152, 1, 0
      %v5409 = vsel %vm5153, 1, 0
      %v5410 = vsel %vm5154, 1, 0
      %v5411 = vsel %vm5155, 1, 0
      %v5412 = vsel %vm5156, 1, 0
      %v5413 = vsel %vm5157, 1, 0
      %v5414 = vsel %vm5158, 1, 0
      %v5415 = vsel %vm5159, 1, 0
      %v5416 = vsel %vm5160, 1, 0
      %v5417 = vsel %vm5161, 1, 0
      %v5418 = vsel %vm5162, 1, 0
      %v5419 = vsel %vm5163, 1, 0
      %v5420 = vsel %vm5164, 1, 0
      %v5421 = vsel %vm5165, 1, 0
      %v5422 = vsel %vm5166, 1, 0
      %v5423 = vsel %vm5167, 1, 0
      %v5424 = vsel %vm5168, 1, 0
      %v5425 = vsel %vm5169, 1, 0
      %v5426 = vsel %vm5170, 1, 0
      %v5427 = vsel %vm5171, 1, 0
      %v5428 = vsel %vm5172, 1, 0
      %v5429 = vsel %vm5173, 1, 0
      %v5430 = vsel %vm5174, 1, 0
      %v5431 = vsel %vm5175, 1, 0
      %v5432 = vsel %vm5176, 1, 0
      %v5433 = vsel %vm5177, 1, 0
      %v5434 = vsel %vm5178, 1, 0
      %v5435 = vsel %vm5179, 1, 0
      %v5436 = vsel %vm5180, 1, 0
      %v5437 = vsel %vm5181, 1, 0
      %v5438 = vsel %vm5182, 1, 0
      %v5439 = vsel %vm5183, 1, 0
      %v5440 = vsel %vm5184, 1, 0
      %v5441 = vsel %vm5185, 1, 0
      %v5442 = vsel %vm5186, 1, 0
      %v5443 = vsel %vm5187, 1, 0
      %v5444 = vsel %vm5188, 1, 0
      %v5445 = vsel %vm5189, 1, 0
      %v5446 = vsel %vm5190, 1, 0
      %v5447 = vsel %vm5191, 1, 0
      %v5448 = vsel %vm5192, 1, 0
      %v5449 = vsel %vm5193, 1, 0
      %v5450 = vsel %vm5194, 1, 0
      %v5451 = vsel %vm5195, 1, 0
      %v5452 = vsel %vm5196, 1, 0
      %v5453 = vsel %vm5197, 1, 0
      %v5454 = vsel %vm5198, 1, 0
      %v5455 = vsel %vm5199, 1, 0
      %v5456 = vsel %vm5200, 1, 0
      %v5457 = vsel %vm5201, 1, 0
      %v5458 = vsel %vm5202, 1, 0
      %v5459 = vsel %vm5203, 1, 0
      %v5460 = vsel %vm5204, 1, 0
      %v5461 = vsel %vm5205, 1, 0
      %v5462 = vsel %vm5206, 1, 0
      %v5463 = vsel %vm5207, 1, 0
      %v5464 = vsel %vm5208, 1, 0
      %v5465 = vsel %vm5209, 1, 0
      %v5466 = vsel %vm5210, 1, 0
      %v5467 = vsel %vm5211, 1, 0
      %v5468 = vsel %vm5212, 1, 0
      %v5469 = vsel %vm5213, 1, 0
      %v5470 = vsel %vm5214, 1, 0
      %v5471 = vsel %vm5215, 1, 0
      %v5472 = vsel %vm5216, 1, 0
      %v5473 = vsel %vm5217, 1, 0
      %v5474 = vsel %vm5218, 1, 0
      %v5475 = vsel %vm5219, 1, 0
      %v5476 = vsel %vm5220, 1, 0
      %v5477 = vsel %vm5221, 1, 0
      %v5478 = vsel %vm5222, 1, 0
      %v5479 = vsel %vm5223, 1, 0
      %v5480 = vsel %vm5224, 1, 0
      %v5481 = vsel %vm5225, 1, 0
      %v5482 = vsel %vm5226, 1, 0
      %v5483 = vsel %vm5227, 1, 0
      %v5484 = vsel %vm5228, 1, 0
      %v5485 = vsel %vm5229, 1, 0
      %v5486 = vsel %vm5230, 1, 0
      %v5487 = vsel %vm5231, 1, 0
      %v5488 = vsel %vm5232, 1, 0
      %v5489 = vsel %vm5233, 1, 0
      %v5490 = vsel %vm5234, 1, 0
      %v5491 = vsel %vm5235, 1, 0
      %v5492 = vsel %vm5236, 1, 0
      %v5493 = vsel %vm5237, 1, 0
      %v5494 = vsel %vm5238, 1, 0
      %v5495 = vsel %vm5239, 1, 0
      %v5496 = vsel %vm5240, 1, 0
      %v5497 = vsel %vm5241, 1, 0
      %v5498 = vsel %vm5242, 1, 0
      %v5499 = vsel %vm5243, 1, 0
      %v5500 = vsel %vm5244, 1, 0
      %v5501 = vsel %vm5245, 1, 0
      %v5502 = vsel %vm5246, 1, 0
      %v5503 = vsel %vm5247, 1, 0
      %v5504 = vsel %vm5248, 1, 0
      %v5505 = vsel %vm5249, 1, 0
      %v5506 = vsel %vm5250, 1, 0
      %v5507 = vsel %vm5251, 1, 0
      %v5508 = vsel %vm5252, 1, 0
      %v5509 = vsel %vm5253, 1, 0
      %v5510 = vsel %vm5254, 1, 0
      %v5511 = vsel %vm5255, 1, 0
      %v5512 = vsel %vm5256, 1, 0
      %v5513 = vsel %vm5257, 1, 0
      %v5514 = vsel %vm5258, 1, 0
      %v5515 = vsel %vm5259, 1, 0
      %v5516 = vsel %vm5260, 1, 0
      %v5517 = vsel %vm5261, 1, 0
      %v5518 = vsel %vm5262, 1, 0
      %v5519 = vsel %vm5263, 1, 0
      %v5520 = vsel %vm5264, 1, 0
      %v5521 = vsel %vm5265, 1, 0
      %v5522 = vsel %vm5266, 1, 0
      %v5523 = vsel %vm5267, 1, 0
      %v5524 = vsel %vm5268, 1, 0
      %v5525 = vsel %vm5269, 1, 0
      %v5526 = vsel %vm5270, 1, 0
      %v5527 = vsel %vm5271, 1, 0
      %v5528 = vsel %vm5272, 1, 0
      %v5529 = vsel %vm5273, 1, 0
      %v5530 = vsel %vm5274, 1, 0
      %v5531 = vsel %vm5275, 1, 0
      %v5532 = vsel %vm5276, 1, 0
      %v5533 = vsel %vm5277, 1, 0
      %v5534 = vsel %vm5278, 1, 0
      %v5535 = vsel %vm5279, 1, 0
      %v5536 = vsel %vm5280, 1, 0
      %v5537 = vsel %vm5281, 1, 0
      %v5538 = vsel %vm5282, 1, 0
      %v5539 = vsel %vm5283, 1, 0
      %v5540 = vsel %vm5284, 1, 0
      %v5541 = vsel %vm5285, 1, 0
      %v5542 = vsel %vm5286, 1, 0
      %v5543 = vsel %vm5287, 1, 0
      %v5544 = vsel %vm5288, 1, 0
      %v5545 = vsel %vm5289, 1, 0
      %v5546 = vsel %vm5290, 1, 0
      %v5547 = vsel %vm5291, 1, 0
      %v5548 = vsel %vm5292, 1, 0
      %v5549 = vsel %vm5293, 1, 0
      %v5550 = vsel %vm5294, 1, 0
      %v5551 = vsel %vm5295, 1, 0
      %v5552 = vsel %vm5296, 1, 0
      %v5553 = vsel %vm5297, 1, 0
      %v5554 = vsel %vm5298, 1, 0
      %v5555 = vsel %vm5299, 1, 0
      %v5556 = vsel %vm5300, 1, 0
      %v5557 = vsel %vm5301, 1, 0
      %v5558 = vsel %vm5302, 1, 0
      %v5559 = vsel %vm5303, 1, 0
      %v5560 = vsel %vm5304, 1, 0
      %v5561 = vsel %vm5305, 1, 0
      %v5562 = vsel %vm5306, 1, 0
      %v5563 = vsel %vm5307, 1, 0
      %v5564 = vsel %vm5308, 1, 0
      %v5565 = vsel %vm5309, 1, 0
      %v5566 = vsel %vm5310, 1, 0
      %v5567 = vsel %vm5311, 1, 0
      %v5568 = vsel %vm5312, 1, 0
      %v5569 = vsel %vm5313, 1, 0
      %v5570 = vsel %vm5314, 1, 0
      %v5571 = vsel %vm5315, 1, 0
      %v5572 = vsel %vm5316, 1, 0
      %v5573 = vsel %vm5317, 1, 0
      %v5574 = vsel %vm5318, 1, 0
      %v5575 = vsel %vm5319, 1, 0
      %v5576 = vsel %vm5320, 1, 0
      %v5577 = vsel %vm5321, 1, 0
      %v5578 = vsel %vm5322, 1, 0
      %v5579 = vsel %vm5323, 1, 0
      %v5580 = vsel %vm5324, 1, 0
      %v5581 = vsel %vm5325, 1, 0
      %v5582 = vsel %vm5326, 1, 0
      %v5583 = vsel %vm5327, 1, 0
      %v5584 = vsel %vm5328, 1, 0
      %v5585 = vsel %vm5329, 1, 0
      %v5586 = vsel %vm5330, 1, 0
      %v5587 = vsel %vm5331, 1, 0
      %v5588 = vsel %vm5332, 1, 0
      %v5589 = vsel %vm5333, 1, 0
      %v5590 = vsel %vm5334, 1, 0
      %v5591 = vsel %vm5335, 1, 0
      %v5592 = vsel %vm5336, 1, 0
      %v5593 = vsel %vm5337, 1, 0
      %v5594 = vsel %vm5338, 1, 0
      %v5595 = vsel %vm5339, 1, 0
      %v5596 = vsel %vm5340, 1, 0
      %v5597 = vsel %vm5341, 1, 0
      %v5598 = vsel %vm5342, 1, 0
      %v5599 = vsel %vm5343, 1, 0
      %v5600 = vsel %vm5344, 1, 0
      %v5601 = vsel %vm5345, 1, 0
      %v5602 = vsel %vm5346, 1, 0
      %v5603 = vsel %vm5347, 1, 0
      %v5604 = vsel %vm5348, 1, 0
      %v5605 = vsel %vm5349, 1, 0
      %v5606 = vsel %vm5350, 1, 0
      %v5607 = vsel %vm5351, 1, 0
      %v5608 = vsel %vm5352, 1, 0
      %v5609 = vsel %vm5353, 1, 0
      %v5610 = vsel %vm5354, 1, 0
      %v5611 = vsel %vm5355, 1, 0
      %v5612 = vsel %vm5356, 1, 0
      %v5613 = vsel %vm5357, 1, 0
      %v5614 = vsel %vm5358, 1, 0
      %v5615 = vsel %vm5359, 1, 0
      %v5616 = vsel %vm5360, 1, 0
      %v5617 = vsel %vm5361, 1, 0
      %v5618 = vsel %vm5362, 1, 0
      %v5619 = vsel %vm5363, 1, 0
      %v5620 = vsel %vm5364, 1, 0
      %v5621 = vsel %vm5365, 1, 0
      %v5622 = vsel %vm5366, 1, 0
      %v5623 = vsel %vm5367, 1, 0
      %v5624 = vsel %vm5368, 1, 0
      %v5625 = vsel %vm5369, 1, 0
      %v5626 = vsel %vm5370, 1, 0
      %v5627 = vsel %vm5371, 1, 0
      %v5628 = vsel %vm5372, 1, 0
      %v5629 = vsel %vm5373, 1, 0
      %v5630 = vsel %vm5374, 1, 0
      %v5631 = vsel %vm5375, 1, 0
      %v5632 = vsel %vm5376, 1, 0
      %v5633 = vsel %vm5377, 1, 0
      %v5634 = vsel %vm5378, 1, 0
      %v5635 = vsel %vm5379, 1, 0
      %v5636 = vsel %vm5380, 1, 0
      %v5637 = vsel %vm5381, 1, 0
      %v5638 = vsel %vm5382, 1, 0
      %v5639 = vsel %vm5383, 1, 0
      %v5640 = vsel %vm5384, 1, 0
      %v5641 = vsel %vm5385, 1, 0
      %v5642 = vsel %vm5386, 1, 0
      %v5643 = vsel %vm5387, 1, 0
      %v5644 = vsel %vm5388, 1, 0
      %v5645 = vsel %vm5389, 1, 0
      %v5646 = vsel %vm5390, 1, 0
      %v5647 = vsel %vm5391, 1, 0
      %v5648 = vsel %vm5392, 1, 0
      %v5649 = vsel %vm5393, 1, 0
      %v5650 = vsel %vm5394, 1, 0
      %v5651 = vsel %vm5395, 1, 0
      %v5652 = vsel %vm5396, 1, 0
      %v5653 = vsel %vm5397, 1, 0
      %v5654 = vsel %vm5398, 1, 0
      %v5655 = vsel %vm5399, 1, 0
      %v5656 = vsel %vm5400, 1, 0
      %v5657 = vcvt.s32.f32 %v5401
      %v5658 = vcvt.s32.f32 %v5402
      %v5659 = vcvt.s32.f32 %v5403
      %v5660 = vcvt.s32.f32 %v5404
      %v5661 = vcvt.s32.f32 %v5405
      %v5662 = vcvt.s32.f32 %v5406
      %v5663 = vcvt.s32.f32 %v5407
      %v5664 = vcvt.s32.f32 %v5408
      %v5665 = vcvt.s32.f32 %v5409
      %v5666 = vcvt.s32.f32 %v5410
      %v5667 = vcvt.s32.f32 %v5411
      %v5668 = vcvt.s32.f32 %v5412
      %v5669 = vcvt.s32.f32 %v5413
      %v5670 = vcvt.s32.f32 %v5414
      %v5671 = vcvt.s32.f32 %v5415
      %v5672 = vcvt.s32.f32 %v5416
      %v5673 = vcvt.s32.f32 %v5417
      %v5674 = vcvt.s32.f32 %v5418
      %v5675 = vcvt.s32.f32 %v5419
      %v5676 = vcvt.s32.f32 %v5420
      %v5677 = vcvt.s32.f32 %v5421
      %v5678 = vcvt.s32.f32 %v5422
      %v5679 = vcvt.s32.f32 %v5423
      %v5680 = vcvt.s32.f32 %v5424
      %v5681 = vcvt.s32.f32 %v5425
      %v5682 = vcvt.s32.f32 %v5426
      %v5683 = vcvt.s32.f32 %v5427
      %v5684 = vcvt.s32.f32 %v5428
      %v5685 = vcvt.s32.f32 %v5429
      %v5686 = vcvt.s32.f32 %v5430
      %v5687 = vcvt.s32.f32 %v5431
      %v5688 = vcvt.s32.f32 %v5432
      %v5689 = vcvt.s32.f32 %v5433
      %v5690 = vcvt.s32.f32 %v5434
      %v5691 = vcvt.s32.f32 %v5435
      %v5692 = vcvt.s32.f32 %v5436
      %v5693 = vcvt.s32.f32 %v5437
      %v5694 = vcvt.s32.f32 %v5438
      %v5695 = vcvt.s32.f32 %v5439
      %v5696 = vcvt.s32.f32 %v5440
      %v5697 = vcvt.s32.f32 %v5441
      %v5698 = vcvt.s32.f32 %v5442
      %v5699 = vcvt.s32.f32 %v5443
      %v5700 = vcvt.s32.f32 %v5444
      %v5701 = vcvt.s32.f32 %v5445
      %v5702 = vcvt.s32.f32 %v5446
      %v5703 = vcvt.s32.f32 %v5447
      %v5704 = vcvt.s32.f32 %v5448
      %v5705 = vcvt.s32.f32 %v5449
      %v5706 = vcvt.s32.f32 %v5450
      %v5707 = vcvt.s32.f32 %v5451
      %v5708 = vcvt.s32.f32 %v5452
      %v5709 = vcvt.s32.f32 %v5453
      %v5710 = vcvt.s32.f32 %v5454
      %v5711 = vcvt.s32.f32 %v5455
      %v5712 = vcvt.s32.f32 %v5456
      %v5713 = vcvt.s32.f32 %v5457
      %v5714 = vcvt.s32.f32 %v5458
      %v5715 = vcvt.s32.f32 %v5459
      %v5716 = vcvt.s32.f32 %v5460
      %v5717 = vcvt.s32.f32 %v5461
      %v5718 = vcvt.s32.f32 %v5462
      %v5719 = vcvt.s32.f32 %v5463
      %v5720 = vcvt.s32.f32 %v5464
      %v5721 = vcvt.s32.f32 %v5465
      %v5722 = vcvt.s32.f32 %v5466
      %v5723 = vcvt.s32.f32 %v5467
      %v5724 = vcvt.s32.f32 %v5468
      %v5725 = vcvt.s32.f32 %v5469
      %v5726 = vcvt.s32.f32 %v5470
      %v5727 = vcvt.s32.f32 %v5471
      %v5728 = vcvt.s32.f32 %v5472
      %v5729 = vcvt.s32.f32 %v5473
      %v5730 = vcvt.s32.f32 %v5474
      %v5731 = vcvt.s32.f32 %v5475
      %v5732 = vcvt.s32.f32 %v5476
      %v5733 = vcvt.s32.f32 %v5477
      %v5734 = vcvt.s32.f32 %v5478
      %v5735 = vcvt.s32.f32 %v5479
      %v5736 = vcvt.s32.f32 %v5480
      %v5737 = vcvt.s32.f32 %v5481
      %v5738 = vcvt.s32.f32 %v5482
      %v5739 = vcvt.s32.f32 %v5483
      %v5740 = vcvt.s32.f32 %v5484
      %v5741 = vcvt.s32.f32 %v5485
      %v5742 = vcvt.s32.f32 %v5486
      %v5743 = vcvt.s32.f32 %v5487
      %v5744 = vcvt.s32.f32 %v5488
      %v5745 = vcvt.s32.f32 %v5489
      %v5746 = vcvt.s32.f32 %v5490
      %v5747 = vcvt.s32.f32 %v5491
      %v5748 = vcvt.s32.f32 %v5492
      %v5749 = vcvt.s32.f32 %v5493
      %v5750 = vcvt.s32.f32 %v5494
      %v5751 = vcvt.s32.f32 %v5495
      %v5752 = vcvt.s32.f32 %v5496
      %v5753 = vcvt.s32.f32 %v5497
      %v5754 = vcvt.s32.f32 %v5498
      %v5755 = vcvt.s32.f32 %v5499
      %v5756 = vcvt.s32.f32 %v5500
      %v5757 = vcvt.s32.f32 %v5501
      %v5758 = vcvt.s32.f32 %v5502
      %v5759 = vcvt.s32.f32 %v5503
      %v5760 = vcvt.s32.f32 %v5504
      %v5761 = vcvt.s32.f32 %v5505
      %v5762 = vcvt.s32.f32 %v5506
      %v5763 = vcvt.s32.f32 %v5507
      %v5764 = vcvt.s32.f32 %v5508
      %v5765 = vcvt.s32.f32 %v5509
      %v5766 = vcvt.s32.f32 %v5510
      %v5767 = vcvt.s32.f32 %v5511
      %v5768 = vcvt.s32.f32 %v5512
      %v5769 = vcvt.s32.f32 %v5513
      %v5770 = vcvt.s32.f32 %v5514
      %v5771 = vcvt.s32.f32 %v5515
      %v5772 = vcvt.s32.f32 %v5516
      %v5773 = vcvt.s32.f32 %v5517
      %v5774 = vcvt.s32.f32 %v5518
      %v5775 = vcvt.s32.f32 %v5519
      %v5776 = vcvt.s32.f32 %v5520
      %v5777 = vcvt.s32.f32 %v5521
      %v5778 = vcvt.s32.f32 %v5522
      %v5779 = vcvt.s32.f32 %v5523
      %v5780 = vcvt.s32.f32 %v5524
      %v5781 = vcvt.s32.f32 %v5525
      %v5782 = vcvt.s32.f32 %v5526
      %v5783 = vcvt.s32.f32 %v5527
      %v5784 = vcvt.s32.f32 %v5528
      %v5785 = vcvt.s32.f32 %v5529
      %v5786 = vcvt.s32.f32 %v5530
      %v5787 = vcvt.s32.f32 %v5531
      %v5788 = vcvt.s32.f32 %v5532
      %v5789 = vcvt.s32.f32 %v5533
      %v5790 = vcvt.s32.f32 %v5534
      %v5791 = vcvt.s32.f32 %v5535
      %v5792 = vcvt.s32.f32 %v5536
      %v5793 = vcvt.s32.f32 %v5537
      %v5794 = vcvt.s32.f32 %v5538
      %v5795 = vcvt.s32.f32 %v5539
      %v5796 = vcvt.s32.f32 %v5540
      %v5797 = vcvt.s32.f32 %v5541
      %v5798 = vcvt.s32.f32 %v5542
      %v5799 = vcvt.s32.f32 %v5543
      %v5800 = vcvt.s32.f32 %v5544
      %v5801 = vcvt.s32.f32 %v5545
      %v5802 = vcvt.s32.f32 %v5546
      %v5803 = vcvt.s32.f32 %v5547
      %v5804 = vcvt.s32.f32 %v5548
      %v5805 = vcvt.s32.f32 %v5549
      %v5806 = vcvt.s32.f32 %v5550
      %v5807 = vcvt.s32.f32 %v5551
      %v5808 = vcvt.s32.f32 %v5552
      %v5809 = vcvt.s32.f32 %v5553
      %v5810 = vcvt.s32.f32 %v5554
      %v5811 = vcvt.s32.f32 %v5555
      %v5812 = vcvt.s32.f32 %v5556
      %v5813 = vcvt.s32.f32 %v5557
      %v5814 = vcvt.s32.f32 %v5558
      %v5815 = vcvt.s32.f32 %v5559
      %v5816 = vcvt.s32.f32 %v5560
      %v5817 = vcvt.s32.f32 %v5561
      %v5818 = vcvt.s32.f32 %v5562
      %v5819 = vcvt.s32.f32 %v5563
      %v5820 = vcvt.s32.f32 %v5564
      %v5821 = vcvt.s32.f32 %v5565
      %v5822 = vcvt.s32.f32 %v5566
      %v5823 = vcvt.s32.f32 %v5567
      %v5824 = vcvt.s32.f32 %v5568
      %v5825 = vcvt.s32.f32 %v5569
      %v5826 = vcvt.s32.f32 %v5570
      %v5827 = vcvt.s32.f32 %v5571
      %v5828 = vcvt.s32.f32 %v5572
      %v5829 = vcvt.s32.f32 %v5573
      %v5830 = vcvt.s32.f32 %v5574
      %v5831 = vcvt.s32.f32 %v5575
      %v5832 = vcvt.s32.f32 %v5576
      %v5833 = vcvt.s32.f32 %v5577
      %v5834 = vcvt.s32.f32 %v5578
      %v5835 = vcvt.s32.f32 %v5579
      %v5836 = vcvt.s32.f32 %v5580
      %v5837 = vcvt.s32.f32 %v5581
      %v5838 = vcvt.s32.f32 %v5582
      %v5839 = vcvt.s32.f32 %v5583
      %v5840 = vcvt.s32.f32 %v5584
      %v5841 = vcvt.s32.f32 %v5585
      %v5842 = vcvt.s32.f32 %v5586
      %v5843 = vcvt.s32.f32 %v5587
      %v5844 = vcvt.s32.f32 %v5588
      %v5845 = vcvt.s32.f32 %v5589
      %v5846 = vcvt.s32.f32 %v5590
      %v5847 = vcvt.s32.f32 %v5591
      %v5848 = vcvt.s32.f32 %v5592
      %v5849 = vcvt.s32.f32 %v5593
      %v5850 = vcvt.s32.f32 %v5594
      %v5851 = vcvt.s32.f32 %v5595
      %v5852 = vcvt.s32.f32 %v5596
      %v5853 = vcvt.s32.f32 %v5597
      %v5854 = vcvt.s32.f32 %v5598
      %v5855 = vcvt.s32.f32 %v5599
      %v5856 = vcvt.s32.f32 %v5600
      %v5857 = vcvt.s32.f32 %v5601
      %v5858 = vcvt.s32.f32 %v5602
      %v5859 = vcvt.s32.f32 %v5603
      %v5860 = vcvt.s32.f32 %v5604
      %v5861 = vcvt.s32.f32 %v5605
      %v5862 = vcvt.s32.f32 %v5606
      %v5863 = vcvt.s32.f32 %v5607
      %v5864 = vcvt.s32.f32 %v5608
      %v5865 = vcvt.s32.f32 %v5609
      %v5866 = vcvt.s32.f32 %v5610
      %v5867 = vcvt.s32.f32 %v5611
      %v5868 = vcvt.s32.f32 %v5612
      %v5869 = vcvt.s32.f32 %v5613
      %v5870 = vcvt.s32.f32 %v5614
      %v5871 = vcvt.s32.f32 %v5615
      %v5872 = vcvt.s32.f32 %v5616
      %v5873 = vcvt.s32.f32 %v5617
      %v5874 = vcvt.s32.f32 %v5618
      %v5875 = vcvt.s32.f32 %v5619
      %v5876 = vcvt.s32.f32 %v5620
      %v5877 = vcvt.s32.f32 %v5621
      %v5878 = vcvt.s32.f32 %v5622
      %v5879 = vcvt.s32.f32 %v5623
      %v5880 = vcvt.s32.f32 %v5624
      %v5881 = vcvt.s32.f32 %v5625
      %v5882 = vcvt.s32.f32 %v5626
      %v5883 = vcvt.s32.f32 %v5627
      %v5884 = vcvt.s32.f32 %v5628
      %v5885 = vcvt.s32.f32 %v5629
      %v5886 = vcvt.s32.f32 %v5630
      %v5887 = vcvt.s32.f32 %v5631
      %v5888 = vcvt.s32.f32 %v5632
      %v5889 = vcvt.s32.f32 %v5633
      %v5890 = vcvt.s32.f32 %v5634
      %v5891 = vcvt.s32.f32 %v5635
      %v5892 = vcvt.s32.f32 %v5636
      %v5893 = vcvt.s32.f32 %v5637
      %v5894 = vcvt.s32.f32 %v5638
      %v5895 = vcvt.s32.f32 %v5639
      %v5896 = vcvt.s32.f32 %v5640
      %v5897 = vcvt.s32.f32 %v5641
      %v5898 = vcvt.s32.f32 %v5642
      %v5899 = vcvt.s32.f32 %v5643
      %v5900 = vcvt.s32.f32 %v5644
      %v5901 = vcvt.s32.f32 %v5645
      %v5902 = vcvt.s32.f32 %v5646
      %v5903 = vcvt.s32.f32 %v5647
      %v5904 = vcvt.s32.f32 %v5648
      %v5905 = vcvt.s32.f32 %v5649
      %v5906 = vcvt.s32.f32 %v5650
      %v5907 = vcvt.s32.f32 %v5651
      %v5908 = vcvt.s32.f32 %v5652
      %v5909 = vcvt.s32.f32 %v5653
      %v5910 = vcvt.s32.f32 %v5654
      %v5911 = vcvt.s32.f32 %v5655
      %v5912 = vcvt.s32.f32 %v5656
      %5913 = vmatprep.subr.mxu0 0.0
      %5914 = vmatpush1.msra.mxu0 %v5672
      %5915 = vmatprep.subr.mxu0 0.0
      %5916 = vmatpush1.msra.mxu0 %v5671
      %5917 = vmatprep.subr.mxu0 0.0
      %5918 = vmatpush1.msra.mxu0 %v5670
      %5919 = vmatprep.subr.mxu0 0.0
      %5920 = vmatpush1.msra.mxu0 %v5669
      %5921 = vmatprep.subr.mxu0 0.0
      %5922 = vmatpush1.msra.mxu0 %v5668
      %5923 = vmatprep.subr.mxu0 0.0
      %5924 = vmatpush1.msra.mxu0 %v5667
      %5925 = vmatprep.subr.mxu0 0.0
      %5926 = vmatpush1.msra.mxu0 %v5666
      %5927 = vmatprep.subr.mxu0 0.0
      %5928 = vmatpush1.msra.mxu0 %v5665
      %5929 = vmatprep.subr.mxu0 0.0
      %5930 = vmatpush1.msra.mxu0 %v5664
      %5931 = vmatprep.subr.mxu0 0.0
      %5932 = vmatpush1.msra.mxu0 %v5663
      %5933 = vmatprep.subr.mxu0 0.0
      %5934 = vmatpush1.msra.mxu0 %v5662
      %5935 = vmatprep.subr.mxu0 0.0
      %5936 = vmatpush1.msra.mxu0 %v5661
      %5937 = vmatprep.subr.mxu0 0.0
      %5938 = vmatpush1.msra.mxu0 %v5660
      %5939 = vmatprep.subr.mxu0 0.0
      %5940 = vmatpush1.msra.mxu0 %v5659
      %5941 = vmatprep.subr.mxu0 0.0
      %5942 = vmatpush1.msra.mxu0 %v5658
      %5943 = vmatprep.subr.mxu0 0.0
      %5944 = vmatpush1.msra.mxu0 %v5657
      %5945 = vmatprep.subr.mxu0 0.0
      %5946 = vmatpush2.msra.mxu0 %v5688
      %5947 = vmatprep.subr.mxu0 0.0
      %5948 = vmatpush2.msra.mxu0 %v5687
      %5949 = vmatprep.subr.mxu0 0.0
      %5950 = vmatpush2.msra.mxu0 %v5686
      %5951 = vmatprep.subr.mxu0 0.0
      %5952 = vmatpush2.msra.mxu0 %v5685
      %5953 = vmatprep.subr.mxu0 0.0
      %5954 = vmatpush2.msra.mxu0 %v5684
      %5955 = vmatprep.subr.mxu0 0.0
      %5956 = vmatpush2.msra.mxu0 %v5683
      %5957 = vmatprep.subr.mxu0 0.0
      %5958 = vmatpush2.msra.mxu0 %v5682
      %5959 = vmatprep.subr.mxu0 0.0
      %5960 = vmatpush2.msra.mxu0 %v5681
      %5961 = vmatprep.subr.mxu0 0.0
      %5962 = vmatpush2.msra.mxu0 %v5680
      %5963 = vmatprep.subr.mxu0 0.0
      %5964 = vmatpush2.msra.mxu0 %v5679
      %5965 = vmatprep.subr.mxu0 0.0
      %5966 = vmatpush2.msra.mxu0 %v5678
      %5967 = vmatprep.subr.mxu0 0.0
      %5968 = vmatpush2.msra.mxu0 %v5677
      %5969 = vmatprep.subr.mxu0 0.0
      %5970 = vmatpush2.msra.mxu0 %v5676
      %5971 = vmatprep.subr.mxu0 0.0
      %5972 = vmatpush2.msra.mxu0 %v5675
      %5973 = vmatprep.subr.mxu0 0.0
      %5974 = vmatpush2.msra.mxu0 %v5674
      %5975 = vmatprep.subr.mxu0 0.0
      %5976 = vmatpush2.msra.mxu0 %v5673
      %5977 = vmatprep.mubr.f32.mxu0 %v4935
      %5978 = vmatmul.mubr.f32.gmra.mxu0 %v4934
      %v5979 = vpop.f32.mrf.mxu0
      %v5980 = vadd.f32 0.0, %v5979
      %v5981 = vpop.f32.mrf.mxu0
      %5982 = vdwg.mxu0
      %5983 = vmatprep.subr.mxu0 0.0
      %5984 = vmatpush1.msra.mxu0 %v5704
      %5985 = vmatprep.subr.mxu0 0.0
      %5986 = vmatpush1.msra.mxu0 %v5703
      %5987 = vmatprep.subr.mxu0 0.0
      %5988 = vmatpush1.msra.mxu0 %v5702
      %5989 = vmatprep.subr.mxu0 0.0
      %5990 = vmatpush1.msra.mxu0 %v5701
      %5991 = vmatprep.subr.mxu0 0.0
      %5992 = vmatpush1.msra.mxu0 %v5700
      %5993 = vmatprep.subr.mxu0 0.0
      %5994 = vmatpush1.msra.mxu0 %v5699
      %5995 = vmatprep.subr.mxu0 0.0
      %5996 = vmatpush1.msra.mxu0 %v5698
      %5997 = vmatprep.subr.mxu0 0.0
      %5998 = vmatpush1.msra.mxu0 %v5697
      %5999 = vmatprep.subr.mxu0 0.0
      %6000 = vmatpush1.msra.mxu0 %v5696
      %6001 = vmatprep.subr.mxu0 0.0
      %6002 = vmatpush1.msra.mxu0 %v5695
      %6003 = vmatprep.subr.mxu0 0.0
      %6004 = vmatpush1.msra.mxu0 %v5694
      %6005 = vmatprep.subr.mxu0 0.0
      %6006 = vmatpush1.msra.mxu0 %v5693
      %6007 = vmatprep.subr.mxu0 0.0
      %6008 = vmatpush1.msra.mxu0 %v5692
      %6009 = vmatprep.subr.mxu0 0.0
      %6010 = vmatpush1.msra.mxu0 %v5691
      %6011 = vmatprep.subr.mxu0 0.0
      %6012 = vmatpush1.msra.mxu0 %v5690
      %6013 = vmatprep.subr.mxu0 0.0
      %6014 = vmatpush1.msra.mxu0 %v5689
      %6015 = vmatprep.subr.mxu0 0.0
      %6016 = vmatpush2.msra.mxu0 %v5720
      %6017 = vmatprep.subr.mxu0 0.0
      %6018 = vmatpush2.msra.mxu0 %v5719
      %6019 = vmatprep.subr.mxu0 0.0
      %6020 = vmatpush2.msra.mxu0 %v5718
      %6021 = vmatprep.subr.mxu0 0.0
      %6022 = vmatpush2.msra.mxu0 %v5717
      %6023 = vmatprep.subr.mxu0 0.0
      %6024 = vmatpush2.msra.mxu0 %v5716
      %6025 = vmatprep.subr.mxu0 0.0
      %6026 = vmatpush2.msra.mxu0 %v5715
      %6027 = vmatprep.subr.mxu0 0.0
      %6028 = vmatpush2.msra.mxu0 %v5714
      %6029 = vmatprep.subr.mxu0 0.0
      %6030 = vmatpush2.msra.mxu0 %v5713
      %6031 = vmatprep.subr.mxu0 0.0
      %6032 = vmatpush2.msra.mxu0 %v5712
      %6033 = vmatprep.subr.mxu0 0.0
      %6034 = vmatpush2.msra.mxu0 %v5711
      %6035 = vmatprep.subr.mxu0 0.0
      %6036 = vmatpush2.msra.mxu0 %v5710
      %6037 = vmatprep.subr.mxu0 0.0
      %6038 = vmatpush2.msra.mxu0 %v5709
      %6039 = vmatprep.subr.mxu0 0.0
      %6040 = vmatpush2.msra.mxu0 %v5708
      %6041 = vmatprep.subr.mxu0 0.0
      %6042 = vmatpush2.msra.mxu0 %v5707
      %6043 = vmatprep.subr.mxu0 0.0
      %6044 = vmatpush2.msra.mxu0 %v5706
      %6045 = vmatprep.subr.mxu0 0.0
      %6046 = vmatpush2.msra.mxu0 %v5705
      %6047 = vmatprep.mubr.f32.mxu0 %v4937
      %6048 = vmatmul.mubr.f32.gmra.mxu0 %v4936
      %v6049 = vpop.f32.mrf.mxu0
      %v6050 = vadd.f32 %v5980, %v6049
      %v6051 = vpop.f32.mrf.mxu0
      %6052 = vdwg.mxu0
      %6053 = vmatprep.subr.mxu0 0.0
      %6054 = vmatpush1.msra.mxu0 %v5736
      %6055 = vmatprep.subr.mxu0 0.0
      %6056 = vmatpush1.msra.mxu0 %v5735
      %6057 = vmatprep.subr.mxu0 0.0
      %6058 = vmatpush1.msra.mxu0 %v5734
      %6059 = vmatprep.subr.mxu0 0.0
      %6060 = vmatpush1.msra.mxu0 %v5733
      %6061 = vmatprep.subr.mxu0 0.0
      %6062 = vmatpush1.msra.mxu0 %v5732
      %6063 = vmatprep.subr.mxu0 0.0
      %6064 = vmatpush1.msra.mxu0 %v5731
      %6065 = vmatprep.subr.mxu0 0.0
      %6066 = vmatpush1.msra.mxu0 %v5730
      %6067 = vmatprep.subr.mxu0 0.0
      %6068 = vmatpush1.msra.mxu0 %v5729
      %6069 = vmatprep.subr.mxu0 0.0
      %6070 = vmatpush1.msra.mxu0 %v5728
      %6071 = vmatprep.subr.mxu0 0.0
      %6072 = vmatpush1.msra.mxu0 %v5727
      %6073 = vmatprep.subr.mxu0 0.0
      %6074 = vmatpush1.msra.mxu0 %v5726
      %6075 = vmatprep.subr.mxu0 0.0
      %6076 = vmatpush1.msra.mxu0 %v5725
      %6077 = vmatprep.subr.mxu0 0.0
      %6078 = vmatpush1.msra.mxu0 %v5724
      %6079 = vmatprep.subr.mxu0 0.0
      %6080 = vmatpush1.msra.mxu0 %v5723
      %6081 = vmatprep.subr.mxu0 0.0
      %6082 = vmatpush1.msra.mxu0 %v5722
      %6083 = vmatprep.subr.mxu0 0.0
      %6084 = vmatpush1.msra.mxu0 %v5721
      %6085 = vmatprep.subr.mxu0 0.0
      %6086 = vmatpush2.msra.mxu0 %v5752
      %6087 = vmatprep.subr.mxu0 0.0
      %6088 = vmatpush2.msra.mxu0 %v5751
      %6089 = vmatprep.subr.mxu0 0.0
      %6090 = vmatpush2.msra.mxu0 %v5750
      %6091 = vmatprep.subr.mxu0 0.0
      %6092 = vmatpush2.msra.mxu0 %v5749
      %6093 = vmatprep.subr.mxu0 0.0
      %6094 = vmatpush2.msra.mxu0 %v5748
      %6095 = vmatprep.subr.mxu0 0.0
      %6096 = vmatpush2.msra.mxu0 %v5747
      %6097 = vmatprep.subr.mxu0 0.0
      %6098 = vmatpush2.msra.mxu0 %v5746
      %6099 = vmatprep.subr.mxu0 0.0
      %6100 = vmatpush2.msra.mxu0 %v5745
      %6101 = vmatprep.subr.mxu0 0.0
      %6102 = vmatpush2.msra.mxu0 %v5744
      %6103 = vmatprep.subr.mxu0 0.0
      %6104 = vmatpush2.msra.mxu0 %v5743
      %6105 = vmatprep.subr.mxu0 0.0
      %6106 = vmatpush2.msra.mxu0 %v5742
      %6107 = vmatprep.subr.mxu0 0.0
      %6108 = vmatpush2.msra.mxu0 %v5741
      %6109 = vmatprep.subr.mxu0 0.0
      %6110 = vmatpush2.msra.mxu0 %v5740
      %6111 = vmatprep.subr.mxu0 0.0
      %6112 = vmatpush2.msra.mxu0 %v5739
      %6113 = vmatprep.subr.mxu0 0.0
      %6114 = vmatpush2.msra.mxu0 %v5738
      %6115 = vmatprep.subr.mxu0 0.0
      %6116 = vmatpush2.msra.mxu0 %v5737
      %6117 = vmatprep.mubr.f32.mxu0 %v4939
      %6118 = vmatmul.mubr.f32.gmra.mxu0 %v4938
      %v6119 = vpop.f32.mrf.mxu0
      %v6120 = vadd.f32 %v6050, %v6119
      %v6121 = vpop.f32.mrf.mxu0
      %6122 = vdwg.mxu0
      %6123 = vmatprep.subr.mxu0 0.0
      %6124 = vmatpush1.msra.mxu0 %v5768
      %6125 = vmatprep.subr.mxu0 0.0
      %6126 = vmatpush1.msra.mxu0 %v5767
      %6127 = vmatprep.subr.mxu0 0.0
      %6128 = vmatpush1.msra.mxu0 %v5766
      %6129 = vmatprep.subr.mxu0 0.0
      %6130 = vmatpush1.msra.mxu0 %v5765
      %6131 = vmatprep.subr.mxu0 0.0
      %6132 = vmatpush1.msra.mxu0 %v5764
      %6133 = vmatprep.subr.mxu0 0.0
      %6134 = vmatpush1.msra.mxu0 %v5763
      %6135 = vmatprep.subr.mxu0 0.0
      %6136 = vmatpush1.msra.mxu0 %v5762
      %6137 = vmatprep.subr.mxu0 0.0
      %6138 = vmatpush1.msra.mxu0 %v5761
      %6139 = vmatprep.subr.mxu0 0.0
      %6140 = vmatpush1.msra.mxu0 %v5760
      %6141 = vmatprep.subr.mxu0 0.0
      %6142 = vmatpush1.msra.mxu0 %v5759
      %6143 = vmatprep.subr.mxu0 0.0
      %6144 = vmatpush1.msra.mxu0 %v5758
      %6145 = vmatprep.subr.mxu0 0.0
      %6146 = vmatpush1.msra.mxu0 %v5757
      %6147 = vmatprep.subr.mxu0 0.0
      %6148 = vmatpush1.msra.mxu0 %v5756
      %6149 = vmatprep.subr.mxu0 0.0
      %6150 = vmatpush1.msra.mxu0 %v5755
      %6151 = vmatprep.subr.mxu0 0.0
      %6152 = vmatpush1.msra.mxu0 %v5754
      %6153 = vmatprep.subr.mxu0 0.0
      %6154 = vmatpush1.msra.mxu0 %v5753
      %6155 = vmatprep.subr.mxu0 0.0
      %6156 = vmatpush2.msra.mxu0 %v5784
      %6157 = vmatprep.subr.mxu0 0.0
      %6158 = vmatpush2.msra.mxu0 %v5783
      %6159 = vmatprep.subr.mxu0 0.0
      %6160 = vmatpush2.msra.mxu0 %v5782
      %6161 = vmatprep.subr.mxu0 0.0
      %6162 = vmatpush2.msra.mxu0 %v5781
      %6163 = vmatprep.subr.mxu0 0.0
      %6164 = vmatpush2.msra.mxu0 %v5780
      %6165 = vmatprep.subr.mxu0 0.0
      %6166 = vmatpush2.msra.mxu0 %v5779
      %6167 = vmatprep.subr.mxu0 0.0
      %6168 = vmatpush2.msra.mxu0 %v5778
      %6169 = vmatprep.subr.mxu0 0.0
      %6170 = vmatpush2.msra.mxu0 %v5777
      %6171 = vmatprep.subr.mxu0 0.0
      %6172 = vmatpush2.msra.mxu0 %v5776
      %6173 = vmatprep.subr.mxu0 0.0
      %6174 = vmatpush2.msra.mxu0 %v5775
      %6175 = vmatprep.subr.mxu0 0.0
      %6176 = vmatpush2.msra.mxu0 %v5774
      %6177 = vmatprep.subr.mxu0 0.0
      %6178 = vmatpush2.msra.mxu0 %v5773
      %6179 = vmatprep.subr.mxu0 0.0
      %6180 = vmatpush2.msra.mxu0 %v5772
      %6181 = vmatprep.subr.mxu0 0.0
      %6182 = vmatpush2.msra.mxu0 %v5771
      %6183 = vmatprep.subr.mxu0 0.0
      %6184 = vmatpush2.msra.mxu0 %v5770
      %6185 = vmatprep.subr.mxu0 0.0
      %6186 = vmatpush2.msra.mxu0 %v5769
      %6187 = vmatprep.mubr.f32.mxu0 %v4941
      %6188 = vmatmul.mubr.f32.gmra.mxu0 %v4940
      %v6189 = vpop.f32.mrf.mxu0
      %v6190 = vadd.f32 %v6120, %v6189
      %v6191 = vpop.f32.mrf.mxu0
      %6192 = vdwg.mxu0
      %6193 = vmatprep.subr.mxu0 0.0
      %6194 = vmatpush1.msra.mxu0 %v5800
      %6195 = vmatprep.subr.mxu0 0.0
      %6196 = vmatpush1.msra.mxu0 %v5799
      %6197 = vmatprep.subr.mxu0 0.0
      %6198 = vmatpush1.msra.mxu0 %v5798
      %6199 = vmatprep.subr.mxu0 0.0
      %6200 = vmatpush1.msra.mxu0 %v5797
      %6201 = vmatprep.subr.mxu0 0.0
      %6202 = vmatpush1.msra.mxu0 %v5796
      %6203 = vmatprep.subr.mxu0 0.0
      %6204 = vmatpush1.msra.mxu0 %v5795
      %6205 = vmatprep.subr.mxu0 0.0
      %6206 = vmatpush1.msra.mxu0 %v5794
      %6207 = vmatprep.subr.mxu0 0.0
      %6208 = vmatpush1.msra.mxu0 %v5793
      %6209 = vmatprep.subr.mxu0 0.0
      %6210 = vmatpush1.msra.mxu0 %v5792
      %6211 = vmatprep.subr.mxu0 0.0
      %6212 = vmatpush1.msra.mxu0 %v5791
      %6213 = vmatprep.subr.mxu0 0.0
      %6214 = vmatpush1.msra.mxu0 %v5790
      %6215 = vmatprep.subr.mxu0 0.0
      %6216 = vmatpush1.msra.mxu0 %v5789
      %6217 = vmatprep.subr.mxu0 0.0
      %6218 = vmatpush1.msra.mxu0 %v5788
      %6219 = vmatprep.subr.mxu0 0.0
      %6220 = vmatpush1.msra.mxu0 %v5787
      %6221 = vmatprep.subr.mxu0 0.0
      %6222 = vmatpush1.msra.mxu0 %v5786
      %6223 = vmatprep.subr.mxu0 0.0
      %6224 = vmatpush1.msra.mxu0 %v5785
      %6225 = vmatprep.subr.mxu0 0.0
      %6226 = vmatpush2.msra.mxu0 %v5816
      %6227 = vmatprep.subr.mxu0 0.0
      %6228 = vmatpush2.msra.mxu0 %v5815
      %6229 = vmatprep.subr.mxu0 0.0
      %6230 = vmatpush2.msra.mxu0 %v5814
      %6231 = vmatprep.subr.mxu0 0.0
      %6232 = vmatpush2.msra.mxu0 %v5813
      %6233 = vmatprep.subr.mxu0 0.0
      %6234 = vmatpush2.msra.mxu0 %v5812
      %6235 = vmatprep.subr.mxu0 0.0
      %6236 = vmatpush2.msra.mxu0 %v5811
      %6237 = vmatprep.subr.mxu0 0.0
      %6238 = vmatpush2.msra.mxu0 %v5810
      %6239 = vmatprep.subr.mxu0 0.0
      %6240 = vmatpush2.msra.mxu0 %v5809
      %6241 = vmatprep.subr.mxu0 0.0
      %6242 = vmatpush2.msra.mxu0 %v5808
      %6243 = vmatprep.subr.mxu0 0.0
      %6244 = vmatpush2.msra.mxu0 %v5807
      %6245 = vmatprep.subr.mxu0 0.0
      %6246 = vmatpush2.msra.mxu0 %v5806
      %6247 = vmatprep.subr.mxu0 0.0
      %6248 = vmatpush2.msra.mxu0 %v5805
      %6249 = vmatprep.subr.mxu0 0.0
      %6250 = vmatpush2.msra.mxu0 %v5804
      %6251 = vmatprep.subr.mxu0 0.0
      %6252 = vmatpush2.msra.mxu0 %v5803
      %6253 = vmatprep.subr.mxu0 0.0
      %6254 = vmatpush2.msra.mxu0 %v5802
      %6255 = vmatprep.subr.mxu0 0.0
      %6256 = vmatpush2.msra.mxu0 %v5801
      %6257 = vmatprep.mubr.f32.mxu0 %v4943
      %6258 = vmatmul.mubr.f32.gmra.mxu0 %v4942
      %v6259 = vpop.f32.mrf.mxu0
      %v6260 = vadd.f32 %v6190, %v6259
      %v6261 = vpop.f32.mrf.mxu0
      %6262 = vdwg.mxu0
      %6263 = vmatprep.subr.mxu0 0.0
      %6264 = vmatpush1.msra.mxu0 %v5832
      %6265 = vmatprep.subr.mxu0 0.0
      %6266 = vmatpush1.msra.mxu0 %v5831
      %6267 = vmatprep.subr.mxu0 0.0
      %6268 = vmatpush1.msra.mxu0 %v5830
      %6269 = vmatprep.subr.mxu0 0.0
      %6270 = vmatpush1.msra.mxu0 %v5829
      %6271 = vmatprep.subr.mxu0 0.0
      %6272 = vmatpush1.msra.mxu0 %v5828
      %6273 = vmatprep.subr.mxu0 0.0
      %6274 = vmatpush1.msra.mxu0 %v5827
      %6275 = vmatprep.subr.mxu0 0.0
      %6276 = vmatpush1.msra.mxu0 %v5826
      %6277 = vmatprep.subr.mxu0 0.0
      %6278 = vmatpush1.msra.mxu0 %v5825
      %6279 = vmatprep.subr.mxu0 0.0
      %6280 = vmatpush1.msra.mxu0 %v5824
      %6281 = vmatprep.subr.mxu0 0.0
      %6282 = vmatpush1.msra.mxu0 %v5823
      %6283 = vmatprep.subr.mxu0 0.0
      %6284 = vmatpush1.msra.mxu0 %v5822
      %6285 = vmatprep.subr.mxu0 0.0
      %6286 = vmatpush1.msra.mxu0 %v5821
      %6287 = vmatprep.subr.mxu0 0.0
      %6288 = vmatpush1.msra.mxu0 %v5820
      %6289 = vmatprep.subr.mxu0 0.0
      %6290 = vmatpush1.msra.mxu0 %v5819
      %6291 = vmatprep.subr.mxu0 0.0
      %6292 = vmatpush1.msra.mxu0 %v5818
      %6293 = vmatprep.subr.mxu0 0.0
      %6294 = vmatpush1.msra.mxu0 %v5817
      %6295 = vmatprep.subr.mxu0 0.0
      %6296 = vmatpush2.msra.mxu0 %v5848
      %6297 = vmatprep.subr.mxu0 0.0
      %6298 = vmatpush2.msra.mxu0 %v5847
      %6299 = vmatprep.subr.mxu0 0.0
      %6300 = vmatpush2.msra.mxu0 %v5846
      %6301 = vmatprep.subr.mxu0 0.0
      %6302 = vmatpush2.msra.mxu0 %v5845
      %6303 = vmatprep.subr.mxu0 0.0
      %6304 = vmatpush2.msra.mxu0 %v5844
      %6305 = vmatprep.subr.mxu0 0.0
      %6306 = vmatpush2.msra.mxu0 %v5843
      %6307 = vmatprep.subr.mxu0 0.0
      %6308 = vmatpush2.msra.mxu0 %v5842
      %6309 = vmatprep.subr.mxu0 0.0
      %6310 = vmatpush2.msra.mxu0 %v5841
      %6311 = vmatprep.subr.mxu0 0.0
      %6312 = vmatpush2.msra.mxu0 %v5840
      %6313 = vmatprep.subr.mxu0 0.0
      %6314 = vmatpush2.msra.mxu0 %v5839
      %6315 = vmatprep.subr.mxu0 0.0
      %6316 = vmatpush2.msra.mxu0 %v5838
      %6317 = vmatprep.subr.mxu0 0.0
      %6318 = vmatpush2.msra.mxu0 %v5837
      %6319 = vmatprep.subr.mxu0 0.0
      %6320 = vmatpush2.msra.mxu0 %v5836
      %6321 = vmatprep.subr.mxu0 0.0
      %6322 = vmatpush2.msra.mxu0 %v5835
      %6323 = vmatprep.subr.mxu0 0.0
      %6324 = vmatpush2.msra.mxu0 %v5834
      %6325 = vmatprep.subr.mxu0 0.0
      %6326 = vmatpush2.msra.mxu0 %v5833
      %6327 = vmatprep.mubr.f32.mxu0 %v4945
      %6328 = vmatmul.mubr.f32.gmra.mxu0 %v4944
      %v6329 = vpop.f32.mrf.mxu0
      %v6330 = vadd.f32 %v6260, %v6329
      %v6331 = vpop.f32.mrf.mxu0
      %6332 = vdwg.mxu0
      %6333 = vmatprep.subr.mxu0 0.0
      %6334 = vmatpush1.msra.mxu0 %v5864
      %6335 = vmatprep.subr.mxu0 0.0
      %6336 = vmatpush1.msra.mxu0 %v5863
      %6337 = vmatprep.subr.mxu0 0.0
      %6338 = vmatpush1.msra.mxu0 %v5862
      %6339 = vmatprep.subr.mxu0 0.0
      %6340 = vmatpush1.msra.mxu0 %v5861
      %6341 = vmatprep.subr.mxu0 0.0
      %6342 = vmatpush1.msra.mxu0 %v5860
      %6343 = vmatprep.subr.mxu0 0.0
      %6344 = vmatpush1.msra.mxu0 %v5859
      %6345 = vmatprep.subr.mxu0 0.0
      %6346 = vmatpush1.msra.mxu0 %v5858
      %6347 = vmatprep.subr.mxu0 0.0
      %6348 = vmatpush1.msra.mxu0 %v5857
      %6349 = vmatprep.subr.mxu0 0.0
      %6350 = vmatpush1.msra.mxu0 %v5856
      %6351 = vmatprep.subr.mxu0 0.0
      %6352 = vmatpush1.msra.mxu0 %v5855
      %6353 = vmatprep.subr.mxu0 0.0
      %6354 = vmatpush1.msra.mxu0 %v5854
      %6355 = vmatprep.subr.mxu0 0.0
      %6356 = vmatpush1.msra.mxu0 %v5853
      %6357 = vmatprep.subr.mxu0 0.0
      %6358 = vmatpush1.msra.mxu0 %v5852
      %6359 = vmatprep.subr.mxu0 0.0
      %6360 = vmatpush1.msra.mxu0 %v5851
      %6361 = vmatprep.subr.mxu0 0.0
      %6362 = vmatpush1.msra.mxu0 %v5850
      %6363 = vmatprep.subr.mxu0 0.0
      %6364 = vmatpush1.msra.mxu0 %v5849
      %6365 = vmatprep.subr.mxu0 0.0
      %6366 = vmatpush2.msra.mxu0 %v5880
      %6367 = vmatprep.subr.mxu0 0.0
      %6368 = vmatpush2.msra.mxu0 %v5879
      %6369 = vmatprep.subr.mxu0 0.0
      %6370 = vmatpush2.msra.mxu0 %v5878
      %6371 = vmatprep.subr.mxu0 0.0
      %6372 = vmatpush2.msra.mxu0 %v5877
      %6373 = vmatprep.subr.mxu0 0.0
      %6374 = vmatpush2.msra.mxu0 %v5876
      %6375 = vmatprep.subr.mxu0 0.0
      %6376 = vmatpush2.msra.mxu0 %v5875
      %6377 = vmatprep.subr.mxu0 0.0
      %6378 = vmatpush2.msra.mxu0 %v5874
      %6379 = vmatprep.subr.mxu0 0.0
      %6380 = vmatpush2.msra.mxu0 %v5873
      %6381 = vmatprep.subr.mxu0 0.0
      %6382 = vmatpush2.msra.mxu0 %v5872
      %6383 = vmatprep.subr.mxu0 0.0
      %6384 = vmatpush2.msra.mxu0 %v5871
      %6385 = vmatprep.subr.mxu0 0.0
      %6386 = vmatpush2.msra.mxu0 %v5870
      %6387 = vmatprep.subr.mxu0 0.0
      %6388 = vmatpush2.msra.mxu0 %v5869
      %6389 = vmatprep.subr.mxu0 0.0
      %6390 = vmatpush2.msra.mxu0 %v5868
      %6391 = vmatprep.subr.mxu0 0.0
      %6392 = vmatpush2.msra.mxu0 %v5867
      %6393 = vmatprep.subr.mxu0 0.0
      %6394 = vmatpush2.msra.mxu0 %v5866
      %6395 = vmatprep.subr.mxu0 0.0
      %6396 = vmatpush2.msra.mxu0 %v5865
      %6397 = vmatprep.mubr.f32.mxu0 %v4947
      %6398 = vmatmul.mubr.f32.gmra.mxu0 %v4946
      %v6399 = vpop.f32.mrf.mxu0
      %v6400 = vadd.f32 %v6330, %v6399
      %v6401 = vpop.f32.mrf.mxu0
      %6402 = vdwg.mxu0
      %6403 = vmatprep.subr.mxu0 0.0
      %6404 = vmatpush1.msra.mxu0 %v5896
      %6405 = vmatprep.subr.mxu0 0.0
      %6406 = vmatpush1.msra.mxu0 %v5895
      %6407 = vmatprep.subr.mxu0 0.0
      %6408 = vmatpush1.msra.mxu0 %v5894
      %6409 = vmatprep.subr.mxu0 0.0
      %6410 = vmatpush1.msra.mxu0 %v5893
      %6411 = vmatprep.subr.mxu0 0.0
      %6412 = vmatpush1.msra.mxu0 %v5892
      %6413 = vmatprep.subr.mxu0 0.0
      %6414 = vmatpush1.msra.mxu0 %v5891
      %6415 = vmatprep.subr.mxu0 0.0
      %6416 = vmatpush1.msra.mxu0 %v5890
      %6417 = vmatprep.subr.mxu0 0.0
      %6418 = vmatpush1.msra.mxu0 %v5889
      %6419 = vmatprep.subr.mxu0 0.0
      %6420 = vmatpush1.msra.mxu0 %v5888
      %6421 = vmatprep.subr.mxu0 0.0
      %6422 = vmatpush1.msra.mxu0 %v5887
      %6423 = vmatprep.subr.mxu0 0.0
      %6424 = vmatpush1.msra.mxu0 %v5886
      %6425 = vmatprep.subr.mxu0 0.0
      %6426 = vmatpush1.msra.mxu0 %v5885
      %6427 = vmatprep.subr.mxu0 0.0
      %6428 = vmatpush1.msra.mxu0 %v5884
      %6429 = vmatprep.subr.mxu0 0.0
      %6430 = vmatpush1.msra.mxu0 %v5883
      %6431 = vmatprep.subr.mxu0 0.0
      %6432 = vmatpush1.msra.mxu0 %v5882
      %6433 = vmatprep.subr.mxu0 0.0
      %6434 = vmatpush1.msra.mxu0 %v5881
      %6435 = vmatprep.subr.mxu0 0.0
      %6436 = vmatpush2.msra.mxu0 %v5912
      %6437 = vmatprep.subr.mxu0 0.0
      %6438 = vmatpush2.msra.mxu0 %v5911
      %6439 = vmatprep.subr.mxu0 0.0
      %6440 = vmatpush2.msra.mxu0 %v5910
      %6441 = vmatprep.subr.mxu0 0.0
      %6442 = vmatpush2.msra.mxu0 %v5909
      %6443 = vmatprep.subr.mxu0 0.0
      %6444 = vmatpush2.msra.mxu0 %v5908
      %6445 = vmatprep.subr.mxu0 0.0
      %6446 = vmatpush2.msra.mxu0 %v5907
      %6447 = vmatprep.subr.mxu0 0.0
      %6448 = vmatpush2.msra.mxu0 %v5906
      %6449 = vmatprep.subr.mxu0 0.0
      %6450 = vmatpush2.msra.mxu0 %v5905
      %6451 = vmatprep.subr.mxu0 0.0
      %6452 = vmatpush2.msra.mxu0 %v5904
      %6453 = vmatprep.subr.mxu0 0.0
      %6454 = vmatpush2.msra.mxu0 %v5903
      %6455 = vmatprep.subr.mxu0 0.0
      %6456 = vmatpush2.msra.mxu0 %v5902
      %6457 = vmatprep.subr.mxu0 0.0
      %6458 = vmatpush2.msra.mxu0 %v5901
      %6459 = vmatprep.subr.mxu0 0.0
      %6460 = vmatpush2.msra.mxu0 %v5900
      %6461 = vmatprep.subr.mxu0 0.0
      %6462 = vmatpush2.msra.mxu0 %v5899
      %6463 = vmatprep.subr.mxu0 0.0
      %6464 = vmatpush2.msra.mxu0 %v5898
      %6465 = vmatprep.subr.mxu0 0.0
      %6466 = vmatpush2.msra.mxu0 %v5897
      %6467 = vmatprep.mubr.f32.mxu0 %v4949
      %6468 = vmatmul.mubr.f32.gmra.mxu0 %v4948
      %v6469 = vpop.f32.mrf.mxu0
      %v6470 = vadd.f32 %v6400, %v6469
      %v6471 = vpop.f32.mrf.mxu0
      %6472 = vdwg.mxu0
      %6473 = vst [vmem:[%s198] sm:$0xff] %v6470
      %p6474 = scmp.lt.s32.totalorder %s15, 1
      %s6475 = scalar_select %p6474, %s15, 1
      %s6476 = smul.addr %s6475, 16
      %s6477 = smul.addr %s6476, 8
      %s6478 = scalar_lea.vmem %s2, %s6477
      %p6479 = scmp.lt.s32.totalorder %s15, 1
      %s6480 = scalar_select %p6479, %s15, 1
      %s6481 = smul.addr %s6480, 8
      %s6482 = scalar_lea.vmem %s3, %s6481
      // Predicated region
      $region29: #{softpool_forward.3} parent=27 // pred_check
        %p6483 = pneg %p85
      $region30: #{softpool_forward.3} parent=27 // pred_check_branch
        %6485 = sbr.rel (%p6483) target = $region32
      $region31: #{softpool_forward.3} parent=27 // pred_region
        _
      $region32: #{softpool_forward.3} parent=27 // pred_fallthru
        _
      // Predicated region
      $region33: #{softpool_forward.3} parent=27 // pred_check
        %p6486 = pneg %p111
      $region34: #{softpool_forward.3} parent=27 // pred_check_branch
        %6488 = sbr.rel (%p6486) target = $region36
      $region35: #{softpool_forward.3} parent=27 // pred_region
        _
      $region36: #{softpool_forward.3} parent=27 // pred_fallthru
        _
    $region28: #{softpool_forward.3} parent=5 // pred_fallthru
      _
    %p6489 = scmp.le.s32.totalorder 2, %s10
    // Predicated region
    $region37: #{softpool_forward.3} parent=5 // pred_check
      %p6490 = pneg %p6489
    $region38: #{softpool_forward.3} parent=5 // pred_check_branch
      %6492 = sbr.rel (%p6490) target = $region40
    $region39: #{softpool_forward.3} parent=5 // pred_region
      %s6493 = ssub.s32 %s10, 2
      // Predicated region
      $region41: #{softpool_forward.3} parent=39 // pred_check
        %p6494 = pneg %p91
      $region42: #{softpool_forward.3} parent=39 // pred_check_branch
        %6496 = sbr.rel (%p6494) target = $region44
      $region43: #{softpool_forward.3} parent=39 // pred_region
        %p6497 = scmp.lt.s32.totalorder %s16, 1
        %s6498 = scalar_select %p6497, %s16, 1
        %s6499 = smul.addr %s6498, 16
        %s6500 = smul.addr %s6499, 8
        %s6501 = scalar_lea.vmem %s2, %s6500
      $region44: #{softpool_forward.3} parent=39 // pred_fallthru
        _
      // Predicated region
      $region45: #{softpool_forward.3} parent=39 // pred_check
        %p6502 = pneg %p117
      $region46: #{softpool_forward.3} parent=39 // pred_check_branch
        %6504 = sbr.rel (%p6502) target = $region48
      $region47: #{softpool_forward.3} parent=39 // pred_region
        %p6505 = scmp.lt.s32.totalorder %s16, 1
        %s6506 = scalar_select %p6505, %s16, 1
        %s6507 = smul.addr %s6506, 8
        %s6508 = scalar_lea.vmem %s3, %s6507
      $region48: #{softpool_forward.3} parent=39 // pred_fallthru
        _
    $region40: #{softpool_forward.3} parent=5 // pred_fallthru
      _
  $region6: #{softpool_forward.3} parent=0 // loop_footer
    %s14 = sadd.s32 1, %s10
  $region7: #{softpool_forward.3} parent=0 // loop_footer_branch
    %9 = sbr.rel target = $region3
  $region8: #{softpool_forward.3} parent=0 // loop_exit
    _

</llo_original>
